<compile_context>
chip_gen: v7x
topology: tpu7x:2x2x1
jax: 0.10.0
libtpu: 0.0.40
codegen_flags: <defaults>
</compile_context>

<pallas_src>
import functools

import jax
import jax.numpy as jnp
from jax import lax
from jax.experimental import pallas as pl
from jax.experimental.pallas import tpu as pltpu

BN_EPS = 1e-5


def _round_up(x, m):
    return (x + m - 1) // m * m


# ---------------------------------------------------------------------------
# Pass 1: conv (27 shifted matmuls) + per-channel masked sum / sumsq partials
# ---------------------------------------------------------------------------
def _conv_stats_kernel(w_ref, x_ref, mask_ref, y_ref, s1_ref, s2_ref, acc_ref,
                       *, taps):
    # w_ref   : (27, co_blk, Cin_p) bf16  tap-major weights (resident)
    # x_ref   : (Cin_p, Lp)         bf16  one sample, zero-padded + flattened
    # mask_ref: (1, La)             f32   1.0 at valid output anchors, else 0.0
    # y_ref   : (co_blk, La)        f32   conv output (pre-BN) for this block
    # s1_ref  : (co_blk, 1)         f32   per-channel sum   (accumulated over n)
    # s2_ref  : (co_blk, 1)         f32   per-channel sumsq (accumulated over n)
    # acc_ref : (co_blk, La)        f32   VMEM accumulator scratch
    la = y_ref.shape[-1]

    acc_ref[...] = jnp.zeros_like(acc_ref)
    for t, off in enumerate(taps):
        # Static lane-offset slice of the padded volume: anchor a reads a + off.
        xs = x_ref[:, off:off + la]                       # (Cin_p, La) bf16
        acc_ref[...] += jnp.dot(w_ref[t], xs,
                                preferred_element_type=jnp.float32)

    acc = acc_ref[...]
    y_ref[...] = acc

    @pl.when(pl.program_id(1) == 0)
    def _init():
        s1_ref[...] = jnp.zeros_like(s1_ref)
        s2_ref[...] = jnp.zeros_like(s2_ref)

    masked = acc * mask_ref[...]                          # zero out invalid anchors
    s1_ref[...] += jnp.sum(masked, axis=1, keepdims=True)
    s2_ref[...] += jnp.sum(masked * acc, axis=1, keepdims=True)


# ---------------------------------------------------------------------------
# Pass 2: fused BatchNorm affine (pre-folded scale/shift) + ReLU
# ---------------------------------------------------------------------------
def _bn_relu_kernel(scale_ref, shift_ref, y_ref, o_ref):
    # scale_ref/shift_ref: (co_blk, 1) f32 ; y_ref/o_ref: (co_blk, La) f32
    o_ref[...] = jnp.maximum(y_ref[...] * scale_ref[...] + shift_ref[...], 0.0)


# ---------------------------------------------------------------------------
# One Conv3d(k=3,p=1) + BatchNorm3d(train stats) + ReLU block
# ---------------------------------------------------------------------------
def conv_bn_relu_block(x, w, gamma, beta):
    # x: (N, Cin, D, H, W) f32 ; w: (Cout, Cin, 3, 3, 3) ; gamma/beta: (Cout,)
    N, Cin, D, H, W = x.shape
    Cout = w.shape[0]
    Dp, Hp, Wp = D + 2, H + 2, W + 2
    Lp = Dp * Hp * Wp
    o_max = 2 * Hp * Wp + 2 * Wp + 2          # largest tap offset (kd=kh=kw=2)
    La = Lp - o_max                           # number of anchors computed

    # Channel padding (layout friendliness) and Cout tiling.
    Cin_p = _round_up(Cin, 8)
    if Cout >= 128:
        co_blk = 128
        Co_p = _round_up(Cout, co_blk)
    else:
        Co_p = _round_up(Cout, 8)
        co_blk = Co_p
    n_co = Co_p // co_blk

    # ---- plain-JAX prep (cheap, ~1x activation traffic; no 27x blow-up) ----
    xp = jnp.pad(x, ((0, 0), (0, Cin_p - Cin), (1, 1), (1, 1), (1, 1)))
    x_flat = xp.reshape(N, Cin_p, Lp).astype(jnp.bfloat16)

    wp = jnp.pad(w, ((0, Co_p - Cout), (0, Cin_p - Cin), (0, 0), (0, 0), (0, 0)))
    w_t = jnp.transpose(wp, (2, 3, 4, 0, 1)).reshape(27, Co_p, Cin_p)
    w_t = w_t.astype(jnp.bfloat16)

    dd = (jnp.arange(Dp) < D).astype(jnp.float32)
    hh = (jnp.arange(Hp) < H).astype(jnp.float32)
    ww = (jnp.arange(Wp) < W).astype(jnp.float32)
    mask = (dd[:, None, None] * hh[None, :, None] * ww[None, None, :])
    mask = mask.reshape(1, Lp)[:, :La]

    taps = tuple(kd * Hp * Wp + kh * Wp + kw
                 for kd in range(3) for kh in range(3) for kw in range(3))

    # ---- pass 1: conv + BN partial stats -----------------------------------
    y_conv, s1, s2 = pl.pallas_call(
        functools.partial(_conv_stats_kernel, taps=taps),
        out_shape=(
            jax.ShapeDtypeStruct((N, Co_p, La), jnp.float32),
            jax.ShapeDtypeStruct((Co_p, 1), jnp.float32),
            jax.ShapeDtypeStruct((Co_p, 1), jnp.float32),
        ),
        grid=(n_co, N),
        in_specs=[
            pl.BlockSpec((27, co_blk, Cin_p), lambda co, n: (0, co, 0)),
            pl.BlockSpec((None, Cin_p, Lp), lambda co, n: (n, 0, 0)),
            pl.BlockSpec((1, La), lambda co, n: (0, 0)),
        ],
        out_specs=(
            pl.BlockSpec((None, co_blk, La), lambda co, n: (n, co, 0)),
            pl.BlockSpec((co_blk, 1), lambda co, n: (co, 0)),
            pl.BlockSpec((co_blk, 1), lambda co, n: (co, 0)),
        ),
        scratch_shapes=[pltpu.VMEM((co_blk, La), jnp.float32)],
        compiler_params=pltpu.CompilerParams(
            dimension_semantics=("parallel", "arbitrary"),
            vmem_limit_bytes=32 * 1024 * 1024),   # within v7x's 64 MiB physical
    )(w_t, x_flat, mask)

    # ---- fold BN into a per-channel scale/shift (tiny, plain JAX) ----------
    count = float(N * D * H * W)
    mean = s1 / count                                    # (Co_p, 1)
    var = jnp.maximum(s2 / count - mean * mean, 0.0)     # biased (training-mode) var
    inv_std = lax.rsqrt(var + BN_EPS)
    gamma_p = jnp.pad(gamma, (0, Co_p - Cout)).reshape(Co_p, 1)
    beta_p = jnp.pad(beta, (0, Co_p - Cout)).reshape(Co_p, 1)
    scale = gamma_p * inv_std
    shift = beta_p - mean * scale

    # ---- pass 2: normalize + ReLU (elementwise, lane-dense blocks) ---------
    y_out = pl.pallas_call(
        _bn_relu_kernel,
        out_shape=jax.ShapeDtypeStruct((N, Co_p, La), jnp.float32),
        grid=(n_co, N),
        in_specs=[
            pl.BlockSpec((co_blk, 1), lambda co, n: (co, 0)),
            pl.BlockSpec((co_blk, 1), lambda co, n: (co, 0)),
            pl.BlockSpec((None, co_blk, La), lambda co, n: (n, co, 0)),
        ],
        out_specs=pl.BlockSpec((None, co_blk, La), lambda co, n: (n, co, 0)),
        compiler_params=pltpu.CompilerParams(
            dimension_semantics=("parallel", "parallel"),
            vmem_limit_bytes=32 * 1024 * 1024),
    )(scale, shift, y_conv)

    # ---- extract valid anchors back to NCDHW (no transposes needed) --------
    y_full = jnp.pad(y_out, ((0, 0), (0, 0), (0, Lp - La)))
    y_full = y_full.reshape(N, Co_p, Dp, Hp, Wp)
    return y_full[:, :Cout, :D, :H, :W]


def conv3x3_forward(x, params):
    (w1, _b1, g1, be1), (w2, _b2, g2, be2) = params
    # Conv biases are ignored: exactly cancelled by training-mode BN mean subtraction.
    y = conv_bn_relu_block(x, w1, g1, be1)
    y = conv_bn_relu_block(y, w2, g2, be2)
    return y


# ---------------------------------------------------------------------------
# Pure-JAX reference (conv inputs pre-rounded to bf16 to match the MXU operands;
# keeps the conv bias to demonstrate its exact cancellation by BN).
# ---------------------------------------------------------------------------
def _ref_block(x, w, b, gamma, beta):
    xb = x.astype(jnp.bfloat16).astype(jnp.float32)
    wb = w.astype(jnp.bfloat16).astype(jnp.float32)
    y = lax.conv_general_dilated(
        xb, wb, window_strides=(1, 1, 1),
        padding=((1, 1), (1, 1), (1, 1)),
        dimension_numbers=("NCDHW", "OIDHW", "NCDHW"))
    y = y + b.reshape(1, -1, 1, 1, 1)
    mean = jnp.mean(y, axis=(0, 2, 3, 4), keepdims=True)
    var = jnp.mean(jnp.square(y - mean), axis=(0, 2, 3, 4), keepdims=True)
    y = (y - mean) * lax.rsqrt(var + BN_EPS)
    y = y * gamma.reshape(1, -1, 1, 1, 1) + beta.reshape(1, -1, 1, 1, 1)
    return jnp.maximum(y, 0.0)


def _ref_forward(x, params):
    (w1, b1, g1, be1), (w2, b2, g2, be2) = params
    return _ref_block(_ref_block(x, w1, b1, g1, be1), w2, b2, g2, be2)


# ---------------------------------------------------------------------------
# Deterministic parameter init (nn.Conv3d / nn.BatchNorm3d shapes)
# ---------------------------------------------------------------------------
def init_params(key, in_feat, out_feat):
    k1, k2, k3, k4 = jax.random.split(key, 4)
    fan1 = in_feat * 27
    fan2 = out_feat * 27
    w1 = jax.random.uniform(k1, (out_feat, in_feat, 3, 3, 3), jnp.float32,
                            -1.0, 1.0) / jnp.sqrt(fan1)
    b1 = jax.random.uniform(k2, (out_feat,), jnp.float32, -1.0, 1.0) / jnp.sqrt(fan1)
    w2 = jax.random.uniform(k3, (out_feat, out_feat, 3, 3, 3), jnp.float32,
                            -1.0, 1.0) / jnp.sqrt(fan2)
    b2 = jax.random.uniform(k4, (out_feat,), jnp.float32, -1.0, 1.0) / jnp.sqrt(fan2)
    gamma = jnp.ones((out_feat,), jnp.float32)   # BatchNorm default init
    beta = jnp.zeros((out_feat,), jnp.float32)
    return (w1, b1, gamma, beta), (w2, b2, gamma, beta)


if __name__ == "__main__":
    key = jax.random.PRNGKey(0)
    kx, kp = jax.random.split(key)

    N, Cin, Cout, D, H, W = 2, 4, 8, 8, 8, 8
    x = jax.random.normal(kx, (N, Cin, D, H, W), jnp.float32)
    params = init_params(kp, Cin, Cout)

    out = jax.jit(conv3x3_forward)(x, params)
    out = jax.block_until_ready(out)

    ref = _ref_forward(x, params)
    assert out.shape == (N, Cout, D, H, W)
    assert jnp.allclose(out, ref, rtol=1e-2, atol=1e-2), "mismatch vs JAX reference"

    print("KERNEL_OK")
</pallas_src>

<mosaic_0001>
module attributes {stable_mosaic.version = 11 : i64} {
  func.func @_bn_relu_kernel(%arg0: i32, %arg1: i32, %arg2: memref<8x1xf32, #tpu.memory_space<vmem>>, %arg3: memref<8x1xf32, #tpu.memory_space<vmem>>, %arg4: memref<1x8x778xf32, #tpu.memory_space<vmem>>, %arg5: memref<1x8x778xf32, #tpu.memory_space<vmem>>) attributes {dimension_semantics = [#tpu.dimension_semantics<parallel>, #tpu.dimension_semantics<parallel>], iteration_bounds = array<i64: 1, 2>, scalar_prefetch = 0 : i64, scratch_operands = 0 : i64, tpu.core_type = #tpu.core_type<tc>, window_params = [{transform_indices = @transform_0, window_bounds = array<i64: 8, 1>}, {transform_indices = @transform_1, window_bounds = array<i64: 8, 1>}, {transform_indices = @transform_2, window_bounds = array<i64: 1, 8, 778>}, {transform_indices = @transform_3, window_bounds = array<i64: 1, 8, 778>}]} {
    %c0 = arith.constant 0 : index
    %c0_0 = arith.constant 0 : index
    %c0_1 = arith.constant 0 : index
    %0 = vector.load %arg4[%c0, %c0_0, %c0_1] : memref<1x8x778xf32, #tpu.memory_space<vmem>>, vector<1x8x778xf32>
    %1 = vector.shape_cast %0 : vector<1x8x778xf32> to vector<8x778xf32>
    %c0_2 = arith.constant 0 : index
    %c0_3 = arith.constant 0 : index
    %2 = vector.load %arg2[%c0_2, %c0_3] : memref<8x1xf32, #tpu.memory_space<vmem>>, vector<8x1xf32>
    %3 = vector.broadcast %2 : vector<8x1xf32> to vector<8x778xf32>
    %4 = arith.mulf %1, %3 : vector<8x778xf32>
    %c0_4 = arith.constant 0 : index
    %c0_5 = arith.constant 0 : index
    %5 = vector.load %arg3[%c0_4, %c0_5] : memref<8x1xf32, #tpu.memory_space<vmem>>, vector<8x1xf32>
    %6 = vector.broadcast %5 : vector<8x1xf32> to vector<8x778xf32>
    %7 = arith.addf %4, %6 : vector<8x778xf32>
    %cst = arith.constant 0.000000e+00 : f32
    %8 = vector.broadcast %cst : f32 to vector<8x778xf32>
    %9 = arith.maximumf %7, %8 : vector<8x778xf32>
    %c0_6 = arith.constant 0 : index
    %c0_7 = arith.constant 0 : index
    %c0_8 = arith.constant 0 : index
    %10 = vector.load %arg5[%c0_6, %c0_7, %c0_8] : memref<1x8x778xf32, #tpu.memory_space<vmem>>, vector<1x8x778xf32>
    %11 = vector.shape_cast %10 : vector<1x8x778xf32> to vector<8x778xf32>
    %12 = vector.shape_cast %9 : vector<8x778xf32> to vector<1x8x778xf32>
    tpu.vector_store %arg5[%c0_6, %c0_7, %c0_8], %12 {strides = array<i32>} : memref<1x8x778xf32, #tpu.memory_space<vmem>>, vector<1x8x778xf32>,
    return
  }
  func.func @transform_0(%arg0: i32, %arg1: i32) -> (i32, i32) {
    %c0_i32 = arith.constant 0 : i32
    %c0_i32_0 = arith.constant 0 : i32
    return %arg0, %c0_i32 : i32, i32
  }
  func.func @transform_1(%arg0: i32, %arg1: i32) -> (i32, i32) {
    %c0_i32 = arith.constant 0 : i32
    %c0_i32_0 = arith.constant 0 : i32
    return %arg0, %c0_i32 : i32, i32
  }
  func.func @transform_2(%arg0: i32, %arg1: i32) -> (i32, i32, i32) {
    %c0_i32 = arith.constant 0 : i32
    %c0_i32_0 = arith.constant 0 : i32
    return %arg1, %arg0, %c0_i32 : i32, i32, i32
  }
  func.func @transform_3(%arg0: i32, %arg1: i32) -> (i32, i32, i32) {
    %c0_i32 = arith.constant 0 : i32
    %c0_i32_0 = arith.constant 0 : i32
    return %arg1, %arg0, %c0_i32 : i32, i32, i32
  }
}

module attributes {stable_mosaic.version = 11 : i64} {
  func.func @_conv_stats_kernel(%arg0: i32, %arg1: i32, %arg2: memref<27x8x8xbf16, #tpu.memory_space<vmem>>, %arg3: memref<1x8x1000xbf16, #tpu.memory_space<vmem>>, %arg4: memref<1x778xf32, #tpu.memory_space<vmem>>, %arg5: memref<1x8x778xf32, #tpu.memory_space<vmem>>, %arg6: memref<8x1xf32, #tpu.memory_space<vmem>>, %arg7: memref<8x1xf32, #tpu.memory_space<vmem>>, %arg8: memref<8x778xf32, #tpu.memory_space<vmem>>) attributes {dimension_semantics = [#tpu.dimension_semantics<parallel>, #tpu.dimension_semantics<arbitrary>], iteration_bounds = array<i64: 1, 2>, scalar_prefetch = 0 : i64, scratch_operands = 1 : i64, tpu.core_type = #tpu.core_type<tc>, window_params = [{transform_indices = @transform_0, window_bounds = array<i64: 27, 8, 8>}, {transform_indices = @transform_1, window_bounds = array<i64: 1, 8, 1000>}, {pipeline_mode = #tpu.pipeline_mode<synchronous>, transform_indices = @transform_2, window_bounds = array<i64: 1, 778>}, {transform_indices = @transform_3, window_bounds = array<i64: 1, 8, 778>}, {transform_indices = @transform_4, window_bounds = array<i64: 8, 1>}, {transform_indices = @transform_5, window_bounds = array<i64: 8, 1>}]} {
    %cst = arith.constant 0.000000e+00 : f32
    %0 = vector.broadcast %cst : f32 to vector<8x778xf32>
    %c0 = arith.constant 0 : index
    %c0_0 = arith.constant 0 : index
    %1 = vector.load %arg8[%c0, %c0_0] : memref<8x778xf32, #tpu.memory_space<vmem>>, vector<8x778xf32>
    tpu.vector_store %arg8[%c0, %c0_0], %0 {strides = array<i32>} : memref<8x778xf32, #tpu.memory_space<vmem>>, vector<8x778xf32>,
    %c0_1 = arith.constant 0 : index
    %c0_2 = arith.constant 0 : index
    %c0_3 = arith.constant 0 : index
    %2 = vector.load %arg3[%c0_1, %c0_2, %c0_3] : memref<1x8x1000xbf16, #tpu.memory_space<vmem>>, vector<1x8x778xbf16>
    %3 = vector.shape_cast %2 : vector<1x8x778xbf16> to vector<8x778xbf16>
    %c0_4 = arith.constant 0 : index
    %c0_5 = arith.constant 0 : index
    %4 = vector.load %arg8[%c0_4, %c0_5] : memref<8x778xf32, #tpu.memory_space<vmem>>, vector<8x778xf32>
    %c0_6 = arith.constant 0 : index
    %c0_7 = arith.constant 0 : index
    %c0_8 = arith.constant 0 : index
    %5 = vector.load %arg2[%c0_6, %c0_7, %c0_8] : memref<27x8x8xbf16, #tpu.memory_space<vmem>>, vector<1x8x8xbf16>
    %6 = vector.shape_cast %5 : vector<1x8x8xbf16> to vector<8x8xbf16>
    %cst_9 = arith.constant dense<0.000000e+00> : vector<8x778xf32>
    %7 = tpu.matmul %6, %3, %cst_9 {dimension_numbers = #tpu.dot_dimension_numbers<[1], [0], [0], [1], [0, 0, 1, 1], [], []>} : vector<8x8xbf16>, vector<8x778xbf16>, vector<8x778xf32> -> vector<8x778xf32>
    %8 = arith.addf %4, %7 : vector<8x778xf32>
    %c0_10 = arith.constant 0 : index
    %c0_11 = arith.constant 0 : index
    %9 = vector.load %arg8[%c0_10, %c0_11] : memref<8x778xf32, #tpu.memory_space<vmem>>, vector<8x778xf32>
    tpu.vector_store %arg8[%c0_10, %c0_11], %8 {strides = array<i32>} : memref<8x778xf32, #tpu.memory_space<vmem>>, vector<8x778xf32>,
    %c0_12 = arith.constant 0 : index
    %c0_13 = arith.constant 0 : index
    %c1 = arith.constant 1 : index
    %10 = vector.load %arg3[%c0_12, %c0_13, %c1] : memref<1x8x1000xbf16, #tpu.memory_space<vmem>>, vector<1x8x778xbf16>
    %11 = vector.shape_cast %10 : vector<1x8x778xbf16> to vector<8x778xbf16>
    %c0_14 = arith.constant 0 : index
    %c0_15 = arith.constant 0 : index
    %12 = vector.load %arg8[%c0_14, %c0_15] : memref<8x778xf32, #tpu.memory_space<vmem>>, vector<8x778xf32>
    %c1_16 = arith.constant 1 : index
    %c0_17 = arith.constant 0 : index
    %c0_18 = arith.constant 0 : index
    %13 = vector.load %arg2[%c1_16, %c0_17, %c0_18] : memref<27x8x8xbf16, #tpu.memory_space<vmem>>, vector<1x8x8xbf16>
    %14 = vector.shape_cast %13 : vector<1x8x8xbf16> to vector<8x8xbf16>
    %cst_19 = arith.constant dense<0.000000e+00> : vector<8x778xf32>
    %15 = tpu.matmul %14, %11, %cst_19 {dimension_numbers = #tpu.dot_dimension_numbers<[1], [0], [0], [1], [0, 0, 1, 1], [], []>} : vector<8x8xbf16>, vector<8x778xbf16>, vector<8x778xf32> -> vector<8x778xf32>
    %16 = arith.addf %12, %15 : vector<8x778xf32>
    %c0_20 = arith.constant 0 : index
    %c0_21 = arith.constant 0 : index
    %17 = vector.load %arg8[%c0_20, %c0_21] : memref<8x778xf32, #tpu.memory_space<vmem>>, vector<8x778xf32>
    tpu.vector_store %arg8[%c0_20, %c0_21], %16 {strides = array<i32>} : memref<8x778xf32, #tpu.memory_space<vmem>>, vector<8x778xf32>,
    %c0_22 = arith.constant 0 : index
    %c0_23 = arith.constant 0 : index
    %c2 = arith.constant 2 : index
    %18 = vector.load %arg3[%c0_22, %c0_23, %c2] : memref<1x8x1000xbf16, #tpu.memory_space<vmem>>, vector<1x8x778xbf16>
    %19 = vector.shape_cast %18 : vector<1x8x778xbf16> to vector<8x778xbf16>
    %c0_24 = arith.constant 0 : index
    %c0_25 = arith.constant 0 : index
    %20 = vector.load %arg8[%c0_24, %c0_25] : memref<8x778xf32, #tpu.memory_space<vmem>>, vector<8x778xf32>
    %c2_26 = arith.constant 2 : index
    %c0_27 = arith.constant 0 : index
    %c0_28 = arith.constant 0 : index
    %21 = vector.load %arg2[%c2_26, %c0_27, %c0_28] : memref<27x8x8xbf16, #tpu.memory_space<vmem>>, vector<1x8x8xbf16>
    %22 = vector.shape_cast %21 : vector<1x8x8xbf16> to vector<8x8xbf16>
    %cst_29 = arith.constant dense<0.000000e+00> : vector<8x778xf32>
    %23 = tpu.matmul %22, %19, %cst_29 {dimension_numbers = #tpu.dot_dimension_numbers<[1], [0], [0], [1], [0, 0, 1, 1], [], []>} : vector<8x8xbf16>, vector<8x778xbf16>, vector<8x778xf32> -> vector<8x778xf32>
    %24 = arith.addf %20, %23 : vector<8x778xf32>
    %c0_30 = arith.constant 0 : index
    %c0_31 = arith.constant 0 : index
    %25 = vector.load %arg8[%c0_30, %c0_31] : memref<8x778xf32, #tpu.memory_space<vmem>>, vector<8x778xf32>
    tpu.vector_store %arg8[%c0_30, %c0_31], %24 {strides = array<i32>} : memref<8x778xf32, #tpu.memory_space<vmem>>, vector<8x778xf32>,
    %c0_32 = arith.constant 0 : index
    %c0_33 = arith.constant 0 : index
    %c10 = arith.constant 10 : index
    %26 = vector.load %arg3[%c0_32, %c0_33, %c10] : memref<1x8x1000xbf16, #tpu.memory_space<vmem>>, vector<1x8x778xbf16>
    %27 = vector.shape_cast %26 : vector<1x8x778xbf16> to vector<8x778xbf16>
    %c0_34 = arith.constant 0 : index
    %c0_35 = arith.constant 0 : index
    %28 = vector.load %arg8[%c0_34, %c0_35] : memref<8x778xf32, #tpu.memory_space<vmem>>, vector<8x778xf32>
    %c3 = arith.constant 3 : index
    %c0_36 = arith.constant 0 : index
    %c0_37 = arith.constant 0 : index
    %29 = vector.load %arg2[%c3, %c0_36, %c0_37] : memref<27x8x8xbf16, #tpu.memory_space<vmem>>, vector<1x8x8xbf16>
    %30 = vector.shape_cast %29 : vector<1x8x8xbf16> to vector<8x8xbf16>
    %cst_38 = arith.constant dense<0.000000e+00> : vector<8x778xf32>
    %31 = tpu.matmul %30, %27, %cst_38 {dimension_numbers = #tpu.dot_dimension_numbers<[1], [0], [0], [1], [0, 0, 1, 1], [], []>} : vector<8x8xbf16>, vector<8x778xbf16>, vector<8x778xf32> -> vector<8x778xf32>
    %32 = arith.addf %28, %31 : vector<8x778xf32>
    %c0_39 = arith.constant 0 : index
    %c0_40 = arith.constant 0 : index
    %33 = vector.load %arg8[%c0_39, %c0_40] : memref<8x778xf32, #tpu.memory_space<vmem>>, vector<8x778xf32>
    tpu.vector_store %arg8[%c0_39, %c0_40], %32 {strides = array<i32>} : memref<8x778xf32, #tpu.memory_space<vmem>>, vector<8x778xf32>,
    %c0_41 = arith.constant 0 : index
    %c0_42 = arith.constant 0 : index
    %c11 = arith.constant 11 : index
    %34 = vector.load %arg3[%c0_41, %c0_42, %c11] : memref<1x8x1000xbf16, #tpu.memory_space<vmem>>, vector<1x8x778xbf16>
    %35 = vector.shape_cast %34 : vector<1x8x778xbf16> to vector<8x778xbf16>
    %c0_43 = arith.constant 0 : index
    %c0_44 = arith.constant 0 : index
    %36 = vector.load %arg8[%c0_43, %c0_44] : memref<8x778xf32, #tpu.memory_space<vmem>>, vector<8x778xf32>
    %c4 = arith.constant 4 : index
    %c0_45 = arith.constant 0 : index
    %c0_46 = arith.constant 0 : index
    %37 = vector.load %arg2[%c4, %c0_45, %c0_46] : memref<27x8x8xbf16, #tpu.memory_space<vmem>>, vector<1x8x8xbf16>
    %38 = vector.shape_cast %37 : vector<1x8x8xbf16> to vector<8x8xbf16>
    %cst_47 = arith.constant dense<0.000000e+00> : vector<8x778xf32>
    %39 = tpu.matmul %38, %35, %cst_47 {dimension_numbers = #tpu.dot_dimension_numbers<[1], [0], [0], [1], [0, 0, 1, 1], [], []>} : vector<8x8xbf16>, vector<8x778xbf16>, vector<8x778xf32> -> vector<8x778xf32>
    %40 = arith.addf %36, %39 : vector<8x778xf32>
    %c0_48 = arith.constant 0 : index
    %c0_49 = arith.constant 0 : index
    %41 = vector.load %arg8[%c0_48, %c0_49] : memref<8x778xf32, #tpu.memory_space<vmem>>, vector<8x778xf32>
    tpu.vector_store %arg8[%c0_48, %c0_49], %40 {strides = array<i32>} : memref<8x778xf32, #tpu.memory_space<vmem>>, vector<8x778xf32>,
    %c0_50 = arith.constant 0 : index
    %c0_51 = arith.constant 0 : index
    %c12 = arith.constant 12 : index
    %42 = vector.load %arg3[%c0_50, %c0_51, %c12] : memref<1x8x1000xbf16, #tpu.memory_space<vmem>>, vector<1x8x778xbf16>
    %43 = vector.shape_cast %42 : vector<1x8x778xbf16> to vector<8x778xbf16>
    %c0_52 = arith.constant 0 : index
    %c0_53 = arith.constant 0 : index
    %44 = vector.load %arg8[%c0_52, %c0_53] : memref<8x778xf32, #tpu.memory_space<vmem>>, vector<8x778xf32>
    %c5 = arith.constant 5 : index
    %c0_54 = arith.constant 0 : index
    %c0_55 = arith.constant 0 : index
    %45 = vector.load %arg2[%c5, %c0_54, %c0_55] : memref<27x8x8xbf16, #tpu.memory_space<vmem>>, vector<1x8x8xbf16>
    %46 = vector.shape_cast %45 : vector<1x8x8xbf16> to vector<8x8xbf16>
    %cst_56 = arith.constant dense<0.000000e+00> : vector<8x778xf32>
    %47 = tpu.matmul %46, %43, %cst_56 {dimension_numbers = #tpu.dot_dimension_numbers<[1], [0], [0], [1], [0, 0, 1, 1], [], []>} : vector<8x8xbf16>, vector<8x778xbf16>, vector<8x778xf32> -> vector<8x778xf32>
    %48 = arith.addf %44, %47 : vector<8x778xf32>
    %c0_57 = arith.constant 0 : index
    %c0_58 = arith.constant 0 : index
    %49 = vector.load %arg8[%c0_57, %c0_58] : memref<8x778xf32, #tpu.memory_space<vmem>>, vector<8x778xf32>
    tpu.vector_store %arg8[%c0_57, %c0_58], %48 {strides = array<i32>} : memref<8x778xf32, #tpu.memory_space<vmem>>, vector<8x778xf32>,
    %c0_59 = arith.constant 0 : index
    %c0_60 = arith.constant 0 : index
    %c20 = arith.constant 20 : index
    %50 = vector.load %arg3[%c0_59, %c0_60, %c20] : memref<1x8x1000xbf16, #tpu.memory_space<vmem>>, vector<1x8x778xbf16>
    %51 = vector.shape_cast %50 : vector<1x8x778xbf16> to vector<8x778xbf16>
    %c0_61 = arith.constant 0 : index
    %c0_62 = arith.constant 0 : index
    %52 = vector.load %arg8[%c0_61, %c0_62] : memref<8x778xf32, #tpu.memory_space<vmem>>, vector<8x778xf32>
    %c6 = arith.constant 6 : index
    %c0_63 = arith.constant 0 : index
    %c0_64 = arith.constant 0 : index
    %53 = vector.load %arg2[%c6, %c0_63, %c0_64] : memref<27x8x8xbf16, #tpu.memory_space<vmem>>, vector<1x8x8xbf16>
    %54 = vector.shape_cast %53 : vector<1x8x8xbf16> to vector<8x8xbf16>
    %cst_65 = arith.constant dense<0.000000e+00> : vector<8x778xf32>
    %55 = tpu.matmul %54, %51, %cst_65 {dimension_numbers = #tpu.dot_dimension_numbers<[1], [0], [0], [1], [0, 0, 1, 1], [], []>} : vector<8x8xbf16>, vector<8x778xbf16>, vector<8x778xf32> -> vector<8x778xf32>
    %56 = arith.addf %52, %55 : vector<8x778xf32>
    %c0_66 = arith.constant 0 : index
    %c0_67 = arith.constant 0 : index
    %57 = vector.load %arg8[%c0_66, %c0_67] : memref<8x778xf32, #tpu.memory_space<vmem>>, vector<8x778xf32>
    tpu.vector_store %arg8[%c0_66, %c0_67], %56 {strides = array<i32>} : memref<8x778xf32, #tpu.memory_space<vmem>>, vector<8x778xf32>,
    %c0_68 = arith.constant 0 : index
    %c0_69 = arith.constant 0 : index
    %c21 = arith.constant 21 : index
    %58 = vector.load %arg3[%c0_68, %c0_69, %c21] : memref<1x8x1000xbf16, #tpu.memory_space<vmem>>, vector<1x8x778xbf16>
    %59 = vector.shape_cast %58 : vector<1x8x778xbf16> to vector<8x778xbf16>
    %c0_70 = arith.constant 0 : index
    %c0_71 = arith.constant 0 : index
    %60 = vector.load %arg8[%c0_70, %c0_71] : memref<8x778xf32, #tpu.memory_space<vmem>>, vector<8x778xf32>
    %c7 = arith.constant 7 : index
    %c0_72 = arith.constant 0 : index
    %c0_73 = arith.constant 0 : index
    %61 = vector.load %arg2[%c7, %c0_72, %c0_73] : memref<27x8x8xbf16, #tpu.memory_space<vmem>>, vector<1x8x8xbf16>
    %62 = vector.shape_cast %61 : vector<1x8x8xbf16> to vector<8x8xbf16>
    %cst_74 = arith.constant dense<0.000000e+00> : vector<8x778xf32>
    %63 = tpu.matmul %62, %59, %cst_74 {dimension_numbers = #tpu.dot_dimension_numbers<[1], [0], [0], [1], [0, 0, 1, 1], [], []>} : vector<8x8xbf16>, vector<8x778xbf16>, vector<8x778xf32> -> vector<8x778xf32>
    %64 = arith.addf %60, %63 : vector<8x778xf32>
    %c0_75 = arith.constant 0 : index
    %c0_76 = arith.constant 0 : index
    %65 = vector.load %arg8[%c0_75, %c0_76] : memref<8x778xf32, #tpu.memory_space<vmem>>, vector<8x778xf32>
    tpu.vector_store %arg8[%c0_75, %c0_76], %64 {strides = array<i32>} : memref<8x778xf32, #tpu.memory_space<vmem>>, vector<8x778xf32>,
    %c0_77 = arith.constant 0 : index
    %c0_78 = arith.constant 0 : index
    %c22 = arith.constant 22 : index
    %66 = vector.load %arg3[%c0_77, %c0_78, %c22] : memref<1x8x1000xbf16, #tpu.memory_space<vmem>>, vector<1x8x778xbf16>
    %67 = vector.shape_cast %66 : vector<1x8x778xbf16> to vector<8x778xbf16>
    %c0_79 = arith.constant 0 : index
    %c0_80 = arith.constant 0 : index
    %68 = vector.load %arg8[%c0_79, %c0_80] : memref<8x778xf32, #tpu.memory_space<vmem>>, vector<8x778xf32>
    %c8 = arith.constant 8 : index
    %c0_81 = arith.constant 0 : index
    %c0_82 = arith.constant 0 : index
    %69 = vector.load %arg2[%c8, %c0_81, %c0_82] : memref<27x8x8xbf16, #tpu.memory_space<vmem>>, vector<1x8x8xbf16>
    %70 = vector.shape_cast %69 : vector<1x8x8xbf16> to vector<8x8xbf16>
    %cst_83 = arith.constant dense<0.000000e+00> : vector<8x778xf32>
    %71 = tpu.matmul %70, %67, %cst_83 {dimension_numbers = #tpu.dot_dimension_numbers<[1], [0], [0], [1], [0, 0, 1, 1], [], []>} : vector<8x8xbf16>, vector<8x778xbf16>, vector<8x778xf32> -> vector<8x778xf32>
    %72 = arith.addf %68, %71 : vector<8x778xf32>
    %c0_84 = arith.constant 0 : index
    %c0_85 = arith.constant 0 : index
    %73 = vector.load %arg8[%c0_84, %c0_85] : memref<8x778xf32, #tpu.memory_space<vmem>>, vector<8x778xf32>
    tpu.vector_store %arg8[%c0_84, %c0_85], %72 {strides = array<i32>} : memref<8x778xf32, #tpu.memory_space<vmem>>, vector<8x778xf32>,
    %c0_86 = arith.constant 0 : index
    %c0_87 = arith.constant 0 : index
    %c100 = arith.constant 100 : index
    %74 = vector.load %arg3[%c0_86, %c0_87, %c100] : memref<1x8x1000xbf16, #tpu.memory_space<vmem>>, vector<1x8x778xbf16>
    %75 = vector.shape_cast %74 : vector<1x8x778xbf16> to vector<8x778xbf16>
    %c0_88 = arith.constant 0 : index
    %c0_89 = arith.constant 0 : index
    %76 = vector.load %arg8[%c0_88, %c0_89] : memref<8x778xf32, #tpu.memory_space<vmem>>, vector<8x778xf32>
    %c9 = arith.constant 9 : index
    %c0_90 = arith.constant 0 : index
    %c0_91 = arith.constant 0 : index
    %77 = vector.load %arg2[%c9, %c0_90, %c0_91] : memref<27x8x8xbf16, #tpu.memory_space<vmem>>, vector<1x8x8xbf16>
    %78 = vector.shape_cast %77 : vector<1x8x8xbf16> to vector<8x8xbf16>
    %cst_92 = arith.constant dense<0.000000e+00> : vector<8x778xf32>
    %79 = tpu.matmul %78, %75, %cst_92 {dimension_numbers = #tpu.dot_dimension_numbers<[1], [0], [0], [1], [0, 0, 1, 1], [], []>} : vector<8x8xbf16>, vector<8x778xbf16>, vector<8x778xf32> -> vector<8x778xf32>
    %80 = arith.addf %76, %79 : vector<8x778xf32>
    %c0_93 = arith.constant 0 : index
    %c0_94 = arith.constant 0 : index
    %81 = vector.load %arg8[%c0_93, %c0_94] : memref<8x778xf32, #tpu.memory_space<vmem>>, vector<8x778xf32>
    tpu.vector_store %arg8[%c0_93, %c0_94], %80 {strides = array<i32>} : memref<8x778xf32, #tpu.memory_space<vmem>>, vector<8x778xf32>,
    %c0_95 = arith.constant 0 : index
    %c0_96 = arith.constant 0 : index
    %c101 = arith.constant 101 : index
    %82 = vector.load %arg3[%c0_95, %c0_96, %c101] : memref<1x8x1000xbf16, #tpu.memory_space<vmem>>, vector<1x8x778xbf16>
    %83 = vector.shape_cast %82 : vector<1x8x778xbf16> to vector<8x778xbf16>
    %c0_97 = arith.constant 0 : index
    %c0_98 = arith.constant 0 : index
    %84 = vector.load %arg8[%c0_97, %c0_98] : memref<8x778xf32, #tpu.memory_space<vmem>>, vector<8x778xf32>
    %c10_99 = arith.constant 10 : index
    %c0_100 = arith.constant 0 : index
    %c0_101 = arith.constant 0 : index
    %85 = vector.load %arg2[%c10_99, %c0_100, %c0_101] : memref<27x8x8xbf16, #tpu.memory_space<vmem>>, vector<1x8x8xbf16>
    %86 = vector.shape_cast %85 : vector<1x8x8xbf16> to vector<8x8xbf16>
    %cst_102 = arith.constant dense<0.000000e+00> : vector<8x778xf32>
    %87 = tpu.matmul %86, %83, %cst_102 {dimension_numbers = #tpu.dot_dimension_numbers<[1], [0], [0], [1], [0, 0, 1, 1], [], []>} : vector<8x8xbf16>, vector<8x778xbf16>, vector<8x778xf32> -> vector<8x778xf32>
    %88 = arith.addf %84, %87 : vector<8x778xf32>
    %c0_103 = arith.constant 0 : index
    %c0_104 = arith.constant 0 : index
    %89 = vector.load %arg8[%c0_103, %c0_104] : memref<8x778xf32, #tpu.memory_space<vmem>>, vector<8x778xf32>
    tpu.vector_store %arg8[%c0_103, %c0_104], %88 {strides = array<i32>} : memref<8x778xf32, #tpu.memory_space<vmem>>, vector<8x778xf32>,
    %c0_105 = arith.constant 0 : index
    %c0_106 = arith.constant 0 : index
    %c102 = arith.constant 102 : index
    %90 = vector.load %arg3[%c0_105, %c0_106, %c102] : memref<1x8x1000xbf16, #tpu.memory_space<vmem>>, vector<1x8x778xbf16>
    %91 = vector.shape_cast %90 : vector<1x8x778xbf16> to vector<8x778xbf16>
    %c0_107 = arith.constant 0 : index
    %c0_108 = arith.constant 0 : index
    %92 = vector.load %arg8[%c0_107, %c0_108] : memref<8x778xf32, #tpu.memory_space<vmem>>, vector<8x778xf32>
    %c11_109 = arith.constant 11 : index
    %c0_110 = arith.constant 0 : index
    %c0_111 = arith.constant 0 : index
    %93 = vector.load %arg2[%c11_109, %c0_110, %c0_111] : memref<27x8x8xbf16, #tpu.memory_space<vmem>>, vector<1x8x8xbf16>
    %94 = vector.shape_cast %93 : vector<1x8x8xbf16> to vector<8x8xbf16>
    %cst_112 = arith.constant dense<0.000000e+00> : vector<8x778xf32>
    %95 = tpu.matmul %94, %91, %cst_112 {dimension_numbers = #tpu.dot_dimension_numbers<[1], [0], [0], [1], [0, 0, 1, 1], [], []>} : vector<8x8xbf16>, vector<8x778xbf16>, vector<8x778xf32> -> vector<8x778xf32>
    %96 = arith.addf %92, %95 : vector<8x778xf32>
    %c0_113 = arith.constant 0 : index
    %c0_114 = arith.constant 0 : index
    %97 = vector.load %arg8[%c0_113, %c0_114] : memref<8x778xf32, #tpu.memory_space<vmem>>, vector<8x778xf32>
    tpu.vector_store %arg8[%c0_113, %c0_114], %96 {strides = array<i32>} : memref<8x778xf32, #tpu.memory_space<vmem>>, vector<8x778xf32>,
    %c0_115 = arith.constant 0 : index
    %c0_116 = arith.constant 0 : index
    %c110 = arith.constant 110 : index
    %98 = vector.load %arg3[%c0_115, %c0_116, %c110] : memref<1x8x1000xbf16, #tpu.memory_space<vmem>>, vector<1x8x778xbf16>
    %99 = vector.shape_cast %98 : vector<1x8x778xbf16> to vector<8x778xbf16>
    %c0_117 = arith.constant 0 : index
    %c0_118 = arith.constant 0 : index
    %100 = vector.load %arg8[%c0_117, %c0_118] : memref<8x778xf32, #tpu.memory_space<vmem>>, vector<8x778xf32>
    %c12_119 = arith.constant 12 : index
    %c0_120 = arith.constant 0 : index
    %c0_121 = arith.constant 0 : index
    %101 = vector.load %arg2[%c12_119, %c0_120, %c0_121] : memref<27x8x8xbf16, #tpu.memory_space<vmem>>, vector<1x8x8xbf16>
    %102 = vector.shape_cast %101 : vector<1x8x8xbf16> to vector<8x8xbf16>
    %cst_122 = arith.constant dense<0.000000e+00> : vector<8x778xf32>
    %103 = tpu.matmul %102, %99, %cst_122 {dimension_numbers = #tpu.dot_dimension_numbers<[1], [0], [0], [1], [0, 0, 1, 1], [], []>} : vector<8x8xbf16>, vector<8x778xbf16>, vector<8x778xf32> -> vector<8x778xf32>
    %104 = arith.addf %100, %103 : vector<8x778xf32>
    %c0_123 = arith.constant 0 : index
    %c0_124 = arith.constant 0 : index
    %105 = vector.load %arg8[%c0_123, %c0_124] : memref<8x778xf32, #tpu.memory_space<vmem>>, vector<8x778xf32>
    tpu.vector_store %arg8[%c0_123, %c0_124], %104 {strides = array<i32>} : memref<8x778xf32, #tpu.memory_space<vmem>>, vector<8x778xf32>,
    %c0_125 = arith.constant 0 : index
    %c0_126 = arith.constant 0 : index
    %c111 = arith.constant 111 : index
    %106 = vector.load %arg3[%c0_125, %c0_126, %c111] : memref<1x8x1000xbf16, #tpu.memory_space<vmem>>, vector<1x8x778xbf16>
    %107 = vector.shape_cast %106 : vector<1x8x778xbf16> to vector<8x778xbf16>
    %c0_127 = arith.constant 0 : index
    %c0_128 = arith.constant 0 : index
    %108 = vector.load %arg8[%c0_127, %c0_128] : memref<8x778xf32, #tpu.memory_space<vmem>>, vector<8x778xf32>
    %c13 = arith.constant 13 : index
    %c0_129 = arith.constant 0 : index
    %c0_130 = arith.constant 0 : index
    %109 = vector.load %arg2[%c13, %c0_129, %c0_130] : memref<27x8x8xbf16, #tpu.memory_space<vmem>>, vector<1x8x8xbf16>
    %110 = vector.shape_cast %109 : vector<1x8x8xbf16> to vector<8x8xbf16>
    %cst_131 = arith.constant dense<0.000000e+00> : vector<8x778xf32>
    %111 = tpu.matmul %110, %107, %cst_131 {dimension_numbers = #tpu.dot_dimension_numbers<[1], [0], [0], [1], [0, 0, 1, 1], [], []>} : vector<8x8xbf16>, vector<8x778xbf16>, vector<8x778xf32> -> vector<8x778xf32>
    %112 = arith.addf %108, %111 : vector<8x778xf32>
    %c0_132 = arith.constant 0 : index
    %c0_133 = arith.constant 0 : index
    %113 = vector.load %arg8[%c0_132, %c0_133] : memref<8x778xf32, #tpu.memory_space<vmem>>, vector<8x778xf32>
    tpu.vector_store %arg8[%c0_132, %c0_133], %112 {strides = array<i32>} : memref<8x778xf32, #tpu.memory_space<vmem>>, vector<8x778xf32>,
    %c0_134 = arith.constant 0 : index
    %c0_135 = arith.constant 0 : index
    %c112 = arith.constant 112 : index
    %114 = vector.load %arg3[%c0_134, %c0_135, %c112] : memref<1x8x1000xbf16, #tpu.memory_space<vmem>>, vector<1x8x778xbf16>
    %115 = vector.shape_cast %114 : vector<1x8x778xbf16> to vector<8x778xbf16>
    %c0_136 = arith.constant 0 : index
    %c0_137 = arith.constant 0 : index
    %116 = vector.load %arg8[%c0_136, %c0_137] : memref<8x778xf32, #tpu.memory_space<vmem>>, vector<8x778xf32>
    %c14 = arith.constant 14 : index
    %c0_138 = arith.constant 0 : index
    %c0_139 = arith.constant 0 : index
    %117 = vector.load %arg2[%c14, %c0_138, %c0_139] : memref<27x8x8xbf16, #tpu.memory_space<vmem>>, vector<1x8x8xbf16>
    %118 = vector.shape_cast %117 : vector<1x8x8xbf16> to vector<8x8xbf16>
    %cst_140 = arith.constant dense<0.000000e+00> : vector<8x778xf32>
    %119 = tpu.matmul %118, %115, %cst_140 {dimension_numbers = #tpu.dot_dimension_numbers<[1], [0], [0], [1], [0, 0, 1, 1], [], []>} : vector<8x8xbf16>, vector<8x778xbf16>, vector<8x778xf32> -> vector<8x778xf32>
    %120 = arith.addf %116, %119 : vector<8x778xf32>
    %c0_141 = arith.constant 0 : index
    %c0_142 = arith.constant 0 : index
    %121 = vector.load %arg8[%c0_141, %c0_142] : memref<8x778xf32, #tpu.memory_space<vmem>>, vector<8x778xf32>
    tpu.vector_store %arg8[%c0_141, %c0_142], %120 {strides = array<i32>} : memref<8x778xf32, #tpu.memory_space<vmem>>, vector<8x778xf32>,
    %c0_143 = arith.constant 0 : index
    %c0_144 = arith.constant 0 : index
    %c120 = arith.constant 120 : index
    %122 = vector.load %arg3[%c0_143, %c0_144, %c120] : memref<1x8x1000xbf16, #tpu.memory_space<vmem>>, vector<1x8x778xbf16>
    %123 = vector.shape_cast %122 : vector<1x8x778xbf16> to vector<8x778xbf16>
    %c0_145 = arith.constant 0 : index
    %c0_146 = arith.constant 0 : index
    %124 = vector.load %arg8[%c0_145, %c0_146] : memref<8x778xf32, #tpu.memory_space<vmem>>, vector<8x778xf32>
    %c15 = arith.constant 15 : index
    %c0_147 = arith.constant 0 : index
    %c0_148 = arith.constant 0 : index
    %125 = vector.load %arg2[%c15, %c0_147, %c0_148] : memref<27x8x8xbf16, #tpu.memory_space<vmem>>, vector<1x8x8xbf16>
    %126 = vector.shape_cast %125 : vector<1x8x8xbf16> to vector<8x8xbf16>
    %cst_149 = arith.constant dense<0.000000e+00> : vector<8x778xf32>
    %127 = tpu.matmul %126, %123, %cst_149 {dimension_numbers = #tpu.dot_dimension_numbers<[1], [0], [0], [1], [0, 0, 1, 1], [], []>} : vector<8x8xbf16>, vector<8x778xbf16>, vector<8x778xf32> -> vector<8x778xf32>
    %128 = arith.addf %124, %127 : vector<8x778xf32>
    %c0_150 = arith.constant 0 : index
    %c0_151 = arith.constant 0 : index
    %129 = vector.load %arg8[%c0_150, %c0_151] : memref<8x778xf32, #tpu.memory_space<vmem>>, vector<8x778xf32>
    tpu.vector_store %arg8[%c0_150, %c0_151], %128 {strides = array<i32>} : memref<8x778xf32, #tpu.memory_space<vmem>>, vector<8x778xf32>,
    %c0_152 = arith.constant 0 : index
    %c0_153 = arith.constant 0 : index
    %c121 = arith.constant 121 : index
    %130 = vector.load %arg3[%c0_152, %c0_153, %c121] : memref<1x8x1000xbf16, #tpu.memory_space<vmem>>, vector<1x8x778xbf16>
    %131 = vector.shape_cast %130 : vector<1x8x778xbf16> to vector<8x778xbf16>
    %c0_154 = arith.constant 0 : index
    %c0_155 = arith.constant 0 : index
    %132 = vector.load %arg8[%c0_154, %c0_155] : memref<8x778xf32, #tpu.memory_space<vmem>>, vector<8x778xf32>
    %c16 = arith.constant 16 : index
    %c0_156 = arith.constant 0 : index
    %c0_157 = arith.constant 0 : index
    %133 = vector.load %arg2[%c16, %c0_156, %c0_157] : memref<27x8x8xbf16, #tpu.memory_space<vmem>>, vector<1x8x8xbf16>
    %134 = vector.shape_cast %133 : vector<1x8x8xbf16> to vector<8x8xbf16>
    %cst_158 = arith.constant dense<0.000000e+00> : vector<8x778xf32>
    %135 = tpu.matmul %134, %131, %cst_158 {dimension_numbers = #tpu.dot_dimension_numbers<[1], [0], [0], [1], [0, 0, 1, 1], [], []>} : vector<8x8xbf16>, vector<8x778xbf16>, vector<8x778xf32> -> vector<8x778xf32>
    %136 = arith.addf %132, %135 : vector<8x778xf32>
    %c0_159 = arith.constant 0 : index
    %c0_160 = arith.constant 0 : index
    %137 = vector.load %arg8[%c0_159, %c0_160] : memref<8x778xf32, #tpu.memory_space<vmem>>, vector<8x778xf32>
    tpu.vector_store %arg8[%c0_159, %c0_160], %136 {strides = array<i32>} : memref<8x778xf32, #tpu.memory_space<vmem>>, vector<8x778xf32>,
    %c0_161 = arith.constant 0 : index
    %c0_162 = arith.constant 0 : index
    %c122 = arith.constant 122 : index
    %138 = vector.load %arg3[%c0_161, %c0_162, %c122] : memref<1x8x1000xbf16, #tpu.memory_space<vmem>>, vector<1x8x778xbf16>
    %139 = vector.shape_cast %138 : vector<1x8x778xbf16> to vector<8x778xbf16>
    %c0_163 = arith.constant 0 : index
    %c0_164 = arith.constant 0 : index
    %140 = vector.load %arg8[%c0_163, %c0_164] : memref<8x778xf32, #tpu.memory_space<vmem>>, vector<8x778xf32>
    %c17 = arith.constant 17 : index
    %c0_165 = arith.constant 0 : index
    %c0_166 = arith.constant 0 : index
    %141 = vector.load %arg2[%c17, %c0_165, %c0_166] : memref<27x8x8xbf16, #tpu.memory_space<vmem>>, vector<1x8x8xbf16>
    %142 = vector.shape_cast %141 : vector<1x8x8xbf16> to vector<8x8xbf16>
    %cst_167 = arith.constant dense<0.000000e+00> : vector<8x778xf32>
    %143 = tpu.matmul %142, %139, %cst_167 {dimension_numbers = #tpu.dot_dimension_numbers<[1], [0], [0], [1], [0, 0, 1, 1], [], []>} : vector<8x8xbf16>, vector<8x778xbf16>, vector<8x778xf32> -> vector<8x778xf32>
    %144 = arith.addf %140, %143 : vector<8x778xf32>
    %c0_168 = arith.constant 0 : index
    %c0_169 = arith.constant 0 : index
    %145 = vector.load %arg8[%c0_168, %c0_169] : memref<8x778xf32, #tpu.memory_space<vmem>>, vector<8x778xf32>
    tpu.vector_store %arg8[%c0_168, %c0_169], %144 {strides = array<i32>} : memref<8x778xf32, #tpu.memory_space<vmem>>, vector<8x778xf32>,
    %c0_170 = arith.constant 0 : index
    %c0_171 = arith.constant 0 : index
    %c200 = arith.constant 200 : index
    %146 = vector.load %arg3[%c0_170, %c0_171, %c200] : memref<1x8x1000xbf16, #tpu.memory_space<vmem>>, vector<1x8x778xbf16>
    %147 = vector.shape_cast %146 : vector<1x8x778xbf16> to vector<8x778xbf16>
    %c0_172 = arith.constant 0 : index
    %c0_173 = arith.constant 0 : index
    %148 = vector.load %arg8[%c0_172, %c0_173] : memref<8x778xf32, #tpu.memory_space<vmem>>, vector<8x778xf32>
    %c18 = arith.constant 18 : index
    %c0_174 = arith.constant 0 : index
    %c0_175 = arith.constant 0 : index
    %149 = vector.load %arg2[%c18, %c0_174, %c0_175] : memref<27x8x8xbf16, #tpu.memory_space<vmem>>, vector<1x8x8xbf16>
    %150 = vector.shape_cast %149 : vector<1x8x8xbf16> to vector<8x8xbf16>
    %cst_176 = arith.constant dense<0.000000e+00> : vector<8x778xf32>
    %151 = tpu.matmul %150, %147, %cst_176 {dimension_numbers = #tpu.dot_dimension_numbers<[1], [0], [0], [1], [0, 0, 1, 1], [], []>} : vector<8x8xbf16>, vector<8x778xbf16>, vector<8x778xf32> -> vector<8x778xf32>
    %152 = arith.addf %148, %151 : vector<8x778xf32>
    %c0_177 = arith.constant 0 : index
    %c0_178 = arith.constant 0 : index
    %153 = vector.load %arg8[%c0_177, %c0_178] : memref<8x778xf32, #tpu.memory_space<vmem>>, vector<8x778xf32>
    tpu.vector_store %arg8[%c0_177, %c0_178], %152 {strides = array<i32>} : memref<8x778xf32, #tpu.memory_space<vmem>>, vector<8x778xf32>,
    %c0_179 = arith.constant 0 : index
    %c0_180 = arith.constant 0 : index
    %c201 = arith.constant 201 : index
    %154 = vector.load %arg3[%c0_179, %c0_180, %c201] : memref<1x8x1000xbf16, #tpu.memory_space<vmem>>, vector<1x8x778xbf16>
    %155 = vector.shape_cast %154 : vector<1x8x778xbf16> to vector<8x778xbf16>
    %c0_181 = arith.constant 0 : index
    %c0_182 = arith.constant 0 : index
    %156 = vector.load %arg8[%c0_181, %c0_182] : memref<8x778xf32, #tpu.memory_space<vmem>>, vector<8x778xf32>
    %c19 = arith.constant 19 : index
    %c0_183 = arith.constant 0 : index
    %c0_184 = arith.constant 0 : index
    %157 = vector.load %arg2[%c19, %c0_183, %c0_184] : memref<27x8x8xbf16, #tpu.memory_space<vmem>>, vector<1x8x8xbf16>
    %158 = vector.shape_cast %157 : vector<1x8x8xbf16> to vector<8x8xbf16>
    %cst_185 = arith.constant dense<0.000000e+00> : vector<8x778xf32>
    %159 = tpu.matmul %158, %155, %cst_185 {dimension_numbers = #tpu.dot_dimension_numbers<[1], [0], [0], [1], [0, 0, 1, 1], [], []>} : vector<8x8xbf16>, vector<8x778xbf16>, vector<8x778xf32> -> vector<8x778xf32>
    %160 = arith.addf %156, %159 : vector<8x778xf32>
    %c0_186 = arith.constant 0 : index
    %c0_187 = arith.constant 0 : index
    %161 = vector.load %arg8[%c0_186, %c0_187] : memref<8x778xf32, #tpu.memory_space<vmem>>, vector<8x778xf32>
    tpu.vector_store %arg8[%c0_186, %c0_187], %160 {strides = array<i32>} : memref<8x778xf32, #tpu.memory_space<vmem>>, vector<8x778xf32>,
    %c0_188 = arith.constant 0 : index
    %c0_189 = arith.constant 0 : index
    %c202 = arith.constant 202 : index
    %162 = vector.load %arg3[%c0_188, %c0_189, %c202] : memref<1x8x1000xbf16, #tpu.memory_space<vmem>>, vector<1x8x778xbf16>
    %163 = vector.shape_cast %162 : vector<1x8x778xbf16> to vector<8x778xbf16>
    %c0_190 = arith.constant 0 : index
    %c0_191 = arith.constant 0 : index
    %164 = vector.load %arg8[%c0_190, %c0_191] : memref<8x778xf32, #tpu.memory_space<vmem>>, vector<8x778xf32>
    %c20_192 = arith.constant 20 : index
    %c0_193 = arith.constant 0 : index
    %c0_194 = arith.constant 0 : index
    %165 = vector.load %arg2[%c20_192, %c0_193, %c0_194] : memref<27x8x8xbf16, #tpu.memory_space<vmem>>, vector<1x8x8xbf16>
    %166 = vector.shape_cast %165 : vector<1x8x8xbf16> to vector<8x8xbf16>
    %cst_195 = arith.constant dense<0.000000e+00> : vector<8x778xf32>
    %167 = tpu.matmul %166, %163, %cst_195 {dimension_numbers = #tpu.dot_dimension_numbers<[1], [0], [0], [1], [0, 0, 1, 1], [], []>} : vector<8x8xbf16>, vector<8x778xbf16>, vector<8x778xf32> -> vector<8x778xf32>
    %168 = arith.addf %164, %167 : vector<8x778xf32>
    %c0_196 = arith.constant 0 : index
    %c0_197 = arith.constant 0 : index
    %169 = vector.load %arg8[%c0_196, %c0_197] : memref<8x778xf32, #tpu.memory_space<vmem>>, vector<8x778xf32>
    tpu.vector_store %arg8[%c0_196, %c0_197], %168 {strides = array<i32>} : memref<8x778xf32, #tpu.memory_space<vmem>>, vector<8x778xf32>,
    %c0_198 = arith.constant 0 : index
    %c0_199 = arith.constant 0 : index
    %c210 = arith.constant 210 : index
    %170 = vector.load %arg3[%c0_198, %c0_199, %c210] : memref<1x8x1000xbf16, #tpu.memory_space<vmem>>, vector<1x8x778xbf16>
    %171 = vector.shape_cast %170 : vector<1x8x778xbf16> to vector<8x778xbf16>
    %c0_200 = arith.constant 0 : index
    %c0_201 = arith.constant 0 : index
    %172 = vector.load %arg8[%c0_200, %c0_201] : memref<8x778xf32, #tpu.memory_space<vmem>>, vector<8x778xf32>
    %c21_202 = arith.constant 21 : index
    %c0_203 = arith.constant 0 : index
    %c0_204 = arith.constant 0 : index
    %173 = vector.load %arg2[%c21_202, %c0_203, %c0_204] : memref<27x8x8xbf16, #tpu.memory_space<vmem>>, vector<1x8x8xbf16>
    %174 = vector.shape_cast %173 : vector<1x8x8xbf16> to vector<8x8xbf16>
    %cst_205 = arith.constant dense<0.000000e+00> : vector<8x778xf32>
    %175 = tpu.matmul %174, %171, %cst_205 {dimension_numbers = #tpu.dot_dimension_numbers<[1], [0], [0], [1], [0, 0, 1, 1], [], []>} : vector<8x8xbf16>, vector<8x778xbf16>, vector<8x778xf32> -> vector<8x778xf32>
    %176 = arith.addf %172, %175 : vector<8x778xf32>
    %c0_206 = arith.constant 0 : index
    %c0_207 = arith.constant 0 : index
    %177 = vector.load %arg8[%c0_206, %c0_207] : memref<8x778xf32, #tpu.memory_space<vmem>>, vector<8x778xf32>
    tpu.vector_store %arg8[%c0_206, %c0_207], %176 {strides = array<i32>} : memref<8x778xf32, #tpu.memory_space<vmem>>, vector<8x778xf32>,
    %c0_208 = arith.constant 0 : index
    %c0_209 = arith.constant 0 : index
    %c211 = arith.constant 211 : index
    %178 = vector.load %arg3[%c0_208, %c0_209, %c211] : memref<1x8x1000xbf16, #tpu.memory_space<vmem>>, vector<1x8x778xbf16>
    %179 = vector.shape_cast %178 : vector<1x8x778xbf16> to vector<8x778xbf16>
    %c0_210 = arith.constant 0 : index
    %c0_211 = arith.constant 0 : index
    %180 = vector.load %arg8[%c0_210, %c0_211] : memref<8x778xf32, #tpu.memory_space<vmem>>, vector<8x778xf32>
    %c22_212 = arith.constant 22 : index
    %c0_213 = arith.constant 0 : index
    %c0_214 = arith.constant 0 : index
    %181 = vector.load %arg2[%c22_212, %c0_213, %c0_214] : memref<27x8x8xbf16, #tpu.memory_space<vmem>>, vector<1x8x8xbf16>
    %182 = vector.shape_cast %181 : vector<1x8x8xbf16> to vector<8x8xbf16>
    %cst_215 = arith.constant dense<0.000000e+00> : vector<8x778xf32>
    %183 = tpu.matmul %182, %179, %cst_215 {dimension_numbers = #tpu.dot_dimension_numbers<[1], [0], [0], [1], [0, 0, 1, 1], [], []>} : vector<8x8xbf16>, vector<8x778xbf16>, vector<8x778xf32> -> vector<8x778xf32>
    %184 = arith.addf %180, %183 : vector<8x778xf32>
    %c0_216 = arith.constant 0 : index
    %c0_217 = arith.constant 0 : index
    %185 = vector.load %arg8[%c0_216, %c0_217] : memref<8x778xf32, #tpu.memory_space<vmem>>, vector<8x778xf32>
    tpu.vector_store %arg8[%c0_216, %c0_217], %184 {strides = array<i32>} : memref<8x778xf32, #tpu.memory_space<vmem>>, vector<8x778xf32>,
    %c0_218 = arith.constant 0 : index
    %c0_219 = arith.constant 0 : index
    %c212 = arith.constant 212 : index
    %186 = vector.load %arg3[%c0_218, %c0_219, %c212] : memref<1x8x1000xbf16, #tpu.memory_space<vmem>>, vector<1x8x778xbf16>
    %187 = vector.shape_cast %186 : vector<1x8x778xbf16> to vector<8x778xbf16>
    %c0_220 = arith.constant 0 : index
    %c0_221 = arith.constant 0 : index
    %188 = vector.load %arg8[%c0_220, %c0_221] : memref<8x778xf32, #tpu.memory_space<vmem>>, vector<8x778xf32>
    %c23 = arith.constant 23 : index
    %c0_222 = arith.constant 0 : index
    %c0_223 = arith.constant 0 : index
    %189 = vector.load %arg2[%c23, %c0_222, %c0_223] : memref<27x8x8xbf16, #tpu.memory_space<vmem>>, vector<1x8x8xbf16>
    %190 = vector.shape_cast %189 : vector<1x8x8xbf16> to vector<8x8xbf16>
    %cst_224 = arith.constant dense<0.000000e+00> : vector<8x778xf32>
    %191 = tpu.matmul %190, %187, %cst_224 {dimension_numbers = #tpu.dot_dimension_numbers<[1], [0], [0], [1], [0, 0, 1, 1], [], []>} : vector<8x8xbf16>, vector<8x778xbf16>, vector<8x778xf32> -> vector<8x778xf32>
    %192 = arith.addf %188, %191 : vector<8x778xf32>
    %c0_225 = arith.constant 0 : index
    %c0_226 = arith.constant 0 : index
    %193 = vector.load %arg8[%c0_225, %c0_226] : memref<8x778xf32, #tpu.memory_space<vmem>>, vector<8x778xf32>
    tpu.vector_store %arg8[%c0_225, %c0_226], %192 {strides = array<i32>} : memref<8x778xf32, #tpu.memory_space<vmem>>, vector<8x778xf32>,
    %c0_227 = arith.constant 0 : index
    %c0_228 = arith.constant 0 : index
    %c220 = arith.constant 220 : index
    %194 = vector.load %arg3[%c0_227, %c0_228, %c220] : memref<1x8x1000xbf16, #tpu.memory_space<vmem>>, vector<1x8x778xbf16>
    %195 = vector.shape_cast %194 : vector<1x8x778xbf16> to vector<8x778xbf16>
    %c0_229 = arith.constant 0 : index
    %c0_230 = arith.constant 0 : index
    %196 = vector.load %arg8[%c0_229, %c0_230] : memref<8x778xf32, #tpu.memory_space<vmem>>, vector<8x778xf32>
    %c24 = arith.constant 24 : index
    %c0_231 = arith.constant 0 : index
    %c0_232 = arith.constant 0 : index
    %197 = vector.load %arg2[%c24, %c0_231, %c0_232] : memref<27x8x8xbf16, #tpu.memory_space<vmem>>, vector<1x8x8xbf16>
    %198 = vector.shape_cast %197 : vector<1x8x8xbf16> to vector<8x8xbf16>
    %cst_233 = arith.constant dense<0.000000e+00> : vector<8x778xf32>
    %199 = tpu.matmul %198, %195, %cst_233 {dimension_numbers = #tpu.dot_dimension_numbers<[1], [0], [0], [1], [0, 0, 1, 1], [], []>} : vector<8x8xbf16>, vector<8x778xbf16>, vector<8x778xf32> -> vector<8x778xf32>
    %200 = arith.addf %196, %199 : vector<8x778xf32>
    %c0_234 = arith.constant 0 : index
    %c0_235 = arith.constant 0 : index
    %201 = vector.load %arg8[%c0_234, %c0_235] : memref<8x778xf32, #tpu.memory_space<vmem>>, vector<8x778xf32>
    tpu.vector_store %arg8[%c0_234, %c0_235], %200 {strides = array<i32>} : memref<8x778xf32, #tpu.memory_space<vmem>>, vector<8x778xf32>,
    %c0_236 = arith.constant 0 : index
    %c0_237 = arith.constant 0 : index
    %c221 = arith.constant 221 : index
    %202 = vector.load %arg3[%c0_236, %c0_237, %c221] : memref<1x8x1000xbf16, #tpu.memory_space<vmem>>, vector<1x8x778xbf16>
    %203 = vector.shape_cast %202 : vector<1x8x778xbf16> to vector<8x778xbf16>
    %c0_238 = arith.constant 0 : index
    %c0_239 = arith.constant 0 : index
    %204 = vector.load %arg8[%c0_238, %c0_239] : memref<8x778xf32, #tpu.memory_space<vmem>>, vector<8x778xf32>
    %c25 = arith.constant 25 : index
    %c0_240 = arith.constant 0 : index
    %c0_241 = arith.constant 0 : index
    %205 = vector.load %arg2[%c25, %c0_240, %c0_241] : memref<27x8x8xbf16, #tpu.memory_space<vmem>>, vector<1x8x8xbf16>
    %206 = vector.shape_cast %205 : vector<1x8x8xbf16> to vector<8x8xbf16>
    %cst_242 = arith.constant dense<0.000000e+00> : vector<8x778xf32>
    %207 = tpu.matmul %206, %203, %cst_242 {dimension_numbers = #tpu.dot_dimension_numbers<[1], [0], [0], [1], [0, 0, 1, 1], [], []>} : vector<8x8xbf16>, vector<8x778xbf16>, vector<8x778xf32> -> vector<8x778xf32>
    %208 = arith.addf %204, %207 : vector<8x778xf32>
    %c0_243 = arith.constant 0 : index
    %c0_244 = arith.constant 0 : index
    %209 = vector.load %arg8[%c0_243, %c0_244] : memref<8x778xf32, #tpu.memory_space<vmem>>, vector<8x778xf32>
    tpu.vector_store %arg8[%c0_243, %c0_244], %208 {strides = array<i32>} : memref<8x778xf32, #tpu.memory_space<vmem>>, vector<8x778xf32>,
    %c0_245 = arith.constant 0 : index
    %c0_246 = arith.constant 0 : index
    %c222 = arith.constant 222 : index
    %210 = vector.load %arg3[%c0_245, %c0_246, %c222] : memref<1x8x1000xbf16, #tpu.memory_space<vmem>>, vector<1x8x778xbf16>
    %211 = vector.shape_cast %210 : vector<1x8x778xbf16> to vector<8x778xbf16>
    %c0_247 = arith.constant 0 : index
    %c0_248 = arith.constant 0 : index
    %212 = vector.load %arg8[%c0_247, %c0_248] : memref<8x778xf32, #tpu.memory_space<vmem>>, vector<8x778xf32>
    %c26 = arith.constant 26 : index
    %c0_249 = arith.constant 0 : index
    %c0_250 = arith.constant 0 : index
    %213 = vector.load %arg2[%c26, %c0_249, %c0_250] : memref<27x8x8xbf16, #tpu.memory_space<vmem>>, vector<1x8x8xbf16>
    %214 = vector.shape_cast %213 : vector<1x8x8xbf16> to vector<8x8xbf16>
    %cst_251 = arith.constant dense<0.000000e+00> : vector<8x778xf32>
    %215 = tpu.matmul %214, %211, %cst_251 {dimension_numbers = #tpu.dot_dimension_numbers<[1], [0], [0], [1], [0, 0, 1, 1], [], []>} : vector<8x8xbf16>, vector<8x778xbf16>, vector<8x778xf32> -> vector<8x778xf32>
    %216 = arith.addf %212, %215 : vector<8x778xf32>
    %c0_252 = arith.constant 0 : index
    %c0_253 = arith.constant 0 : index
    %217 = vector.load %arg8[%c0_252, %c0_253] : memref<8x778xf32, #tpu.memory_space<vmem>>, vector<8x778xf32>
    tpu.vector_store %arg8[%c0_252, %c0_253], %216 {strides = array<i32>} : memref<8x778xf32, #tpu.memory_space<vmem>>, vector<8x778xf32>,
    %c0_254 = arith.constant 0 : index
    %c0_255 = arith.constant 0 : index
    %218 = vector.load %arg8[%c0_254, %c0_255] : memref<8x778xf32, #tpu.memory_space<vmem>>, vector<8x778xf32>
    %c0_256 = arith.constant 0 : index
    %c0_257 = arith.constant 0 : index
    %c0_258 = arith.constant 0 : index
    %219 = vector.load %arg5[%c0_256, %c0_257, %c0_258] : memref<1x8x778xf32, #tpu.memory_space<vmem>>, vector<1x8x778xf32>
    %220 = vector.shape_cast %219 : vector<1x8x778xf32> to vector<8x778xf32>
    %221 = vector.shape_cast %218 : vector<8x778xf32> to vector<1x8x778xf32>
    tpu.vector_store %arg5[%c0_256, %c0_257, %c0_258], %221 {strides = array<i32>} : memref<1x8x778xf32, #tpu.memory_space<vmem>>, vector<1x8x778xf32>,
    %c0_i32 = arith.constant 0 : i32
    %222 = arith.cmpi eq, %arg1, %c0_i32 : i32
    %223 = arith.extui %222 : i1 to i32
    %c0_i32_259 = arith.constant 0 : i32
    %224 = arith.cmpi ne, %223, %c0_i32_259 : i32
    scf.if %224 {
      %cst_272 = arith.constant 0.000000e+00 : f32
      %239 = vector.broadcast %cst_272 : f32 to vector<8x1xf32>
      %c0_273 = arith.constant 0 : index
      %c0_274 = arith.constant 0 : index
      %240 = vector.load %arg6[%c0_273, %c0_274] : memref<8x1xf32, #tpu.memory_space<vmem>>, vector<8x1xf32>
      tpu.vector_store %arg6[%c0_273, %c0_274], %239 {strides = array<i32>} : memref<8x1xf32, #tpu.memory_space<vmem>>, vector<8x1xf32>,
      %cst_275 = arith.constant 0.000000e+00 : f32
      %241 = vector.broadcast %cst_275 : f32 to vector<8x1xf32>
      %c0_276 = arith.constant 0 : index
      %c0_277 = arith.constant 0 : index
      %242 = vector.load %arg7[%c0_276, %c0_277] : memref<8x1xf32, #tpu.memory_space<vmem>>, vector<8x1xf32>
      tpu.vector_store %arg7[%c0_276, %c0_277], %241 {strides = array<i32>} : memref<8x1xf32, #tpu.memory_space<vmem>>, vector<8x1xf32>,
    } else {
    }
    %c0_260 = arith.constant 0 : index
    %c0_261 = arith.constant 0 : index
    %225 = vector.load %arg4[%c0_260, %c0_261] : memref<1x778xf32, #tpu.memory_space<vmem>>, vector<1x778xf32>
    %226 = vector.broadcast %225 : vector<1x778xf32> to vector<8x778xf32>
    %227 = arith.mulf %218, %226 : vector<8x778xf32>
    %c0_262 = arith.constant 0 : index
    %c0_263 = arith.constant 0 : index
    %228 = vector.load %arg6[%c0_262, %c0_263] : memref<8x1xf32, #tpu.memory_space<vmem>>, vector<8x1xf32>
    %cst_264 = arith.constant dense<0.000000e+00> : vector<8xf32>
    %229 = vector.multi_reduction <add>, %227, %cst_264 [1] : vector<8x778xf32> to vector<8xf32>
    %230 = vector.shape_cast %229 : vector<8xf32> to vector<8x1xf32>
    %231 = arith.addf %228, %230 : vector<8x1xf32>
    %c0_265 = arith.constant 0 : index
    %c0_266 = arith.constant 0 : index
    %232 = vector.load %arg6[%c0_265, %c0_266] : memref<8x1xf32, #tpu.memory_space<vmem>>, vector<8x1xf32>
    tpu.vector_store %arg6[%c0_265, %c0_266], %231 {strides = array<i32>} : memref<8x1xf32, #tpu.memory_space<vmem>>, vector<8x1xf32>,
    %c0_267 = arith.constant 0 : index
    %c0_268 = arith.constant 0 : index
    %233 = vector.load %arg7[%c0_267, %c0_268] : memref<8x1xf32, #tpu.memory_space<vmem>>, vector<8x1xf32>
    %234 = arith.mulf %227, %218 : vector<8x778xf32>
    %cst_269 = arith.constant dense<0.000000e+00> : vector<8xf32>
    %235 = vector.multi_reduction <add>, %234, %cst_269 [1] : vector<8x778xf32> to vector<8xf32>
    %236 = vector.shape_cast %235 : vector<8xf32> to vector<8x1xf32>
    %237 = arith.addf %233, %236 : vector<8x1xf32>
    %c0_270 = arith.constant 0 : index
    %c0_271 = arith.constant 0 : index
    %238 = vector.load %arg7[%c0_270, %c0_271] : memref<8x1xf32, #tpu.memory_space<vmem>>, vector<8x1xf32>
    tpu.vector_store %arg7[%c0_270, %c0_271], %237 {strides = array<i32>} : memref<8x1xf32, #tpu.memory_space<vmem>>, vector<8x1xf32>,
    return
  }
  func.func @transform_0(%arg0: i32, %arg1: i32) -> (i32, i32, i32) {
    %c0_i32 = arith.constant 0 : i32
    %c0_i32_0 = arith.constant 0 : i32
    %c0_i32_1 = arith.constant 0 : i32
    return %c0_i32, %arg0, %c0_i32_0 : i32, i32, i32
  }
  func.func @transform_1(%arg0: i32, %arg1: i32) -> (i32, i32, i32) {
    %c0_i32 = arith.constant 0 : i32
    %c0_i32_0 = arith.constant 0 : i32
    %c0_i32_1 = arith.constant 0 : i32
    return %arg1, %c0_i32, %c0_i32_0 : i32, i32, i32
  }
  func.func @transform_2(%arg0: i32, %arg1: i32) -> (i32, i32) {
    %c0_i32 = arith.constant 0 : i32
    %c0_i32_0 = arith.constant 0 : i32
    %c0_i32_1 = arith.constant 0 : i32
    return %c0_i32, %c0_i32_0 : i32, i32
  }
  func.func @transform_3(%arg0: i32, %arg1: i32) -> (i32, i32, i32) {
    %c0_i32 = arith.constant 0 : i32
    %c0_i32_0 = arith.constant 0 : i32
    return %arg1, %arg0, %c0_i32 : i32, i32, i32
  }
  func.func @transform_4(%arg0: i32, %arg1: i32) -> (i32, i32) {
    %c0_i32 = arith.constant 0 : i32
    %c0_i32_0 = arith.constant 0 : i32
    return %arg0, %c0_i32 : i32, i32
  }
  func.func @transform_5(%arg0: i32, %arg1: i32) -> (i32, i32) {
    %c0_i32 = arith.constant 0 : i32
    %c0_i32_0 = arith.constant 0 : i32
    return %arg0, %c0_i32 : i32, i32
  }
}

</mosaic_0001>

<llo_original>
// kernel: conv3x3_forward.5
$region0: #{conv3x3_forward.5}
  #allocation0 [shape = 'u32[]', space=smem, size = 0x4, offset = 0x4, fixed_abs, tag = 'smem constant byte address 0x4 - core index']
  #allocation1 [shape = 'u32[144,128]{1,0:T(1,128)}', space=vmem, size = 0x12000, scoped, tag = 'internal scratch']
  %s0 = inlined_call_operand.vmem [shape: f32[8,1], index: 0, kind: input, shape index: {}]
  %s1 = inlined_call_operand.vmem [shape: f32[8,1], index: 1, kind: input, shape index: {}]
  %s2 = inlined_call_operand.vmem [shape: f32[2,8,778], index: 2, kind: input, shape index: {}]
  %s3 = inlined_call_operand.vmem [shape: f32[2,8,778], index: 3, kind: output, shape index: {}]
  %s4 = sld [smem:[#allocation0]]
  $region45: #{conv3x3_forward.5} parent=0
    _
  %s6 = ssub.s32 1, %s4
  %s7 = scalar_select 0, %s6, %s4
  loop: start=0, step=1, limit=4
  $region2: #{conv3x3_forward.5} parent=0 // loop_pre_header
    _
  $region3: #{conv3x3_forward.5} parent=0 // loop_header
    %s9 = sphi 0, %s13
    %p10 = scmp.ge.s32.totalorder %s9, 4
    %s16 = sphi 0, %s28
    %s17 = sphi 0, %s24
    %s18 = sphi 0, %s16
    %s19 = sphi 0, %s17
    %s20 = sphi 0, %s18
    %s21 = sphi 0, %s19
    %s31 = sphi 0, %s33
    %s34 = sphi 0, %s31
    %s35 = sphi 0, %s34
    %s51 = sphi 0, %s35
    %s57 = sphi 0, %s59
    %s60 = sphi 0, %s57
    %s61 = sphi 0, %s60
    %s77 = sphi 0, %s61
    %s85 = sphi 0, %s87
    %s88 = sphi 0, %s85
    %s89 = sphi 0, %s88
    %s105 = sphi 0, %s89
    %s113 = sphi 0, %s115
    %s116 = sphi 0, %s113
    %s117 = sphi 0, %s116
    %s133 = sphi 0, %s117
  $region4: #{conv3x3_forward.5} parent=0 // loop_header_branch
    %12 = sbr.rel (%p10) target = $region8
  $region5: #{conv3x3_forward.5} parent=0 // loop_body
    %s14 = ssub.s32 %s9, 1
    %s15 = ssub.s32 %s9, 2
    %s22 = sadd.s32 1, %s17
    %p23 = scmp.ge.s32.totalorder %s22, 2
    %s24 = scalar_select %p23, 0, %s22
    %s25 = sadd.s32 1, %s16
    %s26 = scalar_select %p23, %s25, %s16
    %p27 = scmp.ge.s32.totalorder %s26, 1
    %s28 = scalar_select %p27, 0, %s26
    %s29 = ssub.s32 %s16, %s28
    %p30 = scmp.eq.s32.totalorder %s29, 0
    %s32 = sadd.s32 %s31, 1
    %s33 = scalar_select %p30, %s31, %s32
    %p36 = pneg %p30
    %p37 = scmp.eq.s32.totalorder %s9, 1
    %p38 = por %p36, %p37
    %p39 = scmp.ne.s32.totalorder %s31, %s34
    %p40 = scmp.eq.s32.totalorder %s9, 0
    %p41 = por %p39, %p40
    %p42 = scmp.ne.s32.totalorder %s31, %s34
    %p43 = scmp.eq.s32.totalorder %s14, 1
    %p44 = por %p42, %p43
    %p45 = scmp.ne.s32.totalorder %s34, %s35
    %p46 = scmp.eq.s32.totalorder %s14, 0
    %p47 = por %p45, %p46
    %p48 = scmp.ne.s32.totalorder %s34, %s35
    %p49 = scmp.eq.s32.totalorder %s15, 1
    %p50 = por %p48, %p49
    %p52 = scmp.ne.s32.totalorder %s35, %s51
    %p53 = scmp.eq.s32.totalorder %s15, 0
    %p54 = por %p52, %p53
    %s55 = ssub.s32 %s16, %s28
    %p56 = scmp.eq.s32.totalorder %s55, 0
    %s58 = sadd.s32 %s57, 1
    %s59 = scalar_select %p56, %s57, %s58
    %p62 = pneg %p56
    %p63 = scmp.eq.s32.totalorder %s9, 1
    %p64 = por %p62, %p63
    %p65 = scmp.ne.s32.totalorder %s57, %s60
    %p66 = scmp.eq.s32.totalorder %s9, 0
    %p67 = por %p65, %p66
    %p68 = scmp.ne.s32.totalorder %s57, %s60
    %p69 = scmp.eq.s32.totalorder %s14, 1
    %p70 = por %p68, %p69
    %p71 = scmp.ne.s32.totalorder %s60, %s61
    %p72 = scmp.eq.s32.totalorder %s14, 0
    %p73 = por %p71, %p72
    %p74 = scmp.ne.s32.totalorder %s60, %s61
    %p75 = scmp.eq.s32.totalorder %s15, 1
    %p76 = por %p74, %p75
    %p78 = scmp.ne.s32.totalorder %s61, %s77
    %p79 = scmp.eq.s32.totalorder %s15, 0
    %p80 = por %p78, %p79
    %s81 = ssub.s32 %s17, %s24
    %s82 = ssub.s32 %s16, %s28
    %s83 = sor.u32 %s81, %s82
    %p84 = scmp.eq.s32.totalorder %s83, 0
    %s86 = sadd.s32 %s85, 1
    %s87 = scalar_select %p84, %s85, %s86
    %p90 = pneg %p84
    %p91 = scmp.eq.s32.totalorder %s9, 1
    %p92 = por %p90, %p91
    %p93 = scmp.ne.s32.totalorder %s85, %s88
    %p94 = scmp.eq.s32.totalorder %s9, 0
    %p95 = por %p93, %p94
    %p96 = scmp.ne.s32.totalorder %s85, %s88
    %p97 = scmp.eq.s32.totalorder %s14, 1
    %p98 = por %p96, %p97
    %p99 = scmp.ne.s32.totalorder %s88, %s89
    %p100 = scmp.eq.s32.totalorder %s14, 0
    %p101 = por %p99, %p100
    %p102 = scmp.ne.s32.totalorder %s88, %s89
    %p103 = scmp.eq.s32.totalorder %s15, 1
    %p104 = por %p102, %p103
    %p106 = scmp.ne.s32.totalorder %s89, %s105
    %p107 = scmp.eq.s32.totalorder %s15, 0
    %p108 = por %p106, %p107
    %s109 = ssub.s32 %s17, %s24
    %s110 = ssub.s32 %s16, %s28
    %s111 = sor.u32 %s109, %s110
    %p112 = scmp.eq.s32.totalorder %s111, 0
    %s114 = sadd.s32 %s113, 1
    %s115 = scalar_select %p112, %s113, %s114
    %p118 = pneg %p112
    %p119 = scmp.eq.s32.totalorder %s9, 1
    %p120 = por %p118, %p119
    %p121 = scmp.ne.s32.totalorder %s113, %s116
    %p122 = scmp.eq.s32.totalorder %s9, 0
    %p123 = por %p121, %p122
    %p124 = scmp.ne.s32.totalorder %s113, %s116
    %p125 = scmp.eq.s32.totalorder %s14, 1
    %p126 = por %p124, %p125
    %p127 = scmp.ne.s32.totalorder %s116, %s117
    %p128 = scmp.eq.s32.totalorder %s14, 0
    %p129 = por %p127, %p128
    %p130 = scmp.ne.s32.totalorder %s116, %s117
    %p131 = scmp.eq.s32.totalorder %s15, 1
    %p132 = por %p130, %p131
    %p134 = scmp.ne.s32.totalorder %s117, %s133
    %p135 = scmp.eq.s32.totalorder %s15, 0
    %p136 = por %p134, %p135
    %p137 = scmp.le.s32.totalorder 1, %s9
    %p138 = scmp.lt.s32.totalorder %s9, 3
    %p139 = pnand %p137, %p138
    %p140 = pneg %p139
    // Predicated region
    $region9: #{conv3x3_forward.5} parent=5 // pred_check
      _
    $region10: #{conv3x3_forward.5} parent=5 // pred_check_branch
      %142 = sbr.rel (%p139) target = $region12
    $region11: #{conv3x3_forward.5} parent=5 // pred_region
      %s143 = ssub.s32 %s9, 1
      // Predicated region
      $region13: #{conv3x3_forward.5} parent=11 // pred_check
        %p144 = pneg %p47
      $region14: #{conv3x3_forward.5} parent=11 // pred_check_branch
        %146 = sbr.rel (%p144) target = $region16
      $region15: #{conv3x3_forward.5} parent=11 // pred_region
        %p147 = scmp.lt.s32.totalorder %s18, 0
        %s148 = scalar_select %p147, %s18, 0
        %s149 = smul.addr %s148, 8
        %s150 = scalar_lea.vmem %s0, %s149
      $region16: #{conv3x3_forward.5} parent=11 // pred_fallthru
        _
      // Predicated region
      $region17: #{conv3x3_forward.5} parent=11 // pred_check
        %p151 = pneg %p73
      $region18: #{conv3x3_forward.5} parent=11 // pred_check_branch
        %153 = sbr.rel (%p151) target = $region20
      $region19: #{conv3x3_forward.5} parent=11 // pred_region
        %p154 = scmp.lt.s32.totalorder %s18, 0
        %s155 = scalar_select %p154, %s18, 0
        %s156 = smul.addr %s155, 8
        %s157 = scalar_lea.vmem %s1, %s156
      $region20: #{conv3x3_forward.5} parent=11 // pred_fallthru
        _
    $region12: #{conv3x3_forward.5} parent=5 // pred_fallthru
      _
    %p158 = scmp.lt.s32.totalorder %s9, 2
    // Predicated region
    $region21: #{conv3x3_forward.5} parent=5 // pred_check
      %p159 = pneg %p158
    $region22: #{conv3x3_forward.5} parent=5 // pred_check_branch
      %161 = sbr.rel (%p159) target = $region24
    $region23: #{conv3x3_forward.5} parent=5 // pred_region
      // Predicated region
      $region25: #{conv3x3_forward.5} parent=23 // pred_check
        %p162 = pneg %p95
      $region26: #{conv3x3_forward.5} parent=23 // pred_check_branch
        %164 = sbr.rel (%p162) target = $region28
      $region27: #{conv3x3_forward.5} parent=23 // pred_region
        %p165 = scmp.lt.s32.totalorder %s17, 1
        %s166 = scalar_select %p165, %s17, 1
        %p167 = scmp.lt.s32.totalorder %s16, 0
        %s168 = scalar_select %p167, %s16, 0
        %s169 = smul.addr %s168, 7
        %s170 = smul.addr %s166, 7
        %s171 = sadd.s32 %s169, %s170
        %s172 = smul.addr %s171, 8
        %s173 = scalar_lea.vmem %s2, %s172
      $region28: #{conv3x3_forward.5} parent=23 // pred_fallthru
        _
    $region24: #{conv3x3_forward.5} parent=5 // pred_fallthru
      _
    %p174 = scmp.le.s32.totalorder 1, %s9
    %p175 = scmp.lt.s32.totalorder %s9, 3
    %p176 = pnand %p174, %p175
    %p177 = pneg %p176
    // Predicated region
    $region29: #{conv3x3_forward.5} parent=5 // pred_check
      _
    $region30: #{conv3x3_forward.5} parent=5 // pred_check_branch
      %179 = sbr.rel (%p176) target = $region32
    $region31: #{conv3x3_forward.5} parent=5 // pred_region
      %s180 = ssub.s32 %s9, 1
      %p181 = scmp.lt.s32.totalorder %s18, 0
      %s182 = scalar_select %p181, %s18, 0
      %s183 = smul.addr %s182, 8
      %s184 = scalar_lea.vmem %s0, %s183
      %p185 = pneg %p47
      %p186 = pneg %p44
      %p187 = scmp.lt.s32.totalorder %s18, 0
      %s188 = scalar_select %p187, %s18, 0
      %s189 = smul.addr %s188, 8
      %s190 = scalar_lea.vmem %s1, %s189
      %p191 = pneg %p73
      %p192 = pneg %p70
      %p193 = scmp.lt.s32.totalorder %s19, 1
      %s194 = scalar_select %p193, %s19, 1
      %p195 = scmp.lt.s32.totalorder %s18, 0
      %s196 = scalar_select %p195, %s18, 0
      %s197 = smul.addr %s196, 7
      %s198 = smul.addr %s194, 7
      %s199 = sadd.s32 %s197, %s198
      %s200 = smul.addr %s199, 8
      %s201 = scalar_lea.vmem %s2, %s200
      %p202 = pneg %p101
      %p203 = pneg %p98
      %p204 = pneg %p129
      %p205 = pneg %p126
      %p206 = scmp.lt.s32.totalorder %s19, 1
      %s207 = scalar_select %p206, %s19, 1
      %p208 = scmp.lt.s32.totalorder %s18, 0
      %s209 = scalar_select %p208, %s18, 0
      %s210 = smul.addr %s209, 7
      %s211 = smul.addr %s207, 7
      %s212 = sadd.s32 %s210, %s211
      %s213 = smul.addr %s212, 8
      %s214 = scalar_lea.vmem %s3, %s213
      %p215 = scmp.lt.s32.totalorder %s18, 0
      %s216 = scalar_select %p215, %s18, 0
      %s217 = smul.addr %s216, 8
      %s218 = scalar_lea.vmem %s0, %s217
      %p219 = scmp.lt.s32.totalorder %s18, 0
      %s220 = scalar_select %p219, %s18, 0
      %s221 = smul.addr %s220, 8
      %s222 = scalar_lea.vmem %s1, %s221
      %p223 = scmp.lt.s32.totalorder %s19, 1
      %s224 = scalar_select %p223, %s19, 1
      %p225 = scmp.lt.s32.totalorder %s18, 0
      %s226 = scalar_select %p225, %s18, 0
      %s227 = smul.addr %s226, 7
      %s228 = smul.addr %s224, 7
      %s229 = sadd.s32 %s227, %s228
      %s230 = smul.addr %s229, 8
      %s231 = scalar_lea.vmem %s2, %s230
      %p232 = scmp.lt.s32.totalorder %s19, 1
      %s233 = scalar_select %p232, %s19, 1
      %p234 = scmp.lt.s32.totalorder %s18, 0
      %s235 = scalar_select %p234, %s18, 0
      %s236 = smul.addr %s235, 7
      %s237 = smul.addr %s233, 7
      %s238 = sadd.s32 %s236, %s237
      %s239 = smul.addr %s238, 8
      %s240 = scalar_lea.vmem %s3, %s239
      %v241 = vld [vmem:[%s231] sm:$0xff]
      %v242 = vld [vmem:[%s231 + $0x8] sm:$0xff]
      %v243 = vld [vmem:[%s231 + $0x10] sm:$0xff]
      %v244 = vld [vmem:[%s231 + $0x18] sm:$0xff]
      %v245 = vld [vmem:[%s231 + $0x20] sm:$0xff]
      %v246 = vld [vmem:[%s231 + $0x28] sm:$0xff]
      %v247 = vld [vmem:[%s231 + $0x30] sm:$0xff]
      %v248 = vld [vmem:[%s218] sm:$0xff]
      %250 = vset.pattern.permute.xlu0 0
      %251 = vperm.xlu0 %250, %v248
      %v252 = vpop.permute.xlu0 %251
      %v254 = vmul.f32 %v241, %v252
      %v255 = vmul.f32 %v242, %v252
      %v256 = vmul.f32 %v243, %v252
      %v257 = vmul.f32 %v244, %v252
      %v258 = vmul.f32 %v245, %v252
      %v259 = vmul.f32 %v246, %v252
      %v260 = vmul.f32 %v247, %v252
      %v261 = vld [vmem:[%s222] sm:$0xff]
      %263 = vset.pattern.permute.xlu0 0
      %264 = vperm.xlu0 %263, %v261
      %v265 = vpop.permute.xlu0 %264
      %v267 = vadd.f32 %v254, %v265
      %v268 = vadd.f32 %v255, %v265
      %v269 = vadd.f32 %v256, %v265
      %v270 = vadd.f32 %v257, %v265
      %v271 = vadd.f32 %v258, %v265
      %v272 = vadd.f32 %v259, %v265
      %v273 = vadd.f32 %v260, %v265
      %v274 = vmax.f32 %v267, 0.0
      %v275 = vmax.f32 %v268, 0.0
      %v276 = vmax.f32 %v269, 0.0
      %v277 = vmax.f32 %v270, 0.0
      %v278 = vmax.f32 %v271, 0.0
      %v279 = vmax.f32 %v272, 0.0
      %v280 = vmax.f32 %v273, 0.0
      %281 = vst [vmem:[%s240] sm:$0xff] %v274
      %282 = vst [vmem:[%s240 + $0x8] sm:$0xff] %v275
      %283 = vst [vmem:[%s240 + $0x10] sm:$0xff] %v276
      %284 = vst [vmem:[%s240 + $0x18] sm:$0xff] %v277
      %285 = vst [vmem:[%s240 + $0x20] sm:$0xff] %v278
      %286 = vst [vmem:[%s240 + $0x28] sm:$0xff] %v279
      %vm287 = vcmask 80896
      %288 = vst.msk [vmem:[%s240 + $0x30] sm:$0xff] %vm287, %v280
      %p289 = scmp.lt.s32.totalorder %s19, 1
      %s290 = scalar_select %p289, %s19, 1
      %p291 = scmp.lt.s32.totalorder %s18, 0
      %s292 = scalar_select %p291, %s18, 0
      %s293 = smul.addr %s292, 7
      %s294 = smul.addr %s290, 7
      %s295 = sadd.s32 %s293, %s294
      %s296 = smul.addr %s295, 8
      %s297 = scalar_lea.vmem %s3, %s296
      // Predicated region
      $region33: #{conv3x3_forward.5} parent=31 // pred_check
        %p298 = pneg %p126
      $region34: #{conv3x3_forward.5} parent=31 // pred_check_branch
        %300 = sbr.rel (%p298) target = $region36
      $region35: #{conv3x3_forward.5} parent=31 // pred_region
        _
      $region36: #{conv3x3_forward.5} parent=31 // pred_fallthru
        _
    $region32: #{conv3x3_forward.5} parent=5 // pred_fallthru
      _
    %p301 = scmp.le.s32.totalorder 2, %s9
    // Predicated region
    $region37: #{conv3x3_forward.5} parent=5 // pred_check
      %p302 = pneg %p301
    $region38: #{conv3x3_forward.5} parent=5 // pred_check_branch
      %304 = sbr.rel (%p302) target = $region40
    $region39: #{conv3x3_forward.5} parent=5 // pred_region
      %s305 = ssub.s32 %s9, 2
      // Predicated region
      $region41: #{conv3x3_forward.5} parent=39 // pred_check
        %p306 = pneg %p132
      $region42: #{conv3x3_forward.5} parent=39 // pred_check_branch
        %308 = sbr.rel (%p306) target = $region44
      $region43: #{conv3x3_forward.5} parent=39 // pred_region
        %p309 = scmp.lt.s32.totalorder %s21, 1
        %s310 = scalar_select %p309, %s21, 1
        %p311 = scmp.lt.s32.totalorder %s20, 0
        %s312 = scalar_select %p311, %s20, 0
        %s313 = smul.addr %s312, 7
        %s314 = smul.addr %s310, 7
        %s315 = sadd.s32 %s313, %s314
        %s316 = smul.addr %s315, 8
        %s317 = scalar_lea.vmem %s3, %s316
      $region44: #{conv3x3_forward.5} parent=39 // pred_fallthru
        _
    $region40: #{conv3x3_forward.5} parent=5 // pred_fallthru
      _
  $region6: #{conv3x3_forward.5} parent=0 // loop_footer
    %s13 = sadd.s32 1, %s9
  $region7: #{conv3x3_forward.5} parent=0 // loop_footer_branch
    %8 = sbr.rel target = $region3
  $region8: #{conv3x3_forward.5} parent=0 // loop_exit
    _

// kernel: conv3x3_forward.4
$region0: #{conv3x3_forward.4}
  #allocation0 [shape = 'u32[]', space=smem, size = 0x4, offset = 0x4, fixed_abs, tag = 'smem constant byte address 0x4 - core index']
  #allocation1 [shape = 'u32[144,128]{1,0:T(1,128)}', space=vmem, size = 0x12000, scoped, tag = 'internal scratch']
  #allocation2 [shape = 'f32[8,778]{1,0:T(8,128)}', space=vmem, size = 0x7000, scoped, tag = 'scratch operand']
  %s0 = inlined_call_operand.vmem [shape: bf16[27,8,8], index: 0, kind: input, shape index: {}]
  %s1 = inlined_call_operand.vmem [shape: bf16[2,8,1000], index: 1, kind: input, shape index: {}]
  %s2 = inlined_call_operand.vmem [shape: f32[1,778], index: 2, kind: input, shape index: {}]
  %s3 = inlined_call_operand.vmem [shape: f32[2,8,778], index: 3, kind: output, shape index: {0}]
  %s4 = inlined_call_operand.vmem [shape: f32[8,1], index: 4, kind: output, shape index: {1}]
  %s5 = inlined_call_operand.vmem [shape: f32[8,1], index: 5, kind: output, shape index: {2}]
  %6 = xla_tuple %s3, %s4, %s5
  %s7 = sld [smem:[#allocation0]]
  $region65: #{conv3x3_forward.4} parent=0
    _
  %s9 = ssub.s32 1, %s7
  %s10 = scalar_select 0, %s9, %s7
  loop: start=0, step=1, limit=4
  $region2: #{conv3x3_forward.4} parent=0 // loop_pre_header
    _
  $region3: #{conv3x3_forward.4} parent=0 // loop_header
    %s12 = sphi 0, %s16
    %p13 = scmp.ge.s32.totalorder %s12, 4
    %s19 = sphi 0, %s31
    %s20 = sphi 0, %s27
    %s21 = sphi 0, %s19
    %s22 = sphi 0, %s20
    %s23 = sphi 0, %s21
    %s24 = sphi 0, %s22
    %s34 = sphi 0, %s36
    %s37 = sphi 0, %s34
    %s38 = sphi 0, %s37
    %s54 = sphi 0, %s38
    %s60 = sphi 0, %s62
    %s63 = sphi 0, %s60
    %s64 = sphi 0, %s63
    %s80 = sphi 0, %s64
    %s84 = sphi 0, %s84
    %s86 = sphi 0, %s84
    %s87 = sphi 0, %s86
    %s101 = sphi 0, %s87
    %s109 = sphi 0, %s111
    %s112 = sphi 0, %s109
    %s113 = sphi 0, %s112
    %s129 = sphi 0, %s113
    %s135 = sphi 0, %s137
    %s138 = sphi 0, %s135
    %s139 = sphi 0, %s138
    %s155 = sphi 0, %s139
    %s161 = sphi 0, %s163
    %s164 = sphi 0, %s161
    %s165 = sphi 0, %s164
    %s181 = sphi 0, %s165
  $region4: #{conv3x3_forward.4} parent=0 // loop_header_branch
    %15 = sbr.rel (%p13) target = $region8
  $region5: #{conv3x3_forward.4} parent=0 // loop_body
    %s17 = ssub.s32 %s12, 1
    %s18 = ssub.s32 %s12, 2
    %s25 = sadd.s32 1, %s20
    %p26 = scmp.ge.s32.totalorder %s25, 2
    %s27 = scalar_select %p26, 0, %s25
    %s28 = sadd.s32 1, %s19
    %s29 = scalar_select %p26, %s28, %s19
    %p30 = scmp.ge.s32.totalorder %s29, 1
    %s31 = scalar_select %p30, 0, %s29
    %s32 = ssub.s32 %s19, %s31
    %p33 = scmp.eq.s32.totalorder %s32, 0
    %s35 = sadd.s32 %s34, 1
    %s36 = scalar_select %p33, %s34, %s35
    %p39 = pneg %p33
    %p40 = scmp.eq.s32.totalorder %s12, 1
    %p41 = por %p39, %p40
    %p42 = scmp.ne.s32.totalorder %s34, %s37
    %p43 = scmp.eq.s32.totalorder %s12, 0
    %p44 = por %p42, %p43
    %p45 = scmp.ne.s32.totalorder %s34, %s37
    %p46 = scmp.eq.s32.totalorder %s17, 1
    %p47 = por %p45, %p46
    %p48 = scmp.ne.s32.totalorder %s37, %s38
    %p49 = scmp.eq.s32.totalorder %s17, 0
    %p50 = por %p48, %p49
    %p51 = scmp.ne.s32.totalorder %s37, %s38
    %p52 = scmp.eq.s32.totalorder %s18, 1
    %p53 = por %p51, %p52
    %p55 = scmp.ne.s32.totalorder %s38, %s54
    %p56 = scmp.eq.s32.totalorder %s18, 0
    %p57 = por %p55, %p56
    %s58 = ssub.s32 %s20, %s27
    %p59 = scmp.eq.s32.totalorder %s58, 0
    %s61 = sadd.s32 %s60, 1
    %s62 = scalar_select %p59, %s60, %s61
    %p65 = pneg %p59
    %p66 = scmp.eq.s32.totalorder %s12, 1
    %p67 = por %p65, %p66
    %p68 = scmp.ne.s32.totalorder %s60, %s63
    %p69 = scmp.eq.s32.totalorder %s12, 0
    %p70 = por %p68, %p69
    %p71 = scmp.ne.s32.totalorder %s60, %s63
    %p72 = scmp.eq.s32.totalorder %s17, 1
    %p73 = por %p71, %p72
    %p74 = scmp.ne.s32.totalorder %s63, %s64
    %p75 = scmp.eq.s32.totalorder %s17, 0
    %p76 = por %p74, %p75
    %p77 = scmp.ne.s32.totalorder %s63, %s64
    %p78 = scmp.eq.s32.totalorder %s18, 1
    %p79 = por %p77, %p78
    %p81 = scmp.ne.s32.totalorder %s64, %s80
    %p82 = scmp.eq.s32.totalorder %s18, 0
    %p83 = por %p81, %p82
    %s85 = sadd.s32 %s84, 1
    %p88 = scmp.eq.s32.totalorder %s12, 1
    %p89 = scmp.ne.s32.totalorder %s84, %s86
    %p90 = scmp.eq.s32.totalorder %s12, 0
    %p91 = por %p89, %p90
    %p92 = scmp.ne.s32.totalorder %s84, %s86
    %p93 = scmp.eq.s32.totalorder %s17, 1
    %p94 = por %p92, %p93
    %p95 = scmp.ne.s32.totalorder %s86, %s87
    %p96 = scmp.eq.s32.totalorder %s17, 0
    %p97 = por %p95, %p96
    %p98 = scmp.ne.s32.totalorder %s86, %s87
    %p99 = scmp.eq.s32.totalorder %s18, 1
    %p100 = por %p98, %p99
    %p102 = scmp.ne.s32.totalorder %s87, %s101
    %p103 = scmp.eq.s32.totalorder %s18, 0
    %p104 = por %p102, %p103
    %s105 = ssub.s32 %s20, %s27
    %s106 = ssub.s32 %s19, %s31
    %s107 = sor.u32 %s105, %s106
    %p108 = scmp.eq.s32.totalorder %s107, 0
    %s110 = sadd.s32 %s109, 1
    %s111 = scalar_select %p108, %s109, %s110
    %p114 = pneg %p108
    %p115 = scmp.eq.s32.totalorder %s12, 1
    %p116 = por %p114, %p115
    %p117 = scmp.ne.s32.totalorder %s109, %s112
    %p118 = scmp.eq.s32.totalorder %s12, 0
    %p119 = por %p117, %p118
    %p120 = scmp.ne.s32.totalorder %s109, %s112
    %p121 = scmp.eq.s32.totalorder %s17, 1
    %p122 = por %p120, %p121
    %p123 = scmp.ne.s32.totalorder %s112, %s113
    %p124 = scmp.eq.s32.totalorder %s17, 0
    %p125 = por %p123, %p124
    %p126 = scmp.ne.s32.totalorder %s112, %s113
    %p127 = scmp.eq.s32.totalorder %s18, 1
    %p128 = por %p126, %p127
    %p130 = scmp.ne.s32.totalorder %s113, %s129
    %p131 = scmp.eq.s32.totalorder %s18, 0
    %p132 = por %p130, %p131
    %s133 = ssub.s32 %s19, %s31
    %p134 = scmp.eq.s32.totalorder %s133, 0
    %s136 = sadd.s32 %s135, 1
    %s137 = scalar_select %p134, %s135, %s136
    %p140 = pneg %p134
    %p141 = scmp.eq.s32.totalorder %s12, 1
    %p142 = por %p140, %p141
    %p143 = scmp.ne.s32.totalorder %s135, %s138
    %p144 = scmp.eq.s32.totalorder %s12, 0
    %p145 = por %p143, %p144
    %p146 = scmp.ne.s32.totalorder %s135, %s138
    %p147 = scmp.eq.s32.totalorder %s17, 1
    %p148 = por %p146, %p147
    %p149 = scmp.ne.s32.totalorder %s138, %s139
    %p150 = scmp.eq.s32.totalorder %s17, 0
    %p151 = por %p149, %p150
    %p152 = scmp.ne.s32.totalorder %s138, %s139
    %p153 = scmp.eq.s32.totalorder %s18, 1
    %p154 = por %p152, %p153
    %p156 = scmp.ne.s32.totalorder %s139, %s155
    %p157 = scmp.eq.s32.totalorder %s18, 0
    %p158 = por %p156, %p157
    %s159 = ssub.s32 %s19, %s31
    %p160 = scmp.eq.s32.totalorder %s159, 0
    %s162 = sadd.s32 %s161, 1
    %s163 = scalar_select %p160, %s161, %s162
    %p166 = pneg %p160
    %p167 = scmp.eq.s32.totalorder %s12, 1
    %p168 = por %p166, %p167
    %p169 = scmp.ne.s32.totalorder %s161, %s164
    %p170 = scmp.eq.s32.totalorder %s12, 0
    %p171 = por %p169, %p170
    %p172 = scmp.ne.s32.totalorder %s161, %s164
    %p173 = scmp.eq.s32.totalorder %s17, 1
    %p174 = por %p172, %p173
    %p175 = scmp.ne.s32.totalorder %s164, %s165
    %p176 = scmp.eq.s32.totalorder %s17, 0
    %p177 = por %p175, %p176
    %p178 = scmp.ne.s32.totalorder %s164, %s165
    %p179 = scmp.eq.s32.totalorder %s18, 1
    %p180 = por %p178, %p179
    %p182 = scmp.ne.s32.totalorder %s165, %s181
    %p183 = scmp.eq.s32.totalorder %s18, 0
    %p184 = por %p182, %p183
    %p185 = scmp.le.s32.totalorder 1, %s12
    %p186 = scmp.lt.s32.totalorder %s12, 3
    %p187 = pnand %p185, %p186
    %p188 = pneg %p187
    // Predicated region
    $region9: #{conv3x3_forward.4} parent=5 // pred_check
      _
    $region10: #{conv3x3_forward.4} parent=5 // pred_check_branch
      %190 = sbr.rel (%p187) target = $region12
    $region11: #{conv3x3_forward.4} parent=5 // pred_region
      %s191 = ssub.s32 %s12, 1
      // Predicated region
      $region13: #{conv3x3_forward.4} parent=11 // pred_check
        %p192 = pneg %p50
      $region14: #{conv3x3_forward.4} parent=11 // pred_check_branch
        %194 = sbr.rel (%p192) target = $region16
      $region15: #{conv3x3_forward.4} parent=11 // pred_region
        %p195 = scmp.lt.s32.totalorder %s21, 0
        %s196 = scalar_select %p195, %s21, 0
        %s197 = smul.addr %s196, 4
        %s198 = scalar_lea.vmem %s0, %s197
      $region16: #{conv3x3_forward.4} parent=11 // pred_fallthru
        _
      // Predicated region
      $region17: #{conv3x3_forward.4} parent=11 // pred_check
        %p199 = pneg %p97
      $region18: #{conv3x3_forward.4} parent=11 // pred_check_branch
        %201 = sbr.rel (%p199) target = $region20
      $region19: #{conv3x3_forward.4} parent=11 // pred_region
        _
      $region20: #{conv3x3_forward.4} parent=11 // pred_fallthru
        _
    $region12: #{conv3x3_forward.4} parent=5 // pred_fallthru
      _
    %p202 = scmp.lt.s32.totalorder %s12, 2
    // Predicated region
    $region21: #{conv3x3_forward.4} parent=5 // pred_check
      %p203 = pneg %p202
    $region22: #{conv3x3_forward.4} parent=5 // pred_check_branch
      %205 = sbr.rel (%p203) target = $region24
    $region23: #{conv3x3_forward.4} parent=5 // pred_region
      // Predicated region
      $region25: #{conv3x3_forward.4} parent=23 // pred_check
        %p206 = pneg %p70
      $region26: #{conv3x3_forward.4} parent=23 // pred_check_branch
        %208 = sbr.rel (%p206) target = $region28
      $region27: #{conv3x3_forward.4} parent=23 // pred_region
        %p209 = scmp.lt.s32.totalorder %s20, 1
        %s210 = scalar_select %p209, %s20, 1
        %s211 = smul.addr %s210, 8
        %s212 = smul.addr %s211, 4
        %s213 = scalar_lea.vmem %s1, %s212
      $region28: #{conv3x3_forward.4} parent=23 // pred_fallthru
        _
    $region24: #{conv3x3_forward.4} parent=5 // pred_fallthru
      _
    %p214 = scmp.le.s32.totalorder 1, %s12
    %p215 = scmp.lt.s32.totalorder %s12, 3
    %p216 = pnand %p214, %p215
    %p217 = pneg %p216
    // Predicated region
    $region29: #{conv3x3_forward.4} parent=5 // pred_check
      _
    $region30: #{conv3x3_forward.4} parent=5 // pred_check_branch
      %219 = sbr.rel (%p216) target = $region32
    $region31: #{conv3x3_forward.4} parent=5 // pred_region
      %s220 = ssub.s32 %s12, 1
      %p221 = scmp.lt.s32.totalorder %s21, 0
      %s222 = scalar_select %p221, %s21, 0
      %s223 = smul.addr %s222, 4
      %s224 = scalar_lea.vmem %s0, %s223
      %p225 = pneg %p50
      %p226 = pneg %p47
      %p227 = scmp.lt.s32.totalorder %s22, 1
      %s228 = scalar_select %p227, %s22, 1
      %s229 = smul.addr %s228, 8
      %s230 = smul.addr %s229, 4
      %s231 = scalar_lea.vmem %s1, %s230
      %p232 = pneg %p76
      %p233 = pneg %p73
      %p234 = pneg %p97
      %p235 = pneg %p94
      %p236 = pneg %p125
      %p237 = pneg %p122
      %p238 = scmp.lt.s32.totalorder %s22, 1
      %s239 = scalar_select %p238, %s22, 1
      %p240 = scmp.lt.s32.totalorder %s21, 0
      %s241 = scalar_select %p240, %s21, 0
      %s242 = smul.addr %s241, 7
      %s243 = smul.addr %s239, 7
      %s244 = sadd.s32 %s242, %s243
      %s245 = smul.addr %s244, 8
      %s246 = scalar_lea.vmem %s3, %s245
      %p247 = pneg %p151
      %p248 = pneg %p148
      %p249 = scmp.lt.s32.totalorder %s21, 0
      %s250 = scalar_select %p249, %s21, 0
      %s251 = smul.addr %s250, 8
      %s252 = scalar_lea.vmem %s4, %s251
      %p253 = pneg %p177
      %p254 = pneg %p174
      %p255 = scmp.lt.s32.totalorder %s21, 0
      %s256 = scalar_select %p255, %s21, 0
      %s257 = smul.addr %s256, 8
      %s258 = scalar_lea.vmem %s5, %s257
      %p259 = scmp.lt.s32.totalorder %s21, 0
      %s260 = scalar_select %p259, %s21, 0
      %s261 = smul.addr %s260, 4
      %s262 = scalar_lea.vmem %s0, %s261
      %p263 = scmp.lt.s32.totalorder %s22, 1
      %s264 = scalar_select %p263, %s22, 1
      %s265 = smul.addr %s264, 8
      %s266 = smul.addr %s265, 4
      %s267 = scalar_lea.vmem %s1, %s266
      %p268 = scmp.lt.s32.totalorder %s22, 1
      %s269 = scalar_select %p268, %s22, 1
      %p270 = scmp.lt.s32.totalorder %s21, 0
      %s271 = scalar_select %p270, %s21, 0
      %s272 = smul.addr %s271, 7
      %s273 = smul.addr %s269, 7
      %s274 = sadd.s32 %s272, %s273
      %s275 = smul.addr %s274, 8
      %s276 = scalar_lea.vmem %s3, %s275
      %p277 = scmp.lt.s32.totalorder %s21, 0
      %s278 = scalar_select %p277, %s21, 0
      %s279 = smul.addr %s278, 8
      %s280 = scalar_lea.vmem %s4, %s279
      %p281 = scmp.lt.s32.totalorder %s21, 0
      %s282 = scalar_select %p281, %s21, 0
      %s283 = smul.addr %s282, 8
      %s284 = scalar_lea.vmem %s5, %s283
      %286 = vst [vmem:[#allocation2] sm:$0xff] 0.0
      %287 = vst [vmem:[#allocation2 + $0x8] sm:$0xff] 0.0
      %288 = vst [vmem:[#allocation2 + $0x10] sm:$0xff] 0.0
      %289 = vst [vmem:[#allocation2 + $0x18] sm:$0xff] 0.0
      %290 = vst [vmem:[#allocation2 + $0x20] sm:$0xff] 0.0
      %291 = vst [vmem:[#allocation2 + $0x28] sm:$0xff] 0.0
      %vm292 = vcmask 80896
      %293 = vst.msk [vmem:[#allocation2 + $0x30] sm:$0xff] %vm292, 0.0
      %v294 = vld [vmem:[%s267] sm:$0xff]
      %v295 = vld [vmem:[%s267 + $0x8] sm:$0xff]
      %v296 = vld [vmem:[%s267 + $0x10] sm:$0xff]
      %v297 = vld [vmem:[%s267 + $0x18] sm:$0xf]
      %v298 = vld [vmem:[#allocation2] sm:$0xff]
      %v299 = vld [vmem:[#allocation2 + $0x8] sm:$0xff]
      %v300 = vld [vmem:[#allocation2 + $0x10] sm:$0xff]
      %v301 = vld [vmem:[#allocation2 + $0x18] sm:$0xff]
      %v302 = vld [vmem:[#allocation2 + $0x20] sm:$0xff]
      %v303 = vld [vmem:[#allocation2 + $0x28] sm:$0xff]
      %v304 = vld [vmem:[#allocation2 + $0x30] sm:$0xff]
      %v305 = vld [vmem:[%s262] sm:$0xf]
      %v310 = vunpack.c.l.b16 %v294
      %v311 = vunpack.c.h.b16 %v294
      %v312 = vunpack.c.l.b16 %v295
      %v313 = vunpack.c.h.b16 %v295
      %v314 = vunpack.c.l.b16 %v296
      %v315 = vunpack.c.h.b16 %v296
      %v316 = vunpack.c.l.b16 %v297
      %v317 = vpack.c.b16 %v310, %v310
      %v318 = vpack.c.b16 %v311, %v311
      %v319 = vpack.c.b16 %v312, %v312
      %v320 = vpack.c.b16 %v313, %v313
      %v321 = vpack.c.b16 %v314, %v314
      %v322 = vpack.c.b16 %v315, %v315
      %v323 = vpack.c.b16 %v316, %v316
      %vm324 = vcmask 64512
      %v326 = vsel %vm324, %v305, 0
      %vm328 = vcmask 1043456
      %v330 = vsel %vm328, %v317, 0
      %v333 = vsel %vm328, %v318, 0
      %v336 = vsel %vm328, %v319, 0
      %v339 = vsel %vm328, %v320, 0
      %v342 = vsel %vm328, %v321, 0
      %v345 = vsel %vm328, %v322, 0
      %v348 = vsel %vm328, %v323, 0
      %350 = vmatprep.subr.bf16.mxu0 %v333
      %351 = vmatpush1.bf16.msra.mxu0 %v330
      %352 = vmatprep.subr.bf16.mxu0 0
      %353 = vmatpush1.bf16.msra.mxu0 0
      %354 = vmatprep.subr.bf16.mxu0 0
      %355 = vmatpush1.bf16.msra.mxu0 0
      %356 = vmatprep.subr.bf16.mxu0 0
      %357 = vmatpush1.bf16.msra.mxu0 0
      %358 = vmatprep.subr.bf16.mxu0 0
      %359 = vmatpush1.bf16.msra.mxu0 0
      %360 = vmatprep.subr.bf16.mxu0 0
      %361 = vmatpush1.bf16.msra.mxu0 0
      %362 = vmatprep.subr.bf16.mxu0 0
      %363 = vmatpush1.bf16.msra.mxu0 0
      %364 = vmatprep.subr.bf16.mxu0 0
      %365 = vmatpush1.bf16.msra.mxu0 0
      %366 = vmatprep.subr.bf16.mxu0 0
      %367 = vmatpush1.bf16.msra.mxu0 0
      %368 = vmatprep.subr.bf16.mxu0 0
      %369 = vmatpush1.bf16.msra.mxu0 0
      %370 = vmatprep.subr.bf16.mxu0 0
      %371 = vmatpush1.bf16.msra.mxu0 0
      %372 = vmatprep.subr.bf16.mxu0 0
      %373 = vmatpush1.bf16.msra.mxu0 0
      %374 = vmatprep.subr.bf16.mxu0 0
      %375 = vmatpush1.bf16.msra.mxu0 0
      %376 = vmatprep.subr.bf16.mxu0 0
      %377 = vmatpush1.bf16.msra.mxu0 0
      %378 = vmatprep.subr.bf16.mxu0 0
      %379 = vmatpush1.bf16.msra.mxu0 0
      %380 = vmatprep.subr.bf16.mxu0 0
      %381 = vmatpush1.bf16.msra.mxu0 0
      %382 = vmatprep.mubr.bf16.mxu0 0
      %383 = vmatmul.mubr.bf16.gmra.mrb[0].mxu0 %v326
      %v384 = vpop.f32.mrb[0].mxu0
      %v385 = vadd.f32 0.0, %v384
      %v386 = vpop.f32.mrb[0].mxu0
      %v387 = vadd.f32 0.0, %v386
      %v388 = vpop.f32.mrb[0].mxu0
      %v389 = vpop.f32.mrb[0].mxu0
      %390 = vdwg.mxu0
      %391 = vmatprep.subr.bf16.mxu0 %v339
      %392 = vmatpush1.bf16.msra.mxu0 %v336
      %393 = vmatprep.subr.bf16.mxu0 0
      %394 = vmatpush1.bf16.msra.mxu0 0
      %395 = vmatprep.subr.bf16.mxu0 0
      %396 = vmatpush1.bf16.msra.mxu0 0
      %397 = vmatprep.subr.bf16.mxu0 0
      %398 = vmatpush1.bf16.msra.mxu0 0
      %399 = vmatprep.subr.bf16.mxu0 0
      %400 = vmatpush1.bf16.msra.mxu0 0
      %401 = vmatprep.subr.bf16.mxu0 0
      %402 = vmatpush1.bf16.msra.mxu0 0
      %403 = vmatprep.subr.bf16.mxu0 0
      %404 = vmatpush1.bf16.msra.mxu0 0
      %405 = vmatprep.subr.bf16.mxu0 0
      %406 = vmatpush1.bf16.msra.mxu0 0
      %407 = vmatprep.subr.bf16.mxu0 0
      %408 = vmatpush1.bf16.msra.mxu0 0
      %409 = vmatprep.subr.bf16.mxu0 0
      %410 = vmatpush1.bf16.msra.mxu0 0
      %411 = vmatprep.subr.bf16.mxu0 0
      %412 = vmatpush1.bf16.msra.mxu0 0
      %413 = vmatprep.subr.bf16.mxu0 0
      %414 = vmatpush1.bf16.msra.mxu0 0
      %415 = vmatprep.subr.bf16.mxu0 0
      %416 = vmatpush1.bf16.msra.mxu0 0
      %417 = vmatprep.subr.bf16.mxu0 0
      %418 = vmatpush1.bf16.msra.mxu0 0
      %419 = vmatprep.subr.bf16.mxu0 0
      %420 = vmatpush1.bf16.msra.mxu0 0
      %421 = vmatprep.subr.bf16.mxu0 0
      %422 = vmatpush1.bf16.msra.mxu0 0
      %423 = vmatprep.mubr.bf16.mxu0 0
      %424 = vmatmul.mubr.bf16.gmra.mrb[0].mxu0 %v326
      %v425 = vpop.f32.mrb[0].mxu0
      %v426 = vadd.f32 0.0, %v425
      %v427 = vpop.f32.mrb[0].mxu0
      %v428 = vadd.f32 0.0, %v427
      %v429 = vpop.f32.mrb[0].mxu0
      %v430 = vpop.f32.mrb[0].mxu0
      %431 = vdwg.mxu0
      %432 = vmatprep.subr.bf16.mxu0 %v345
      %433 = vmatpush1.bf16.msra.mxu0 %v342
      %434 = vmatprep.subr.bf16.mxu0 0
      %435 = vmatpush1.bf16.msra.mxu0 0
      %436 = vmatprep.subr.bf16.mxu0 0
      %437 = vmatpush1.bf16.msra.mxu0 0
      %438 = vmatprep.subr.bf16.mxu0 0
      %439 = vmatpush1.bf16.msra.mxu0 0
      %440 = vmatprep.subr.bf16.mxu0 0
      %441 = vmatpush1.bf16.msra.mxu0 0
      %442 = vmatprep.subr.bf16.mxu0 0
      %443 = vmatpush1.bf16.msra.mxu0 0
      %444 = vmatprep.subr.bf16.mxu0 0
      %445 = vmatpush1.bf16.msra.mxu0 0
      %446 = vmatprep.subr.bf16.mxu0 0
      %447 = vmatpush1.bf16.msra.mxu0 0
      %448 = vmatprep.subr.bf16.mxu0 0
      %449 = vmatpush1.bf16.msra.mxu0 0
      %450 = vmatprep.subr.bf16.mxu0 0
      %451 = vmatpush1.bf16.msra.mxu0 0
      %452 = vmatprep.subr.bf16.mxu0 0
      %453 = vmatpush1.bf16.msra.mxu0 0
      %454 = vmatprep.subr.bf16.mxu0 0
      %455 = vmatpush1.bf16.msra.mxu0 0
      %456 = vmatprep.subr.bf16.mxu0 0
      %457 = vmatpush1.bf16.msra.mxu0 0
      %458 = vmatprep.subr.bf16.mxu0 0
      %459 = vmatpush1.bf16.msra.mxu0 0
      %460 = vmatprep.subr.bf16.mxu0 0
      %461 = vmatpush1.bf16.msra.mxu0 0
      %462 = vmatprep.subr.bf16.mxu0 0
      %463 = vmatpush1.bf16.msra.mxu0 0
      %464 = vmatprep.mubr.bf16.mxu0 0
      %465 = vmatmul.mubr.bf16.gmra.mrb[0].mxu0 %v326
      %v466 = vpop.f32.mrb[0].mxu0
      %v467 = vadd.f32 0.0, %v466
      %v468 = vpop.f32.mrb[0].mxu0
      %v469 = vadd.f32 0.0, %v468
      %v470 = vpop.f32.mrb[0].mxu0
      %v471 = vpop.f32.mrb[0].mxu0
      %472 = vdwg.mxu0
      %473 = vmatprep.subr.bf16.mxu0 0
      %474 = vmatpush1.bf16.msra.mxu0 %v348
      %475 = vmatprep.subr.bf16.mxu0 0
      %476 = vmatpush1.bf16.msra.mxu0 0
      %477 = vmatprep.subr.bf16.mxu0 0
      %478 = vmatpush1.bf16.msra.mxu0 0
      %479 = vmatprep.subr.bf16.mxu0 0
      %480 = vmatpush1.bf16.msra.mxu0 0
      %481 = vmatprep.subr.bf16.mxu0 0
      %482 = vmatpush1.bf16.msra.mxu0 0
      %483 = vmatprep.subr.bf16.mxu0 0
      %484 = vmatpush1.bf16.msra.mxu0 0
      %485 = vmatprep.subr.bf16.mxu0 0
      %486 = vmatpush1.bf16.msra.mxu0 0
      %487 = vmatprep.subr.bf16.mxu0 0
      %488 = vmatpush1.bf16.msra.mxu0 0
      %489 = vmatprep.subr.bf16.mxu0 0
      %490 = vmatpush1.bf16.msra.mxu0 0
      %491 = vmatprep.subr.bf16.mxu0 0
      %492 = vmatpush1.bf16.msra.mxu0 0
      %493 = vmatprep.subr.bf16.mxu0 0
      %494 = vmatpush1.bf16.msra.mxu0 0
      %495 = vmatprep.subr.bf16.mxu0 0
      %496 = vmatpush1.bf16.msra.mxu0 0
      %497 = vmatprep.subr.bf16.mxu0 0
      %498 = vmatpush1.bf16.msra.mxu0 0
      %499 = vmatprep.subr.bf16.mxu0 0
      %500 = vmatpush1.bf16.msra.mxu0 0
      %501 = vmatprep.subr.bf16.mxu0 0
      %502 = vmatpush1.bf16.msra.mxu0 0
      %503 = vmatprep.subr.bf16.mxu0 0
      %504 = vmatpush1.bf16.msra.mxu0 0
      %505 = vmatprep.mubr.bf16.mxu0 0
      %506 = vmatmul.mubr.bf16.gmra.mrb[0].mxu0 %v326
      %v507 = vpop.f32.mrb[0].mxu0
      %v508 = vadd.f32 0.0, %v507
      %v509 = vpop.f32.mrb[0].mxu0
      %v510 = vpop.f32.mrb[0].mxu0
      %v511 = vpop.f32.mrb[0].mxu0
      %512 = vdwg.mxu0
      %v513 = vadd.f32 %v298, %v385
      %v514 = vadd.f32 %v299, %v387
      %v515 = vadd.f32 %v300, %v426
      %v516 = vadd.f32 %v301, %v428
      %v517 = vadd.f32 %v302, %v467
      %v518 = vadd.f32 %v303, %v469
      %v519 = vadd.f32 %v304, %v508
      %520 = vst [vmem:[#allocation2] sm:$0xff] %v513
      %521 = vst [vmem:[#allocation2 + $0x8] sm:$0xff] %v514
      %522 = vst [vmem:[#allocation2 + $0x10] sm:$0xff] %v515
      %523 = vst [vmem:[#allocation2 + $0x18] sm:$0xff] %v516
      %524 = vst [vmem:[#allocation2 + $0x20] sm:$0xff] %v517
      %525 = vst [vmem:[#allocation2 + $0x28] sm:$0xff] %v518
      %526 = vst.msk [vmem:[#allocation2 + $0x30] sm:$0xff] %vm292, %v519
      %v527 = vld [vmem:[%s267] sm:$0xff]
      %v528 = vld [vmem:[%s267 + $0x8] sm:$0xff]
      %v529 = vld [vmem:[%s267 + $0x10] sm:$0xff]
      %v530 = vld [vmem:[%s267 + $0x18] sm:$0xf]
      %v531 = vld [vmem:[#allocation2] sm:$0xff]
      %v532 = vld [vmem:[#allocation2 + $0x8] sm:$0xff]
      %v533 = vld [vmem:[#allocation2 + $0x10] sm:$0xff]
      %v534 = vld [vmem:[#allocation2 + $0x18] sm:$0xff]
      %v535 = vld [vmem:[#allocation2 + $0x20] sm:$0xff]
      %v536 = vld [vmem:[#allocation2 + $0x28] sm:$0xff]
      %v537 = vld [vmem:[#allocation2 + $0x30] sm:$0xff]
      %s538 = scalar_lea.vmem %s262, 4
      %v539 = vld [vmem:[%s538] sm:$0xf]
      %v544 = vunpack.c.l.b16 %v527
      %v545 = vunpack.c.h.b16 %v527
      %v546 = vunpack.c.l.b16 %v528
      %v547 = vunpack.c.h.b16 %v528
      %v548 = vunpack.c.l.b16 %v529
      %v549 = vunpack.c.h.b16 %v529
      %v550 = vunpack.c.l.b16 %v530
      %v551 = vpack.c.b16 %v544, %v544
      %v552 = vpack.c.b16 %v545, %v545
      %v553 = vpack.c.b16 %v546, %v546
      %v554 = vpack.c.b16 %v547, %v547
      %v555 = vpack.c.b16 %v548, %v548
      %v556 = vpack.c.b16 %v549, %v549
      %v557 = vpack.c.b16 %v550, %v550
      %558 = vrot.lane.b32.xlu0 %v551, 127
      %v559 = vpop.permute.xlu0 %558
      %560 = vrot.lane.b32.xlu0 %v552, 127
      %v561 = vpop.permute.xlu0 %560
      %562 = vrot.lane.b32.xlu0 %v553, 127
      %v563 = vpop.permute.xlu0 %562
      %564 = vrot.lane.b32.xlu0 %v554, 127
      %v565 = vpop.permute.xlu0 %564
      %566 = vrot.lane.b32.xlu0 %v555, 127
      %v567 = vpop.permute.xlu0 %566
      %568 = vrot.lane.b32.xlu0 %v556, 127
      %v569 = vpop.permute.xlu0 %568
      %570 = vrot.lane.b32.xlu0 %v557, 127
      %v571 = vpop.permute.xlu0 %570
      %vm572 = vcmask 1039360
      %v573 = vsel %vm572, %v559, %v561
      %v574 = vsel %vm572, %v561, %v563
      %v575 = vsel %vm572, %v563, %v565
      %v576 = vsel %vm572, %v565, %v567
      %v577 = vsel %vm572, %v567, %v569
      %v578 = vsel %vm572, %v569, %v571
      %v580 = vsel %vm324, %v539, 0
      %v583 = vsel %vm328, %v573, 0
      %v586 = vsel %vm328, %v574, 0
      %v589 = vsel %vm328, %v575, 0
      %v592 = vsel %vm328, %v576, 0
      %v595 = vsel %vm328, %v577, 0
      %v598 = vsel %vm328, %v578, 0
      %v601 = vsel %vm328, %v571, 0
      %603 = vmatprep.subr.bf16.mxu0 %v586
      %604 = vmatpush1.bf16.msra.mxu0 %v583
      %605 = vmatprep.subr.bf16.mxu0 0
      %606 = vmatpush1.bf16.msra.mxu0 0
      %607 = vmatprep.subr.bf16.mxu0 0
      %608 = vmatpush1.bf16.msra.mxu0 0
      %609 = vmatprep.subr.bf16.mxu0 0
      %610 = vmatpush1.bf16.msra.mxu0 0
      %611 = vmatprep.subr.bf16.mxu0 0
      %612 = vmatpush1.bf16.msra.mxu0 0
      %613 = vmatprep.subr.bf16.mxu0 0
      %614 = vmatpush1.bf16.msra.mxu0 0
      %615 = vmatprep.subr.bf16.mxu0 0
      %616 = vmatpush1.bf16.msra.mxu0 0
      %617 = vmatprep.subr.bf16.mxu0 0
      %618 = vmatpush1.bf16.msra.mxu0 0
      %619 = vmatprep.subr.bf16.mxu0 0
      %620 = vmatpush1.bf16.msra.mxu0 0
      %621 = vmatprep.subr.bf16.mxu0 0
      %622 = vmatpush1.bf16.msra.mxu0 0
      %623 = vmatprep.subr.bf16.mxu0 0
      %624 = vmatpush1.bf16.msra.mxu0 0
      %625 = vmatprep.subr.bf16.mxu0 0
      %626 = vmatpush1.bf16.msra.mxu0 0
      %627 = vmatprep.subr.bf16.mxu0 0
      %628 = vmatpush1.bf16.msra.mxu0 0
      %629 = vmatprep.subr.bf16.mxu0 0
      %630 = vmatpush1.bf16.msra.mxu0 0
      %631 = vmatprep.subr.bf16.mxu0 0
      %632 = vmatpush1.bf16.msra.mxu0 0
      %633 = vmatprep.subr.bf16.mxu0 0
      %634 = vmatpush1.bf16.msra.mxu0 0
      %635 = vmatprep.mubr.bf16.mxu0 0
      %636 = vmatmul.mubr.bf16.gmra.mrb[0].mxu0 %v580
      %v637 = vpop.f32.mrb[0].mxu0
      %v638 = vadd.f32 0.0, %v637
      %v639 = vpop.f32.mrb[0].mxu0
      %v640 = vadd.f32 0.0, %v639
      %v641 = vpop.f32.mrb[0].mxu0
      %v642 = vpop.f32.mrb[0].mxu0
      %643 = vdwg.mxu0
      %644 = vmatprep.subr.bf16.mxu0 %v592
      %645 = vmatpush1.bf16.msra.mxu0 %v589
      %646 = vmatprep.subr.bf16.mxu0 0
      %647 = vmatpush1.bf16.msra.mxu0 0
      %648 = vmatprep.subr.bf16.mxu0 0
      %649 = vmatpush1.bf16.msra.mxu0 0
      %650 = vmatprep.subr.bf16.mxu0 0
      %651 = vmatpush1.bf16.msra.mxu0 0
      %652 = vmatprep.subr.bf16.mxu0 0
      %653 = vmatpush1.bf16.msra.mxu0 0
      %654 = vmatprep.subr.bf16.mxu0 0
      %655 = vmatpush1.bf16.msra.mxu0 0
      %656 = vmatprep.subr.bf16.mxu0 0
      %657 = vmatpush1.bf16.msra.mxu0 0
      %658 = vmatprep.subr.bf16.mxu0 0
      %659 = vmatpush1.bf16.msra.mxu0 0
      %660 = vmatprep.subr.bf16.mxu0 0
      %661 = vmatpush1.bf16.msra.mxu0 0
      %662 = vmatprep.subr.bf16.mxu0 0
      %663 = vmatpush1.bf16.msra.mxu0 0
      %664 = vmatprep.subr.bf16.mxu0 0
      %665 = vmatpush1.bf16.msra.mxu0 0
      %666 = vmatprep.subr.bf16.mxu0 0
      %667 = vmatpush1.bf16.msra.mxu0 0
      %668 = vmatprep.subr.bf16.mxu0 0
      %669 = vmatpush1.bf16.msra.mxu0 0
      %670 = vmatprep.subr.bf16.mxu0 0
      %671 = vmatpush1.bf16.msra.mxu0 0
      %672 = vmatprep.subr.bf16.mxu0 0
      %673 = vmatpush1.bf16.msra.mxu0 0
      %674 = vmatprep.subr.bf16.mxu0 0
      %675 = vmatpush1.bf16.msra.mxu0 0
      %676 = vmatprep.mubr.bf16.mxu0 0
      %677 = vmatmul.mubr.bf16.gmra.mrb[0].mxu0 %v580
      %v678 = vpop.f32.mrb[0].mxu0
      %v679 = vadd.f32 0.0, %v678
      %v680 = vpop.f32.mrb[0].mxu0
      %v681 = vadd.f32 0.0, %v680
      %v682 = vpop.f32.mrb[0].mxu0
      %v683 = vpop.f32.mrb[0].mxu0
      %684 = vdwg.mxu0
      %685 = vmatprep.subr.bf16.mxu0 %v598
      %686 = vmatpush1.bf16.msra.mxu0 %v595
      %687 = vmatprep.subr.bf16.mxu0 0
      %688 = vmatpush1.bf16.msra.mxu0 0
      %689 = vmatprep.subr.bf16.mxu0 0
      %690 = vmatpush1.bf16.msra.mxu0 0
      %691 = vmatprep.subr.bf16.mxu0 0
      %692 = vmatpush1.bf16.msra.mxu0 0
      %693 = vmatprep.subr.bf16.mxu0 0
      %694 = vmatpush1.bf16.msra.mxu0 0
      %695 = vmatprep.subr.bf16.mxu0 0
      %696 = vmatpush1.bf16.msra.mxu0 0
      %697 = vmatprep.subr.bf16.mxu0 0
      %698 = vmatpush1.bf16.msra.mxu0 0
      %699 = vmatprep.subr.bf16.mxu0 0
      %700 = vmatpush1.bf16.msra.mxu0 0
      %701 = vmatprep.subr.bf16.mxu0 0
      %702 = vmatpush1.bf16.msra.mxu0 0
      %703 = vmatprep.subr.bf16.mxu0 0
      %704 = vmatpush1.bf16.msra.mxu0 0
      %705 = vmatprep.subr.bf16.mxu0 0
      %706 = vmatpush1.bf16.msra.mxu0 0
      %707 = vmatprep.subr.bf16.mxu0 0
      %708 = vmatpush1.bf16.msra.mxu0 0
      %709 = vmatprep.subr.bf16.mxu0 0
      %710 = vmatpush1.bf16.msra.mxu0 0
      %711 = vmatprep.subr.bf16.mxu0 0
      %712 = vmatpush1.bf16.msra.mxu0 0
      %713 = vmatprep.subr.bf16.mxu0 0
      %714 = vmatpush1.bf16.msra.mxu0 0
      %715 = vmatprep.subr.bf16.mxu0 0
      %716 = vmatpush1.bf16.msra.mxu0 0
      %717 = vmatprep.mubr.bf16.mxu0 0
      %718 = vmatmul.mubr.bf16.gmra.mrb[0].mxu0 %v580
      %v719 = vpop.f32.mrb[0].mxu0
      %v720 = vadd.f32 0.0, %v719
      %v721 = vpop.f32.mrb[0].mxu0
      %v722 = vadd.f32 0.0, %v721
      %v723 = vpop.f32.mrb[0].mxu0
      %v724 = vpop.f32.mrb[0].mxu0
      %725 = vdwg.mxu0
      %726 = vmatprep.subr.bf16.mxu0 0
      %727 = vmatpush1.bf16.msra.mxu0 %v601
      %728 = vmatprep.subr.bf16.mxu0 0
      %729 = vmatpush1.bf16.msra.mxu0 0
      %730 = vmatprep.subr.bf16.mxu0 0
      %731 = vmatpush1.bf16.msra.mxu0 0
      %732 = vmatprep.subr.bf16.mxu0 0
      %733 = vmatpush1.bf16.msra.mxu0 0
      %734 = vmatprep.subr.bf16.mxu0 0
      %735 = vmatpush1.bf16.msra.mxu0 0
      %736 = vmatprep.subr.bf16.mxu0 0
      %737 = vmatpush1.bf16.msra.mxu0 0
      %738 = vmatprep.subr.bf16.mxu0 0
      %739 = vmatpush1.bf16.msra.mxu0 0
      %740 = vmatprep.subr.bf16.mxu0 0
      %741 = vmatpush1.bf16.msra.mxu0 0
      %742 = vmatprep.subr.bf16.mxu0 0
      %743 = vmatpush1.bf16.msra.mxu0 0
      %744 = vmatprep.subr.bf16.mxu0 0
      %745 = vmatpush1.bf16.msra.mxu0 0
      %746 = vmatprep.subr.bf16.mxu0 0
      %747 = vmatpush1.bf16.msra.mxu0 0
      %748 = vmatprep.subr.bf16.mxu0 0
      %749 = vmatpush1.bf16.msra.mxu0 0
      %750 = vmatprep.subr.bf16.mxu0 0
      %751 = vmatpush1.bf16.msra.mxu0 0
      %752 = vmatprep.subr.bf16.mxu0 0
      %753 = vmatpush1.bf16.msra.mxu0 0
      %754 = vmatprep.subr.bf16.mxu0 0
      %755 = vmatpush1.bf16.msra.mxu0 0
      %756 = vmatprep.subr.bf16.mxu0 0
      %757 = vmatpush1.bf16.msra.mxu0 0
      %758 = vmatprep.mubr.bf16.mxu0 0
      %759 = vmatmul.mubr.bf16.gmra.mrb[0].mxu0 %v580
      %v760 = vpop.f32.mrb[0].mxu0
      %v761 = vadd.f32 0.0, %v760
      %v762 = vpop.f32.mrb[0].mxu0
      %v763 = vpop.f32.mrb[0].mxu0
      %v764 = vpop.f32.mrb[0].mxu0
      %765 = vdwg.mxu0
      %v766 = vadd.f32 %v531, %v638
      %v767 = vadd.f32 %v532, %v640
      %v768 = vadd.f32 %v533, %v679
      %v769 = vadd.f32 %v534, %v681
      %v770 = vadd.f32 %v535, %v720
      %v771 = vadd.f32 %v536, %v722
      %v772 = vadd.f32 %v537, %v761
      %773 = vst [vmem:[#allocation2] sm:$0xff] %v766
      %774 = vst [vmem:[#allocation2 + $0x8] sm:$0xff] %v767
      %775 = vst [vmem:[#allocation2 + $0x10] sm:$0xff] %v768
      %776 = vst [vmem:[#allocation2 + $0x18] sm:$0xff] %v769
      %777 = vst [vmem:[#allocation2 + $0x20] sm:$0xff] %v770
      %778 = vst [vmem:[#allocation2 + $0x28] sm:$0xff] %v771
      %779 = vst.msk [vmem:[#allocation2 + $0x30] sm:$0xff] %vm292, %v772
      %v780 = vld [vmem:[%s267] sm:$0xff]
      %v781 = vld [vmem:[%s267 + $0x8] sm:$0xff]
      %v782 = vld [vmem:[%s267 + $0x10] sm:$0xff]
      %v783 = vld [vmem:[%s267 + $0x18] sm:$0xf]
      %v784 = vld [vmem:[#allocation2] sm:$0xff]
      %v785 = vld [vmem:[#allocation2 + $0x8] sm:$0xff]
      %v786 = vld [vmem:[#allocation2 + $0x10] sm:$0xff]
      %v787 = vld [vmem:[#allocation2 + $0x18] sm:$0xff]
      %v788 = vld [vmem:[#allocation2 + $0x20] sm:$0xff]
      %v789 = vld [vmem:[#allocation2 + $0x28] sm:$0xff]
      %v790 = vld [vmem:[#allocation2 + $0x30] sm:$0xff]
      %s791 = scalar_lea.vmem %s262, 8
      %v792 = vld [vmem:[%s791] sm:$0xf]
      %v797 = vunpack.c.l.b16 %v780
      %v798 = vunpack.c.h.b16 %v780
      %v799 = vunpack.c.l.b16 %v781
      %v800 = vunpack.c.h.b16 %v781
      %v801 = vunpack.c.l.b16 %v782
      %v802 = vunpack.c.h.b16 %v782
      %v803 = vunpack.c.l.b16 %v783
      %v804 = vpack.c.b16 %v797, %v797
      %v805 = vpack.c.b16 %v798, %v798
      %v806 = vpack.c.b16 %v799, %v799
      %v807 = vpack.c.b16 %v800, %v800
      %v808 = vpack.c.b16 %v801, %v801
      %v809 = vpack.c.b16 %v802, %v802
      %v810 = vpack.c.b16 %v803, %v803
      %811 = vrot.lane.b32.xlu0 %v804, 126
      %v812 = vpop.permute.xlu0 %811
      %813 = vrot.lane.b32.xlu0 %v805, 126
      %v814 = vpop.permute.xlu0 %813
      %815 = vrot.lane.b32.xlu0 %v806, 126
      %v816 = vpop.permute.xlu0 %815
      %817 = vrot.lane.b32.xlu0 %v807, 126
      %v818 = vpop.permute.xlu0 %817
      %819 = vrot.lane.b32.xlu0 %v808, 126
      %v820 = vpop.permute.xlu0 %819
      %821 = vrot.lane.b32.xlu0 %v809, 126
      %v822 = vpop.permute.xlu0 %821
      %823 = vrot.lane.b32.xlu0 %v810, 126
      %v824 = vpop.permute.xlu0 %823
      %vm825 = vcmask 1031168
      %v826 = vsel %vm825, %v812, %v814
      %v827 = vsel %vm825, %v814, %v816
      %v828 = vsel %vm825, %v816, %v818
      %v829 = vsel %vm825, %v818, %v820
      %v830 = vsel %vm825, %v820, %v822
      %v831 = vsel %vm825, %v822, %v824
      %v833 = vsel %vm324, %v792, 0
      %v836 = vsel %vm328, %v826, 0
      %v839 = vsel %vm328, %v827, 0
      %v842 = vsel %vm328, %v828, 0
      %v845 = vsel %vm328, %v829, 0
      %v848 = vsel %vm328, %v830, 0
      %v851 = vsel %vm328, %v831, 0
      %v854 = vsel %vm328, %v824, 0
      %856 = vmatprep.subr.bf16.mxu0 %v839
      %857 = vmatpush1.bf16.msra.mxu0 %v836
      %858 = vmatprep.subr.bf16.mxu0 0
      %859 = vmatpush1.bf16.msra.mxu0 0
      %860 = vmatprep.subr.bf16.mxu0 0
      %861 = vmatpush1.bf16.msra.mxu0 0
      %862 = vmatprep.subr.bf16.mxu0 0
      %863 = vmatpush1.bf16.msra.mxu0 0
      %864 = vmatprep.subr.bf16.mxu0 0
      %865 = vmatpush1.bf16.msra.mxu0 0
      %866 = vmatprep.subr.bf16.mxu0 0
      %867 = vmatpush1.bf16.msra.mxu0 0
      %868 = vmatprep.subr.bf16.mxu0 0
      %869 = vmatpush1.bf16.msra.mxu0 0
      %870 = vmatprep.subr.bf16.mxu0 0
      %871 = vmatpush1.bf16.msra.mxu0 0
      %872 = vmatprep.subr.bf16.mxu0 0
      %873 = vmatpush1.bf16.msra.mxu0 0
      %874 = vmatprep.subr.bf16.mxu0 0
      %875 = vmatpush1.bf16.msra.mxu0 0
      %876 = vmatprep.subr.bf16.mxu0 0
      %877 = vmatpush1.bf16.msra.mxu0 0
      %878 = vmatprep.subr.bf16.mxu0 0
      %879 = vmatpush1.bf16.msra.mxu0 0
      %880 = vmatprep.subr.bf16.mxu0 0
      %881 = vmatpush1.bf16.msra.mxu0 0
      %882 = vmatprep.subr.bf16.mxu0 0
      %883 = vmatpush1.bf16.msra.mxu0 0
      %884 = vmatprep.subr.bf16.mxu0 0
      %885 = vmatpush1.bf16.msra.mxu0 0
      %886 = vmatprep.subr.bf16.mxu0 0
      %887 = vmatpush1.bf16.msra.mxu0 0
      %888 = vmatprep.mubr.bf16.mxu0 0
      %889 = vmatmul.mubr.bf16.gmra.mrb[0].mxu0 %v833
      %v890 = vpop.f32.mrb[0].mxu0
      %v891 = vadd.f32 0.0, %v890
      %v892 = vpop.f32.mrb[0].mxu0
      %v893 = vadd.f32 0.0, %v892
      %v894 = vpop.f32.mrb[0].mxu0
      %v895 = vpop.f32.mrb[0].mxu0
      %896 = vdwg.mxu0
      %897 = vmatprep.subr.bf16.mxu0 %v845
      %898 = vmatpush1.bf16.msra.mxu0 %v842
      %899 = vmatprep.subr.bf16.mxu0 0
      %900 = vmatpush1.bf16.msra.mxu0 0
      %901 = vmatprep.subr.bf16.mxu0 0
      %902 = vmatpush1.bf16.msra.mxu0 0
      %903 = vmatprep.subr.bf16.mxu0 0
      %904 = vmatpush1.bf16.msra.mxu0 0
      %905 = vmatprep.subr.bf16.mxu0 0
      %906 = vmatpush1.bf16.msra.mxu0 0
      %907 = vmatprep.subr.bf16.mxu0 0
      %908 = vmatpush1.bf16.msra.mxu0 0
      %909 = vmatprep.subr.bf16.mxu0 0
      %910 = vmatpush1.bf16.msra.mxu0 0
      %911 = vmatprep.subr.bf16.mxu0 0
      %912 = vmatpush1.bf16.msra.mxu0 0
      %913 = vmatprep.subr.bf16.mxu0 0
      %914 = vmatpush1.bf16.msra.mxu0 0
      %915 = vmatprep.subr.bf16.mxu0 0
      %916 = vmatpush1.bf16.msra.mxu0 0
      %917 = vmatprep.subr.bf16.mxu0 0
      %918 = vmatpush1.bf16.msra.mxu0 0
      %919 = vmatprep.subr.bf16.mxu0 0
      %920 = vmatpush1.bf16.msra.mxu0 0
      %921 = vmatprep.subr.bf16.mxu0 0
      %922 = vmatpush1.bf16.msra.mxu0 0
      %923 = vmatprep.subr.bf16.mxu0 0
      %924 = vmatpush1.bf16.msra.mxu0 0
      %925 = vmatprep.subr.bf16.mxu0 0
      %926 = vmatpush1.bf16.msra.mxu0 0
      %927 = vmatprep.subr.bf16.mxu0 0
      %928 = vmatpush1.bf16.msra.mxu0 0
      %929 = vmatprep.mubr.bf16.mxu0 0
      %930 = vmatmul.mubr.bf16.gmra.mrb[0].mxu0 %v833
      %v931 = vpop.f32.mrb[0].mxu0
      %v932 = vadd.f32 0.0, %v931
      %v933 = vpop.f32.mrb[0].mxu0
      %v934 = vadd.f32 0.0, %v933
      %v935 = vpop.f32.mrb[0].mxu0
      %v936 = vpop.f32.mrb[0].mxu0
      %937 = vdwg.mxu0
      %938 = vmatprep.subr.bf16.mxu0 %v851
      %939 = vmatpush1.bf16.msra.mxu0 %v848
      %940 = vmatprep.subr.bf16.mxu0 0
      %941 = vmatpush1.bf16.msra.mxu0 0
      %942 = vmatprep.subr.bf16.mxu0 0
      %943 = vmatpush1.bf16.msra.mxu0 0
      %944 = vmatprep.subr.bf16.mxu0 0
      %945 = vmatpush1.bf16.msra.mxu0 0
      %946 = vmatprep.subr.bf16.mxu0 0
      %947 = vmatpush1.bf16.msra.mxu0 0
      %948 = vmatprep.subr.bf16.mxu0 0
      %949 = vmatpush1.bf16.msra.mxu0 0
      %950 = vmatprep.subr.bf16.mxu0 0
      %951 = vmatpush1.bf16.msra.mxu0 0
      %952 = vmatprep.subr.bf16.mxu0 0
      %953 = vmatpush1.bf16.msra.mxu0 0
      %954 = vmatprep.subr.bf16.mxu0 0
      %955 = vmatpush1.bf16.msra.mxu0 0
      %956 = vmatprep.subr.bf16.mxu0 0
      %957 = vmatpush1.bf16.msra.mxu0 0
      %958 = vmatprep.subr.bf16.mxu0 0
      %959 = vmatpush1.bf16.msra.mxu0 0
      %960 = vmatprep.subr.bf16.mxu0 0
      %961 = vmatpush1.bf16.msra.mxu0 0
      %962 = vmatprep.subr.bf16.mxu0 0
      %963 = vmatpush1.bf16.msra.mxu0 0
      %964 = vmatprep.subr.bf16.mxu0 0
      %965 = vmatpush1.bf16.msra.mxu0 0
      %966 = vmatprep.subr.bf16.mxu0 0
      %967 = vmatpush1.bf16.msra.mxu0 0
      %968 = vmatprep.subr.bf16.mxu0 0
      %969 = vmatpush1.bf16.msra.mxu0 0
      %970 = vmatprep.mubr.bf16.mxu0 0
      %971 = vmatmul.mubr.bf16.gmra.mrb[0].mxu0 %v833
      %v972 = vpop.f32.mrb[0].mxu0
      %v973 = vadd.f32 0.0, %v972
      %v974 = vpop.f32.mrb[0].mxu0
      %v975 = vadd.f32 0.0, %v974
      %v976 = vpop.f32.mrb[0].mxu0
      %v977 = vpop.f32.mrb[0].mxu0
      %978 = vdwg.mxu0
      %979 = vmatprep.subr.bf16.mxu0 0
      %980 = vmatpush1.bf16.msra.mxu0 %v854
      %981 = vmatprep.subr.bf16.mxu0 0
      %982 = vmatpush1.bf16.msra.mxu0 0
      %983 = vmatprep.subr.bf16.mxu0 0
      %984 = vmatpush1.bf16.msra.mxu0 0
      %985 = vmatprep.subr.bf16.mxu0 0
      %986 = vmatpush1.bf16.msra.mxu0 0
      %987 = vmatprep.subr.bf16.mxu0 0
      %988 = vmatpush1.bf16.msra.mxu0 0
      %989 = vmatprep.subr.bf16.mxu0 0
      %990 = vmatpush1.bf16.msra.mxu0 0
      %991 = vmatprep.subr.bf16.mxu0 0
      %992 = vmatpush1.bf16.msra.mxu0 0
      %993 = vmatprep.subr.bf16.mxu0 0
      %994 = vmatpush1.bf16.msra.mxu0 0
      %995 = vmatprep.subr.bf16.mxu0 0
      %996 = vmatpush1.bf16.msra.mxu0 0
      %997 = vmatprep.subr.bf16.mxu0 0
      %998 = vmatpush1.bf16.msra.mxu0 0
      %999 = vmatprep.subr.bf16.mxu0 0
      %1000 = vmatpush1.bf16.msra.mxu0 0
      %1001 = vmatprep.subr.bf16.mxu0 0
      %1002 = vmatpush1.bf16.msra.mxu0 0
      %1003 = vmatprep.subr.bf16.mxu0 0
      %1004 = vmatpush1.bf16.msra.mxu0 0
      %1005 = vmatprep.subr.bf16.mxu0 0
      %1006 = vmatpush1.bf16.msra.mxu0 0
      %1007 = vmatprep.subr.bf16.mxu0 0
      %1008 = vmatpush1.bf16.msra.mxu0 0
      %1009 = vmatprep.subr.bf16.mxu0 0
      %1010 = vmatpush1.bf16.msra.mxu0 0
      %1011 = vmatprep.mubr.bf16.mxu0 0
      %1012 = vmatmul.mubr.bf16.gmra.mrb[0].mxu0 %v833
      %v1013 = vpop.f32.mrb[0].mxu0
      %v1014 = vadd.f32 0.0, %v1013
      %v1015 = vpop.f32.mrb[0].mxu0
      %v1016 = vpop.f32.mrb[0].mxu0
      %v1017 = vpop.f32.mrb[0].mxu0
      %1018 = vdwg.mxu0
      %v1019 = vadd.f32 %v784, %v891
      %v1020 = vadd.f32 %v785, %v893
      %v1021 = vadd.f32 %v786, %v932
      %v1022 = vadd.f32 %v787, %v934
      %v1023 = vadd.f32 %v788, %v973
      %v1024 = vadd.f32 %v789, %v975
      %v1025 = vadd.f32 %v790, %v1014
      %1026 = vst [vmem:[#allocation2] sm:$0xff] %v1019
      %1027 = vst [vmem:[#allocation2 + $0x8] sm:$0xff] %v1020
      %1028 = vst [vmem:[#allocation2 + $0x10] sm:$0xff] %v1021
      %1029 = vst [vmem:[#allocation2 + $0x18] sm:$0xff] %v1022
      %1030 = vst [vmem:[#allocation2 + $0x20] sm:$0xff] %v1023
      %1031 = vst [vmem:[#allocation2 + $0x28] sm:$0xff] %v1024
      %1032 = vst.msk [vmem:[#allocation2 + $0x30] sm:$0xff] %vm292, %v1025
      %v1033 = vld [vmem:[%s267] sm:$0xff]
      %v1034 = vld [vmem:[%s267 + $0x8] sm:$0xff]
      %v1035 = vld [vmem:[%s267 + $0x10] sm:$0xff]
      %v1036 = vld [vmem:[%s267 + $0x18] sm:$0xf]
      %v1037 = vld [vmem:[#allocation2] sm:$0xff]
      %v1038 = vld [vmem:[#allocation2 + $0x8] sm:$0xff]
      %v1039 = vld [vmem:[#allocation2 + $0x10] sm:$0xff]
      %v1040 = vld [vmem:[#allocation2 + $0x18] sm:$0xff]
      %v1041 = vld [vmem:[#allocation2 + $0x20] sm:$0xff]
      %v1042 = vld [vmem:[#allocation2 + $0x28] sm:$0xff]
      %v1043 = vld [vmem:[#allocation2 + $0x30] sm:$0xff]
      %s1044 = scalar_lea.vmem %s262, 12
      %v1045 = vld [vmem:[%s1044] sm:$0xf]
      %v1050 = vunpack.c.l.b16 %v1033
      %v1051 = vunpack.c.h.b16 %v1033
      %v1052 = vunpack.c.l.b16 %v1034
      %v1053 = vunpack.c.h.b16 %v1034
      %v1054 = vunpack.c.l.b16 %v1035
      %v1055 = vunpack.c.h.b16 %v1035
      %v1056 = vunpack.c.l.b16 %v1036
      %v1057 = vpack.c.b16 %v1050, %v1050
      %v1058 = vpack.c.b16 %v1051, %v1051
      %v1059 = vpack.c.b16 %v1052, %v1052
      %v1060 = vpack.c.b16 %v1053, %v1053
      %v1061 = vpack.c.b16 %v1054, %v1054
      %v1062 = vpack.c.b16 %v1055, %v1055
      %v1063 = vpack.c.b16 %v1056, %v1056
      %1064 = vrot.lane.b32.xlu0 %v1057, 118
      %v1065 = vpop.permute.xlu0 %1064
      %1066 = vrot.lane.b32.xlu0 %v1058, 118
      %v1067 = vpop.permute.xlu0 %1066
      %1068 = vrot.lane.b32.xlu0 %v1059, 118
      %v1069 = vpop.permute.xlu0 %1068
      %1070 = vrot.lane.b32.xlu0 %v1060, 118
      %v1071 = vpop.permute.xlu0 %1070
      %1072 = vrot.lane.b32.xlu0 %v1061, 118
      %v1073 = vpop.permute.xlu0 %1072
      %1074 = vrot.lane.b32.xlu0 %v1062, 118
      %v1075 = vpop.permute.xlu0 %1074
      %1076 = vrot.lane.b32.xlu0 %v1063, 118
      %v1077 = vpop.permute.xlu0 %1076
      %vm1078 = vcmask 965632
      %v1079 = vsel %vm1078, %v1065, %v1067
      %v1080 = vsel %vm1078, %v1067, %v1069
      %v1081 = vsel %vm1078, %v1069, %v1071
      %v1082 = vsel %vm1078, %v1071, %v1073
      %v1083 = vsel %vm1078, %v1073, %v1075
      %v1084 = vsel %vm1078, %v1075, %v1077
      %v1086 = vsel %vm324, %v1045, 0
      %v1089 = vsel %vm328, %v1079, 0
      %v1092 = vsel %vm328, %v1080, 0
      %v1095 = vsel %vm328, %v1081, 0
      %v1098 = vsel %vm328, %v1082, 0
      %v1101 = vsel %vm328, %v1083, 0
      %v1104 = vsel %vm328, %v1084, 0
      %v1107 = vsel %vm328, %v1077, 0
      %1109 = vmatprep.subr.bf16.mxu0 %v1092
      %1110 = vmatpush1.bf16.msra.mxu0 %v1089
      %1111 = vmatprep.subr.bf16.mxu0 0
      %1112 = vmatpush1.bf16.msra.mxu0 0
      %1113 = vmatprep.subr.bf16.mxu0 0
      %1114 = vmatpush1.bf16.msra.mxu0 0
      %1115 = vmatprep.subr.bf16.mxu0 0
      %1116 = vmatpush1.bf16.msra.mxu0 0
      %1117 = vmatprep.subr.bf16.mxu0 0
      %1118 = vmatpush1.bf16.msra.mxu0 0
      %1119 = vmatprep.subr.bf16.mxu0 0
      %1120 = vmatpush1.bf16.msra.mxu0 0
      %1121 = vmatprep.subr.bf16.mxu0 0
      %1122 = vmatpush1.bf16.msra.mxu0 0
      %1123 = vmatprep.subr.bf16.mxu0 0
      %1124 = vmatpush1.bf16.msra.mxu0 0
      %1125 = vmatprep.subr.bf16.mxu0 0
      %1126 = vmatpush1.bf16.msra.mxu0 0
      %1127 = vmatprep.subr.bf16.mxu0 0
      %1128 = vmatpush1.bf16.msra.mxu0 0
      %1129 = vmatprep.subr.bf16.mxu0 0
      %1130 = vmatpush1.bf16.msra.mxu0 0
      %1131 = vmatprep.subr.bf16.mxu0 0
      %1132 = vmatpush1.bf16.msra.mxu0 0
      %1133 = vmatprep.subr.bf16.mxu0 0
      %1134 = vmatpush1.bf16.msra.mxu0 0
      %1135 = vmatprep.subr.bf16.mxu0 0
      %1136 = vmatpush1.bf16.msra.mxu0 0
      %1137 = vmatprep.subr.bf16.mxu0 0
      %1138 = vmatpush1.bf16.msra.mxu0 0
      %1139 = vmatprep.subr.bf16.mxu0 0
      %1140 = vmatpush1.bf16.msra.mxu0 0
      %1141 = vmatprep.mubr.bf16.mxu0 0
      %1142 = vmatmul.mubr.bf16.gmra.mrb[0].mxu0 %v1086
      %v1143 = vpop.f32.mrb[0].mxu0
      %v1144 = vadd.f32 0.0, %v1143
      %v1145 = vpop.f32.mrb[0].mxu0
      %v1146 = vadd.f32 0.0, %v1145
      %v1147 = vpop.f32.mrb[0].mxu0
      %v1148 = vpop.f32.mrb[0].mxu0
      %1149 = vdwg.mxu0
      %1150 = vmatprep.subr.bf16.mxu0 %v1098
      %1151 = vmatpush1.bf16.msra.mxu0 %v1095
      %1152 = vmatprep.subr.bf16.mxu0 0
      %1153 = vmatpush1.bf16.msra.mxu0 0
      %1154 = vmatprep.subr.bf16.mxu0 0
      %1155 = vmatpush1.bf16.msra.mxu0 0
      %1156 = vmatprep.subr.bf16.mxu0 0
      %1157 = vmatpush1.bf16.msra.mxu0 0
      %1158 = vmatprep.subr.bf16.mxu0 0
      %1159 = vmatpush1.bf16.msra.mxu0 0
      %1160 = vmatprep.subr.bf16.mxu0 0
      %1161 = vmatpush1.bf16.msra.mxu0 0
      %1162 = vmatprep.subr.bf16.mxu0 0
      %1163 = vmatpush1.bf16.msra.mxu0 0
      %1164 = vmatprep.subr.bf16.mxu0 0
      %1165 = vmatpush1.bf16.msra.mxu0 0
      %1166 = vmatprep.subr.bf16.mxu0 0
      %1167 = vmatpush1.bf16.msra.mxu0 0
      %1168 = vmatprep.subr.bf16.mxu0 0
      %1169 = vmatpush1.bf16.msra.mxu0 0
      %1170 = vmatprep.subr.bf16.mxu0 0
      %1171 = vmatpush1.bf16.msra.mxu0 0
      %1172 = vmatprep.subr.bf16.mxu0 0
      %1173 = vmatpush1.bf16.msra.mxu0 0
      %1174 = vmatprep.subr.bf16.mxu0 0
      %1175 = vmatpush1.bf16.msra.mxu0 0
      %1176 = vmatprep.subr.bf16.mxu0 0
      %1177 = vmatpush1.bf16.msra.mxu0 0
      %1178 = vmatprep.subr.bf16.mxu0 0
      %1179 = vmatpush1.bf16.msra.mxu0 0
      %1180 = vmatprep.subr.bf16.mxu0 0
      %1181 = vmatpush1.bf16.msra.mxu0 0
      %1182 = vmatprep.mubr.bf16.mxu0 0
      %1183 = vmatmul.mubr.bf16.gmra.mrb[0].mxu0 %v1086
      %v1184 = vpop.f32.mrb[0].mxu0
      %v1185 = vadd.f32 0.0, %v1184
      %v1186 = vpop.f32.mrb[0].mxu0
      %v1187 = vadd.f32 0.0, %v1186
      %v1188 = vpop.f32.mrb[0].mxu0
      %v1189 = vpop.f32.mrb[0].mxu0
      %1190 = vdwg.mxu0
      %1191 = vmatprep.subr.bf16.mxu0 %v1104
      %1192 = vmatpush1.bf16.msra.mxu0 %v1101
      %1193 = vmatprep.subr.bf16.mxu0 0
      %1194 = vmatpush1.bf16.msra.mxu0 0
      %1195 = vmatprep.subr.bf16.mxu0 0
      %1196 = vmatpush1.bf16.msra.mxu0 0
      %1197 = vmatprep.subr.bf16.mxu0 0
      %1198 = vmatpush1.bf16.msra.mxu0 0
      %1199 = vmatprep.subr.bf16.mxu0 0
      %1200 = vmatpush1.bf16.msra.mxu0 0
      %1201 = vmatprep.subr.bf16.mxu0 0
      %1202 = vmatpush1.bf16.msra.mxu0 0
      %1203 = vmatprep.subr.bf16.mxu0 0
      %1204 = vmatpush1.bf16.msra.mxu0 0
      %1205 = vmatprep.subr.bf16.mxu0 0
      %1206 = vmatpush1.bf16.msra.mxu0 0
      %1207 = vmatprep.subr.bf16.mxu0 0
      %1208 = vmatpush1.bf16.msra.mxu0 0
      %1209 = vmatprep.subr.bf16.mxu0 0
      %1210 = vmatpush1.bf16.msra.mxu0 0
      %1211 = vmatprep.subr.bf16.mxu0 0
      %1212 = vmatpush1.bf16.msra.mxu0 0
      %1213 = vmatprep.subr.bf16.mxu0 0
      %1214 = vmatpush1.bf16.msra.mxu0 0
      %1215 = vmatprep.subr.bf16.mxu0 0
      %1216 = vmatpush1.bf16.msra.mxu0 0
      %1217 = vmatprep.subr.bf16.mxu0 0
      %1218 = vmatpush1.bf16.msra.mxu0 0
      %1219 = vmatprep.subr.bf16.mxu0 0
      %1220 = vmatpush1.bf16.msra.mxu0 0
      %1221 = vmatprep.subr.bf16.mxu0 0
      %1222 = vmatpush1.bf16.msra.mxu0 0
      %1223 = vmatprep.mubr.bf16.mxu0 0
      %1224 = vmatmul.mubr.bf16.gmra.mrb[0].mxu0 %v1086
      %v1225 = vpop.f32.mrb[0].mxu0
      %v1226 = vadd.f32 0.0, %v1225
      %v1227 = vpop.f32.mrb[0].mxu0
      %v1228 = vadd.f32 0.0, %v1227
      %v1229 = vpop.f32.mrb[0].mxu0
      %v1230 = vpop.f32.mrb[0].mxu0
      %1231 = vdwg.mxu0
      %1232 = vmatprep.subr.bf16.mxu0 0
      %1233 = vmatpush1.bf16.msra.mxu0 %v1107
      %1234 = vmatprep.subr.bf16.mxu0 0
      %1235 = vmatpush1.bf16.msra.mxu0 0
      %1236 = vmatprep.subr.bf16.mxu0 0
      %1237 = vmatpush1.bf16.msra.mxu0 0
      %1238 = vmatprep.subr.bf16.mxu0 0
      %1239 = vmatpush1.bf16.msra.mxu0 0
      %1240 = vmatprep.subr.bf16.mxu0 0
      %1241 = vmatpush1.bf16.msra.mxu0 0
      %1242 = vmatprep.subr.bf16.mxu0 0
      %1243 = vmatpush1.bf16.msra.mxu0 0
      %1244 = vmatprep.subr.bf16.mxu0 0
      %1245 = vmatpush1.bf16.msra.mxu0 0
      %1246 = vmatprep.subr.bf16.mxu0 0
      %1247 = vmatpush1.bf16.msra.mxu0 0
      %1248 = vmatprep.subr.bf16.mxu0 0
      %1249 = vmatpush1.bf16.msra.mxu0 0
      %1250 = vmatprep.subr.bf16.mxu0 0
      %1251 = vmatpush1.bf16.msra.mxu0 0
      %1252 = vmatprep.subr.bf16.mxu0 0
      %1253 = vmatpush1.bf16.msra.mxu0 0
      %1254 = vmatprep.subr.bf16.mxu0 0
      %1255 = vmatpush1.bf16.msra.mxu0 0
      %1256 = vmatprep.subr.bf16.mxu0 0
      %1257 = vmatpush1.bf16.msra.mxu0 0
      %1258 = vmatprep.subr.bf16.mxu0 0
      %1259 = vmatpush1.bf16.msra.mxu0 0
      %1260 = vmatprep.subr.bf16.mxu0 0
      %1261 = vmatpush1.bf16.msra.mxu0 0
      %1262 = vmatprep.subr.bf16.mxu0 0
      %1263 = vmatpush1.bf16.msra.mxu0 0
      %1264 = vmatprep.mubr.bf16.mxu0 0
      %1265 = vmatmul.mubr.bf16.gmra.mrb[0].mxu0 %v1086
      %v1266 = vpop.f32.mrb[0].mxu0
      %v1267 = vadd.f32 0.0, %v1266
      %v1268 = vpop.f32.mrb[0].mxu0
      %v1269 = vpop.f32.mrb[0].mxu0
      %v1270 = vpop.f32.mrb[0].mxu0
      %1271 = vdwg.mxu0
      %v1272 = vadd.f32 %v1037, %v1144
      %v1273 = vadd.f32 %v1038, %v1146
      %v1274 = vadd.f32 %v1039, %v1185
      %v1275 = vadd.f32 %v1040, %v1187
      %v1276 = vadd.f32 %v1041, %v1226
      %v1277 = vadd.f32 %v1042, %v1228
      %v1278 = vadd.f32 %v1043, %v1267
      %1279 = vst [vmem:[#allocation2] sm:$0xff] %v1272
      %1280 = vst [vmem:[#allocation2 + $0x8] sm:$0xff] %v1273
      %1281 = vst [vmem:[#allocation2 + $0x10] sm:$0xff] %v1274
      %1282 = vst [vmem:[#allocation2 + $0x18] sm:$0xff] %v1275
      %1283 = vst [vmem:[#allocation2 + $0x20] sm:$0xff] %v1276
      %1284 = vst [vmem:[#allocation2 + $0x28] sm:$0xff] %v1277
      %1285 = vst.msk [vmem:[#allocation2 + $0x30] sm:$0xff] %vm292, %v1278
      %v1286 = vld [vmem:[%s267] sm:$0xff]
      %v1287 = vld [vmem:[%s267 + $0x8] sm:$0xff]
      %v1288 = vld [vmem:[%s267 + $0x10] sm:$0xff]
      %v1289 = vld [vmem:[%s267 + $0x18] sm:$0xf]
      %v1290 = vld [vmem:[#allocation2] sm:$0xff]
      %v1291 = vld [vmem:[#allocation2 + $0x8] sm:$0xff]
      %v1292 = vld [vmem:[#allocation2 + $0x10] sm:$0xff]
      %v1293 = vld [vmem:[#allocation2 + $0x18] sm:$0xff]
      %v1294 = vld [vmem:[#allocation2 + $0x20] sm:$0xff]
      %v1295 = vld [vmem:[#allocation2 + $0x28] sm:$0xff]
      %v1296 = vld [vmem:[#allocation2 + $0x30] sm:$0xff]
      %s1297 = scalar_lea.vmem %s262, 16
      %v1298 = vld [vmem:[%s1297] sm:$0xf]
      %v1303 = vunpack.c.l.b16 %v1286
      %v1304 = vunpack.c.h.b16 %v1286
      %v1305 = vunpack.c.l.b16 %v1287
      %v1306 = vunpack.c.h.b16 %v1287
      %v1307 = vunpack.c.l.b16 %v1288
      %v1308 = vunpack.c.h.b16 %v1288
      %v1309 = vunpack.c.l.b16 %v1289
      %v1310 = vpack.c.b16 %v1303, %v1303
      %v1311 = vpack.c.b16 %v1304, %v1304
      %v1312 = vpack.c.b16 %v1305, %v1305
      %v1313 = vpack.c.b16 %v1306, %v1306
      %v1314 = vpack.c.b16 %v1307, %v1307
      %v1315 = vpack.c.b16 %v1308, %v1308
      %v1316 = vpack.c.b16 %v1309, %v1309
      %1317 = vrot.lane.b32.xlu0 %v1310, 117
      %v1318 = vpop.permute.xlu0 %1317
      %1319 = vrot.lane.b32.xlu0 %v1311, 117
      %v1320 = vpop.permute.xlu0 %1319
      %1321 = vrot.lane.b32.xlu0 %v1312, 117
      %v1322 = vpop.permute.xlu0 %1321
      %1323 = vrot.lane.b32.xlu0 %v1313, 117
      %v1324 = vpop.permute.xlu0 %1323
      %1325 = vrot.lane.b32.xlu0 %v1314, 117
      %v1326 = vpop.permute.xlu0 %1325
      %1327 = vrot.lane.b32.xlu0 %v1315, 117
      %v1328 = vpop.permute.xlu0 %1327
      %1329 = vrot.lane.b32.xlu0 %v1316, 117
      %v1330 = vpop.permute.xlu0 %1329
      %vm1331 = vcmask 957440
      %v1332 = vsel %vm1331, %v1318, %v1320
      %v1333 = vsel %vm1331, %v1320, %v1322
      %v1334 = vsel %vm1331, %v1322, %v1324
      %v1335 = vsel %vm1331, %v1324, %v1326
      %v1336 = vsel %vm1331, %v1326, %v1328
      %v1337 = vsel %vm1331, %v1328, %v1330
      %v1339 = vsel %vm324, %v1298, 0
      %v1342 = vsel %vm328, %v1332, 0
      %v1345 = vsel %vm328, %v1333, 0
      %v1348 = vsel %vm328, %v1334, 0
      %v1351 = vsel %vm328, %v1335, 0
      %v1354 = vsel %vm328, %v1336, 0
      %v1357 = vsel %vm328, %v1337, 0
      %v1360 = vsel %vm328, %v1330, 0
      %1362 = vmatprep.subr.bf16.mxu0 %v1345
      %1363 = vmatpush1.bf16.msra.mxu0 %v1342
      %1364 = vmatprep.subr.bf16.mxu0 0
      %1365 = vmatpush1.bf16.msra.mxu0 0
      %1366 = vmatprep.subr.bf16.mxu0 0
      %1367 = vmatpush1.bf16.msra.mxu0 0
      %1368 = vmatprep.subr.bf16.mxu0 0
      %1369 = vmatpush1.bf16.msra.mxu0 0
      %1370 = vmatprep.subr.bf16.mxu0 0
      %1371 = vmatpush1.bf16.msra.mxu0 0
      %1372 = vmatprep.subr.bf16.mxu0 0
      %1373 = vmatpush1.bf16.msra.mxu0 0
      %1374 = vmatprep.subr.bf16.mxu0 0
      %1375 = vmatpush1.bf16.msra.mxu0 0
      %1376 = vmatprep.subr.bf16.mxu0 0
      %1377 = vmatpush1.bf16.msra.mxu0 0
      %1378 = vmatprep.subr.bf16.mxu0 0
      %1379 = vmatpush1.bf16.msra.mxu0 0
      %1380 = vmatprep.subr.bf16.mxu0 0
      %1381 = vmatpush1.bf16.msra.mxu0 0
      %1382 = vmatprep.subr.bf16.mxu0 0
      %1383 = vmatpush1.bf16.msra.mxu0 0
      %1384 = vmatprep.subr.bf16.mxu0 0
      %1385 = vmatpush1.bf16.msra.mxu0 0
      %1386 = vmatprep.subr.bf16.mxu0 0
      %1387 = vmatpush1.bf16.msra.mxu0 0
      %1388 = vmatprep.subr.bf16.mxu0 0
      %1389 = vmatpush1.bf16.msra.mxu0 0
      %1390 = vmatprep.subr.bf16.mxu0 0
      %1391 = vmatpush1.bf16.msra.mxu0 0
      %1392 = vmatprep.subr.bf16.mxu0 0
      %1393 = vmatpush1.bf16.msra.mxu0 0
      %1394 = vmatprep.mubr.bf16.mxu0 0
      %1395 = vmatmul.mubr.bf16.gmra.mrb[0].mxu0 %v1339
      %v1396 = vpop.f32.mrb[0].mxu0
      %v1397 = vadd.f32 0.0, %v1396
      %v1398 = vpop.f32.mrb[0].mxu0
      %v1399 = vadd.f32 0.0, %v1398
      %v1400 = vpop.f32.mrb[0].mxu0
      %v1401 = vpop.f32.mrb[0].mxu0
      %1402 = vdwg.mxu0
      %1403 = vmatprep.subr.bf16.mxu0 %v1351
      %1404 = vmatpush1.bf16.msra.mxu0 %v1348
      %1405 = vmatprep.subr.bf16.mxu0 0
      %1406 = vmatpush1.bf16.msra.mxu0 0
      %1407 = vmatprep.subr.bf16.mxu0 0
      %1408 = vmatpush1.bf16.msra.mxu0 0
      %1409 = vmatprep.subr.bf16.mxu0 0
      %1410 = vmatpush1.bf16.msra.mxu0 0
      %1411 = vmatprep.subr.bf16.mxu0 0
      %1412 = vmatpush1.bf16.msra.mxu0 0
      %1413 = vmatprep.subr.bf16.mxu0 0
      %1414 = vmatpush1.bf16.msra.mxu0 0
      %1415 = vmatprep.subr.bf16.mxu0 0
      %1416 = vmatpush1.bf16.msra.mxu0 0
      %1417 = vmatprep.subr.bf16.mxu0 0
      %1418 = vmatpush1.bf16.msra.mxu0 0
      %1419 = vmatprep.subr.bf16.mxu0 0
      %1420 = vmatpush1.bf16.msra.mxu0 0
      %1421 = vmatprep.subr.bf16.mxu0 0
      %1422 = vmatpush1.bf16.msra.mxu0 0
      %1423 = vmatprep.subr.bf16.mxu0 0
      %1424 = vmatpush1.bf16.msra.mxu0 0
      %1425 = vmatprep.subr.bf16.mxu0 0
      %1426 = vmatpush1.bf16.msra.mxu0 0
      %1427 = vmatprep.subr.bf16.mxu0 0
      %1428 = vmatpush1.bf16.msra.mxu0 0
      %1429 = vmatprep.subr.bf16.mxu0 0
      %1430 = vmatpush1.bf16.msra.mxu0 0
      %1431 = vmatprep.subr.bf16.mxu0 0
      %1432 = vmatpush1.bf16.msra.mxu0 0
      %1433 = vmatprep.subr.bf16.mxu0 0
      %1434 = vmatpush1.bf16.msra.mxu0 0
      %1435 = vmatprep.mubr.bf16.mxu0 0
      %1436 = vmatmul.mubr.bf16.gmra.mrb[0].mxu0 %v1339
      %v1437 = vpop.f32.mrb[0].mxu0
      %v1438 = vadd.f32 0.0, %v1437
      %v1439 = vpop.f32.mrb[0].mxu0
      %v1440 = vadd.f32 0.0, %v1439
      %v1441 = vpop.f32.mrb[0].mxu0
      %v1442 = vpop.f32.mrb[0].mxu0
      %1443 = vdwg.mxu0
      %1444 = vmatprep.subr.bf16.mxu0 %v1357
      %1445 = vmatpush1.bf16.msra.mxu0 %v1354
      %1446 = vmatprep.subr.bf16.mxu0 0
      %1447 = vmatpush1.bf16.msra.mxu0 0
      %1448 = vmatprep.subr.bf16.mxu0 0
      %1449 = vmatpush1.bf16.msra.mxu0 0
      %1450 = vmatprep.subr.bf16.mxu0 0
      %1451 = vmatpush1.bf16.msra.mxu0 0
      %1452 = vmatprep.subr.bf16.mxu0 0
      %1453 = vmatpush1.bf16.msra.mxu0 0
      %1454 = vmatprep.subr.bf16.mxu0 0
      %1455 = vmatpush1.bf16.msra.mxu0 0
      %1456 = vmatprep.subr.bf16.mxu0 0
      %1457 = vmatpush1.bf16.msra.mxu0 0
      %1458 = vmatprep.subr.bf16.mxu0 0
      %1459 = vmatpush1.bf16.msra.mxu0 0
      %1460 = vmatprep.subr.bf16.mxu0 0
      %1461 = vmatpush1.bf16.msra.mxu0 0
      %1462 = vmatprep.subr.bf16.mxu0 0
      %1463 = vmatpush1.bf16.msra.mxu0 0
      %1464 = vmatprep.subr.bf16.mxu0 0
      %1465 = vmatpush1.bf16.msra.mxu0 0
      %1466 = vmatprep.subr.bf16.mxu0 0
      %1467 = vmatpush1.bf16.msra.mxu0 0
      %1468 = vmatprep.subr.bf16.mxu0 0
      %1469 = vmatpush1.bf16.msra.mxu0 0
      %1470 = vmatprep.subr.bf16.mxu0 0
      %1471 = vmatpush1.bf16.msra.mxu0 0
      %1472 = vmatprep.subr.bf16.mxu0 0
      %1473 = vmatpush1.bf16.msra.mxu0 0
      %1474 = vmatprep.subr.bf16.mxu0 0
      %1475 = vmatpush1.bf16.msra.mxu0 0
      %1476 = vmatprep.mubr.bf16.mxu0 0
      %1477 = vmatmul.mubr.bf16.gmra.mrb[0].mxu0 %v1339
      %v1478 = vpop.f32.mrb[0].mxu0
      %v1479 = vadd.f32 0.0, %v1478
      %v1480 = vpop.f32.mrb[0].mxu0
      %v1481 = vadd.f32 0.0, %v1480
      %v1482 = vpop.f32.mrb[0].mxu0
      %v1483 = vpop.f32.mrb[0].mxu0
      %1484 = vdwg.mxu0
      %1485 = vmatprep.subr.bf16.mxu0 0
      %1486 = vmatpush1.bf16.msra.mxu0 %v1360
      %1487 = vmatprep.subr.bf16.mxu0 0
      %1488 = vmatpush1.bf16.msra.mxu0 0
      %1489 = vmatprep.subr.bf16.mxu0 0
      %1490 = vmatpush1.bf16.msra.mxu0 0
      %1491 = vmatprep.subr.bf16.mxu0 0
      %1492 = vmatpush1.bf16.msra.mxu0 0
      %1493 = vmatprep.subr.bf16.mxu0 0
      %1494 = vmatpush1.bf16.msra.mxu0 0
      %1495 = vmatprep.subr.bf16.mxu0 0
      %1496 = vmatpush1.bf16.msra.mxu0 0
      %1497 = vmatprep.subr.bf16.mxu0 0
      %1498 = vmatpush1.bf16.msra.mxu0 0
      %1499 = vmatprep.subr.bf16.mxu0 0
      %1500 = vmatpush1.bf16.msra.mxu0 0
      %1501 = vmatprep.subr.bf16.mxu0 0
      %1502 = vmatpush1.bf16.msra.mxu0 0
      %1503 = vmatprep.subr.bf16.mxu0 0
      %1504 = vmatpush1.bf16.msra.mxu0 0
      %1505 = vmatprep.subr.bf16.mxu0 0
      %1506 = vmatpush1.bf16.msra.mxu0 0
      %1507 = vmatprep.subr.bf16.mxu0 0
      %1508 = vmatpush1.bf16.msra.mxu0 0
      %1509 = vmatprep.subr.bf16.mxu0 0
      %1510 = vmatpush1.bf16.msra.mxu0 0
      %1511 = vmatprep.subr.bf16.mxu0 0
      %1512 = vmatpush1.bf16.msra.mxu0 0
      %1513 = vmatprep.subr.bf16.mxu0 0
      %1514 = vmatpush1.bf16.msra.mxu0 0
      %1515 = vmatprep.subr.bf16.mxu0 0
      %1516 = vmatpush1.bf16.msra.mxu0 0
      %1517 = vmatprep.mubr.bf16.mxu0 0
      %1518 = vmatmul.mubr.bf16.gmra.mrb[0].mxu0 %v1339
      %v1519 = vpop.f32.mrb[0].mxu0
      %v1520 = vadd.f32 0.0, %v1519
      %v1521 = vpop.f32.mrb[0].mxu0
      %v1522 = vpop.f32.mrb[0].mxu0
      %v1523 = vpop.f32.mrb[0].mxu0
      %1524 = vdwg.mxu0
      %v1525 = vadd.f32 %v1290, %v1397
      %v1526 = vadd.f32 %v1291, %v1399
      %v1527 = vadd.f32 %v1292, %v1438
      %v1528 = vadd.f32 %v1293, %v1440
      %v1529 = vadd.f32 %v1294, %v1479
      %v1530 = vadd.f32 %v1295, %v1481
      %v1531 = vadd.f32 %v1296, %v1520
      %1532 = vst [vmem:[#allocation2] sm:$0xff] %v1525
      %1533 = vst [vmem:[#allocation2 + $0x8] sm:$0xff] %v1526
      %1534 = vst [vmem:[#allocation2 + $0x10] sm:$0xff] %v1527
      %1535 = vst [vmem:[#allocation2 + $0x18] sm:$0xff] %v1528
      %1536 = vst [vmem:[#allocation2 + $0x20] sm:$0xff] %v1529
      %1537 = vst [vmem:[#allocation2 + $0x28] sm:$0xff] %v1530
      %1538 = vst.msk [vmem:[#allocation2 + $0x30] sm:$0xff] %vm292, %v1531
      %v1539 = vld [vmem:[%s267] sm:$0xff]
      %v1540 = vld [vmem:[%s267 + $0x8] sm:$0xff]
      %v1541 = vld [vmem:[%s267 + $0x10] sm:$0xff]
      %v1542 = vld [vmem:[%s267 + $0x18] sm:$0xf]
      %v1543 = vld [vmem:[#allocation2] sm:$0xff]
      %v1544 = vld [vmem:[#allocation2 + $0x8] sm:$0xff]
      %v1545 = vld [vmem:[#allocation2 + $0x10] sm:$0xff]
      %v1546 = vld [vmem:[#allocation2 + $0x18] sm:$0xff]
      %v1547 = vld [vmem:[#allocation2 + $0x20] sm:$0xff]
      %v1548 = vld [vmem:[#allocation2 + $0x28] sm:$0xff]
      %v1549 = vld [vmem:[#allocation2 + $0x30] sm:$0xff]
      %s1550 = scalar_lea.vmem %s262, 20
      %v1551 = vld [vmem:[%s1550] sm:$0xf]
      %v1556 = vunpack.c.l.b16 %v1539
      %v1557 = vunpack.c.h.b16 %v1539
      %v1558 = vunpack.c.l.b16 %v1540
      %v1559 = vunpack.c.h.b16 %v1540
      %v1560 = vunpack.c.l.b16 %v1541
      %v1561 = vunpack.c.h.b16 %v1541
      %v1562 = vunpack.c.l.b16 %v1542
      %v1563 = vpack.c.b16 %v1556, %v1556
      %v1564 = vpack.c.b16 %v1557, %v1557
      %v1565 = vpack.c.b16 %v1558, %v1558
      %v1566 = vpack.c.b16 %v1559, %v1559
      %v1567 = vpack.c.b16 %v1560, %v1560
      %v1568 = vpack.c.b16 %v1561, %v1561
      %v1569 = vpack.c.b16 %v1562, %v1562
      %1570 = vrot.lane.b32.xlu0 %v1563, 116
      %v1571 = vpop.permute.xlu0 %1570
      %1572 = vrot.lane.b32.xlu0 %v1564, 116
      %v1573 = vpop.permute.xlu0 %1572
      %1574 = vrot.lane.b32.xlu0 %v1565, 116
      %v1575 = vpop.permute.xlu0 %1574
      %1576 = vrot.lane.b32.xlu0 %v1566, 116
      %v1577 = vpop.permute.xlu0 %1576
      %1578 = vrot.lane.b32.xlu0 %v1567, 116
      %v1579 = vpop.permute.xlu0 %1578
      %1580 = vrot.lane.b32.xlu0 %v1568, 116
      %v1581 = vpop.permute.xlu0 %1580
      %1582 = vrot.lane.b32.xlu0 %v1569, 116
      %v1583 = vpop.permute.xlu0 %1582
      %vm1584 = vcmask 949248
      %v1585 = vsel %vm1584, %v1571, %v1573
      %v1586 = vsel %vm1584, %v1573, %v1575
      %v1587 = vsel %vm1584, %v1575, %v1577
      %v1588 = vsel %vm1584, %v1577, %v1579
      %v1589 = vsel %vm1584, %v1579, %v1581
      %v1590 = vsel %vm1584, %v1581, %v1583
      %v1592 = vsel %vm324, %v1551, 0
      %v1595 = vsel %vm328, %v1585, 0
      %v1598 = vsel %vm328, %v1586, 0
      %v1601 = vsel %vm328, %v1587, 0
      %v1604 = vsel %vm328, %v1588, 0
      %v1607 = vsel %vm328, %v1589, 0
      %v1610 = vsel %vm328, %v1590, 0
      %v1613 = vsel %vm328, %v1583, 0
      %1615 = vmatprep.subr.bf16.mxu0 %v1598
      %1616 = vmatpush1.bf16.msra.mxu0 %v1595
      %1617 = vmatprep.subr.bf16.mxu0 0
      %1618 = vmatpush1.bf16.msra.mxu0 0
      %1619 = vmatprep.subr.bf16.mxu0 0
      %1620 = vmatpush1.bf16.msra.mxu0 0
      %1621 = vmatprep.subr.bf16.mxu0 0
      %1622 = vmatpush1.bf16.msra.mxu0 0
      %1623 = vmatprep.subr.bf16.mxu0 0
      %1624 = vmatpush1.bf16.msra.mxu0 0
      %1625 = vmatprep.subr.bf16.mxu0 0
      %1626 = vmatpush1.bf16.msra.mxu0 0
      %1627 = vmatprep.subr.bf16.mxu0 0
      %1628 = vmatpush1.bf16.msra.mxu0 0
      %1629 = vmatprep.subr.bf16.mxu0 0
      %1630 = vmatpush1.bf16.msra.mxu0 0
      %1631 = vmatprep.subr.bf16.mxu0 0
      %1632 = vmatpush1.bf16.msra.mxu0 0
      %1633 = vmatprep.subr.bf16.mxu0 0
      %1634 = vmatpush1.bf16.msra.mxu0 0
      %1635 = vmatprep.subr.bf16.mxu0 0
      %1636 = vmatpush1.bf16.msra.mxu0 0
      %1637 = vmatprep.subr.bf16.mxu0 0
      %1638 = vmatpush1.bf16.msra.mxu0 0
      %1639 = vmatprep.subr.bf16.mxu0 0
      %1640 = vmatpush1.bf16.msra.mxu0 0
      %1641 = vmatprep.subr.bf16.mxu0 0
      %1642 = vmatpush1.bf16.msra.mxu0 0
      %1643 = vmatprep.subr.bf16.mxu0 0
      %1644 = vmatpush1.bf16.msra.mxu0 0
      %1645 = vmatprep.subr.bf16.mxu0 0
      %1646 = vmatpush1.bf16.msra.mxu0 0
      %1647 = vmatprep.mubr.bf16.mxu0 0
      %1648 = vmatmul.mubr.bf16.gmra.mrb[0].mxu0 %v1592
      %v1649 = vpop.f32.mrb[0].mxu0
      %v1650 = vadd.f32 0.0, %v1649
      %v1651 = vpop.f32.mrb[0].mxu0
      %v1652 = vadd.f32 0.0, %v1651
      %v1653 = vpop.f32.mrb[0].mxu0
      %v1654 = vpop.f32.mrb[0].mxu0
      %1655 = vdwg.mxu0
      %1656 = vmatprep.subr.bf16.mxu0 %v1604
      %1657 = vmatpush1.bf16.msra.mxu0 %v1601
      %1658 = vmatprep.subr.bf16.mxu0 0
      %1659 = vmatpush1.bf16.msra.mxu0 0
      %1660 = vmatprep.subr.bf16.mxu0 0
      %1661 = vmatpush1.bf16.msra.mxu0 0
      %1662 = vmatprep.subr.bf16.mxu0 0
      %1663 = vmatpush1.bf16.msra.mxu0 0
      %1664 = vmatprep.subr.bf16.mxu0 0
      %1665 = vmatpush1.bf16.msra.mxu0 0
      %1666 = vmatprep.subr.bf16.mxu0 0
      %1667 = vmatpush1.bf16.msra.mxu0 0
      %1668 = vmatprep.subr.bf16.mxu0 0
      %1669 = vmatpush1.bf16.msra.mxu0 0
      %1670 = vmatprep.subr.bf16.mxu0 0
      %1671 = vmatpush1.bf16.msra.mxu0 0
      %1672 = vmatprep.subr.bf16.mxu0 0
      %1673 = vmatpush1.bf16.msra.mxu0 0
      %1674 = vmatprep.subr.bf16.mxu0 0
      %1675 = vmatpush1.bf16.msra.mxu0 0
      %1676 = vmatprep.subr.bf16.mxu0 0
      %1677 = vmatpush1.bf16.msra.mxu0 0
      %1678 = vmatprep.subr.bf16.mxu0 0
      %1679 = vmatpush1.bf16.msra.mxu0 0
      %1680 = vmatprep.subr.bf16.mxu0 0
      %1681 = vmatpush1.bf16.msra.mxu0 0
      %1682 = vmatprep.subr.bf16.mxu0 0
      %1683 = vmatpush1.bf16.msra.mxu0 0
      %1684 = vmatprep.subr.bf16.mxu0 0
      %1685 = vmatpush1.bf16.msra.mxu0 0
      %1686 = vmatprep.subr.bf16.mxu0 0
      %1687 = vmatpush1.bf16.msra.mxu0 0
      %1688 = vmatprep.mubr.bf16.mxu0 0
      %1689 = vmatmul.mubr.bf16.gmra.mrb[0].mxu0 %v1592
      %v1690 = vpop.f32.mrb[0].mxu0
      %v1691 = vadd.f32 0.0, %v1690
      %v1692 = vpop.f32.mrb[0].mxu0
      %v1693 = vadd.f32 0.0, %v1692
      %v1694 = vpop.f32.mrb[0].mxu0
      %v1695 = vpop.f32.mrb[0].mxu0
      %1696 = vdwg.mxu0
      %1697 = vmatprep.subr.bf16.mxu0 %v1610
      %1698 = vmatpush1.bf16.msra.mxu0 %v1607
      %1699 = vmatprep.subr.bf16.mxu0 0
      %1700 = vmatpush1.bf16.msra.mxu0 0
      %1701 = vmatprep.subr.bf16.mxu0 0
      %1702 = vmatpush1.bf16.msra.mxu0 0
      %1703 = vmatprep.subr.bf16.mxu0 0
      %1704 = vmatpush1.bf16.msra.mxu0 0
      %1705 = vmatprep.subr.bf16.mxu0 0
      %1706 = vmatpush1.bf16.msra.mxu0 0
      %1707 = vmatprep.subr.bf16.mxu0 0
      %1708 = vmatpush1.bf16.msra.mxu0 0
      %1709 = vmatprep.subr.bf16.mxu0 0
      %1710 = vmatpush1.bf16.msra.mxu0 0
      %1711 = vmatprep.subr.bf16.mxu0 0
      %1712 = vmatpush1.bf16.msra.mxu0 0
      %1713 = vmatprep.subr.bf16.mxu0 0
      %1714 = vmatpush1.bf16.msra.mxu0 0
      %1715 = vmatprep.subr.bf16.mxu0 0
      %1716 = vmatpush1.bf16.msra.mxu0 0
      %1717 = vmatprep.subr.bf16.mxu0 0
      %1718 = vmatpush1.bf16.msra.mxu0 0
      %1719 = vmatprep.subr.bf16.mxu0 0
      %1720 = vmatpush1.bf16.msra.mxu0 0
      %1721 = vmatprep.subr.bf16.mxu0 0
      %1722 = vmatpush1.bf16.msra.mxu0 0
      %1723 = vmatprep.subr.bf16.mxu0 0
      %1724 = vmatpush1.bf16.msra.mxu0 0
      %1725 = vmatprep.subr.bf16.mxu0 0
      %1726 = vmatpush1.bf16.msra.mxu0 0
      %1727 = vmatprep.subr.bf16.mxu0 0
      %1728 = vmatpush1.bf16.msra.mxu0 0
      %1729 = vmatprep.mubr.bf16.mxu0 0
      %1730 = vmatmul.mubr.bf16.gmra.mrb[0].mxu0 %v1592
      %v1731 = vpop.f32.mrb[0].mxu0
      %v1732 = vadd.f32 0.0, %v1731
      %v1733 = vpop.f32.mrb[0].mxu0
      %v1734 = vadd.f32 0.0, %v1733
      %v1735 = vpop.f32.mrb[0].mxu0
      %v1736 = vpop.f32.mrb[0].mxu0
      %1737 = vdwg.mxu0
      %1738 = vmatprep.subr.bf16.mxu0 0
      %1739 = vmatpush1.bf16.msra.mxu0 %v1613
      %1740 = vmatprep.subr.bf16.mxu0 0
      %1741 = vmatpush1.bf16.msra.mxu0 0
      %1742 = vmatprep.subr.bf16.mxu0 0
      %1743 = vmatpush1.bf16.msra.mxu0 0
      %1744 = vmatprep.subr.bf16.mxu0 0
      %1745 = vmatpush1.bf16.msra.mxu0 0
      %1746 = vmatprep.subr.bf16.mxu0 0
      %1747 = vmatpush1.bf16.msra.mxu0 0
      %1748 = vmatprep.subr.bf16.mxu0 0
      %1749 = vmatpush1.bf16.msra.mxu0 0
      %1750 = vmatprep.subr.bf16.mxu0 0
      %1751 = vmatpush1.bf16.msra.mxu0 0
      %1752 = vmatprep.subr.bf16.mxu0 0
      %1753 = vmatpush1.bf16.msra.mxu0 0
      %1754 = vmatprep.subr.bf16.mxu0 0
      %1755 = vmatpush1.bf16.msra.mxu0 0
      %1756 = vmatprep.subr.bf16.mxu0 0
      %1757 = vmatpush1.bf16.msra.mxu0 0
      %1758 = vmatprep.subr.bf16.mxu0 0
      %1759 = vmatpush1.bf16.msra.mxu0 0
      %1760 = vmatprep.subr.bf16.mxu0 0
      %1761 = vmatpush1.bf16.msra.mxu0 0
      %1762 = vmatprep.subr.bf16.mxu0 0
      %1763 = vmatpush1.bf16.msra.mxu0 0
      %1764 = vmatprep.subr.bf16.mxu0 0
      %1765 = vmatpush1.bf16.msra.mxu0 0
      %1766 = vmatprep.subr.bf16.mxu0 0
      %1767 = vmatpush1.bf16.msra.mxu0 0
      %1768 = vmatprep.subr.bf16.mxu0 0
      %1769 = vmatpush1.bf16.msra.mxu0 0
      %1770 = vmatprep.mubr.bf16.mxu0 0
      %1771 = vmatmul.mubr.bf16.gmra.mrb[0].mxu0 %v1592
      %v1772 = vpop.f32.mrb[0].mxu0
      %v1773 = vadd.f32 0.0, %v1772
      %v1774 = vpop.f32.mrb[0].mxu0
      %v1775 = vpop.f32.mrb[0].mxu0
      %v1776 = vpop.f32.mrb[0].mxu0
      %1777 = vdwg.mxu0
      %v1778 = vadd.f32 %v1543, %v1650
      %v1779 = vadd.f32 %v1544, %v1652
      %v1780 = vadd.f32 %v1545, %v1691
      %v1781 = vadd.f32 %v1546, %v1693
      %v1782 = vadd.f32 %v1547, %v1732
      %v1783 = vadd.f32 %v1548, %v1734
      %v1784 = vadd.f32 %v1549, %v1773
      %1785 = vst [vmem:[#allocation2] sm:$0xff] %v1778
      %1786 = vst [vmem:[#allocation2 + $0x8] sm:$0xff] %v1779
      %1787 = vst [vmem:[#allocation2 + $0x10] sm:$0xff] %v1780
      %1788 = vst [vmem:[#allocation2 + $0x18] sm:$0xff] %v1781
      %1789 = vst [vmem:[#allocation2 + $0x20] sm:$0xff] %v1782
      %1790 = vst [vmem:[#allocation2 + $0x28] sm:$0xff] %v1783
      %1791 = vst.msk [vmem:[#allocation2 + $0x30] sm:$0xff] %vm292, %v1784
      %v1792 = vld [vmem:[%s267] sm:$0xff]
      %v1793 = vld [vmem:[%s267 + $0x8] sm:$0xff]
      %v1794 = vld [vmem:[%s267 + $0x10] sm:$0xff]
      %v1795 = vld [vmem:[%s267 + $0x18] sm:$0xf]
      %v1796 = vld [vmem:[#allocation2] sm:$0xff]
      %v1797 = vld [vmem:[#allocation2 + $0x8] sm:$0xff]
      %v1798 = vld [vmem:[#allocation2 + $0x10] sm:$0xff]
      %v1799 = vld [vmem:[#allocation2 + $0x18] sm:$0xff]
      %v1800 = vld [vmem:[#allocation2 + $0x20] sm:$0xff]
      %v1801 = vld [vmem:[#allocation2 + $0x28] sm:$0xff]
      %v1802 = vld [vmem:[#allocation2 + $0x30] sm:$0xff]
      %s1803 = scalar_lea.vmem %s262, 24
      %v1804 = vld [vmem:[%s1803] sm:$0xf]
      %v1809 = vunpack.c.l.b16 %v1792
      %v1810 = vunpack.c.h.b16 %v1792
      %v1811 = vunpack.c.l.b16 %v1793
      %v1812 = vunpack.c.h.b16 %v1793
      %v1813 = vunpack.c.l.b16 %v1794
      %v1814 = vunpack.c.h.b16 %v1794
      %v1815 = vunpack.c.l.b16 %v1795
      %v1816 = vpack.c.b16 %v1809, %v1809
      %v1817 = vpack.c.b16 %v1810, %v1810
      %v1818 = vpack.c.b16 %v1811, %v1811
      %v1819 = vpack.c.b16 %v1812, %v1812
      %v1820 = vpack.c.b16 %v1813, %v1813
      %v1821 = vpack.c.b16 %v1814, %v1814
      %v1822 = vpack.c.b16 %v1815, %v1815
      %1823 = vrot.lane.b32.xlu0 %v1816, 108
      %v1824 = vpop.permute.xlu0 %1823
      %1825 = vrot.lane.b32.xlu0 %v1817, 108
      %v1826 = vpop.permute.xlu0 %1825
      %1827 = vrot.lane.b32.xlu0 %v1818, 108
      %v1828 = vpop.permute.xlu0 %1827
      %1829 = vrot.lane.b32.xlu0 %v1819, 108
      %v1830 = vpop.permute.xlu0 %1829
      %1831 = vrot.lane.b32.xlu0 %v1820, 108
      %v1832 = vpop.permute.xlu0 %1831
      %1833 = vrot.lane.b32.xlu0 %v1821, 108
      %v1834 = vpop.permute.xlu0 %1833
      %1835 = vrot.lane.b32.xlu0 %v1822, 108
      %v1836 = vpop.permute.xlu0 %1835
      %vm1837 = vcmask 883712
      %v1838 = vsel %vm1837, %v1824, %v1826
      %v1839 = vsel %vm1837, %v1826, %v1828
      %v1840 = vsel %vm1837, %v1828, %v1830
      %v1841 = vsel %vm1837, %v1830, %v1832
      %v1842 = vsel %vm1837, %v1832, %v1834
      %v1843 = vsel %vm1837, %v1834, %v1836
      %v1845 = vsel %vm324, %v1804, 0
      %v1848 = vsel %vm328, %v1838, 0
      %v1851 = vsel %vm328, %v1839, 0
      %v1854 = vsel %vm328, %v1840, 0
      %v1857 = vsel %vm328, %v1841, 0
      %v1860 = vsel %vm328, %v1842, 0
      %v1863 = vsel %vm328, %v1843, 0
      %v1866 = vsel %vm328, %v1836, 0
      %1868 = vmatprep.subr.bf16.mxu0 %v1851
      %1869 = vmatpush1.bf16.msra.mxu0 %v1848
      %1870 = vmatprep.subr.bf16.mxu0 0
      %1871 = vmatpush1.bf16.msra.mxu0 0
      %1872 = vmatprep.subr.bf16.mxu0 0
      %1873 = vmatpush1.bf16.msra.mxu0 0
      %1874 = vmatprep.subr.bf16.mxu0 0
      %1875 = vmatpush1.bf16.msra.mxu0 0
      %1876 = vmatprep.subr.bf16.mxu0 0
      %1877 = vmatpush1.bf16.msra.mxu0 0
      %1878 = vmatprep.subr.bf16.mxu0 0
      %1879 = vmatpush1.bf16.msra.mxu0 0
      %1880 = vmatprep.subr.bf16.mxu0 0
      %1881 = vmatpush1.bf16.msra.mxu0 0
      %1882 = vmatprep.subr.bf16.mxu0 0
      %1883 = vmatpush1.bf16.msra.mxu0 0
      %1884 = vmatprep.subr.bf16.mxu0 0
      %1885 = vmatpush1.bf16.msra.mxu0 0
      %1886 = vmatprep.subr.bf16.mxu0 0
      %1887 = vmatpush1.bf16.msra.mxu0 0
      %1888 = vmatprep.subr.bf16.mxu0 0
      %1889 = vmatpush1.bf16.msra.mxu0 0
      %1890 = vmatprep.subr.bf16.mxu0 0
      %1891 = vmatpush1.bf16.msra.mxu0 0
      %1892 = vmatprep.subr.bf16.mxu0 0
      %1893 = vmatpush1.bf16.msra.mxu0 0
      %1894 = vmatprep.subr.bf16.mxu0 0
      %1895 = vmatpush1.bf16.msra.mxu0 0
      %1896 = vmatprep.subr.bf16.mxu0 0
      %1897 = vmatpush1.bf16.msra.mxu0 0
      %1898 = vmatprep.subr.bf16.mxu0 0
      %1899 = vmatpush1.bf16.msra.mxu0 0
      %1900 = vmatprep.mubr.bf16.mxu0 0
      %1901 = vmatmul.mubr.bf16.gmra.mrb[0].mxu0 %v1845
      %v1902 = vpop.f32.mrb[0].mxu0
      %v1903 = vadd.f32 0.0, %v1902
      %v1904 = vpop.f32.mrb[0].mxu0
      %v1905 = vadd.f32 0.0, %v1904
      %v1906 = vpop.f32.mrb[0].mxu0
      %v1907 = vpop.f32.mrb[0].mxu0
      %1908 = vdwg.mxu0
      %1909 = vmatprep.subr.bf16.mxu0 %v1857
      %1910 = vmatpush1.bf16.msra.mxu0 %v1854
      %1911 = vmatprep.subr.bf16.mxu0 0
      %1912 = vmatpush1.bf16.msra.mxu0 0
      %1913 = vmatprep.subr.bf16.mxu0 0
      %1914 = vmatpush1.bf16.msra.mxu0 0
      %1915 = vmatprep.subr.bf16.mxu0 0
      %1916 = vmatpush1.bf16.msra.mxu0 0
      %1917 = vmatprep.subr.bf16.mxu0 0
      %1918 = vmatpush1.bf16.msra.mxu0 0
      %1919 = vmatprep.subr.bf16.mxu0 0
      %1920 = vmatpush1.bf16.msra.mxu0 0
      %1921 = vmatprep.subr.bf16.mxu0 0
      %1922 = vmatpush1.bf16.msra.mxu0 0
      %1923 = vmatprep.subr.bf16.mxu0 0
      %1924 = vmatpush1.bf16.msra.mxu0 0
      %1925 = vmatprep.subr.bf16.mxu0 0
      %1926 = vmatpush1.bf16.msra.mxu0 0
      %1927 = vmatprep.subr.bf16.mxu0 0
      %1928 = vmatpush1.bf16.msra.mxu0 0
      %1929 = vmatprep.subr.bf16.mxu0 0
      %1930 = vmatpush1.bf16.msra.mxu0 0
      %1931 = vmatprep.subr.bf16.mxu0 0
      %1932 = vmatpush1.bf16.msra.mxu0 0
      %1933 = vmatprep.subr.bf16.mxu0 0
      %1934 = vmatpush1.bf16.msra.mxu0 0
      %1935 = vmatprep.subr.bf16.mxu0 0
      %1936 = vmatpush1.bf16.msra.mxu0 0
      %1937 = vmatprep.subr.bf16.mxu0 0
      %1938 = vmatpush1.bf16.msra.mxu0 0
      %1939 = vmatprep.subr.bf16.mxu0 0
      %1940 = vmatpush1.bf16.msra.mxu0 0
      %1941 = vmatprep.mubr.bf16.mxu0 0
      %1942 = vmatmul.mubr.bf16.gmra.mrb[0].mxu0 %v1845
      %v1943 = vpop.f32.mrb[0].mxu0
      %v1944 = vadd.f32 0.0, %v1943
      %v1945 = vpop.f32.mrb[0].mxu0
      %v1946 = vadd.f32 0.0, %v1945
      %v1947 = vpop.f32.mrb[0].mxu0
      %v1948 = vpop.f32.mrb[0].mxu0
      %1949 = vdwg.mxu0
      %1950 = vmatprep.subr.bf16.mxu0 %v1863
      %1951 = vmatpush1.bf16.msra.mxu0 %v1860
      %1952 = vmatprep.subr.bf16.mxu0 0
      %1953 = vmatpush1.bf16.msra.mxu0 0
      %1954 = vmatprep.subr.bf16.mxu0 0
      %1955 = vmatpush1.bf16.msra.mxu0 0
      %1956 = vmatprep.subr.bf16.mxu0 0
      %1957 = vmatpush1.bf16.msra.mxu0 0
      %1958 = vmatprep.subr.bf16.mxu0 0
      %1959 = vmatpush1.bf16.msra.mxu0 0
      %1960 = vmatprep.subr.bf16.mxu0 0
      %1961 = vmatpush1.bf16.msra.mxu0 0
      %1962 = vmatprep.subr.bf16.mxu0 0
      %1963 = vmatpush1.bf16.msra.mxu0 0
      %1964 = vmatprep.subr.bf16.mxu0 0
      %1965 = vmatpush1.bf16.msra.mxu0 0
      %1966 = vmatprep.subr.bf16.mxu0 0
      %1967 = vmatpush1.bf16.msra.mxu0 0
      %1968 = vmatprep.subr.bf16.mxu0 0
      %1969 = vmatpush1.bf16.msra.mxu0 0
      %1970 = vmatprep.subr.bf16.mxu0 0
      %1971 = vmatpush1.bf16.msra.mxu0 0
      %1972 = vmatprep.subr.bf16.mxu0 0
      %1973 = vmatpush1.bf16.msra.mxu0 0
      %1974 = vmatprep.subr.bf16.mxu0 0
      %1975 = vmatpush1.bf16.msra.mxu0 0
      %1976 = vmatprep.subr.bf16.mxu0 0
      %1977 = vmatpush1.bf16.msra.mxu0 0
      %1978 = vmatprep.subr.bf16.mxu0 0
      %1979 = vmatpush1.bf16.msra.mxu0 0
      %1980 = vmatprep.subr.bf16.mxu0 0
      %1981 = vmatpush1.bf16.msra.mxu0 0
      %1982 = vmatprep.mubr.bf16.mxu0 0
      %1983 = vmatmul.mubr.bf16.gmra.mrb[0].mxu0 %v1845
      %v1984 = vpop.f32.mrb[0].mxu0
      %v1985 = vadd.f32 0.0, %v1984
      %v1986 = vpop.f32.mrb[0].mxu0
      %v1987 = vadd.f32 0.0, %v1986
      %v1988 = vpop.f32.mrb[0].mxu0
      %v1989 = vpop.f32.mrb[0].mxu0
      %1990 = vdwg.mxu0
      %1991 = vmatprep.subr.bf16.mxu0 0
      %1992 = vmatpush1.bf16.msra.mxu0 %v1866
      %1993 = vmatprep.subr.bf16.mxu0 0
      %1994 = vmatpush1.bf16.msra.mxu0 0
      %1995 = vmatprep.subr.bf16.mxu0 0
      %1996 = vmatpush1.bf16.msra.mxu0 0
      %1997 = vmatprep.subr.bf16.mxu0 0
      %1998 = vmatpush1.bf16.msra.mxu0 0
      %1999 = vmatprep.subr.bf16.mxu0 0
      %2000 = vmatpush1.bf16.msra.mxu0 0
      %2001 = vmatprep.subr.bf16.mxu0 0
      %2002 = vmatpush1.bf16.msra.mxu0 0
      %2003 = vmatprep.subr.bf16.mxu0 0
      %2004 = vmatpush1.bf16.msra.mxu0 0
      %2005 = vmatprep.subr.bf16.mxu0 0
      %2006 = vmatpush1.bf16.msra.mxu0 0
      %2007 = vmatprep.subr.bf16.mxu0 0
      %2008 = vmatpush1.bf16.msra.mxu0 0
      %2009 = vmatprep.subr.bf16.mxu0 0
      %2010 = vmatpush1.bf16.msra.mxu0 0
      %2011 = vmatprep.subr.bf16.mxu0 0
      %2012 = vmatpush1.bf16.msra.mxu0 0
      %2013 = vmatprep.subr.bf16.mxu0 0
      %2014 = vmatpush1.bf16.msra.mxu0 0
      %2015 = vmatprep.subr.bf16.mxu0 0
      %2016 = vmatpush1.bf16.msra.mxu0 0
      %2017 = vmatprep.subr.bf16.mxu0 0
      %2018 = vmatpush1.bf16.msra.mxu0 0
      %2019 = vmatprep.subr.bf16.mxu0 0
      %2020 = vmatpush1.bf16.msra.mxu0 0
      %2021 = vmatprep.subr.bf16.mxu0 0
      %2022 = vmatpush1.bf16.msra.mxu0 0
      %2023 = vmatprep.mubr.bf16.mxu0 0
      %2024 = vmatmul.mubr.bf16.gmra.mrb[0].mxu0 %v1845
      %v2025 = vpop.f32.mrb[0].mxu0
      %v2026 = vadd.f32 0.0, %v2025
      %v2027 = vpop.f32.mrb[0].mxu0
      %v2028 = vpop.f32.mrb[0].mxu0
      %v2029 = vpop.f32.mrb[0].mxu0
      %2030 = vdwg.mxu0
      %v2031 = vadd.f32 %v1796, %v1903
      %v2032 = vadd.f32 %v1797, %v1905
      %v2033 = vadd.f32 %v1798, %v1944
      %v2034 = vadd.f32 %v1799, %v1946
      %v2035 = vadd.f32 %v1800, %v1985
      %v2036 = vadd.f32 %v1801, %v1987
      %v2037 = vadd.f32 %v1802, %v2026
      %2038 = vst [vmem:[#allocation2] sm:$0xff] %v2031
      %2039 = vst [vmem:[#allocation2 + $0x8] sm:$0xff] %v2032
      %2040 = vst [vmem:[#allocation2 + $0x10] sm:$0xff] %v2033
      %2041 = vst [vmem:[#allocation2 + $0x18] sm:$0xff] %v2034
      %2042 = vst [vmem:[#allocation2 + $0x20] sm:$0xff] %v2035
      %2043 = vst [vmem:[#allocation2 + $0x28] sm:$0xff] %v2036
      %2044 = vst.msk [vmem:[#allocation2 + $0x30] sm:$0xff] %vm292, %v2037
      %v2045 = vld [vmem:[%s267] sm:$0xff]
      %v2046 = vld [vmem:[%s267 + $0x8] sm:$0xff]
      %v2047 = vld [vmem:[%s267 + $0x10] sm:$0xff]
      %v2048 = vld [vmem:[%s267 + $0x18] sm:$0xf]
      %v2049 = vld [vmem:[#allocation2] sm:$0xff]
      %v2050 = vld [vmem:[#allocation2 + $0x8] sm:$0xff]
      %v2051 = vld [vmem:[#allocation2 + $0x10] sm:$0xff]
      %v2052 = vld [vmem:[#allocation2 + $0x18] sm:$0xff]
      %v2053 = vld [vmem:[#allocation2 + $0x20] sm:$0xff]
      %v2054 = vld [vmem:[#allocation2 + $0x28] sm:$0xff]
      %v2055 = vld [vmem:[#allocation2 + $0x30] sm:$0xff]
      %s2056 = scalar_lea.vmem %s262, 28
      %v2057 = vld [vmem:[%s2056] sm:$0xf]
      %v2062 = vunpack.c.l.b16 %v2045
      %v2063 = vunpack.c.h.b16 %v2045
      %v2064 = vunpack.c.l.b16 %v2046
      %v2065 = vunpack.c.h.b16 %v2046
      %v2066 = vunpack.c.l.b16 %v2047
      %v2067 = vunpack.c.h.b16 %v2047
      %v2068 = vunpack.c.l.b16 %v2048
      %v2069 = vpack.c.b16 %v2062, %v2062
      %v2070 = vpack.c.b16 %v2063, %v2063
      %v2071 = vpack.c.b16 %v2064, %v2064
      %v2072 = vpack.c.b16 %v2065, %v2065
      %v2073 = vpack.c.b16 %v2066, %v2066
      %v2074 = vpack.c.b16 %v2067, %v2067
      %v2075 = vpack.c.b16 %v2068, %v2068
      %2076 = vrot.lane.b32.xlu0 %v2069, 107
      %v2077 = vpop.permute.xlu0 %2076
      %2078 = vrot.lane.b32.xlu0 %v2070, 107
      %v2079 = vpop.permute.xlu0 %2078
      %2080 = vrot.lane.b32.xlu0 %v2071, 107
      %v2081 = vpop.permute.xlu0 %2080
      %2082 = vrot.lane.b32.xlu0 %v2072, 107
      %v2083 = vpop.permute.xlu0 %2082
      %2084 = vrot.lane.b32.xlu0 %v2073, 107
      %v2085 = vpop.permute.xlu0 %2084
      %2086 = vrot.lane.b32.xlu0 %v2074, 107
      %v2087 = vpop.permute.xlu0 %2086
      %2088 = vrot.lane.b32.xlu0 %v2075, 107
      %v2089 = vpop.permute.xlu0 %2088
      %vm2090 = vcmask 875520
      %v2091 = vsel %vm2090, %v2077, %v2079
      %v2092 = vsel %vm2090, %v2079, %v2081
      %v2093 = vsel %vm2090, %v2081, %v2083
      %v2094 = vsel %vm2090, %v2083, %v2085
      %v2095 = vsel %vm2090, %v2085, %v2087
      %v2096 = vsel %vm2090, %v2087, %v2089
      %v2098 = vsel %vm324, %v2057, 0
      %v2101 = vsel %vm328, %v2091, 0
      %v2104 = vsel %vm328, %v2092, 0
      %v2107 = vsel %vm328, %v2093, 0
      %v2110 = vsel %vm328, %v2094, 0
      %v2113 = vsel %vm328, %v2095, 0
      %v2116 = vsel %vm328, %v2096, 0
      %v2119 = vsel %vm328, %v2089, 0
      %2121 = vmatprep.subr.bf16.mxu0 %v2104
      %2122 = vmatpush1.bf16.msra.mxu0 %v2101
      %2123 = vmatprep.subr.bf16.mxu0 0
      %2124 = vmatpush1.bf16.msra.mxu0 0
      %2125 = vmatprep.subr.bf16.mxu0 0
      %2126 = vmatpush1.bf16.msra.mxu0 0
      %2127 = vmatprep.subr.bf16.mxu0 0
      %2128 = vmatpush1.bf16.msra.mxu0 0
      %2129 = vmatprep.subr.bf16.mxu0 0
      %2130 = vmatpush1.bf16.msra.mxu0 0
      %2131 = vmatprep.subr.bf16.mxu0 0
      %2132 = vmatpush1.bf16.msra.mxu0 0
      %2133 = vmatprep.subr.bf16.mxu0 0
      %2134 = vmatpush1.bf16.msra.mxu0 0
      %2135 = vmatprep.subr.bf16.mxu0 0
      %2136 = vmatpush1.bf16.msra.mxu0 0
      %2137 = vmatprep.subr.bf16.mxu0 0
      %2138 = vmatpush1.bf16.msra.mxu0 0
      %2139 = vmatprep.subr.bf16.mxu0 0
      %2140 = vmatpush1.bf16.msra.mxu0 0
      %2141 = vmatprep.subr.bf16.mxu0 0
      %2142 = vmatpush1.bf16.msra.mxu0 0
      %2143 = vmatprep.subr.bf16.mxu0 0
      %2144 = vmatpush1.bf16.msra.mxu0 0
      %2145 = vmatprep.subr.bf16.mxu0 0
      %2146 = vmatpush1.bf16.msra.mxu0 0
      %2147 = vmatprep.subr.bf16.mxu0 0
      %2148 = vmatpush1.bf16.msra.mxu0 0
      %2149 = vmatprep.subr.bf16.mxu0 0
      %2150 = vmatpush1.bf16.msra.mxu0 0
      %2151 = vmatprep.subr.bf16.mxu0 0
      %2152 = vmatpush1.bf16.msra.mxu0 0
      %2153 = vmatprep.mubr.bf16.mxu0 0
      %2154 = vmatmul.mubr.bf16.gmra.mrb[0].mxu0 %v2098
      %v2155 = vpop.f32.mrb[0].mxu0
      %v2156 = vadd.f32 0.0, %v2155
      %v2157 = vpop.f32.mrb[0].mxu0
      %v2158 = vadd.f32 0.0, %v2157
      %v2159 = vpop.f32.mrb[0].mxu0
      %v2160 = vpop.f32.mrb[0].mxu0
      %2161 = vdwg.mxu0
      %2162 = vmatprep.subr.bf16.mxu0 %v2110
      %2163 = vmatpush1.bf16.msra.mxu0 %v2107
      %2164 = vmatprep.subr.bf16.mxu0 0
      %2165 = vmatpush1.bf16.msra.mxu0 0
      %2166 = vmatprep.subr.bf16.mxu0 0
      %2167 = vmatpush1.bf16.msra.mxu0 0
      %2168 = vmatprep.subr.bf16.mxu0 0
      %2169 = vmatpush1.bf16.msra.mxu0 0
      %2170 = vmatprep.subr.bf16.mxu0 0
      %2171 = vmatpush1.bf16.msra.mxu0 0
      %2172 = vmatprep.subr.bf16.mxu0 0
      %2173 = vmatpush1.bf16.msra.mxu0 0
      %2174 = vmatprep.subr.bf16.mxu0 0
      %2175 = vmatpush1.bf16.msra.mxu0 0
      %2176 = vmatprep.subr.bf16.mxu0 0
      %2177 = vmatpush1.bf16.msra.mxu0 0
      %2178 = vmatprep.subr.bf16.mxu0 0
      %2179 = vmatpush1.bf16.msra.mxu0 0
      %2180 = vmatprep.subr.bf16.mxu0 0
      %2181 = vmatpush1.bf16.msra.mxu0 0
      %2182 = vmatprep.subr.bf16.mxu0 0
      %2183 = vmatpush1.bf16.msra.mxu0 0
      %2184 = vmatprep.subr.bf16.mxu0 0
      %2185 = vmatpush1.bf16.msra.mxu0 0
      %2186 = vmatprep.subr.bf16.mxu0 0
      %2187 = vmatpush1.bf16.msra.mxu0 0
      %2188 = vmatprep.subr.bf16.mxu0 0
      %2189 = vmatpush1.bf16.msra.mxu0 0
      %2190 = vmatprep.subr.bf16.mxu0 0
      %2191 = vmatpush1.bf16.msra.mxu0 0
      %2192 = vmatprep.subr.bf16.mxu0 0
      %2193 = vmatpush1.bf16.msra.mxu0 0
      %2194 = vmatprep.mubr.bf16.mxu0 0
      %2195 = vmatmul.mubr.bf16.gmra.mrb[0].mxu0 %v2098
      %v2196 = vpop.f32.mrb[0].mxu0
      %v2197 = vadd.f32 0.0, %v2196
      %v2198 = vpop.f32.mrb[0].mxu0
      %v2199 = vadd.f32 0.0, %v2198
      %v2200 = vpop.f32.mrb[0].mxu0
      %v2201 = vpop.f32.mrb[0].mxu0
      %2202 = vdwg.mxu0
      %2203 = vmatprep.subr.bf16.mxu0 %v2116
      %2204 = vmatpush1.bf16.msra.mxu0 %v2113
      %2205 = vmatprep.subr.bf16.mxu0 0
      %2206 = vmatpush1.bf16.msra.mxu0 0
      %2207 = vmatprep.subr.bf16.mxu0 0
      %2208 = vmatpush1.bf16.msra.mxu0 0
      %2209 = vmatprep.subr.bf16.mxu0 0
      %2210 = vmatpush1.bf16.msra.mxu0 0
      %2211 = vmatprep.subr.bf16.mxu0 0
      %2212 = vmatpush1.bf16.msra.mxu0 0
      %2213 = vmatprep.subr.bf16.mxu0 0
      %2214 = vmatpush1.bf16.msra.mxu0 0
      %2215 = vmatprep.subr.bf16.mxu0 0
      %2216 = vmatpush1.bf16.msra.mxu0 0
      %2217 = vmatprep.subr.bf16.mxu0 0
      %2218 = vmatpush1.bf16.msra.mxu0 0
      %2219 = vmatprep.subr.bf16.mxu0 0
      %2220 = vmatpush1.bf16.msra.mxu0 0
      %2221 = vmatprep.subr.bf16.mxu0 0
      %2222 = vmatpush1.bf16.msra.mxu0 0
      %2223 = vmatprep.subr.bf16.mxu0 0
      %2224 = vmatpush1.bf16.msra.mxu0 0
      %2225 = vmatprep.subr.bf16.mxu0 0
      %2226 = vmatpush1.bf16.msra.mxu0 0
      %2227 = vmatprep.subr.bf16.mxu0 0
      %2228 = vmatpush1.bf16.msra.mxu0 0
      %2229 = vmatprep.subr.bf16.mxu0 0
      %2230 = vmatpush1.bf16.msra.mxu0 0
      %2231 = vmatprep.subr.bf16.mxu0 0
      %2232 = vmatpush1.bf16.msra.mxu0 0
      %2233 = vmatprep.subr.bf16.mxu0 0
      %2234 = vmatpush1.bf16.msra.mxu0 0
      %2235 = vmatprep.mubr.bf16.mxu0 0
      %2236 = vmatmul.mubr.bf16.gmra.mrb[0].mxu0 %v2098
      %v2237 = vpop.f32.mrb[0].mxu0
      %v2238 = vadd.f32 0.0, %v2237
      %v2239 = vpop.f32.mrb[0].mxu0
      %v2240 = vadd.f32 0.0, %v2239
      %v2241 = vpop.f32.mrb[0].mxu0
      %v2242 = vpop.f32.mrb[0].mxu0
      %2243 = vdwg.mxu0
      %2244 = vmatprep.subr.bf16.mxu0 0
      %2245 = vmatpush1.bf16.msra.mxu0 %v2119
      %2246 = vmatprep.subr.bf16.mxu0 0
      %2247 = vmatpush1.bf16.msra.mxu0 0
      %2248 = vmatprep.subr.bf16.mxu0 0
      %2249 = vmatpush1.bf16.msra.mxu0 0
      %2250 = vmatprep.subr.bf16.mxu0 0
      %2251 = vmatpush1.bf16.msra.mxu0 0
      %2252 = vmatprep.subr.bf16.mxu0 0
      %2253 = vmatpush1.bf16.msra.mxu0 0
      %2254 = vmatprep.subr.bf16.mxu0 0
      %2255 = vmatpush1.bf16.msra.mxu0 0
      %2256 = vmatprep.subr.bf16.mxu0 0
      %2257 = vmatpush1.bf16.msra.mxu0 0
      %2258 = vmatprep.subr.bf16.mxu0 0
      %2259 = vmatpush1.bf16.msra.mxu0 0
      %2260 = vmatprep.subr.bf16.mxu0 0
      %2261 = vmatpush1.bf16.msra.mxu0 0
      %2262 = vmatprep.subr.bf16.mxu0 0
      %2263 = vmatpush1.bf16.msra.mxu0 0
      %2264 = vmatprep.subr.bf16.mxu0 0
      %2265 = vmatpush1.bf16.msra.mxu0 0
      %2266 = vmatprep.subr.bf16.mxu0 0
      %2267 = vmatpush1.bf16.msra.mxu0 0
      %2268 = vmatprep.subr.bf16.mxu0 0
      %2269 = vmatpush1.bf16.msra.mxu0 0
      %2270 = vmatprep.subr.bf16.mxu0 0
      %2271 = vmatpush1.bf16.msra.mxu0 0
      %2272 = vmatprep.subr.bf16.mxu0 0
      %2273 = vmatpush1.bf16.msra.mxu0 0
      %2274 = vmatprep.subr.bf16.mxu0 0
      %2275 = vmatpush1.bf16.msra.mxu0 0
      %2276 = vmatprep.mubr.bf16.mxu0 0
      %2277 = vmatmul.mubr.bf16.gmra.mrb[0].mxu0 %v2098
      %v2278 = vpop.f32.mrb[0].mxu0
      %v2279 = vadd.f32 0.0, %v2278
      %v2280 = vpop.f32.mrb[0].mxu0
      %v2281 = vpop.f32.mrb[0].mxu0
      %v2282 = vpop.f32.mrb[0].mxu0
      %2283 = vdwg.mxu0
      %v2284 = vadd.f32 %v2049, %v2156
      %v2285 = vadd.f32 %v2050, %v2158
      %v2286 = vadd.f32 %v2051, %v2197
      %v2287 = vadd.f32 %v2052, %v2199
      %v2288 = vadd.f32 %v2053, %v2238
      %v2289 = vadd.f32 %v2054, %v2240
      %v2290 = vadd.f32 %v2055, %v2279
      %2291 = vst [vmem:[#allocation2] sm:$0xff] %v2284
      %2292 = vst [vmem:[#allocation2 + $0x8] sm:$0xff] %v2285
      %2293 = vst [vmem:[#allocation2 + $0x10] sm:$0xff] %v2286
      %2294 = vst [vmem:[#allocation2 + $0x18] sm:$0xff] %v2287
      %2295 = vst [vmem:[#allocation2 + $0x20] sm:$0xff] %v2288
      %2296 = vst [vmem:[#allocation2 + $0x28] sm:$0xff] %v2289
      %2297 = vst.msk [vmem:[#allocation2 + $0x30] sm:$0xff] %vm292, %v2290
      %v2298 = vld [vmem:[%s267] sm:$0xff]
      %v2299 = vld [vmem:[%s267 + $0x8] sm:$0xff]
      %v2300 = vld [vmem:[%s267 + $0x10] sm:$0xff]
      %v2301 = vld [vmem:[%s267 + $0x18] sm:$0xf]
      %v2302 = vld [vmem:[#allocation2] sm:$0xff]
      %v2303 = vld [vmem:[#allocation2 + $0x8] sm:$0xff]
      %v2304 = vld [vmem:[#allocation2 + $0x10] sm:$0xff]
      %v2305 = vld [vmem:[#allocation2 + $0x18] sm:$0xff]
      %v2306 = vld [vmem:[#allocation2 + $0x20] sm:$0xff]
      %v2307 = vld [vmem:[#allocation2 + $0x28] sm:$0xff]
      %v2308 = vld [vmem:[#allocation2 + $0x30] sm:$0xff]
      %s2309 = scalar_lea.vmem %s262, 32
      %v2310 = vld [vmem:[%s2309] sm:$0xf]
      %v2315 = vunpack.c.l.b16 %v2298
      %v2316 = vunpack.c.h.b16 %v2298
      %v2317 = vunpack.c.l.b16 %v2299
      %v2318 = vunpack.c.h.b16 %v2299
      %v2319 = vunpack.c.l.b16 %v2300
      %v2320 = vunpack.c.h.b16 %v2300
      %v2321 = vunpack.c.l.b16 %v2301
      %v2322 = vpack.c.b16 %v2315, %v2315
      %v2323 = vpack.c.b16 %v2316, %v2316
      %v2324 = vpack.c.b16 %v2317, %v2317
      %v2325 = vpack.c.b16 %v2318, %v2318
      %v2326 = vpack.c.b16 %v2319, %v2319
      %v2327 = vpack.c.b16 %v2320, %v2320
      %v2328 = vpack.c.b16 %v2321, %v2321
      %2329 = vrot.lane.b32.xlu0 %v2322, 106
      %v2330 = vpop.permute.xlu0 %2329
      %2331 = vrot.lane.b32.xlu0 %v2323, 106
      %v2332 = vpop.permute.xlu0 %2331
      %2333 = vrot.lane.b32.xlu0 %v2324, 106
      %v2334 = vpop.permute.xlu0 %2333
      %2335 = vrot.lane.b32.xlu0 %v2325, 106
      %v2336 = vpop.permute.xlu0 %2335
      %2337 = vrot.lane.b32.xlu0 %v2326, 106
      %v2338 = vpop.permute.xlu0 %2337
      %2339 = vrot.lane.b32.xlu0 %v2327, 106
      %v2340 = vpop.permute.xlu0 %2339
      %2341 = vrot.lane.b32.xlu0 %v2328, 106
      %v2342 = vpop.permute.xlu0 %2341
      %vm2343 = vcmask 867328
      %v2344 = vsel %vm2343, %v2330, %v2332
      %v2345 = vsel %vm2343, %v2332, %v2334
      %v2346 = vsel %vm2343, %v2334, %v2336
      %v2347 = vsel %vm2343, %v2336, %v2338
      %v2348 = vsel %vm2343, %v2338, %v2340
      %v2349 = vsel %vm2343, %v2340, %v2342
      %v2351 = vsel %vm324, %v2310, 0
      %v2354 = vsel %vm328, %v2344, 0
      %v2357 = vsel %vm328, %v2345, 0
      %v2360 = vsel %vm328, %v2346, 0
      %v2363 = vsel %vm328, %v2347, 0
      %v2366 = vsel %vm328, %v2348, 0
      %v2369 = vsel %vm328, %v2349, 0
      %v2372 = vsel %vm328, %v2342, 0
      %2374 = vmatprep.subr.bf16.mxu0 %v2357
      %2375 = vmatpush1.bf16.msra.mxu0 %v2354
      %2376 = vmatprep.subr.bf16.mxu0 0
      %2377 = vmatpush1.bf16.msra.mxu0 0
      %2378 = vmatprep.subr.bf16.mxu0 0
      %2379 = vmatpush1.bf16.msra.mxu0 0
      %2380 = vmatprep.subr.bf16.mxu0 0
      %2381 = vmatpush1.bf16.msra.mxu0 0
      %2382 = vmatprep.subr.bf16.mxu0 0
      %2383 = vmatpush1.bf16.msra.mxu0 0
      %2384 = vmatprep.subr.bf16.mxu0 0
      %2385 = vmatpush1.bf16.msra.mxu0 0
      %2386 = vmatprep.subr.bf16.mxu0 0
      %2387 = vmatpush1.bf16.msra.mxu0 0
      %2388 = vmatprep.subr.bf16.mxu0 0
      %2389 = vmatpush1.bf16.msra.mxu0 0
      %2390 = vmatprep.subr.bf16.mxu0 0
      %2391 = vmatpush1.bf16.msra.mxu0 0
      %2392 = vmatprep.subr.bf16.mxu0 0
      %2393 = vmatpush1.bf16.msra.mxu0 0
      %2394 = vmatprep.subr.bf16.mxu0 0
      %2395 = vmatpush1.bf16.msra.mxu0 0
      %2396 = vmatprep.subr.bf16.mxu0 0
      %2397 = vmatpush1.bf16.msra.mxu0 0
      %2398 = vmatprep.subr.bf16.mxu0 0
      %2399 = vmatpush1.bf16.msra.mxu0 0
      %2400 = vmatprep.subr.bf16.mxu0 0
      %2401 = vmatpush1.bf16.msra.mxu0 0
      %2402 = vmatprep.subr.bf16.mxu0 0
      %2403 = vmatpush1.bf16.msra.mxu0 0
      %2404 = vmatprep.subr.bf16.mxu0 0
      %2405 = vmatpush1.bf16.msra.mxu0 0
      %2406 = vmatprep.mubr.bf16.mxu0 0
      %2407 = vmatmul.mubr.bf16.gmra.mrb[0].mxu0 %v2351
      %v2408 = vpop.f32.mrb[0].mxu0
      %v2409 = vadd.f32 0.0, %v2408
      %v2410 = vpop.f32.mrb[0].mxu0
      %v2411 = vadd.f32 0.0, %v2410
      %v2412 = vpop.f32.mrb[0].mxu0
      %v2413 = vpop.f32.mrb[0].mxu0
      %2414 = vdwg.mxu0
      %2415 = vmatprep.subr.bf16.mxu0 %v2363
      %2416 = vmatpush1.bf16.msra.mxu0 %v2360
      %2417 = vmatprep.subr.bf16.mxu0 0
      %2418 = vmatpush1.bf16.msra.mxu0 0
      %2419 = vmatprep.subr.bf16.mxu0 0
      %2420 = vmatpush1.bf16.msra.mxu0 0
      %2421 = vmatprep.subr.bf16.mxu0 0
      %2422 = vmatpush1.bf16.msra.mxu0 0
      %2423 = vmatprep.subr.bf16.mxu0 0
      %2424 = vmatpush1.bf16.msra.mxu0 0
      %2425 = vmatprep.subr.bf16.mxu0 0
      %2426 = vmatpush1.bf16.msra.mxu0 0
      %2427 = vmatprep.subr.bf16.mxu0 0
      %2428 = vmatpush1.bf16.msra.mxu0 0
      %2429 = vmatprep.subr.bf16.mxu0 0
      %2430 = vmatpush1.bf16.msra.mxu0 0
      %2431 = vmatprep.subr.bf16.mxu0 0
      %2432 = vmatpush1.bf16.msra.mxu0 0
      %2433 = vmatprep.subr.bf16.mxu0 0
      %2434 = vmatpush1.bf16.msra.mxu0 0
      %2435 = vmatprep.subr.bf16.mxu0 0
      %2436 = vmatpush1.bf16.msra.mxu0 0
      %2437 = vmatprep.subr.bf16.mxu0 0
      %2438 = vmatpush1.bf16.msra.mxu0 0
      %2439 = vmatprep.subr.bf16.mxu0 0
      %2440 = vmatpush1.bf16.msra.mxu0 0
      %2441 = vmatprep.subr.bf16.mxu0 0
      %2442 = vmatpush1.bf16.msra.mxu0 0
      %2443 = vmatprep.subr.bf16.mxu0 0
      %2444 = vmatpush1.bf16.msra.mxu0 0
      %2445 = vmatprep.subr.bf16.mxu0 0
      %2446 = vmatpush1.bf16.msra.mxu0 0
      %2447 = vmatprep.mubr.bf16.mxu0 0
      %2448 = vmatmul.mubr.bf16.gmra.mrb[0].mxu0 %v2351
      %v2449 = vpop.f32.mrb[0].mxu0
      %v2450 = vadd.f32 0.0, %v2449
      %v2451 = vpop.f32.mrb[0].mxu0
      %v2452 = vadd.f32 0.0, %v2451
      %v2453 = vpop.f32.mrb[0].mxu0
      %v2454 = vpop.f32.mrb[0].mxu0
      %2455 = vdwg.mxu0
      %2456 = vmatprep.subr.bf16.mxu0 %v2369
      %2457 = vmatpush1.bf16.msra.mxu0 %v2366
      %2458 = vmatprep.subr.bf16.mxu0 0
      %2459 = vmatpush1.bf16.msra.mxu0 0
      %2460 = vmatprep.subr.bf16.mxu0 0
      %2461 = vmatpush1.bf16.msra.mxu0 0
      %2462 = vmatprep.subr.bf16.mxu0 0
      %2463 = vmatpush1.bf16.msra.mxu0 0
      %2464 = vmatprep.subr.bf16.mxu0 0
      %2465 = vmatpush1.bf16.msra.mxu0 0
      %2466 = vmatprep.subr.bf16.mxu0 0
      %2467 = vmatpush1.bf16.msra.mxu0 0
      %2468 = vmatprep.subr.bf16.mxu0 0
      %2469 = vmatpush1.bf16.msra.mxu0 0
      %2470 = vmatprep.subr.bf16.mxu0 0
      %2471 = vmatpush1.bf16.msra.mxu0 0
      %2472 = vmatprep.subr.bf16.mxu0 0
      %2473 = vmatpush1.bf16.msra.mxu0 0
      %2474 = vmatprep.subr.bf16.mxu0 0
      %2475 = vmatpush1.bf16.msra.mxu0 0
      %2476 = vmatprep.subr.bf16.mxu0 0
      %2477 = vmatpush1.bf16.msra.mxu0 0
      %2478 = vmatprep.subr.bf16.mxu0 0
      %2479 = vmatpush1.bf16.msra.mxu0 0
      %2480 = vmatprep.subr.bf16.mxu0 0
      %2481 = vmatpush1.bf16.msra.mxu0 0
      %2482 = vmatprep.subr.bf16.mxu0 0
      %2483 = vmatpush1.bf16.msra.mxu0 0
      %2484 = vmatprep.subr.bf16.mxu0 0
      %2485 = vmatpush1.bf16.msra.mxu0 0
      %2486 = vmatprep.subr.bf16.mxu0 0
      %2487 = vmatpush1.bf16.msra.mxu0 0
      %2488 = vmatprep.mubr.bf16.mxu0 0
      %2489 = vmatmul.mubr.bf16.gmra.mrb[0].mxu0 %v2351
      %v2490 = vpop.f32.mrb[0].mxu0
      %v2491 = vadd.f32 0.0, %v2490
      %v2492 = vpop.f32.mrb[0].mxu0
      %v2493 = vadd.f32 0.0, %v2492
      %v2494 = vpop.f32.mrb[0].mxu0
      %v2495 = vpop.f32.mrb[0].mxu0
      %2496 = vdwg.mxu0
      %2497 = vmatprep.subr.bf16.mxu0 0
      %2498 = vmatpush1.bf16.msra.mxu0 %v2372
      %2499 = vmatprep.subr.bf16.mxu0 0
      %2500 = vmatpush1.bf16.msra.mxu0 0
      %2501 = vmatprep.subr.bf16.mxu0 0
      %2502 = vmatpush1.bf16.msra.mxu0 0
      %2503 = vmatprep.subr.bf16.mxu0 0
      %2504 = vmatpush1.bf16.msra.mxu0 0
      %2505 = vmatprep.subr.bf16.mxu0 0
      %2506 = vmatpush1.bf16.msra.mxu0 0
      %2507 = vmatprep.subr.bf16.mxu0 0
      %2508 = vmatpush1.bf16.msra.mxu0 0
      %2509 = vmatprep.subr.bf16.mxu0 0
      %2510 = vmatpush1.bf16.msra.mxu0 0
      %2511 = vmatprep.subr.bf16.mxu0 0
      %2512 = vmatpush1.bf16.msra.mxu0 0
      %2513 = vmatprep.subr.bf16.mxu0 0
      %2514 = vmatpush1.bf16.msra.mxu0 0
      %2515 = vmatprep.subr.bf16.mxu0 0
      %2516 = vmatpush1.bf16.msra.mxu0 0
      %2517 = vmatprep.subr.bf16.mxu0 0
      %2518 = vmatpush1.bf16.msra.mxu0 0
      %2519 = vmatprep.subr.bf16.mxu0 0
      %2520 = vmatpush1.bf16.msra.mxu0 0
      %2521 = vmatprep.subr.bf16.mxu0 0
      %2522 = vmatpush1.bf16.msra.mxu0 0
      %2523 = vmatprep.subr.bf16.mxu0 0
      %2524 = vmatpush1.bf16.msra.mxu0 0
      %2525 = vmatprep.subr.bf16.mxu0 0
      %2526 = vmatpush1.bf16.msra.mxu0 0
      %2527 = vmatprep.subr.bf16.mxu0 0
      %2528 = vmatpush1.bf16.msra.mxu0 0
      %2529 = vmatprep.mubr.bf16.mxu0 0
      %2530 = vmatmul.mubr.bf16.gmra.mrb[0].mxu0 %v2351
      %v2531 = vpop.f32.mrb[0].mxu0
      %v2532 = vadd.f32 0.0, %v2531
      %v2533 = vpop.f32.mrb[0].mxu0
      %v2534 = vpop.f32.mrb[0].mxu0
      %v2535 = vpop.f32.mrb[0].mxu0
      %2536 = vdwg.mxu0
      %v2537 = vadd.f32 %v2302, %v2409
      %v2538 = vadd.f32 %v2303, %v2411
      %v2539 = vadd.f32 %v2304, %v2450
      %v2540 = vadd.f32 %v2305, %v2452
      %v2541 = vadd.f32 %v2306, %v2491
      %v2542 = vadd.f32 %v2307, %v2493
      %v2543 = vadd.f32 %v2308, %v2532
      %2544 = vst [vmem:[#allocation2] sm:$0xff] %v2537
      %2545 = vst [vmem:[#allocation2 + $0x8] sm:$0xff] %v2538
      %2546 = vst [vmem:[#allocation2 + $0x10] sm:$0xff] %v2539
      %2547 = vst [vmem:[#allocation2 + $0x18] sm:$0xff] %v2540
      %2548 = vst [vmem:[#allocation2 + $0x20] sm:$0xff] %v2541
      %2549 = vst [vmem:[#allocation2 + $0x28] sm:$0xff] %v2542
      %2550 = vst.msk [vmem:[#allocation2 + $0x30] sm:$0xff] %vm292, %v2543
      %v2551 = vld [vmem:[%s267] sm:$0xff]
      %v2552 = vld [vmem:[%s267 + $0x8] sm:$0xff]
      %v2553 = vld [vmem:[%s267 + $0x10] sm:$0xff]
      %v2554 = vld [vmem:[%s267 + $0x18] sm:$0xf]
      %v2555 = vld [vmem:[#allocation2] sm:$0xff]
      %v2556 = vld [vmem:[#allocation2 + $0x8] sm:$0xff]
      %v2557 = vld [vmem:[#allocation2 + $0x10] sm:$0xff]
      %v2558 = vld [vmem:[#allocation2 + $0x18] sm:$0xff]
      %v2559 = vld [vmem:[#allocation2 + $0x20] sm:$0xff]
      %v2560 = vld [vmem:[#allocation2 + $0x28] sm:$0xff]
      %v2561 = vld [vmem:[#allocation2 + $0x30] sm:$0xff]
      %s2562 = scalar_lea.vmem %s262, 36
      %v2563 = vld [vmem:[%s2562] sm:$0xf]
      %v2568 = vunpack.c.l.b16 %v2551
      %v2569 = vunpack.c.h.b16 %v2551
      %v2570 = vunpack.c.l.b16 %v2552
      %v2571 = vunpack.c.h.b16 %v2552
      %v2572 = vunpack.c.l.b16 %v2553
      %v2573 = vunpack.c.h.b16 %v2553
      %v2574 = vunpack.c.l.b16 %v2554
      %v2575 = vpack.c.b16 %v2568, %v2568
      %v2576 = vpack.c.b16 %v2569, %v2569
      %v2577 = vpack.c.b16 %v2570, %v2570
      %v2578 = vpack.c.b16 %v2571, %v2571
      %v2579 = vpack.c.b16 %v2572, %v2572
      %v2580 = vpack.c.b16 %v2573, %v2573
      %v2581 = vpack.c.b16 %v2574, %v2574
      %2582 = vrot.lane.b32.xlu0 %v2575, 28
      %v2583 = vpop.permute.xlu0 %2582
      %2584 = vrot.lane.b32.xlu0 %v2576, 28
      %v2585 = vpop.permute.xlu0 %2584
      %2586 = vrot.lane.b32.xlu0 %v2577, 28
      %v2587 = vpop.permute.xlu0 %2586
      %2588 = vrot.lane.b32.xlu0 %v2578, 28
      %v2589 = vpop.permute.xlu0 %2588
      %2590 = vrot.lane.b32.xlu0 %v2579, 28
      %v2591 = vpop.permute.xlu0 %2590
      %2592 = vrot.lane.b32.xlu0 %v2580, 28
      %v2593 = vpop.permute.xlu0 %2592
      %2594 = vrot.lane.b32.xlu0 %v2581, 28
      %v2595 = vpop.permute.xlu0 %2594
      %vm2596 = vcmask 228352
      %v2597 = vsel %vm2596, %v2583, %v2585
      %v2598 = vsel %vm2596, %v2585, %v2587
      %v2599 = vsel %vm2596, %v2587, %v2589
      %v2600 = vsel %vm2596, %v2589, %v2591
      %v2601 = vsel %vm2596, %v2591, %v2593
      %v2602 = vsel %vm2596, %v2593, %v2595
      %v2604 = vsel %vm324, %v2563, 0
      %v2607 = vsel %vm328, %v2597, 0
      %v2610 = vsel %vm328, %v2598, 0
      %v2613 = vsel %vm328, %v2599, 0
      %v2616 = vsel %vm328, %v2600, 0
      %v2619 = vsel %vm328, %v2601, 0
      %v2622 = vsel %vm328, %v2602, 0
      %v2625 = vsel %vm328, %v2595, 0
      %2627 = vmatprep.subr.bf16.mxu0 %v2610
      %2628 = vmatpush1.bf16.msra.mxu0 %v2607
      %2629 = vmatprep.subr.bf16.mxu0 0
      %2630 = vmatpush1.bf16.msra.mxu0 0
      %2631 = vmatprep.subr.bf16.mxu0 0
      %2632 = vmatpush1.bf16.msra.mxu0 0
      %2633 = vmatprep.subr.bf16.mxu0 0
      %2634 = vmatpush1.bf16.msra.mxu0 0
      %2635 = vmatprep.subr.bf16.mxu0 0
      %2636 = vmatpush1.bf16.msra.mxu0 0
      %2637 = vmatprep.subr.bf16.mxu0 0
      %2638 = vmatpush1.bf16.msra.mxu0 0
      %2639 = vmatprep.subr.bf16.mxu0 0
      %2640 = vmatpush1.bf16.msra.mxu0 0
      %2641 = vmatprep.subr.bf16.mxu0 0
      %2642 = vmatpush1.bf16.msra.mxu0 0
      %2643 = vmatprep.subr.bf16.mxu0 0
      %2644 = vmatpush1.bf16.msra.mxu0 0
      %2645 = vmatprep.subr.bf16.mxu0 0
      %2646 = vmatpush1.bf16.msra.mxu0 0
      %2647 = vmatprep.subr.bf16.mxu0 0
      %2648 = vmatpush1.bf16.msra.mxu0 0
      %2649 = vmatprep.subr.bf16.mxu0 0
      %2650 = vmatpush1.bf16.msra.mxu0 0
      %2651 = vmatprep.subr.bf16.mxu0 0
      %2652 = vmatpush1.bf16.msra.mxu0 0
      %2653 = vmatprep.subr.bf16.mxu0 0
      %2654 = vmatpush1.bf16.msra.mxu0 0
      %2655 = vmatprep.subr.bf16.mxu0 0
      %2656 = vmatpush1.bf16.msra.mxu0 0
      %2657 = vmatprep.subr.bf16.mxu0 0
      %2658 = vmatpush1.bf16.msra.mxu0 0
      %2659 = vmatprep.mubr.bf16.mxu0 0
      %2660 = vmatmul.mubr.bf16.gmra.mrb[0].mxu0 %v2604
      %v2661 = vpop.f32.mrb[0].mxu0
      %v2662 = vadd.f32 0.0, %v2661
      %v2663 = vpop.f32.mrb[0].mxu0
      %v2664 = vadd.f32 0.0, %v2663
      %v2665 = vpop.f32.mrb[0].mxu0
      %v2666 = vpop.f32.mrb[0].mxu0
      %2667 = vdwg.mxu0
      %2668 = vmatprep.subr.bf16.mxu0 %v2616
      %2669 = vmatpush1.bf16.msra.mxu0 %v2613
      %2670 = vmatprep.subr.bf16.mxu0 0
      %2671 = vmatpush1.bf16.msra.mxu0 0
      %2672 = vmatprep.subr.bf16.mxu0 0
      %2673 = vmatpush1.bf16.msra.mxu0 0
      %2674 = vmatprep.subr.bf16.mxu0 0
      %2675 = vmatpush1.bf16.msra.mxu0 0
      %2676 = vmatprep.subr.bf16.mxu0 0
      %2677 = vmatpush1.bf16.msra.mxu0 0
      %2678 = vmatprep.subr.bf16.mxu0 0
      %2679 = vmatpush1.bf16.msra.mxu0 0
      %2680 = vmatprep.subr.bf16.mxu0 0
      %2681 = vmatpush1.bf16.msra.mxu0 0
      %2682 = vmatprep.subr.bf16.mxu0 0
      %2683 = vmatpush1.bf16.msra.mxu0 0
      %2684 = vmatprep.subr.bf16.mxu0 0
      %2685 = vmatpush1.bf16.msra.mxu0 0
      %2686 = vmatprep.subr.bf16.mxu0 0
      %2687 = vmatpush1.bf16.msra.mxu0 0
      %2688 = vmatprep.subr.bf16.mxu0 0
      %2689 = vmatpush1.bf16.msra.mxu0 0
      %2690 = vmatprep.subr.bf16.mxu0 0
      %2691 = vmatpush1.bf16.msra.mxu0 0
      %2692 = vmatprep.subr.bf16.mxu0 0
      %2693 = vmatpush1.bf16.msra.mxu0 0
      %2694 = vmatprep.subr.bf16.mxu0 0
      %2695 = vmatpush1.bf16.msra.mxu0 0
      %2696 = vmatprep.subr.bf16.mxu0 0
      %2697 = vmatpush1.bf16.msra.mxu0 0
      %2698 = vmatprep.subr.bf16.mxu0 0
      %2699 = vmatpush1.bf16.msra.mxu0 0
      %2700 = vmatprep.mubr.bf16.mxu0 0
      %2701 = vmatmul.mubr.bf16.gmra.mrb[0].mxu0 %v2604
      %v2702 = vpop.f32.mrb[0].mxu0
      %v2703 = vadd.f32 0.0, %v2702
      %v2704 = vpop.f32.mrb[0].mxu0
      %v2705 = vadd.f32 0.0, %v2704
      %v2706 = vpop.f32.mrb[0].mxu0
      %v2707 = vpop.f32.mrb[0].mxu0
      %2708 = vdwg.mxu0
      %2709 = vmatprep.subr.bf16.mxu0 %v2622
      %2710 = vmatpush1.bf16.msra.mxu0 %v2619
      %2711 = vmatprep.subr.bf16.mxu0 0
      %2712 = vmatpush1.bf16.msra.mxu0 0
      %2713 = vmatprep.subr.bf16.mxu0 0
      %2714 = vmatpush1.bf16.msra.mxu0 0
      %2715 = vmatprep.subr.bf16.mxu0 0
      %2716 = vmatpush1.bf16.msra.mxu0 0
      %2717 = vmatprep.subr.bf16.mxu0 0
      %2718 = vmatpush1.bf16.msra.mxu0 0
      %2719 = vmatprep.subr.bf16.mxu0 0
      %2720 = vmatpush1.bf16.msra.mxu0 0
      %2721 = vmatprep.subr.bf16.mxu0 0
      %2722 = vmatpush1.bf16.msra.mxu0 0
      %2723 = vmatprep.subr.bf16.mxu0 0
      %2724 = vmatpush1.bf16.msra.mxu0 0
      %2725 = vmatprep.subr.bf16.mxu0 0
      %2726 = vmatpush1.bf16.msra.mxu0 0
      %2727 = vmatprep.subr.bf16.mxu0 0
      %2728 = vmatpush1.bf16.msra.mxu0 0
      %2729 = vmatprep.subr.bf16.mxu0 0
      %2730 = vmatpush1.bf16.msra.mxu0 0
      %2731 = vmatprep.subr.bf16.mxu0 0
      %2732 = vmatpush1.bf16.msra.mxu0 0
      %2733 = vmatprep.subr.bf16.mxu0 0
      %2734 = vmatpush1.bf16.msra.mxu0 0
      %2735 = vmatprep.subr.bf16.mxu0 0
      %2736 = vmatpush1.bf16.msra.mxu0 0
      %2737 = vmatprep.subr.bf16.mxu0 0
      %2738 = vmatpush1.bf16.msra.mxu0 0
      %2739 = vmatprep.subr.bf16.mxu0 0
      %2740 = vmatpush1.bf16.msra.mxu0 0
      %2741 = vmatprep.mubr.bf16.mxu0 0
      %2742 = vmatmul.mubr.bf16.gmra.mrb[0].mxu0 %v2604
      %v2743 = vpop.f32.mrb[0].mxu0
      %v2744 = vadd.f32 0.0, %v2743
      %v2745 = vpop.f32.mrb[0].mxu0
      %v2746 = vadd.f32 0.0, %v2745
      %v2747 = vpop.f32.mrb[0].mxu0
      %v2748 = vpop.f32.mrb[0].mxu0
      %2749 = vdwg.mxu0
      %2750 = vmatprep.subr.bf16.mxu0 0
      %2751 = vmatpush1.bf16.msra.mxu0 %v2625
      %2752 = vmatprep.subr.bf16.mxu0 0
      %2753 = vmatpush1.bf16.msra.mxu0 0
      %2754 = vmatprep.subr.bf16.mxu0 0
      %2755 = vmatpush1.bf16.msra.mxu0 0
      %2756 = vmatprep.subr.bf16.mxu0 0
      %2757 = vmatpush1.bf16.msra.mxu0 0
      %2758 = vmatprep.subr.bf16.mxu0 0
      %2759 = vmatpush1.bf16.msra.mxu0 0
      %2760 = vmatprep.subr.bf16.mxu0 0
      %2761 = vmatpush1.bf16.msra.mxu0 0
      %2762 = vmatprep.subr.bf16.mxu0 0
      %2763 = vmatpush1.bf16.msra.mxu0 0
      %2764 = vmatprep.subr.bf16.mxu0 0
      %2765 = vmatpush1.bf16.msra.mxu0 0
      %2766 = vmatprep.subr.bf16.mxu0 0
      %2767 = vmatpush1.bf16.msra.mxu0 0
      %2768 = vmatprep.subr.bf16.mxu0 0
      %2769 = vmatpush1.bf16.msra.mxu0 0
      %2770 = vmatprep.subr.bf16.mxu0 0
      %2771 = vmatpush1.bf16.msra.mxu0 0
      %2772 = vmatprep.subr.bf16.mxu0 0
      %2773 = vmatpush1.bf16.msra.mxu0 0
      %2774 = vmatprep.subr.bf16.mxu0 0
      %2775 = vmatpush1.bf16.msra.mxu0 0
      %2776 = vmatprep.subr.bf16.mxu0 0
      %2777 = vmatpush1.bf16.msra.mxu0 0
      %2778 = vmatprep.subr.bf16.mxu0 0
      %2779 = vmatpush1.bf16.msra.mxu0 0
      %2780 = vmatprep.subr.bf16.mxu0 0
      %2781 = vmatpush1.bf16.msra.mxu0 0
      %2782 = vmatprep.mubr.bf16.mxu0 0
      %2783 = vmatmul.mubr.bf16.gmra.mrb[0].mxu0 %v2604
      %v2784 = vpop.f32.mrb[0].mxu0
      %v2785 = vadd.f32 0.0, %v2784
      %v2786 = vpop.f32.mrb[0].mxu0
      %v2787 = vpop.f32.mrb[0].mxu0
      %v2788 = vpop.f32.mrb[0].mxu0
      %2789 = vdwg.mxu0
      %v2790 = vadd.f32 %v2555, %v2662
      %v2791 = vadd.f32 %v2556, %v2664
      %v2792 = vadd.f32 %v2557, %v2703
      %v2793 = vadd.f32 %v2558, %v2705
      %v2794 = vadd.f32 %v2559, %v2744
      %v2795 = vadd.f32 %v2560, %v2746
      %v2796 = vadd.f32 %v2561, %v2785
      %2797 = vst [vmem:[#allocation2] sm:$0xff] %v2790
      %2798 = vst [vmem:[#allocation2 + $0x8] sm:$0xff] %v2791
      %2799 = vst [vmem:[#allocation2 + $0x10] sm:$0xff] %v2792
      %2800 = vst [vmem:[#allocation2 + $0x18] sm:$0xff] %v2793
      %2801 = vst [vmem:[#allocation2 + $0x20] sm:$0xff] %v2794
      %2802 = vst [vmem:[#allocation2 + $0x28] sm:$0xff] %v2795
      %2803 = vst.msk [vmem:[#allocation2 + $0x30] sm:$0xff] %vm292, %v2796
      %v2804 = vld [vmem:[%s267] sm:$0xff]
      %v2805 = vld [vmem:[%s267 + $0x8] sm:$0xff]
      %v2806 = vld [vmem:[%s267 + $0x10] sm:$0xff]
      %v2807 = vld [vmem:[%s267 + $0x18] sm:$0xf]
      %v2808 = vld [vmem:[#allocation2] sm:$0xff]
      %v2809 = vld [vmem:[#allocation2 + $0x8] sm:$0xff]
      %v2810 = vld [vmem:[#allocation2 + $0x10] sm:$0xff]
      %v2811 = vld [vmem:[#allocation2 + $0x18] sm:$0xff]
      %v2812 = vld [vmem:[#allocation2 + $0x20] sm:$0xff]
      %v2813 = vld [vmem:[#allocation2 + $0x28] sm:$0xff]
      %v2814 = vld [vmem:[#allocation2 + $0x30] sm:$0xff]
      %s2815 = scalar_lea.vmem %s262, 40
      %v2816 = vld [vmem:[%s2815] sm:$0xf]
      %v2821 = vunpack.c.l.b16 %v2804
      %v2822 = vunpack.c.h.b16 %v2804
      %v2823 = vunpack.c.l.b16 %v2805
      %v2824 = vunpack.c.h.b16 %v2805
      %v2825 = vunpack.c.l.b16 %v2806
      %v2826 = vunpack.c.h.b16 %v2806
      %v2827 = vunpack.c.l.b16 %v2807
      %v2828 = vpack.c.b16 %v2821, %v2821
      %v2829 = vpack.c.b16 %v2822, %v2822
      %v2830 = vpack.c.b16 %v2823, %v2823
      %v2831 = vpack.c.b16 %v2824, %v2824
      %v2832 = vpack.c.b16 %v2825, %v2825
      %v2833 = vpack.c.b16 %v2826, %v2826
      %v2834 = vpack.c.b16 %v2827, %v2827
      %2835 = vrot.lane.b32.xlu0 %v2828, 27
      %v2836 = vpop.permute.xlu0 %2835
      %2837 = vrot.lane.b32.xlu0 %v2829, 27
      %v2838 = vpop.permute.xlu0 %2837
      %2839 = vrot.lane.b32.xlu0 %v2830, 27
      %v2840 = vpop.permute.xlu0 %2839
      %2841 = vrot.lane.b32.xlu0 %v2831, 27
      %v2842 = vpop.permute.xlu0 %2841
      %2843 = vrot.lane.b32.xlu0 %v2832, 27
      %v2844 = vpop.permute.xlu0 %2843
      %2845 = vrot.lane.b32.xlu0 %v2833, 27
      %v2846 = vpop.permute.xlu0 %2845
      %2847 = vrot.lane.b32.xlu0 %v2834, 27
      %v2848 = vpop.permute.xlu0 %2847
      %vm2849 = vcmask 220160
      %v2850 = vsel %vm2849, %v2836, %v2838
      %v2851 = vsel %vm2849, %v2838, %v2840
      %v2852 = vsel %vm2849, %v2840, %v2842
      %v2853 = vsel %vm2849, %v2842, %v2844
      %v2854 = vsel %vm2849, %v2844, %v2846
      %v2855 = vsel %vm2849, %v2846, %v2848
      %v2857 = vsel %vm324, %v2816, 0
      %v2860 = vsel %vm328, %v2850, 0
      %v2863 = vsel %vm328, %v2851, 0
      %v2866 = vsel %vm328, %v2852, 0
      %v2869 = vsel %vm328, %v2853, 0
      %v2872 = vsel %vm328, %v2854, 0
      %v2875 = vsel %vm328, %v2855, 0
      %v2878 = vsel %vm328, %v2848, 0
      %2880 = vmatprep.subr.bf16.mxu0 %v2863
      %2881 = vmatpush1.bf16.msra.mxu0 %v2860
      %2882 = vmatprep.subr.bf16.mxu0 0
      %2883 = vmatpush1.bf16.msra.mxu0 0
      %2884 = vmatprep.subr.bf16.mxu0 0
      %2885 = vmatpush1.bf16.msra.mxu0 0
      %2886 = vmatprep.subr.bf16.mxu0 0
      %2887 = vmatpush1.bf16.msra.mxu0 0
      %2888 = vmatprep.subr.bf16.mxu0 0
      %2889 = vmatpush1.bf16.msra.mxu0 0
      %2890 = vmatprep.subr.bf16.mxu0 0
      %2891 = vmatpush1.bf16.msra.mxu0 0
      %2892 = vmatprep.subr.bf16.mxu0 0
      %2893 = vmatpush1.bf16.msra.mxu0 0
      %2894 = vmatprep.subr.bf16.mxu0 0
      %2895 = vmatpush1.bf16.msra.mxu0 0
      %2896 = vmatprep.subr.bf16.mxu0 0
      %2897 = vmatpush1.bf16.msra.mxu0 0
      %2898 = vmatprep.subr.bf16.mxu0 0
      %2899 = vmatpush1.bf16.msra.mxu0 0
      %2900 = vmatprep.subr.bf16.mxu0 0
      %2901 = vmatpush1.bf16.msra.mxu0 0
      %2902 = vmatprep.subr.bf16.mxu0 0
      %2903 = vmatpush1.bf16.msra.mxu0 0
      %2904 = vmatprep.subr.bf16.mxu0 0
      %2905 = vmatpush1.bf16.msra.mxu0 0
      %2906 = vmatprep.subr.bf16.mxu0 0
      %2907 = vmatpush1.bf16.msra.mxu0 0
      %2908 = vmatprep.subr.bf16.mxu0 0
      %2909 = vmatpush1.bf16.msra.mxu0 0
      %2910 = vmatprep.subr.bf16.mxu0 0
      %2911 = vmatpush1.bf16.msra.mxu0 0
      %2912 = vmatprep.mubr.bf16.mxu0 0
      %2913 = vmatmul.mubr.bf16.gmra.mrb[0].mxu0 %v2857
      %v2914 = vpop.f32.mrb[0].mxu0
      %v2915 = vadd.f32 0.0, %v2914
      %v2916 = vpop.f32.mrb[0].mxu0
      %v2917 = vadd.f32 0.0, %v2916
      %v2918 = vpop.f32.mrb[0].mxu0
      %v2919 = vpop.f32.mrb[0].mxu0
      %2920 = vdwg.mxu0
      %2921 = vmatprep.subr.bf16.mxu0 %v2869
      %2922 = vmatpush1.bf16.msra.mxu0 %v2866
      %2923 = vmatprep.subr.bf16.mxu0 0
      %2924 = vmatpush1.bf16.msra.mxu0 0
      %2925 = vmatprep.subr.bf16.mxu0 0
      %2926 = vmatpush1.bf16.msra.mxu0 0
      %2927 = vmatprep.subr.bf16.mxu0 0
      %2928 = vmatpush1.bf16.msra.mxu0 0
      %2929 = vmatprep.subr.bf16.mxu0 0
      %2930 = vmatpush1.bf16.msra.mxu0 0
      %2931 = vmatprep.subr.bf16.mxu0 0
      %2932 = vmatpush1.bf16.msra.mxu0 0
      %2933 = vmatprep.subr.bf16.mxu0 0
      %2934 = vmatpush1.bf16.msra.mxu0 0
      %2935 = vmatprep.subr.bf16.mxu0 0
      %2936 = vmatpush1.bf16.msra.mxu0 0
      %2937 = vmatprep.subr.bf16.mxu0 0
      %2938 = vmatpush1.bf16.msra.mxu0 0
      %2939 = vmatprep.subr.bf16.mxu0 0
      %2940 = vmatpush1.bf16.msra.mxu0 0
      %2941 = vmatprep.subr.bf16.mxu0 0
      %2942 = vmatpush1.bf16.msra.mxu0 0
      %2943 = vmatprep.subr.bf16.mxu0 0
      %2944 = vmatpush1.bf16.msra.mxu0 0
      %2945 = vmatprep.subr.bf16.mxu0 0
      %2946 = vmatpush1.bf16.msra.mxu0 0
      %2947 = vmatprep.subr.bf16.mxu0 0
      %2948 = vmatpush1.bf16.msra.mxu0 0
      %2949 = vmatprep.subr.bf16.mxu0 0
      %2950 = vmatpush1.bf16.msra.mxu0 0
      %2951 = vmatprep.subr.bf16.mxu0 0
      %2952 = vmatpush1.bf16.msra.mxu0 0
      %2953 = vmatprep.mubr.bf16.mxu0 0
      %2954 = vmatmul.mubr.bf16.gmra.mrb[0].mxu0 %v2857
      %v2955 = vpop.f32.mrb[0].mxu0
      %v2956 = vadd.f32 0.0, %v2955
      %v2957 = vpop.f32.mrb[0].mxu0
      %v2958 = vadd.f32 0.0, %v2957
      %v2959 = vpop.f32.mrb[0].mxu0
      %v2960 = vpop.f32.mrb[0].mxu0
      %2961 = vdwg.mxu0
      %2962 = vmatprep.subr.bf16.mxu0 %v2875
      %2963 = vmatpush1.bf16.msra.mxu0 %v2872
      %2964 = vmatprep.subr.bf16.mxu0 0
      %2965 = vmatpush1.bf16.msra.mxu0 0
      %2966 = vmatprep.subr.bf16.mxu0 0
      %2967 = vmatpush1.bf16.msra.mxu0 0
      %2968 = vmatprep.subr.bf16.mxu0 0
      %2969 = vmatpush1.bf16.msra.mxu0 0
      %2970 = vmatprep.subr.bf16.mxu0 0
      %2971 = vmatpush1.bf16.msra.mxu0 0
      %2972 = vmatprep.subr.bf16.mxu0 0
      %2973 = vmatpush1.bf16.msra.mxu0 0
      %2974 = vmatprep.subr.bf16.mxu0 0
      %2975 = vmatpush1.bf16.msra.mxu0 0
      %2976 = vmatprep.subr.bf16.mxu0 0
      %2977 = vmatpush1.bf16.msra.mxu0 0
      %2978 = vmatprep.subr.bf16.mxu0 0
      %2979 = vmatpush1.bf16.msra.mxu0 0
      %2980 = vmatprep.subr.bf16.mxu0 0
      %2981 = vmatpush1.bf16.msra.mxu0 0
      %2982 = vmatprep.subr.bf16.mxu0 0
      %2983 = vmatpush1.bf16.msra.mxu0 0
      %2984 = vmatprep.subr.bf16.mxu0 0
      %2985 = vmatpush1.bf16.msra.mxu0 0
      %2986 = vmatprep.subr.bf16.mxu0 0
      %2987 = vmatpush1.bf16.msra.mxu0 0
      %2988 = vmatprep.subr.bf16.mxu0 0
      %2989 = vmatpush1.bf16.msra.mxu0 0
      %2990 = vmatprep.subr.bf16.mxu0 0
      %2991 = vmatpush1.bf16.msra.mxu0 0
      %2992 = vmatprep.subr.bf16.mxu0 0
      %2993 = vmatpush1.bf16.msra.mxu0 0
      %2994 = vmatprep.mubr.bf16.mxu0 0
      %2995 = vmatmul.mubr.bf16.gmra.mrb[0].mxu0 %v2857
      %v2996 = vpop.f32.mrb[0].mxu0
      %v2997 = vadd.f32 0.0, %v2996
      %v2998 = vpop.f32.mrb[0].mxu0
      %v2999 = vadd.f32 0.0, %v2998
      %v3000 = vpop.f32.mrb[0].mxu0
      %v3001 = vpop.f32.mrb[0].mxu0
      %3002 = vdwg.mxu0
      %3003 = vmatprep.subr.bf16.mxu0 0
      %3004 = vmatpush1.bf16.msra.mxu0 %v2878
      %3005 = vmatprep.subr.bf16.mxu0 0
      %3006 = vmatpush1.bf16.msra.mxu0 0
      %3007 = vmatprep.subr.bf16.mxu0 0
      %3008 = vmatpush1.bf16.msra.mxu0 0
      %3009 = vmatprep.subr.bf16.mxu0 0
      %3010 = vmatpush1.bf16.msra.mxu0 0
      %3011 = vmatprep.subr.bf16.mxu0 0
      %3012 = vmatpush1.bf16.msra.mxu0 0
      %3013 = vmatprep.subr.bf16.mxu0 0
      %3014 = vmatpush1.bf16.msra.mxu0 0
      %3015 = vmatprep.subr.bf16.mxu0 0
      %3016 = vmatpush1.bf16.msra.mxu0 0
      %3017 = vmatprep.subr.bf16.mxu0 0
      %3018 = vmatpush1.bf16.msra.mxu0 0
      %3019 = vmatprep.subr.bf16.mxu0 0
      %3020 = vmatpush1.bf16.msra.mxu0 0
      %3021 = vmatprep.subr.bf16.mxu0 0
      %3022 = vmatpush1.bf16.msra.mxu0 0
      %3023 = vmatprep.subr.bf16.mxu0 0
      %3024 = vmatpush1.bf16.msra.mxu0 0
      %3025 = vmatprep.subr.bf16.mxu0 0
      %3026 = vmatpush1.bf16.msra.mxu0 0
      %3027 = vmatprep.subr.bf16.mxu0 0
      %3028 = vmatpush1.bf16.msra.mxu0 0
      %3029 = vmatprep.subr.bf16.mxu0 0
      %3030 = vmatpush1.bf16.msra.mxu0 0
      %3031 = vmatprep.subr.bf16.mxu0 0
      %3032 = vmatpush1.bf16.msra.mxu0 0
      %3033 = vmatprep.subr.bf16.mxu0 0
      %3034 = vmatpush1.bf16.msra.mxu0 0
      %3035 = vmatprep.mubr.bf16.mxu0 0
      %3036 = vmatmul.mubr.bf16.gmra.mrb[0].mxu0 %v2857
      %v3037 = vpop.f32.mrb[0].mxu0
      %v3038 = vadd.f32 0.0, %v3037
      %v3039 = vpop.f32.mrb[0].mxu0
      %v3040 = vpop.f32.mrb[0].mxu0
      %v3041 = vpop.f32.mrb[0].mxu0
      %3042 = vdwg.mxu0
      %v3043 = vadd.f32 %v2808, %v2915
      %v3044 = vadd.f32 %v2809, %v2917
      %v3045 = vadd.f32 %v2810, %v2956
      %v3046 = vadd.f32 %v2811, %v2958
      %v3047 = vadd.f32 %v2812, %v2997
      %v3048 = vadd.f32 %v2813, %v2999
      %v3049 = vadd.f32 %v2814, %v3038
      %3050 = vst [vmem:[#allocation2] sm:$0xff] %v3043
      %3051 = vst [vmem:[#allocation2 + $0x8] sm:$0xff] %v3044
      %3052 = vst [vmem:[#allocation2 + $0x10] sm:$0xff] %v3045
      %3053 = vst [vmem:[#allocation2 + $0x18] sm:$0xff] %v3046
      %3054 = vst [vmem:[#allocation2 + $0x20] sm:$0xff] %v3047
      %3055 = vst [vmem:[#allocation2 + $0x28] sm:$0xff] %v3048
      %3056 = vst.msk [vmem:[#allocation2 + $0x30] sm:$0xff] %vm292, %v3049
      %v3057 = vld [vmem:[%s267] sm:$0xff]
      %v3058 = vld [vmem:[%s267 + $0x8] sm:$0xff]
      %v3059 = vld [vmem:[%s267 + $0x10] sm:$0xff]
      %v3060 = vld [vmem:[%s267 + $0x18] sm:$0xf]
      %v3061 = vld [vmem:[#allocation2] sm:$0xff]
      %v3062 = vld [vmem:[#allocation2 + $0x8] sm:$0xff]
      %v3063 = vld [vmem:[#allocation2 + $0x10] sm:$0xff]
      %v3064 = vld [vmem:[#allocation2 + $0x18] sm:$0xff]
      %v3065 = vld [vmem:[#allocation2 + $0x20] sm:$0xff]
      %v3066 = vld [vmem:[#allocation2 + $0x28] sm:$0xff]
      %v3067 = vld [vmem:[#allocation2 + $0x30] sm:$0xff]
      %s3068 = scalar_lea.vmem %s262, 44
      %v3069 = vld [vmem:[%s3068] sm:$0xf]
      %v3074 = vunpack.c.l.b16 %v3057
      %v3075 = vunpack.c.h.b16 %v3057
      %v3076 = vunpack.c.l.b16 %v3058
      %v3077 = vunpack.c.h.b16 %v3058
      %v3078 = vunpack.c.l.b16 %v3059
      %v3079 = vunpack.c.h.b16 %v3059
      %v3080 = vunpack.c.l.b16 %v3060
      %v3081 = vpack.c.b16 %v3074, %v3074
      %v3082 = vpack.c.b16 %v3075, %v3075
      %v3083 = vpack.c.b16 %v3076, %v3076
      %v3084 = vpack.c.b16 %v3077, %v3077
      %v3085 = vpack.c.b16 %v3078, %v3078
      %v3086 = vpack.c.b16 %v3079, %v3079
      %v3087 = vpack.c.b16 %v3080, %v3080
      %3088 = vrot.lane.b32.xlu0 %v3081, 26
      %v3089 = vpop.permute.xlu0 %3088
      %3090 = vrot.lane.b32.xlu0 %v3082, 26
      %v3091 = vpop.permute.xlu0 %3090
      %3092 = vrot.lane.b32.xlu0 %v3083, 26
      %v3093 = vpop.permute.xlu0 %3092
      %3094 = vrot.lane.b32.xlu0 %v3084, 26
      %v3095 = vpop.permute.xlu0 %3094
      %3096 = vrot.lane.b32.xlu0 %v3085, 26
      %v3097 = vpop.permute.xlu0 %3096
      %3098 = vrot.lane.b32.xlu0 %v3086, 26
      %v3099 = vpop.permute.xlu0 %3098
      %3100 = vrot.lane.b32.xlu0 %v3087, 26
      %v3101 = vpop.permute.xlu0 %3100
      %vm3102 = vcmask 211968
      %v3103 = vsel %vm3102, %v3089, %v3091
      %v3104 = vsel %vm3102, %v3091, %v3093
      %v3105 = vsel %vm3102, %v3093, %v3095
      %v3106 = vsel %vm3102, %v3095, %v3097
      %v3107 = vsel %vm3102, %v3097, %v3099
      %v3108 = vsel %vm3102, %v3099, %v3101
      %v3110 = vsel %vm324, %v3069, 0
      %v3113 = vsel %vm328, %v3103, 0
      %v3116 = vsel %vm328, %v3104, 0
      %v3119 = vsel %vm328, %v3105, 0
      %v3122 = vsel %vm328, %v3106, 0
      %v3125 = vsel %vm328, %v3107, 0
      %v3128 = vsel %vm328, %v3108, 0
      %v3131 = vsel %vm328, %v3101, 0
      %3133 = vmatprep.subr.bf16.mxu0 %v3116
      %3134 = vmatpush1.bf16.msra.mxu0 %v3113
      %3135 = vmatprep.subr.bf16.mxu0 0
      %3136 = vmatpush1.bf16.msra.mxu0 0
      %3137 = vmatprep.subr.bf16.mxu0 0
      %3138 = vmatpush1.bf16.msra.mxu0 0
      %3139 = vmatprep.subr.bf16.mxu0 0
      %3140 = vmatpush1.bf16.msra.mxu0 0
      %3141 = vmatprep.subr.bf16.mxu0 0
      %3142 = vmatpush1.bf16.msra.mxu0 0
      %3143 = vmatprep.subr.bf16.mxu0 0
      %3144 = vmatpush1.bf16.msra.mxu0 0
      %3145 = vmatprep.subr.bf16.mxu0 0
      %3146 = vmatpush1.bf16.msra.mxu0 0
      %3147 = vmatprep.subr.bf16.mxu0 0
      %3148 = vmatpush1.bf16.msra.mxu0 0
      %3149 = vmatprep.subr.bf16.mxu0 0
      %3150 = vmatpush1.bf16.msra.mxu0 0
      %3151 = vmatprep.subr.bf16.mxu0 0
      %3152 = vmatpush1.bf16.msra.mxu0 0
      %3153 = vmatprep.subr.bf16.mxu0 0
      %3154 = vmatpush1.bf16.msra.mxu0 0
      %3155 = vmatprep.subr.bf16.mxu0 0
      %3156 = vmatpush1.bf16.msra.mxu0 0
      %3157 = vmatprep.subr.bf16.mxu0 0
      %3158 = vmatpush1.bf16.msra.mxu0 0
      %3159 = vmatprep.subr.bf16.mxu0 0
      %3160 = vmatpush1.bf16.msra.mxu0 0
      %3161 = vmatprep.subr.bf16.mxu0 0
      %3162 = vmatpush1.bf16.msra.mxu0 0
      %3163 = vmatprep.subr.bf16.mxu0 0
      %3164 = vmatpush1.bf16.msra.mxu0 0
      %3165 = vmatprep.mubr.bf16.mxu0 0
      %3166 = vmatmul.mubr.bf16.gmra.mrb[0].mxu0 %v3110
      %v3167 = vpop.f32.mrb[0].mxu0
      %v3168 = vadd.f32 0.0, %v3167
      %v3169 = vpop.f32.mrb[0].mxu0
      %v3170 = vadd.f32 0.0, %v3169
      %v3171 = vpop.f32.mrb[0].mxu0
      %v3172 = vpop.f32.mrb[0].mxu0
      %3173 = vdwg.mxu0
      %3174 = vmatprep.subr.bf16.mxu0 %v3122
      %3175 = vmatpush1.bf16.msra.mxu0 %v3119
      %3176 = vmatprep.subr.bf16.mxu0 0
      %3177 = vmatpush1.bf16.msra.mxu0 0
      %3178 = vmatprep.subr.bf16.mxu0 0
      %3179 = vmatpush1.bf16.msra.mxu0 0
      %3180 = vmatprep.subr.bf16.mxu0 0
      %3181 = vmatpush1.bf16.msra.mxu0 0
      %3182 = vmatprep.subr.bf16.mxu0 0
      %3183 = vmatpush1.bf16.msra.mxu0 0
      %3184 = vmatprep.subr.bf16.mxu0 0
      %3185 = vmatpush1.bf16.msra.mxu0 0
      %3186 = vmatprep.subr.bf16.mxu0 0
      %3187 = vmatpush1.bf16.msra.mxu0 0
      %3188 = vmatprep.subr.bf16.mxu0 0
      %3189 = vmatpush1.bf16.msra.mxu0 0
      %3190 = vmatprep.subr.bf16.mxu0 0
      %3191 = vmatpush1.bf16.msra.mxu0 0
      %3192 = vmatprep.subr.bf16.mxu0 0
      %3193 = vmatpush1.bf16.msra.mxu0 0
      %3194 = vmatprep.subr.bf16.mxu0 0
      %3195 = vmatpush1.bf16.msra.mxu0 0
      %3196 = vmatprep.subr.bf16.mxu0 0
      %3197 = vmatpush1.bf16.msra.mxu0 0
      %3198 = vmatprep.subr.bf16.mxu0 0
      %3199 = vmatpush1.bf16.msra.mxu0 0
      %3200 = vmatprep.subr.bf16.mxu0 0
      %3201 = vmatpush1.bf16.msra.mxu0 0
      %3202 = vmatprep.subr.bf16.mxu0 0
      %3203 = vmatpush1.bf16.msra.mxu0 0
      %3204 = vmatprep.subr.bf16.mxu0 0
      %3205 = vmatpush1.bf16.msra.mxu0 0
      %3206 = vmatprep.mubr.bf16.mxu0 0
      %3207 = vmatmul.mubr.bf16.gmra.mrb[0].mxu0 %v3110
      %v3208 = vpop.f32.mrb[0].mxu0
      %v3209 = vadd.f32 0.0, %v3208
      %v3210 = vpop.f32.mrb[0].mxu0
      %v3211 = vadd.f32 0.0, %v3210
      %v3212 = vpop.f32.mrb[0].mxu0
      %v3213 = vpop.f32.mrb[0].mxu0
      %3214 = vdwg.mxu0
      %3215 = vmatprep.subr.bf16.mxu0 %v3128
      %3216 = vmatpush1.bf16.msra.mxu0 %v3125
      %3217 = vmatprep.subr.bf16.mxu0 0
      %3218 = vmatpush1.bf16.msra.mxu0 0
      %3219 = vmatprep.subr.bf16.mxu0 0
      %3220 = vmatpush1.bf16.msra.mxu0 0
      %3221 = vmatprep.subr.bf16.mxu0 0
      %3222 = vmatpush1.bf16.msra.mxu0 0
      %3223 = vmatprep.subr.bf16.mxu0 0
      %3224 = vmatpush1.bf16.msra.mxu0 0
      %3225 = vmatprep.subr.bf16.mxu0 0
      %3226 = vmatpush1.bf16.msra.mxu0 0
      %3227 = vmatprep.subr.bf16.mxu0 0
      %3228 = vmatpush1.bf16.msra.mxu0 0
      %3229 = vmatprep.subr.bf16.mxu0 0
      %3230 = vmatpush1.bf16.msra.mxu0 0
      %3231 = vmatprep.subr.bf16.mxu0 0
      %3232 = vmatpush1.bf16.msra.mxu0 0
      %3233 = vmatprep.subr.bf16.mxu0 0
      %3234 = vmatpush1.bf16.msra.mxu0 0
      %3235 = vmatprep.subr.bf16.mxu0 0
      %3236 = vmatpush1.bf16.msra.mxu0 0
      %3237 = vmatprep.subr.bf16.mxu0 0
      %3238 = vmatpush1.bf16.msra.mxu0 0
      %3239 = vmatprep.subr.bf16.mxu0 0
      %3240 = vmatpush1.bf16.msra.mxu0 0
      %3241 = vmatprep.subr.bf16.mxu0 0
      %3242 = vmatpush1.bf16.msra.mxu0 0
      %3243 = vmatprep.subr.bf16.mxu0 0
      %3244 = vmatpush1.bf16.msra.mxu0 0
      %3245 = vmatprep.subr.bf16.mxu0 0
      %3246 = vmatpush1.bf16.msra.mxu0 0
      %3247 = vmatprep.mubr.bf16.mxu0 0
      %3248 = vmatmul.mubr.bf16.gmra.mrb[0].mxu0 %v3110
      %v3249 = vpop.f32.mrb[0].mxu0
      %v3250 = vadd.f32 0.0, %v3249
      %v3251 = vpop.f32.mrb[0].mxu0
      %v3252 = vadd.f32 0.0, %v3251
      %v3253 = vpop.f32.mrb[0].mxu0
      %v3254 = vpop.f32.mrb[0].mxu0
      %3255 = vdwg.mxu0
      %3256 = vmatprep.subr.bf16.mxu0 0
      %3257 = vmatpush1.bf16.msra.mxu0 %v3131
      %3258 = vmatprep.subr.bf16.mxu0 0
      %3259 = vmatpush1.bf16.msra.mxu0 0
      %3260 = vmatprep.subr.bf16.mxu0 0
      %3261 = vmatpush1.bf16.msra.mxu0 0
      %3262 = vmatprep.subr.bf16.mxu0 0
      %3263 = vmatpush1.bf16.msra.mxu0 0
      %3264 = vmatprep.subr.bf16.mxu0 0
      %3265 = vmatpush1.bf16.msra.mxu0 0
      %3266 = vmatprep.subr.bf16.mxu0 0
      %3267 = vmatpush1.bf16.msra.mxu0 0
      %3268 = vmatprep.subr.bf16.mxu0 0
      %3269 = vmatpush1.bf16.msra.mxu0 0
      %3270 = vmatprep.subr.bf16.mxu0 0
      %3271 = vmatpush1.bf16.msra.mxu0 0
      %3272 = vmatprep.subr.bf16.mxu0 0
      %3273 = vmatpush1.bf16.msra.mxu0 0
      %3274 = vmatprep.subr.bf16.mxu0 0
      %3275 = vmatpush1.bf16.msra.mxu0 0
      %3276 = vmatprep.subr.bf16.mxu0 0
      %3277 = vmatpush1.bf16.msra.mxu0 0
      %3278 = vmatprep.subr.bf16.mxu0 0
      %3279 = vmatpush1.bf16.msra.mxu0 0
      %3280 = vmatprep.subr.bf16.mxu0 0
      %3281 = vmatpush1.bf16.msra.mxu0 0
      %3282 = vmatprep.subr.bf16.mxu0 0
      %3283 = vmatpush1.bf16.msra.mxu0 0
      %3284 = vmatprep.subr.bf16.mxu0 0
      %3285 = vmatpush1.bf16.msra.mxu0 0
      %3286 = vmatprep.subr.bf16.mxu0 0
      %3287 = vmatpush1.bf16.msra.mxu0 0
      %3288 = vmatprep.mubr.bf16.mxu0 0
      %3289 = vmatmul.mubr.bf16.gmra.mrb[0].mxu0 %v3110
      %v3290 = vpop.f32.mrb[0].mxu0
      %v3291 = vadd.f32 0.0, %v3290
      %v3292 = vpop.f32.mrb[0].mxu0
      %v3293 = vpop.f32.mrb[0].mxu0
      %v3294 = vpop.f32.mrb[0].mxu0
      %3295 = vdwg.mxu0
      %v3296 = vadd.f32 %v3061, %v3168
      %v3297 = vadd.f32 %v3062, %v3170
      %v3298 = vadd.f32 %v3063, %v3209
      %v3299 = vadd.f32 %v3064, %v3211
      %v3300 = vadd.f32 %v3065, %v3250
      %v3301 = vadd.f32 %v3066, %v3252
      %v3302 = vadd.f32 %v3067, %v3291
      %3303 = vst [vmem:[#allocation2] sm:$0xff] %v3296
      %3304 = vst [vmem:[#allocation2 + $0x8] sm:$0xff] %v3297
      %3305 = vst [vmem:[#allocation2 + $0x10] sm:$0xff] %v3298
      %3306 = vst [vmem:[#allocation2 + $0x18] sm:$0xff] %v3299
      %3307 = vst [vmem:[#allocation2 + $0x20] sm:$0xff] %v3300
      %3308 = vst [vmem:[#allocation2 + $0x28] sm:$0xff] %v3301
      %3309 = vst.msk [vmem:[#allocation2 + $0x30] sm:$0xff] %vm292, %v3302
      %v3310 = vld [vmem:[%s267] sm:$0xff]
      %v3311 = vld [vmem:[%s267 + $0x8] sm:$0xff]
      %v3312 = vld [vmem:[%s267 + $0x10] sm:$0xff]
      %v3313 = vld [vmem:[%s267 + $0x18] sm:$0xf]
      %v3314 = vld [vmem:[#allocation2] sm:$0xff]
      %v3315 = vld [vmem:[#allocation2 + $0x8] sm:$0xff]
      %v3316 = vld [vmem:[#allocation2 + $0x10] sm:$0xff]
      %v3317 = vld [vmem:[#allocation2 + $0x18] sm:$0xff]
      %v3318 = vld [vmem:[#allocation2 + $0x20] sm:$0xff]
      %v3319 = vld [vmem:[#allocation2 + $0x28] sm:$0xff]
      %v3320 = vld [vmem:[#allocation2 + $0x30] sm:$0xff]
      %s3321 = scalar_lea.vmem %s262, 48
      %v3322 = vld [vmem:[%s3321] sm:$0xf]
      %v3327 = vunpack.c.l.b16 %v3310
      %v3328 = vunpack.c.h.b16 %v3310
      %v3329 = vunpack.c.l.b16 %v3311
      %v3330 = vunpack.c.h.b16 %v3311
      %v3331 = vunpack.c.l.b16 %v3312
      %v3332 = vunpack.c.h.b16 %v3312
      %v3333 = vunpack.c.l.b16 %v3313
      %v3334 = vpack.c.b16 %v3327, %v3327
      %v3335 = vpack.c.b16 %v3328, %v3328
      %v3336 = vpack.c.b16 %v3329, %v3329
      %v3337 = vpack.c.b16 %v3330, %v3330
      %v3338 = vpack.c.b16 %v3331, %v3331
      %v3339 = vpack.c.b16 %v3332, %v3332
      %v3340 = vpack.c.b16 %v3333, %v3333
      %3341 = vrot.lane.b32.xlu0 %v3334, 18
      %v3342 = vpop.permute.xlu0 %3341
      %3343 = vrot.lane.b32.xlu0 %v3335, 18
      %v3344 = vpop.permute.xlu0 %3343
      %3345 = vrot.lane.b32.xlu0 %v3336, 18
      %v3346 = vpop.permute.xlu0 %3345
      %3347 = vrot.lane.b32.xlu0 %v3337, 18
      %v3348 = vpop.permute.xlu0 %3347
      %3349 = vrot.lane.b32.xlu0 %v3338, 18
      %v3350 = vpop.permute.xlu0 %3349
      %3351 = vrot.lane.b32.xlu0 %v3339, 18
      %v3352 = vpop.permute.xlu0 %3351
      %3353 = vrot.lane.b32.xlu0 %v3340, 18
      %v3354 = vpop.permute.xlu0 %3353
      %vm3355 = vcmask 146432
      %v3356 = vsel %vm3355, %v3342, %v3344
      %v3357 = vsel %vm3355, %v3344, %v3346
      %v3358 = vsel %vm3355, %v3346, %v3348
      %v3359 = vsel %vm3355, %v3348, %v3350
      %v3360 = vsel %vm3355, %v3350, %v3352
      %v3361 = vsel %vm3355, %v3352, %v3354
      %v3363 = vsel %vm324, %v3322, 0
      %v3366 = vsel %vm328, %v3356, 0
      %v3369 = vsel %vm328, %v3357, 0
      %v3372 = vsel %vm328, %v3358, 0
      %v3375 = vsel %vm328, %v3359, 0
      %v3378 = vsel %vm328, %v3360, 0
      %v3381 = vsel %vm328, %v3361, 0
      %v3384 = vsel %vm328, %v3354, 0
      %3386 = vmatprep.subr.bf16.mxu0 %v3369
      %3387 = vmatpush1.bf16.msra.mxu0 %v3366
      %3388 = vmatprep.subr.bf16.mxu0 0
      %3389 = vmatpush1.bf16.msra.mxu0 0
      %3390 = vmatprep.subr.bf16.mxu0 0
      %3391 = vmatpush1.bf16.msra.mxu0 0
      %3392 = vmatprep.subr.bf16.mxu0 0
      %3393 = vmatpush1.bf16.msra.mxu0 0
      %3394 = vmatprep.subr.bf16.mxu0 0
      %3395 = vmatpush1.bf16.msra.mxu0 0
      %3396 = vmatprep.subr.bf16.mxu0 0
      %3397 = vmatpush1.bf16.msra.mxu0 0
      %3398 = vmatprep.subr.bf16.mxu0 0
      %3399 = vmatpush1.bf16.msra.mxu0 0
      %3400 = vmatprep.subr.bf16.mxu0 0
      %3401 = vmatpush1.bf16.msra.mxu0 0
      %3402 = vmatprep.subr.bf16.mxu0 0
      %3403 = vmatpush1.bf16.msra.mxu0 0
      %3404 = vmatprep.subr.bf16.mxu0 0
      %3405 = vmatpush1.bf16.msra.mxu0 0
      %3406 = vmatprep.subr.bf16.mxu0 0
      %3407 = vmatpush1.bf16.msra.mxu0 0
      %3408 = vmatprep.subr.bf16.mxu0 0
      %3409 = vmatpush1.bf16.msra.mxu0 0
      %3410 = vmatprep.subr.bf16.mxu0 0
      %3411 = vmatpush1.bf16.msra.mxu0 0
      %3412 = vmatprep.subr.bf16.mxu0 0
      %3413 = vmatpush1.bf16.msra.mxu0 0
      %3414 = vmatprep.subr.bf16.mxu0 0
      %3415 = vmatpush1.bf16.msra.mxu0 0
      %3416 = vmatprep.subr.bf16.mxu0 0
      %3417 = vmatpush1.bf16.msra.mxu0 0
      %3418 = vmatprep.mubr.bf16.mxu0 0
      %3419 = vmatmul.mubr.bf16.gmra.mrb[0].mxu0 %v3363
      %v3420 = vpop.f32.mrb[0].mxu0
      %v3421 = vadd.f32 0.0, %v3420
      %v3422 = vpop.f32.mrb[0].mxu0
      %v3423 = vadd.f32 0.0, %v3422
      %v3424 = vpop.f32.mrb[0].mxu0
      %v3425 = vpop.f32.mrb[0].mxu0
      %3426 = vdwg.mxu0
      %3427 = vmatprep.subr.bf16.mxu0 %v3375
      %3428 = vmatpush1.bf16.msra.mxu0 %v3372
      %3429 = vmatprep.subr.bf16.mxu0 0
      %3430 = vmatpush1.bf16.msra.mxu0 0
      %3431 = vmatprep.subr.bf16.mxu0 0
      %3432 = vmatpush1.bf16.msra.mxu0 0
      %3433 = vmatprep.subr.bf16.mxu0 0
      %3434 = vmatpush1.bf16.msra.mxu0 0
      %3435 = vmatprep.subr.bf16.mxu0 0
      %3436 = vmatpush1.bf16.msra.mxu0 0
      %3437 = vmatprep.subr.bf16.mxu0 0
      %3438 = vmatpush1.bf16.msra.mxu0 0
      %3439 = vmatprep.subr.bf16.mxu0 0
      %3440 = vmatpush1.bf16.msra.mxu0 0
      %3441 = vmatprep.subr.bf16.mxu0 0
      %3442 = vmatpush1.bf16.msra.mxu0 0
      %3443 = vmatprep.subr.bf16.mxu0 0
      %3444 = vmatpush1.bf16.msra.mxu0 0
      %3445 = vmatprep.subr.bf16.mxu0 0
      %3446 = vmatpush1.bf16.msra.mxu0 0
      %3447 = vmatprep.subr.bf16.mxu0 0
      %3448 = vmatpush1.bf16.msra.mxu0 0
      %3449 = vmatprep.subr.bf16.mxu0 0
      %3450 = vmatpush1.bf16.msra.mxu0 0
      %3451 = vmatprep.subr.bf16.mxu0 0
      %3452 = vmatpush1.bf16.msra.mxu0 0
      %3453 = vmatprep.subr.bf16.mxu0 0
      %3454 = vmatpush1.bf16.msra.mxu0 0
      %3455 = vmatprep.subr.bf16.mxu0 0
      %3456 = vmatpush1.bf16.msra.mxu0 0
      %3457 = vmatprep.subr.bf16.mxu0 0
      %3458 = vmatpush1.bf16.msra.mxu0 0
      %3459 = vmatprep.mubr.bf16.mxu0 0
      %3460 = vmatmul.mubr.bf16.gmra.mrb[0].mxu0 %v3363
      %v3461 = vpop.f32.mrb[0].mxu0
      %v3462 = vadd.f32 0.0, %v3461
      %v3463 = vpop.f32.mrb[0].mxu0
      %v3464 = vadd.f32 0.0, %v3463
      %v3465 = vpop.f32.mrb[0].mxu0
      %v3466 = vpop.f32.mrb[0].mxu0
      %3467 = vdwg.mxu0
      %3468 = vmatprep.subr.bf16.mxu0 %v3381
      %3469 = vmatpush1.bf16.msra.mxu0 %v3378
      %3470 = vmatprep.subr.bf16.mxu0 0
      %3471 = vmatpush1.bf16.msra.mxu0 0
      %3472 = vmatprep.subr.bf16.mxu0 0
      %3473 = vmatpush1.bf16.msra.mxu0 0
      %3474 = vmatprep.subr.bf16.mxu0 0
      %3475 = vmatpush1.bf16.msra.mxu0 0
      %3476 = vmatprep.subr.bf16.mxu0 0
      %3477 = vmatpush1.bf16.msra.mxu0 0
      %3478 = vmatprep.subr.bf16.mxu0 0
      %3479 = vmatpush1.bf16.msra.mxu0 0
      %3480 = vmatprep.subr.bf16.mxu0 0
      %3481 = vmatpush1.bf16.msra.mxu0 0
      %3482 = vmatprep.subr.bf16.mxu0 0
      %3483 = vmatpush1.bf16.msra.mxu0 0
      %3484 = vmatprep.subr.bf16.mxu0 0
      %3485 = vmatpush1.bf16.msra.mxu0 0
      %3486 = vmatprep.subr.bf16.mxu0 0
      %3487 = vmatpush1.bf16.msra.mxu0 0
      %3488 = vmatprep.subr.bf16.mxu0 0
      %3489 = vmatpush1.bf16.msra.mxu0 0
      %3490 = vmatprep.subr.bf16.mxu0 0
      %3491 = vmatpush1.bf16.msra.mxu0 0
      %3492 = vmatprep.subr.bf16.mxu0 0
      %3493 = vmatpush1.bf16.msra.mxu0 0
      %3494 = vmatprep.subr.bf16.mxu0 0
      %3495 = vmatpush1.bf16.msra.mxu0 0
      %3496 = vmatprep.subr.bf16.mxu0 0
      %3497 = vmatpush1.bf16.msra.mxu0 0
      %3498 = vmatprep.subr.bf16.mxu0 0
      %3499 = vmatpush1.bf16.msra.mxu0 0
      %3500 = vmatprep.mubr.bf16.mxu0 0
      %3501 = vmatmul.mubr.bf16.gmra.mrb[0].mxu0 %v3363
      %v3502 = vpop.f32.mrb[0].mxu0
      %v3503 = vadd.f32 0.0, %v3502
      %v3504 = vpop.f32.mrb[0].mxu0
      %v3505 = vadd.f32 0.0, %v3504
      %v3506 = vpop.f32.mrb[0].mxu0
      %v3507 = vpop.f32.mrb[0].mxu0
      %3508 = vdwg.mxu0
      %3509 = vmatprep.subr.bf16.mxu0 0
      %3510 = vmatpush1.bf16.msra.mxu0 %v3384
      %3511 = vmatprep.subr.bf16.mxu0 0
      %3512 = vmatpush1.bf16.msra.mxu0 0
      %3513 = vmatprep.subr.bf16.mxu0 0
      %3514 = vmatpush1.bf16.msra.mxu0 0
      %3515 = vmatprep.subr.bf16.mxu0 0
      %3516 = vmatpush1.bf16.msra.mxu0 0
      %3517 = vmatprep.subr.bf16.mxu0 0
      %3518 = vmatpush1.bf16.msra.mxu0 0
      %3519 = vmatprep.subr.bf16.mxu0 0
      %3520 = vmatpush1.bf16.msra.mxu0 0
      %3521 = vmatprep.subr.bf16.mxu0 0
      %3522 = vmatpush1.bf16.msra.mxu0 0
      %3523 = vmatprep.subr.bf16.mxu0 0
      %3524 = vmatpush1.bf16.msra.mxu0 0
      %3525 = vmatprep.subr.bf16.mxu0 0
      %3526 = vmatpush1.bf16.msra.mxu0 0
      %3527 = vmatprep.subr.bf16.mxu0 0
      %3528 = vmatpush1.bf16.msra.mxu0 0
      %3529 = vmatprep.subr.bf16.mxu0 0
      %3530 = vmatpush1.bf16.msra.mxu0 0
      %3531 = vmatprep.subr.bf16.mxu0 0
      %3532 = vmatpush1.bf16.msra.mxu0 0
      %3533 = vmatprep.subr.bf16.mxu0 0
      %3534 = vmatpush1.bf16.msra.mxu0 0
      %3535 = vmatprep.subr.bf16.mxu0 0
      %3536 = vmatpush1.bf16.msra.mxu0 0
      %3537 = vmatprep.subr.bf16.mxu0 0
      %3538 = vmatpush1.bf16.msra.mxu0 0
      %3539 = vmatprep.subr.bf16.mxu0 0
      %3540 = vmatpush1.bf16.msra.mxu0 0
      %3541 = vmatprep.mubr.bf16.mxu0 0
      %3542 = vmatmul.mubr.bf16.gmra.mrb[0].mxu0 %v3363
      %v3543 = vpop.f32.mrb[0].mxu0
      %v3544 = vadd.f32 0.0, %v3543
      %v3545 = vpop.f32.mrb[0].mxu0
      %v3546 = vpop.f32.mrb[0].mxu0
      %v3547 = vpop.f32.mrb[0].mxu0
      %3548 = vdwg.mxu0
      %v3549 = vadd.f32 %v3314, %v3421
      %v3550 = vadd.f32 %v3315, %v3423
      %v3551 = vadd.f32 %v3316, %v3462
      %v3552 = vadd.f32 %v3317, %v3464
      %v3553 = vadd.f32 %v3318, %v3503
      %v3554 = vadd.f32 %v3319, %v3505
      %v3555 = vadd.f32 %v3320, %v3544
      %3556 = vst [vmem:[#allocation2] sm:$0xff] %v3549
      %3557 = vst [vmem:[#allocation2 + $0x8] sm:$0xff] %v3550
      %3558 = vst [vmem:[#allocation2 + $0x10] sm:$0xff] %v3551
      %3559 = vst [vmem:[#allocation2 + $0x18] sm:$0xff] %v3552
      %3560 = vst [vmem:[#allocation2 + $0x20] sm:$0xff] %v3553
      %3561 = vst [vmem:[#allocation2 + $0x28] sm:$0xff] %v3554
      %3562 = vst.msk [vmem:[#allocation2 + $0x30] sm:$0xff] %vm292, %v3555
      %v3563 = vld [vmem:[%s267] sm:$0xff]
      %v3564 = vld [vmem:[%s267 + $0x8] sm:$0xff]
      %v3565 = vld [vmem:[%s267 + $0x10] sm:$0xff]
      %v3566 = vld [vmem:[%s267 + $0x18] sm:$0xf]
      %v3567 = vld [vmem:[#allocation2] sm:$0xff]
      %v3568 = vld [vmem:[#allocation2 + $0x8] sm:$0xff]
      %v3569 = vld [vmem:[#allocation2 + $0x10] sm:$0xff]
      %v3570 = vld [vmem:[#allocation2 + $0x18] sm:$0xff]
      %v3571 = vld [vmem:[#allocation2 + $0x20] sm:$0xff]
      %v3572 = vld [vmem:[#allocation2 + $0x28] sm:$0xff]
      %v3573 = vld [vmem:[#allocation2 + $0x30] sm:$0xff]
      %s3574 = scalar_lea.vmem %s262, 52
      %v3575 = vld [vmem:[%s3574] sm:$0xf]
      %v3580 = vunpack.c.l.b16 %v3563
      %v3581 = vunpack.c.h.b16 %v3563
      %v3582 = vunpack.c.l.b16 %v3564
      %v3583 = vunpack.c.h.b16 %v3564
      %v3584 = vunpack.c.l.b16 %v3565
      %v3585 = vunpack.c.h.b16 %v3565
      %v3586 = vunpack.c.l.b16 %v3566
      %v3587 = vpack.c.b16 %v3580, %v3580
      %v3588 = vpack.c.b16 %v3581, %v3581
      %v3589 = vpack.c.b16 %v3582, %v3582
      %v3590 = vpack.c.b16 %v3583, %v3583
      %v3591 = vpack.c.b16 %v3584, %v3584
      %v3592 = vpack.c.b16 %v3585, %v3585
      %v3593 = vpack.c.b16 %v3586, %v3586
      %3594 = vrot.lane.b32.xlu0 %v3587, 17
      %v3595 = vpop.permute.xlu0 %3594
      %3596 = vrot.lane.b32.xlu0 %v3588, 17
      %v3597 = vpop.permute.xlu0 %3596
      %3598 = vrot.lane.b32.xlu0 %v3589, 17
      %v3599 = vpop.permute.xlu0 %3598
      %3600 = vrot.lane.b32.xlu0 %v3590, 17
      %v3601 = vpop.permute.xlu0 %3600
      %3602 = vrot.lane.b32.xlu0 %v3591, 17
      %v3603 = vpop.permute.xlu0 %3602
      %3604 = vrot.lane.b32.xlu0 %v3592, 17
      %v3605 = vpop.permute.xlu0 %3604
      %3606 = vrot.lane.b32.xlu0 %v3593, 17
      %v3607 = vpop.permute.xlu0 %3606
      %vm3608 = vcmask 138240
      %v3609 = vsel %vm3608, %v3595, %v3597
      %v3610 = vsel %vm3608, %v3597, %v3599
      %v3611 = vsel %vm3608, %v3599, %v3601
      %v3612 = vsel %vm3608, %v3601, %v3603
      %v3613 = vsel %vm3608, %v3603, %v3605
      %v3614 = vsel %vm3608, %v3605, %v3607
      %v3616 = vsel %vm324, %v3575, 0
      %v3619 = vsel %vm328, %v3609, 0
      %v3622 = vsel %vm328, %v3610, 0
      %v3625 = vsel %vm328, %v3611, 0
      %v3628 = vsel %vm328, %v3612, 0
      %v3631 = vsel %vm328, %v3613, 0
      %v3634 = vsel %vm328, %v3614, 0
      %v3637 = vsel %vm328, %v3607, 0
      %3639 = vmatprep.subr.bf16.mxu0 %v3622
      %3640 = vmatpush1.bf16.msra.mxu0 %v3619
      %3641 = vmatprep.subr.bf16.mxu0 0
      %3642 = vmatpush1.bf16.msra.mxu0 0
      %3643 = vmatprep.subr.bf16.mxu0 0
      %3644 = vmatpush1.bf16.msra.mxu0 0
      %3645 = vmatprep.subr.bf16.mxu0 0
      %3646 = vmatpush1.bf16.msra.mxu0 0
      %3647 = vmatprep.subr.bf16.mxu0 0
      %3648 = vmatpush1.bf16.msra.mxu0 0
      %3649 = vmatprep.subr.bf16.mxu0 0
      %3650 = vmatpush1.bf16.msra.mxu0 0
      %3651 = vmatprep.subr.bf16.mxu0 0
      %3652 = vmatpush1.bf16.msra.mxu0 0
      %3653 = vmatprep.subr.bf16.mxu0 0
      %3654 = vmatpush1.bf16.msra.mxu0 0
      %3655 = vmatprep.subr.bf16.mxu0 0
      %3656 = vmatpush1.bf16.msra.mxu0 0
      %3657 = vmatprep.subr.bf16.mxu0 0
      %3658 = vmatpush1.bf16.msra.mxu0 0
      %3659 = vmatprep.subr.bf16.mxu0 0
      %3660 = vmatpush1.bf16.msra.mxu0 0
      %3661 = vmatprep.subr.bf16.mxu0 0
      %3662 = vmatpush1.bf16.msra.mxu0 0
      %3663 = vmatprep.subr.bf16.mxu0 0
      %3664 = vmatpush1.bf16.msra.mxu0 0
      %3665 = vmatprep.subr.bf16.mxu0 0
      %3666 = vmatpush1.bf16.msra.mxu0 0
      %3667 = vmatprep.subr.bf16.mxu0 0
      %3668 = vmatpush1.bf16.msra.mxu0 0
      %3669 = vmatprep.subr.bf16.mxu0 0
      %3670 = vmatpush1.bf16.msra.mxu0 0
      %3671 = vmatprep.mubr.bf16.mxu0 0
      %3672 = vmatmul.mubr.bf16.gmra.mrb[0].mxu0 %v3616
      %v3673 = vpop.f32.mrb[0].mxu0
      %v3674 = vadd.f32 0.0, %v3673
      %v3675 = vpop.f32.mrb[0].mxu0
      %v3676 = vadd.f32 0.0, %v3675
      %v3677 = vpop.f32.mrb[0].mxu0
      %v3678 = vpop.f32.mrb[0].mxu0
      %3679 = vdwg.mxu0
      %3680 = vmatprep.subr.bf16.mxu0 %v3628
      %3681 = vmatpush1.bf16.msra.mxu0 %v3625
      %3682 = vmatprep.subr.bf16.mxu0 0
      %3683 = vmatpush1.bf16.msra.mxu0 0
      %3684 = vmatprep.subr.bf16.mxu0 0
      %3685 = vmatpush1.bf16.msra.mxu0 0
      %3686 = vmatprep.subr.bf16.mxu0 0
      %3687 = vmatpush1.bf16.msra.mxu0 0
      %3688 = vmatprep.subr.bf16.mxu0 0
      %3689 = vmatpush1.bf16.msra.mxu0 0
      %3690 = vmatprep.subr.bf16.mxu0 0
      %3691 = vmatpush1.bf16.msra.mxu0 0
      %3692 = vmatprep.subr.bf16.mxu0 0
      %3693 = vmatpush1.bf16.msra.mxu0 0
      %3694 = vmatprep.subr.bf16.mxu0 0
      %3695 = vmatpush1.bf16.msra.mxu0 0
      %3696 = vmatprep.subr.bf16.mxu0 0
      %3697 = vmatpush1.bf16.msra.mxu0 0
      %3698 = vmatprep.subr.bf16.mxu0 0
      %3699 = vmatpush1.bf16.msra.mxu0 0
      %3700 = vmatprep.subr.bf16.mxu0 0
      %3701 = vmatpush1.bf16.msra.mxu0 0
      %3702 = vmatprep.subr.bf16.mxu0 0
      %3703 = vmatpush1.bf16.msra.mxu0 0
      %3704 = vmatprep.subr.bf16.mxu0 0
      %3705 = vmatpush1.bf16.msra.mxu0 0
      %3706 = vmatprep.subr.bf16.mxu0 0
      %3707 = vmatpush1.bf16.msra.mxu0 0
      %3708 = vmatprep.subr.bf16.mxu0 0
      %3709 = vmatpush1.bf16.msra.mxu0 0
      %3710 = vmatprep.subr.bf16.mxu0 0
      %3711 = vmatpush1.bf16.msra.mxu0 0
      %3712 = vmatprep.mubr.bf16.mxu0 0
      %3713 = vmatmul.mubr.bf16.gmra.mrb[0].mxu0 %v3616
      %v3714 = vpop.f32.mrb[0].mxu0
      %v3715 = vadd.f32 0.0, %v3714
      %v3716 = vpop.f32.mrb[0].mxu0
      %v3717 = vadd.f32 0.0, %v3716
      %v3718 = vpop.f32.mrb[0].mxu0
      %v3719 = vpop.f32.mrb[0].mxu0
      %3720 = vdwg.mxu0
      %3721 = vmatprep.subr.bf16.mxu0 %v3634
      %3722 = vmatpush1.bf16.msra.mxu0 %v3631
      %3723 = vmatprep.subr.bf16.mxu0 0
      %3724 = vmatpush1.bf16.msra.mxu0 0
      %3725 = vmatprep.subr.bf16.mxu0 0
      %3726 = vmatpush1.bf16.msra.mxu0 0
      %3727 = vmatprep.subr.bf16.mxu0 0
      %3728 = vmatpush1.bf16.msra.mxu0 0
      %3729 = vmatprep.subr.bf16.mxu0 0
      %3730 = vmatpush1.bf16.msra.mxu0 0
      %3731 = vmatprep.subr.bf16.mxu0 0
      %3732 = vmatpush1.bf16.msra.mxu0 0
      %3733 = vmatprep.subr.bf16.mxu0 0
      %3734 = vmatpush1.bf16.msra.mxu0 0
      %3735 = vmatprep.subr.bf16.mxu0 0
      %3736 = vmatpush1.bf16.msra.mxu0 0
      %3737 = vmatprep.subr.bf16.mxu0 0
      %3738 = vmatpush1.bf16.msra.mxu0 0
      %3739 = vmatprep.subr.bf16.mxu0 0
      %3740 = vmatpush1.bf16.msra.mxu0 0
      %3741 = vmatprep.subr.bf16.mxu0 0
      %3742 = vmatpush1.bf16.msra.mxu0 0
      %3743 = vmatprep.subr.bf16.mxu0 0
      %3744 = vmatpush1.bf16.msra.mxu0 0
      %3745 = vmatprep.subr.bf16.mxu0 0
      %3746 = vmatpush1.bf16.msra.mxu0 0
      %3747 = vmatprep.subr.bf16.mxu0 0
      %3748 = vmatpush1.bf16.msra.mxu0 0
      %3749 = vmatprep.subr.bf16.mxu0 0
      %3750 = vmatpush1.bf16.msra.mxu0 0
      %3751 = vmatprep.subr.bf16.mxu0 0
      %3752 = vmatpush1.bf16.msra.mxu0 0
      %3753 = vmatprep.mubr.bf16.mxu0 0
      %3754 = vmatmul.mubr.bf16.gmra.mrb[0].mxu0 %v3616
      %v3755 = vpop.f32.mrb[0].mxu0
      %v3756 = vadd.f32 0.0, %v3755
      %v3757 = vpop.f32.mrb[0].mxu0
      %v3758 = vadd.f32 0.0, %v3757
      %v3759 = vpop.f32.mrb[0].mxu0
      %v3760 = vpop.f32.mrb[0].mxu0
      %3761 = vdwg.mxu0
      %3762 = vmatprep.subr.bf16.mxu0 0
      %3763 = vmatpush1.bf16.msra.mxu0 %v3637
      %3764 = vmatprep.subr.bf16.mxu0 0
      %3765 = vmatpush1.bf16.msra.mxu0 0
      %3766 = vmatprep.subr.bf16.mxu0 0
      %3767 = vmatpush1.bf16.msra.mxu0 0
      %3768 = vmatprep.subr.bf16.mxu0 0
      %3769 = vmatpush1.bf16.msra.mxu0 0
      %3770 = vmatprep.subr.bf16.mxu0 0
      %3771 = vmatpush1.bf16.msra.mxu0 0
      %3772 = vmatprep.subr.bf16.mxu0 0
      %3773 = vmatpush1.bf16.msra.mxu0 0
      %3774 = vmatprep.subr.bf16.mxu0 0
      %3775 = vmatpush1.bf16.msra.mxu0 0
      %3776 = vmatprep.subr.bf16.mxu0 0
      %3777 = vmatpush1.bf16.msra.mxu0 0
      %3778 = vmatprep.subr.bf16.mxu0 0
      %3779 = vmatpush1.bf16.msra.mxu0 0
      %3780 = vmatprep.subr.bf16.mxu0 0
      %3781 = vmatpush1.bf16.msra.mxu0 0
      %3782 = vmatprep.subr.bf16.mxu0 0
      %3783 = vmatpush1.bf16.msra.mxu0 0
      %3784 = vmatprep.subr.bf16.mxu0 0
      %3785 = vmatpush1.bf16.msra.mxu0 0
      %3786 = vmatprep.subr.bf16.mxu0 0
      %3787 = vmatpush1.bf16.msra.mxu0 0
      %3788 = vmatprep.subr.bf16.mxu0 0
      %3789 = vmatpush1.bf16.msra.mxu0 0
      %3790 = vmatprep.subr.bf16.mxu0 0
      %3791 = vmatpush1.bf16.msra.mxu0 0
      %3792 = vmatprep.subr.bf16.mxu0 0
      %3793 = vmatpush1.bf16.msra.mxu0 0
      %3794 = vmatprep.mubr.bf16.mxu0 0
      %3795 = vmatmul.mubr.bf16.gmra.mrb[0].mxu0 %v3616
      %v3796 = vpop.f32.mrb[0].mxu0
      %v3797 = vadd.f32 0.0, %v3796
      %v3798 = vpop.f32.mrb[0].mxu0
      %v3799 = vpop.f32.mrb[0].mxu0
      %v3800 = vpop.f32.mrb[0].mxu0
      %3801 = vdwg.mxu0
      %v3802 = vadd.f32 %v3567, %v3674
      %v3803 = vadd.f32 %v3568, %v3676
      %v3804 = vadd.f32 %v3569, %v3715
      %v3805 = vadd.f32 %v3570, %v3717
      %v3806 = vadd.f32 %v3571, %v3756
      %v3807 = vadd.f32 %v3572, %v3758
      %v3808 = vadd.f32 %v3573, %v3797
      %3809 = vst [vmem:[#allocation2] sm:$0xff] %v3802
      %3810 = vst [vmem:[#allocation2 + $0x8] sm:$0xff] %v3803
      %3811 = vst [vmem:[#allocation2 + $0x10] sm:$0xff] %v3804
      %3812 = vst [vmem:[#allocation2 + $0x18] sm:$0xff] %v3805
      %3813 = vst [vmem:[#allocation2 + $0x20] sm:$0xff] %v3806
      %3814 = vst [vmem:[#allocation2 + $0x28] sm:$0xff] %v3807
      %3815 = vst.msk [vmem:[#allocation2 + $0x30] sm:$0xff] %vm292, %v3808
      %v3816 = vld [vmem:[%s267] sm:$0xff]
      %v3817 = vld [vmem:[%s267 + $0x8] sm:$0xff]
      %v3818 = vld [vmem:[%s267 + $0x10] sm:$0xff]
      %v3819 = vld [vmem:[%s267 + $0x18] sm:$0xf]
      %v3820 = vld [vmem:[#allocation2] sm:$0xff]
      %v3821 = vld [vmem:[#allocation2 + $0x8] sm:$0xff]
      %v3822 = vld [vmem:[#allocation2 + $0x10] sm:$0xff]
      %v3823 = vld [vmem:[#allocation2 + $0x18] sm:$0xff]
      %v3824 = vld [vmem:[#allocation2 + $0x20] sm:$0xff]
      %v3825 = vld [vmem:[#allocation2 + $0x28] sm:$0xff]
      %v3826 = vld [vmem:[#allocation2 + $0x30] sm:$0xff]
      %s3827 = scalar_lea.vmem %s262, 56
      %v3828 = vld [vmem:[%s3827] sm:$0xf]
      %v3833 = vunpack.c.l.b16 %v3816
      %v3834 = vunpack.c.h.b16 %v3816
      %v3835 = vunpack.c.l.b16 %v3817
      %v3836 = vunpack.c.h.b16 %v3817
      %v3837 = vunpack.c.l.b16 %v3818
      %v3838 = vunpack.c.h.b16 %v3818
      %v3839 = vunpack.c.l.b16 %v3819
      %v3840 = vpack.c.b16 %v3833, %v3833
      %v3841 = vpack.c.b16 %v3834, %v3834
      %v3842 = vpack.c.b16 %v3835, %v3835
      %v3843 = vpack.c.b16 %v3836, %v3836
      %v3844 = vpack.c.b16 %v3837, %v3837
      %v3845 = vpack.c.b16 %v3838, %v3838
      %v3846 = vpack.c.b16 %v3839, %v3839
      %3847 = vrot.lane.b32.xlu0 %v3840, 16
      %v3848 = vpop.permute.xlu0 %3847
      %3849 = vrot.lane.b32.xlu0 %v3841, 16
      %v3850 = vpop.permute.xlu0 %3849
      %3851 = vrot.lane.b32.xlu0 %v3842, 16
      %v3852 = vpop.permute.xlu0 %3851
      %3853 = vrot.lane.b32.xlu0 %v3843, 16
      %v3854 = vpop.permute.xlu0 %3853
      %3855 = vrot.lane.b32.xlu0 %v3844, 16
      %v3856 = vpop.permute.xlu0 %3855
      %3857 = vrot.lane.b32.xlu0 %v3845, 16
      %v3858 = vpop.permute.xlu0 %3857
      %3859 = vrot.lane.b32.xlu0 %v3846, 16
      %v3860 = vpop.permute.xlu0 %3859
      %vm3861 = vcmask 130048
      %v3862 = vsel %vm3861, %v3848, %v3850
      %v3863 = vsel %vm3861, %v3850, %v3852
      %v3864 = vsel %vm3861, %v3852, %v3854
      %v3865 = vsel %vm3861, %v3854, %v3856
      %v3866 = vsel %vm3861, %v3856, %v3858
      %v3867 = vsel %vm3861, %v3858, %v3860
      %v3869 = vsel %vm324, %v3828, 0
      %v3872 = vsel %vm328, %v3862, 0
      %v3875 = vsel %vm328, %v3863, 0
      %v3878 = vsel %vm328, %v3864, 0
      %v3881 = vsel %vm328, %v3865, 0
      %v3884 = vsel %vm328, %v3866, 0
      %v3887 = vsel %vm328, %v3867, 0
      %v3890 = vsel %vm328, %v3860, 0
      %3892 = vmatprep.subr.bf16.mxu0 %v3875
      %3893 = vmatpush1.bf16.msra.mxu0 %v3872
      %3894 = vmatprep.subr.bf16.mxu0 0
      %3895 = vmatpush1.bf16.msra.mxu0 0
      %3896 = vmatprep.subr.bf16.mxu0 0
      %3897 = vmatpush1.bf16.msra.mxu0 0
      %3898 = vmatprep.subr.bf16.mxu0 0
      %3899 = vmatpush1.bf16.msra.mxu0 0
      %3900 = vmatprep.subr.bf16.mxu0 0
      %3901 = vmatpush1.bf16.msra.mxu0 0
      %3902 = vmatprep.subr.bf16.mxu0 0
      %3903 = vmatpush1.bf16.msra.mxu0 0
      %3904 = vmatprep.subr.bf16.mxu0 0
      %3905 = vmatpush1.bf16.msra.mxu0 0
      %3906 = vmatprep.subr.bf16.mxu0 0
      %3907 = vmatpush1.bf16.msra.mxu0 0
      %3908 = vmatprep.subr.bf16.mxu0 0
      %3909 = vmatpush1.bf16.msra.mxu0 0
      %3910 = vmatprep.subr.bf16.mxu0 0
      %3911 = vmatpush1.bf16.msra.mxu0 0
      %3912 = vmatprep.subr.bf16.mxu0 0
      %3913 = vmatpush1.bf16.msra.mxu0 0
      %3914 = vmatprep.subr.bf16.mxu0 0
      %3915 = vmatpush1.bf16.msra.mxu0 0
      %3916 = vmatprep.subr.bf16.mxu0 0
      %3917 = vmatpush1.bf16.msra.mxu0 0
      %3918 = vmatprep.subr.bf16.mxu0 0
      %3919 = vmatpush1.bf16.msra.mxu0 0
      %3920 = vmatprep.subr.bf16.mxu0 0
      %3921 = vmatpush1.bf16.msra.mxu0 0
      %3922 = vmatprep.subr.bf16.mxu0 0
      %3923 = vmatpush1.bf16.msra.mxu0 0
      %3924 = vmatprep.mubr.bf16.mxu0 0
      %3925 = vmatmul.mubr.bf16.gmra.mrb[0].mxu0 %v3869
      %v3926 = vpop.f32.mrb[0].mxu0
      %v3927 = vadd.f32 0.0, %v3926
      %v3928 = vpop.f32.mrb[0].mxu0
      %v3929 = vadd.f32 0.0, %v3928
      %v3930 = vpop.f32.mrb[0].mxu0
      %v3931 = vpop.f32.mrb[0].mxu0
      %3932 = vdwg.mxu0
      %3933 = vmatprep.subr.bf16.mxu0 %v3881
      %3934 = vmatpush1.bf16.msra.mxu0 %v3878
      %3935 = vmatprep.subr.bf16.mxu0 0
      %3936 = vmatpush1.bf16.msra.mxu0 0
      %3937 = vmatprep.subr.bf16.mxu0 0
      %3938 = vmatpush1.bf16.msra.mxu0 0
      %3939 = vmatprep.subr.bf16.mxu0 0
      %3940 = vmatpush1.bf16.msra.mxu0 0
      %3941 = vmatprep.subr.bf16.mxu0 0
      %3942 = vmatpush1.bf16.msra.mxu0 0
      %3943 = vmatprep.subr.bf16.mxu0 0
      %3944 = vmatpush1.bf16.msra.mxu0 0
      %3945 = vmatprep.subr.bf16.mxu0 0
      %3946 = vmatpush1.bf16.msra.mxu0 0
      %3947 = vmatprep.subr.bf16.mxu0 0
      %3948 = vmatpush1.bf16.msra.mxu0 0
      %3949 = vmatprep.subr.bf16.mxu0 0
      %3950 = vmatpush1.bf16.msra.mxu0 0
      %3951 = vmatprep.subr.bf16.mxu0 0
      %3952 = vmatpush1.bf16.msra.mxu0 0
      %3953 = vmatprep.subr.bf16.mxu0 0
      %3954 = vmatpush1.bf16.msra.mxu0 0
      %3955 = vmatprep.subr.bf16.mxu0 0
      %3956 = vmatpush1.bf16.msra.mxu0 0
      %3957 = vmatprep.subr.bf16.mxu0 0
      %3958 = vmatpush1.bf16.msra.mxu0 0
      %3959 = vmatprep.subr.bf16.mxu0 0
      %3960 = vmatpush1.bf16.msra.mxu0 0
      %3961 = vmatprep.subr.bf16.mxu0 0
      %3962 = vmatpush1.bf16.msra.mxu0 0
      %3963 = vmatprep.subr.bf16.mxu0 0
      %3964 = vmatpush1.bf16.msra.mxu0 0
      %3965 = vmatprep.mubr.bf16.mxu0 0
      %3966 = vmatmul.mubr.bf16.gmra.mrb[0].mxu0 %v3869
      %v3967 = vpop.f32.mrb[0].mxu0
      %v3968 = vadd.f32 0.0, %v3967
      %v3969 = vpop.f32.mrb[0].mxu0
      %v3970 = vadd.f32 0.0, %v3969
      %v3971 = vpop.f32.mrb[0].mxu0
      %v3972 = vpop.f32.mrb[0].mxu0
      %3973 = vdwg.mxu0
      %3974 = vmatprep.subr.bf16.mxu0 %v3887
      %3975 = vmatpush1.bf16.msra.mxu0 %v3884
      %3976 = vmatprep.subr.bf16.mxu0 0
      %3977 = vmatpush1.bf16.msra.mxu0 0
      %3978 = vmatprep.subr.bf16.mxu0 0
      %3979 = vmatpush1.bf16.msra.mxu0 0
      %3980 = vmatprep.subr.bf16.mxu0 0
      %3981 = vmatpush1.bf16.msra.mxu0 0
      %3982 = vmatprep.subr.bf16.mxu0 0
      %3983 = vmatpush1.bf16.msra.mxu0 0
      %3984 = vmatprep.subr.bf16.mxu0 0
      %3985 = vmatpush1.bf16.msra.mxu0 0
      %3986 = vmatprep.subr.bf16.mxu0 0
      %3987 = vmatpush1.bf16.msra.mxu0 0
      %3988 = vmatprep.subr.bf16.mxu0 0
      %3989 = vmatpush1.bf16.msra.mxu0 0
      %3990 = vmatprep.subr.bf16.mxu0 0
      %3991 = vmatpush1.bf16.msra.mxu0 0
      %3992 = vmatprep.subr.bf16.mxu0 0
      %3993 = vmatpush1.bf16.msra.mxu0 0
      %3994 = vmatprep.subr.bf16.mxu0 0
      %3995 = vmatpush1.bf16.msra.mxu0 0
      %3996 = vmatprep.subr.bf16.mxu0 0
      %3997 = vmatpush1.bf16.msra.mxu0 0
      %3998 = vmatprep.subr.bf16.mxu0 0
      %3999 = vmatpush1.bf16.msra.mxu0 0
      %4000 = vmatprep.subr.bf16.mxu0 0
      %4001 = vmatpush1.bf16.msra.mxu0 0
      %4002 = vmatprep.subr.bf16.mxu0 0
      %4003 = vmatpush1.bf16.msra.mxu0 0
      %4004 = vmatprep.subr.bf16.mxu0 0
      %4005 = vmatpush1.bf16.msra.mxu0 0
      %4006 = vmatprep.mubr.bf16.mxu0 0
      %4007 = vmatmul.mubr.bf16.gmra.mrb[0].mxu0 %v3869
      %v4008 = vpop.f32.mrb[0].mxu0
      %v4009 = vadd.f32 0.0, %v4008
      %v4010 = vpop.f32.mrb[0].mxu0
      %v4011 = vadd.f32 0.0, %v4010
      %v4012 = vpop.f32.mrb[0].mxu0
      %v4013 = vpop.f32.mrb[0].mxu0
      %4014 = vdwg.mxu0
      %4015 = vmatprep.subr.bf16.mxu0 0
      %4016 = vmatpush1.bf16.msra.mxu0 %v3890
      %4017 = vmatprep.subr.bf16.mxu0 0
      %4018 = vmatpush1.bf16.msra.mxu0 0
      %4019 = vmatprep.subr.bf16.mxu0 0
      %4020 = vmatpush1.bf16.msra.mxu0 0
      %4021 = vmatprep.subr.bf16.mxu0 0
      %4022 = vmatpush1.bf16.msra.mxu0 0
      %4023 = vmatprep.subr.bf16.mxu0 0
      %4024 = vmatpush1.bf16.msra.mxu0 0
      %4025 = vmatprep.subr.bf16.mxu0 0
      %4026 = vmatpush1.bf16.msra.mxu0 0
      %4027 = vmatprep.subr.bf16.mxu0 0
      %4028 = vmatpush1.bf16.msra.mxu0 0
      %4029 = vmatprep.subr.bf16.mxu0 0
      %4030 = vmatpush1.bf16.msra.mxu0 0
      %4031 = vmatprep.subr.bf16.mxu0 0
      %4032 = vmatpush1.bf16.msra.mxu0 0
      %4033 = vmatprep.subr.bf16.mxu0 0
      %4034 = vmatpush1.bf16.msra.mxu0 0
      %4035 = vmatprep.subr.bf16.mxu0 0
      %4036 = vmatpush1.bf16.msra.mxu0 0
      %4037 = vmatprep.subr.bf16.mxu0 0
      %4038 = vmatpush1.bf16.msra.mxu0 0
      %4039 = vmatprep.subr.bf16.mxu0 0
      %4040 = vmatpush1.bf16.msra.mxu0 0
      %4041 = vmatprep.subr.bf16.mxu0 0
      %4042 = vmatpush1.bf16.msra.mxu0 0
      %4043 = vmatprep.subr.bf16.mxu0 0
      %4044 = vmatpush1.bf16.msra.mxu0 0
      %4045 = vmatprep.subr.bf16.mxu0 0
      %4046 = vmatpush1.bf16.msra.mxu0 0
      %4047 = vmatprep.mubr.bf16.mxu0 0
      %4048 = vmatmul.mubr.bf16.gmra.mrb[0].mxu0 %v3869
      %v4049 = vpop.f32.mrb[0].mxu0
      %v4050 = vadd.f32 0.0, %v4049
      %v4051 = vpop.f32.mrb[0].mxu0
      %v4052 = vpop.f32.mrb[0].mxu0
      %v4053 = vpop.f32.mrb[0].mxu0
      %4054 = vdwg.mxu0
      %v4055 = vadd.f32 %v3820, %v3927
      %v4056 = vadd.f32 %v3821, %v3929
      %v4057 = vadd.f32 %v3822, %v3968
      %v4058 = vadd.f32 %v3823, %v3970
      %v4059 = vadd.f32 %v3824, %v4009
      %v4060 = vadd.f32 %v3825, %v4011
      %v4061 = vadd.f32 %v3826, %v4050
      %4062 = vst [vmem:[#allocation2] sm:$0xff] %v4055
      %4063 = vst [vmem:[#allocation2 + $0x8] sm:$0xff] %v4056
      %4064 = vst [vmem:[#allocation2 + $0x10] sm:$0xff] %v4057
      %4065 = vst [vmem:[#allocation2 + $0x18] sm:$0xff] %v4058
      %4066 = vst [vmem:[#allocation2 + $0x20] sm:$0xff] %v4059
      %4067 = vst [vmem:[#allocation2 + $0x28] sm:$0xff] %v4060
      %4068 = vst.msk [vmem:[#allocation2 + $0x30] sm:$0xff] %vm292, %v4061
      %v4069 = vld [vmem:[%s267] sm:$0xff]
      %v4070 = vld [vmem:[%s267 + $0x8] sm:$0xff]
      %v4071 = vld [vmem:[%s267 + $0x10] sm:$0xff]
      %v4072 = vld [vmem:[%s267 + $0x18] sm:$0xff]
      %v4073 = vld [vmem:[#allocation2] sm:$0xff]
      %v4074 = vld [vmem:[#allocation2 + $0x8] sm:$0xff]
      %v4075 = vld [vmem:[#allocation2 + $0x10] sm:$0xff]
      %v4076 = vld [vmem:[#allocation2 + $0x18] sm:$0xff]
      %v4077 = vld [vmem:[#allocation2 + $0x20] sm:$0xff]
      %v4078 = vld [vmem:[#allocation2 + $0x28] sm:$0xff]
      %v4079 = vld [vmem:[#allocation2 + $0x30] sm:$0xff]
      %s4080 = scalar_lea.vmem %s262, 60
      %v4081 = vld [vmem:[%s4080] sm:$0xf]
      %v4086 = vunpack.c.l.b16 %v4069
      %v4087 = vunpack.c.h.b16 %v4069
      %v4088 = vunpack.c.l.b16 %v4070
      %v4089 = vunpack.c.h.b16 %v4070
      %v4090 = vunpack.c.l.b16 %v4071
      %v4091 = vunpack.c.h.b16 %v4071
      %v4092 = vunpack.c.l.b16 %v4072
      %v4093 = vunpack.c.h.b16 %v4072
      %v4094 = vpack.c.b16 %v4086, %v4086
      %v4095 = vpack.c.b16 %v4087, %v4087
      %v4096 = vpack.c.b16 %v4088, %v4088
      %v4097 = vpack.c.b16 %v4089, %v4089
      %v4098 = vpack.c.b16 %v4090, %v4090
      %v4099 = vpack.c.b16 %v4091, %v4091
      %v4100 = vpack.c.b16 %v4092, %v4092
      %v4101 = vpack.c.b16 %v4093, %v4093
      %4102 = vrot.lane.b32.xlu0 %v4094, 8
      %v4103 = vpop.permute.xlu0 %4102
      %4104 = vrot.lane.b32.xlu0 %v4095, 8
      %v4105 = vpop.permute.xlu0 %4104
      %4106 = vrot.lane.b32.xlu0 %v4096, 8
      %v4107 = vpop.permute.xlu0 %4106
      %4108 = vrot.lane.b32.xlu0 %v4097, 8
      %v4109 = vpop.permute.xlu0 %4108
      %4110 = vrot.lane.b32.xlu0 %v4098, 8
      %v4111 = vpop.permute.xlu0 %4110
      %4112 = vrot.lane.b32.xlu0 %v4099, 8
      %v4113 = vpop.permute.xlu0 %4112
      %4114 = vrot.lane.b32.xlu0 %v4100, 8
      %v4115 = vpop.permute.xlu0 %4114
      %4116 = vrot.lane.b32.xlu0 %v4101, 8
      %v4117 = vpop.permute.xlu0 %4116
      %vm4118 = vcmask 64512
      %v4119 = vsel %vm4118, %v4103, %v4105
      %v4120 = vsel %vm4118, %v4105, %v4107
      %v4121 = vsel %vm4118, %v4107, %v4109
      %v4122 = vsel %vm4118, %v4109, %v4111
      %v4123 = vsel %vm4118, %v4111, %v4113
      %v4124 = vsel %vm4118, %v4113, %v4115
      %v4125 = vsel %vm4118, %v4115, %v4117
      %v4127 = vsel %vm324, %v4081, 0
      %v4130 = vsel %vm328, %v4119, 0
      %v4133 = vsel %vm328, %v4120, 0
      %v4136 = vsel %vm328, %v4121, 0
      %v4139 = vsel %vm328, %v4122, 0
      %v4142 = vsel %vm328, %v4123, 0
      %v4145 = vsel %vm328, %v4124, 0
      %v4148 = vsel %vm328, %v4125, 0
      %4150 = vmatprep.subr.bf16.mxu0 %v4133
      %4151 = vmatpush1.bf16.msra.mxu0 %v4130
      %4152 = vmatprep.subr.bf16.mxu0 0
      %4153 = vmatpush1.bf16.msra.mxu0 0
      %4154 = vmatprep.subr.bf16.mxu0 0
      %4155 = vmatpush1.bf16.msra.mxu0 0
      %4156 = vmatprep.subr.bf16.mxu0 0
      %4157 = vmatpush1.bf16.msra.mxu0 0
      %4158 = vmatprep.subr.bf16.mxu0 0
      %4159 = vmatpush1.bf16.msra.mxu0 0
      %4160 = vmatprep.subr.bf16.mxu0 0
      %4161 = vmatpush1.bf16.msra.mxu0 0
      %4162 = vmatprep.subr.bf16.mxu0 0
      %4163 = vmatpush1.bf16.msra.mxu0 0
      %4164 = vmatprep.subr.bf16.mxu0 0
      %4165 = vmatpush1.bf16.msra.mxu0 0
      %4166 = vmatprep.subr.bf16.mxu0 0
      %4167 = vmatpush1.bf16.msra.mxu0 0
      %4168 = vmatprep.subr.bf16.mxu0 0
      %4169 = vmatpush1.bf16.msra.mxu0 0
      %4170 = vmatprep.subr.bf16.mxu0 0
      %4171 = vmatpush1.bf16.msra.mxu0 0
      %4172 = vmatprep.subr.bf16.mxu0 0
      %4173 = vmatpush1.bf16.msra.mxu0 0
      %4174 = vmatprep.subr.bf16.mxu0 0
      %4175 = vmatpush1.bf16.msra.mxu0 0
      %4176 = vmatprep.subr.bf16.mxu0 0
      %4177 = vmatpush1.bf16.msra.mxu0 0
      %4178 = vmatprep.subr.bf16.mxu0 0
      %4179 = vmatpush1.bf16.msra.mxu0 0
      %4180 = vmatprep.subr.bf16.mxu0 0
      %4181 = vmatpush1.bf16.msra.mxu0 0
      %4182 = vmatprep.mubr.bf16.mxu0 0
      %4183 = vmatmul.mubr.bf16.gmra.mrb[0].mxu0 %v4127
      %v4184 = vpop.f32.mrb[0].mxu0
      %v4185 = vadd.f32 0.0, %v4184
      %v4186 = vpop.f32.mrb[0].mxu0
      %v4187 = vadd.f32 0.0, %v4186
      %v4188 = vpop.f32.mrb[0].mxu0
      %v4189 = vpop.f32.mrb[0].mxu0
      %4190 = vdwg.mxu0
      %4191 = vmatprep.subr.bf16.mxu0 %v4139
      %4192 = vmatpush1.bf16.msra.mxu0 %v4136
      %4193 = vmatprep.subr.bf16.mxu0 0
      %4194 = vmatpush1.bf16.msra.mxu0 0
      %4195 = vmatprep.subr.bf16.mxu0 0
      %4196 = vmatpush1.bf16.msra.mxu0 0
      %4197 = vmatprep.subr.bf16.mxu0 0
      %4198 = vmatpush1.bf16.msra.mxu0 0
      %4199 = vmatprep.subr.bf16.mxu0 0
      %4200 = vmatpush1.bf16.msra.mxu0 0
      %4201 = vmatprep.subr.bf16.mxu0 0
      %4202 = vmatpush1.bf16.msra.mxu0 0
      %4203 = vmatprep.subr.bf16.mxu0 0
      %4204 = vmatpush1.bf16.msra.mxu0 0
      %4205 = vmatprep.subr.bf16.mxu0 0
      %4206 = vmatpush1.bf16.msra.mxu0 0
      %4207 = vmatprep.subr.bf16.mxu0 0
      %4208 = vmatpush1.bf16.msra.mxu0 0
      %4209 = vmatprep.subr.bf16.mxu0 0
      %4210 = vmatpush1.bf16.msra.mxu0 0
      %4211 = vmatprep.subr.bf16.mxu0 0
      %4212 = vmatpush1.bf16.msra.mxu0 0
      %4213 = vmatprep.subr.bf16.mxu0 0
      %4214 = vmatpush1.bf16.msra.mxu0 0
      %4215 = vmatprep.subr.bf16.mxu0 0
      %4216 = vmatpush1.bf16.msra.mxu0 0
      %4217 = vmatprep.subr.bf16.mxu0 0
      %4218 = vmatpush1.bf16.msra.mxu0 0
      %4219 = vmatprep.subr.bf16.mxu0 0
      %4220 = vmatpush1.bf16.msra.mxu0 0
      %4221 = vmatprep.subr.bf16.mxu0 0
      %4222 = vmatpush1.bf16.msra.mxu0 0
      %4223 = vmatprep.mubr.bf16.mxu0 0
      %4224 = vmatmul.mubr.bf16.gmra.mrb[0].mxu0 %v4127
      %v4225 = vpop.f32.mrb[0].mxu0
      %v4226 = vadd.f32 0.0, %v4225
      %v4227 = vpop.f32.mrb[0].mxu0
      %v4228 = vadd.f32 0.0, %v4227
      %v4229 = vpop.f32.mrb[0].mxu0
      %v4230 = vpop.f32.mrb[0].mxu0
      %4231 = vdwg.mxu0
      %4232 = vmatprep.subr.bf16.mxu0 %v4145
      %4233 = vmatpush1.bf16.msra.mxu0 %v4142
      %4234 = vmatprep.subr.bf16.mxu0 0
      %4235 = vmatpush1.bf16.msra.mxu0 0
      %4236 = vmatprep.subr.bf16.mxu0 0
      %4237 = vmatpush1.bf16.msra.mxu0 0
      %4238 = vmatprep.subr.bf16.mxu0 0
      %4239 = vmatpush1.bf16.msra.mxu0 0
      %4240 = vmatprep.subr.bf16.mxu0 0
      %4241 = vmatpush1.bf16.msra.mxu0 0
      %4242 = vmatprep.subr.bf16.mxu0 0
      %4243 = vmatpush1.bf16.msra.mxu0 0
      %4244 = vmatprep.subr.bf16.mxu0 0
      %4245 = vmatpush1.bf16.msra.mxu0 0
      %4246 = vmatprep.subr.bf16.mxu0 0
      %4247 = vmatpush1.bf16.msra.mxu0 0
      %4248 = vmatprep.subr.bf16.mxu0 0
      %4249 = vmatpush1.bf16.msra.mxu0 0
      %4250 = vmatprep.subr.bf16.mxu0 0
      %4251 = vmatpush1.bf16.msra.mxu0 0
      %4252 = vmatprep.subr.bf16.mxu0 0
      %4253 = vmatpush1.bf16.msra.mxu0 0
      %4254 = vmatprep.subr.bf16.mxu0 0
      %4255 = vmatpush1.bf16.msra.mxu0 0
      %4256 = vmatprep.subr.bf16.mxu0 0
      %4257 = vmatpush1.bf16.msra.mxu0 0
      %4258 = vmatprep.subr.bf16.mxu0 0
      %4259 = vmatpush1.bf16.msra.mxu0 0
      %4260 = vmatprep.subr.bf16.mxu0 0
      %4261 = vmatpush1.bf16.msra.mxu0 0
      %4262 = vmatprep.subr.bf16.mxu0 0
      %4263 = vmatpush1.bf16.msra.mxu0 0
      %4264 = vmatprep.mubr.bf16.mxu0 0
      %4265 = vmatmul.mubr.bf16.gmra.mrb[0].mxu0 %v4127
      %v4266 = vpop.f32.mrb[0].mxu0
      %v4267 = vadd.f32 0.0, %v4266
      %v4268 = vpop.f32.mrb[0].mxu0
      %v4269 = vadd.f32 0.0, %v4268
      %v4270 = vpop.f32.mrb[0].mxu0
      %v4271 = vpop.f32.mrb[0].mxu0
      %4272 = vdwg.mxu0
      %4273 = vmatprep.subr.bf16.mxu0 0
      %4274 = vmatpush1.bf16.msra.mxu0 %v4148
      %4275 = vmatprep.subr.bf16.mxu0 0
      %4276 = vmatpush1.bf16.msra.mxu0 0
      %4277 = vmatprep.subr.bf16.mxu0 0
      %4278 = vmatpush1.bf16.msra.mxu0 0
      %4279 = vmatprep.subr.bf16.mxu0 0
      %4280 = vmatpush1.bf16.msra.mxu0 0
      %4281 = vmatprep.subr.bf16.mxu0 0
      %4282 = vmatpush1.bf16.msra.mxu0 0
      %4283 = vmatprep.subr.bf16.mxu0 0
      %4284 = vmatpush1.bf16.msra.mxu0 0
      %4285 = vmatprep.subr.bf16.mxu0 0
      %4286 = vmatpush1.bf16.msra.mxu0 0
      %4287 = vmatprep.subr.bf16.mxu0 0
      %4288 = vmatpush1.bf16.msra.mxu0 0
      %4289 = vmatprep.subr.bf16.mxu0 0
      %4290 = vmatpush1.bf16.msra.mxu0 0
      %4291 = vmatprep.subr.bf16.mxu0 0
      %4292 = vmatpush1.bf16.msra.mxu0 0
      %4293 = vmatprep.subr.bf16.mxu0 0
      %4294 = vmatpush1.bf16.msra.mxu0 0
      %4295 = vmatprep.subr.bf16.mxu0 0
      %4296 = vmatpush1.bf16.msra.mxu0 0
      %4297 = vmatprep.subr.bf16.mxu0 0
      %4298 = vmatpush1.bf16.msra.mxu0 0
      %4299 = vmatprep.subr.bf16.mxu0 0
      %4300 = vmatpush1.bf16.msra.mxu0 0
      %4301 = vmatprep.subr.bf16.mxu0 0
      %4302 = vmatpush1.bf16.msra.mxu0 0
      %4303 = vmatprep.subr.bf16.mxu0 0
      %4304 = vmatpush1.bf16.msra.mxu0 0
      %4305 = vmatprep.mubr.bf16.mxu0 0
      %4306 = vmatmul.mubr.bf16.gmra.mrb[0].mxu0 %v4127
      %v4307 = vpop.f32.mrb[0].mxu0
      %v4308 = vadd.f32 0.0, %v4307
      %v4309 = vpop.f32.mrb[0].mxu0
      %v4310 = vpop.f32.mrb[0].mxu0
      %v4311 = vpop.f32.mrb[0].mxu0
      %4312 = vdwg.mxu0
      %v4313 = vadd.f32 %v4073, %v4185
      %v4314 = vadd.f32 %v4074, %v4187
      %v4315 = vadd.f32 %v4075, %v4226
      %v4316 = vadd.f32 %v4076, %v4228
      %v4317 = vadd.f32 %v4077, %v4267
      %v4318 = vadd.f32 %v4078, %v4269
      %v4319 = vadd.f32 %v4079, %v4308
      %4320 = vst [vmem:[#allocation2] sm:$0xff] %v4313
      %4321 = vst [vmem:[#allocation2 + $0x8] sm:$0xff] %v4314
      %4322 = vst [vmem:[#allocation2 + $0x10] sm:$0xff] %v4315
      %4323 = vst [vmem:[#allocation2 + $0x18] sm:$0xff] %v4316
      %4324 = vst [vmem:[#allocation2 + $0x20] sm:$0xff] %v4317
      %4325 = vst [vmem:[#allocation2 + $0x28] sm:$0xff] %v4318
      %4326 = vst.msk [vmem:[#allocation2 + $0x30] sm:$0xff] %vm292, %v4319
      %v4327 = vld [vmem:[%s267] sm:$0xff]
      %v4328 = vld [vmem:[%s267 + $0x8] sm:$0xff]
      %v4329 = vld [vmem:[%s267 + $0x10] sm:$0xff]
      %v4330 = vld [vmem:[%s267 + $0x18] sm:$0xff]
      %v4331 = vld [vmem:[#allocation2] sm:$0xff]
      %v4332 = vld [vmem:[#allocation2 + $0x8] sm:$0xff]
      %v4333 = vld [vmem:[#allocation2 + $0x10] sm:$0xff]
      %v4334 = vld [vmem:[#allocation2 + $0x18] sm:$0xff]
      %v4335 = vld [vmem:[#allocation2 + $0x20] sm:$0xff]
      %v4336 = vld [vmem:[#allocation2 + $0x28] sm:$0xff]
      %v4337 = vld [vmem:[#allocation2 + $0x30] sm:$0xff]
      %s4338 = scalar_lea.vmem %s262, 64
      %v4339 = vld [vmem:[%s4338] sm:$0xf]
      %v4344 = vunpack.c.l.b16 %v4327
      %v4345 = vunpack.c.h.b16 %v4327
      %v4346 = vunpack.c.l.b16 %v4328
      %v4347 = vunpack.c.h.b16 %v4328
      %v4348 = vunpack.c.l.b16 %v4329
      %v4349 = vunpack.c.h.b16 %v4329
      %v4350 = vunpack.c.l.b16 %v4330
      %v4351 = vunpack.c.h.b16 %v4330
      %v4352 = vpack.c.b16 %v4344, %v4344
      %v4353 = vpack.c.b16 %v4345, %v4345
      %v4354 = vpack.c.b16 %v4346, %v4346
      %v4355 = vpack.c.b16 %v4347, %v4347
      %v4356 = vpack.c.b16 %v4348, %v4348
      %v4357 = vpack.c.b16 %v4349, %v4349
      %v4358 = vpack.c.b16 %v4350, %v4350
      %v4359 = vpack.c.b16 %v4351, %v4351
      %4360 = vrot.lane.b32.xlu0 %v4352, 7
      %v4361 = vpop.permute.xlu0 %4360
      %4362 = vrot.lane.b32.xlu0 %v4353, 7
      %v4363 = vpop.permute.xlu0 %4362
      %4364 = vrot.lane.b32.xlu0 %v4354, 7
      %v4365 = vpop.permute.xlu0 %4364
      %4366 = vrot.lane.b32.xlu0 %v4355, 7
      %v4367 = vpop.permute.xlu0 %4366
      %4368 = vrot.lane.b32.xlu0 %v4356, 7
      %v4369 = vpop.permute.xlu0 %4368
      %4370 = vrot.lane.b32.xlu0 %v4357, 7
      %v4371 = vpop.permute.xlu0 %4370
      %4372 = vrot.lane.b32.xlu0 %v4358, 7
      %v4373 = vpop.permute.xlu0 %4372
      %4374 = vrot.lane.b32.xlu0 %v4359, 7
      %v4375 = vpop.permute.xlu0 %4374
      %vm4376 = vcmask 56320
      %v4377 = vsel %vm4376, %v4361, %v4363
      %v4378 = vsel %vm4376, %v4363, %v4365
      %v4379 = vsel %vm4376, %v4365, %v4367
      %v4380 = vsel %vm4376, %v4367, %v4369
      %v4381 = vsel %vm4376, %v4369, %v4371
      %v4382 = vsel %vm4376, %v4371, %v4373
      %v4383 = vsel %vm4376, %v4373, %v4375
      %v4385 = vsel %vm324, %v4339, 0
      %v4388 = vsel %vm328, %v4377, 0
      %v4391 = vsel %vm328, %v4378, 0
      %v4394 = vsel %vm328, %v4379, 0
      %v4397 = vsel %vm328, %v4380, 0
      %v4400 = vsel %vm328, %v4381, 0
      %v4403 = vsel %vm328, %v4382, 0
      %v4406 = vsel %vm328, %v4383, 0
      %4408 = vmatprep.subr.bf16.mxu0 %v4391
      %4409 = vmatpush1.bf16.msra.mxu0 %v4388
      %4410 = vmatprep.subr.bf16.mxu0 0
      %4411 = vmatpush1.bf16.msra.mxu0 0
      %4412 = vmatprep.subr.bf16.mxu0 0
      %4413 = vmatpush1.bf16.msra.mxu0 0
      %4414 = vmatprep.subr.bf16.mxu0 0
      %4415 = vmatpush1.bf16.msra.mxu0 0
      %4416 = vmatprep.subr.bf16.mxu0 0
      %4417 = vmatpush1.bf16.msra.mxu0 0
      %4418 = vmatprep.subr.bf16.mxu0 0
      %4419 = vmatpush1.bf16.msra.mxu0 0
      %4420 = vmatprep.subr.bf16.mxu0 0
      %4421 = vmatpush1.bf16.msra.mxu0 0
      %4422 = vmatprep.subr.bf16.mxu0 0
      %4423 = vmatpush1.bf16.msra.mxu0 0
      %4424 = vmatprep.subr.bf16.mxu0 0
      %4425 = vmatpush1.bf16.msra.mxu0 0
      %4426 = vmatprep.subr.bf16.mxu0 0
      %4427 = vmatpush1.bf16.msra.mxu0 0
      %4428 = vmatprep.subr.bf16.mxu0 0
      %4429 = vmatpush1.bf16.msra.mxu0 0
      %4430 = vmatprep.subr.bf16.mxu0 0
      %4431 = vmatpush1.bf16.msra.mxu0 0
      %4432 = vmatprep.subr.bf16.mxu0 0
      %4433 = vmatpush1.bf16.msra.mxu0 0
      %4434 = vmatprep.subr.bf16.mxu0 0
      %4435 = vmatpush1.bf16.msra.mxu0 0
      %4436 = vmatprep.subr.bf16.mxu0 0
      %4437 = vmatpush1.bf16.msra.mxu0 0
      %4438 = vmatprep.subr.bf16.mxu0 0
      %4439 = vmatpush1.bf16.msra.mxu0 0
      %4440 = vmatprep.mubr.bf16.mxu0 0
      %4441 = vmatmul.mubr.bf16.gmra.mrb[0].mxu0 %v4385
      %v4442 = vpop.f32.mrb[0].mxu0
      %v4443 = vadd.f32 0.0, %v4442
      %v4444 = vpop.f32.mrb[0].mxu0
      %v4445 = vadd.f32 0.0, %v4444
      %v4446 = vpop.f32.mrb[0].mxu0
      %v4447 = vpop.f32.mrb[0].mxu0
      %4448 = vdwg.mxu0
      %4449 = vmatprep.subr.bf16.mxu0 %v4397
      %4450 = vmatpush1.bf16.msra.mxu0 %v4394
      %4451 = vmatprep.subr.bf16.mxu0 0
      %4452 = vmatpush1.bf16.msra.mxu0 0
      %4453 = vmatprep.subr.bf16.mxu0 0
      %4454 = vmatpush1.bf16.msra.mxu0 0
      %4455 = vmatprep.subr.bf16.mxu0 0
      %4456 = vmatpush1.bf16.msra.mxu0 0
      %4457 = vmatprep.subr.bf16.mxu0 0
      %4458 = vmatpush1.bf16.msra.mxu0 0
      %4459 = vmatprep.subr.bf16.mxu0 0
      %4460 = vmatpush1.bf16.msra.mxu0 0
      %4461 = vmatprep.subr.bf16.mxu0 0
      %4462 = vmatpush1.bf16.msra.mxu0 0
      %4463 = vmatprep.subr.bf16.mxu0 0
      %4464 = vmatpush1.bf16.msra.mxu0 0
      %4465 = vmatprep.subr.bf16.mxu0 0
      %4466 = vmatpush1.bf16.msra.mxu0 0
      %4467 = vmatprep.subr.bf16.mxu0 0
      %4468 = vmatpush1.bf16.msra.mxu0 0
      %4469 = vmatprep.subr.bf16.mxu0 0
      %4470 = vmatpush1.bf16.msra.mxu0 0
      %4471 = vmatprep.subr.bf16.mxu0 0
      %4472 = vmatpush1.bf16.msra.mxu0 0
      %4473 = vmatprep.subr.bf16.mxu0 0
      %4474 = vmatpush1.bf16.msra.mxu0 0
      %4475 = vmatprep.subr.bf16.mxu0 0
      %4476 = vmatpush1.bf16.msra.mxu0 0
      %4477 = vmatprep.subr.bf16.mxu0 0
      %4478 = vmatpush1.bf16.msra.mxu0 0
      %4479 = vmatprep.subr.bf16.mxu0 0
      %4480 = vmatpush1.bf16.msra.mxu0 0
      %4481 = vmatprep.mubr.bf16.mxu0 0
      %4482 = vmatmul.mubr.bf16.gmra.mrb[0].mxu0 %v4385
      %v4483 = vpop.f32.mrb[0].mxu0
      %v4484 = vadd.f32 0.0, %v4483
      %v4485 = vpop.f32.mrb[0].mxu0
      %v4486 = vadd.f32 0.0, %v4485
      %v4487 = vpop.f32.mrb[0].mxu0
      %v4488 = vpop.f32.mrb[0].mxu0
      %4489 = vdwg.mxu0
      %4490 = vmatprep.subr.bf16.mxu0 %v4403
      %4491 = vmatpush1.bf16.msra.mxu0 %v4400
      %4492 = vmatprep.subr.bf16.mxu0 0
      %4493 = vmatpush1.bf16.msra.mxu0 0
      %4494 = vmatprep.subr.bf16.mxu0 0
      %4495 = vmatpush1.bf16.msra.mxu0 0
      %4496 = vmatprep.subr.bf16.mxu0 0
      %4497 = vmatpush1.bf16.msra.mxu0 0
      %4498 = vmatprep.subr.bf16.mxu0 0
      %4499 = vmatpush1.bf16.msra.mxu0 0
      %4500 = vmatprep.subr.bf16.mxu0 0
      %4501 = vmatpush1.bf16.msra.mxu0 0
      %4502 = vmatprep.subr.bf16.mxu0 0
      %4503 = vmatpush1.bf16.msra.mxu0 0
      %4504 = vmatprep.subr.bf16.mxu0 0
      %4505 = vmatpush1.bf16.msra.mxu0 0
      %4506 = vmatprep.subr.bf16.mxu0 0
      %4507 = vmatpush1.bf16.msra.mxu0 0
      %4508 = vmatprep.subr.bf16.mxu0 0
      %4509 = vmatpush1.bf16.msra.mxu0 0
      %4510 = vmatprep.subr.bf16.mxu0 0
      %4511 = vmatpush1.bf16.msra.mxu0 0
      %4512 = vmatprep.subr.bf16.mxu0 0
      %4513 = vmatpush1.bf16.msra.mxu0 0
      %4514 = vmatprep.subr.bf16.mxu0 0
      %4515 = vmatpush1.bf16.msra.mxu0 0
      %4516 = vmatprep.subr.bf16.mxu0 0
      %4517 = vmatpush1.bf16.msra.mxu0 0
      %4518 = vmatprep.subr.bf16.mxu0 0
      %4519 = vmatpush1.bf16.msra.mxu0 0
      %4520 = vmatprep.subr.bf16.mxu0 0
      %4521 = vmatpush1.bf16.msra.mxu0 0
      %4522 = vmatprep.mubr.bf16.mxu0 0
      %4523 = vmatmul.mubr.bf16.gmra.mrb[0].mxu0 %v4385
      %v4524 = vpop.f32.mrb[0].mxu0
      %v4525 = vadd.f32 0.0, %v4524
      %v4526 = vpop.f32.mrb[0].mxu0
      %v4527 = vadd.f32 0.0, %v4526
      %v4528 = vpop.f32.mrb[0].mxu0
      %v4529 = vpop.f32.mrb[0].mxu0
      %4530 = vdwg.mxu0
      %4531 = vmatprep.subr.bf16.mxu0 0
      %4532 = vmatpush1.bf16.msra.mxu0 %v4406
      %4533 = vmatprep.subr.bf16.mxu0 0
      %4534 = vmatpush1.bf16.msra.mxu0 0
      %4535 = vmatprep.subr.bf16.mxu0 0
      %4536 = vmatpush1.bf16.msra.mxu0 0
      %4537 = vmatprep.subr.bf16.mxu0 0
      %4538 = vmatpush1.bf16.msra.mxu0 0
      %4539 = vmatprep.subr.bf16.mxu0 0
      %4540 = vmatpush1.bf16.msra.mxu0 0
      %4541 = vmatprep.subr.bf16.mxu0 0
      %4542 = vmatpush1.bf16.msra.mxu0 0
      %4543 = vmatprep.subr.bf16.mxu0 0
      %4544 = vmatpush1.bf16.msra.mxu0 0
      %4545 = vmatprep.subr.bf16.mxu0 0
      %4546 = vmatpush1.bf16.msra.mxu0 0
      %4547 = vmatprep.subr.bf16.mxu0 0
      %4548 = vmatpush1.bf16.msra.mxu0 0
      %4549 = vmatprep.subr.bf16.mxu0 0
      %4550 = vmatpush1.bf16.msra.mxu0 0
      %4551 = vmatprep.subr.bf16.mxu0 0
      %4552 = vmatpush1.bf16.msra.mxu0 0
      %4553 = vmatprep.subr.bf16.mxu0 0
      %4554 = vmatpush1.bf16.msra.mxu0 0
      %4555 = vmatprep.subr.bf16.mxu0 0
      %4556 = vmatpush1.bf16.msra.mxu0 0
      %4557 = vmatprep.subr.bf16.mxu0 0
      %4558 = vmatpush1.bf16.msra.mxu0 0
      %4559 = vmatprep.subr.bf16.mxu0 0
      %4560 = vmatpush1.bf16.msra.mxu0 0
      %4561 = vmatprep.subr.bf16.mxu0 0
      %4562 = vmatpush1.bf16.msra.mxu0 0
      %4563 = vmatprep.mubr.bf16.mxu0 0
      %4564 = vmatmul.mubr.bf16.gmra.mrb[0].mxu0 %v4385
      %v4565 = vpop.f32.mrb[0].mxu0
      %v4566 = vadd.f32 0.0, %v4565
      %v4567 = vpop.f32.mrb[0].mxu0
      %v4568 = vpop.f32.mrb[0].mxu0
      %v4569 = vpop.f32.mrb[0].mxu0
      %4570 = vdwg.mxu0
      %v4571 = vadd.f32 %v4331, %v4443
      %v4572 = vadd.f32 %v4332, %v4445
      %v4573 = vadd.f32 %v4333, %v4484
      %v4574 = vadd.f32 %v4334, %v4486
      %v4575 = vadd.f32 %v4335, %v4525
      %v4576 = vadd.f32 %v4336, %v4527
      %v4577 = vadd.f32 %v4337, %v4566
      %4578 = vst [vmem:[#allocation2] sm:$0xff] %v4571
      %4579 = vst [vmem:[#allocation2 + $0x8] sm:$0xff] %v4572
      %4580 = vst [vmem:[#allocation2 + $0x10] sm:$0xff] %v4573
      %4581 = vst [vmem:[#allocation2 + $0x18] sm:$0xff] %v4574
      %4582 = vst [vmem:[#allocation2 + $0x20] sm:$0xff] %v4575
      %4583 = vst [vmem:[#allocation2 + $0x28] sm:$0xff] %v4576
      %4584 = vst.msk [vmem:[#allocation2 + $0x30] sm:$0xff] %vm292, %v4577
      %v4585 = vld [vmem:[%s267] sm:$0xff]
      %v4586 = vld [vmem:[%s267 + $0x8] sm:$0xff]
      %v4587 = vld [vmem:[%s267 + $0x10] sm:$0xff]
      %v4588 = vld [vmem:[%s267 + $0x18] sm:$0xff]
      %v4589 = vld [vmem:[#allocation2] sm:$0xff]
      %v4590 = vld [vmem:[#allocation2 + $0x8] sm:$0xff]
      %v4591 = vld [vmem:[#allocation2 + $0x10] sm:$0xff]
      %v4592 = vld [vmem:[#allocation2 + $0x18] sm:$0xff]
      %v4593 = vld [vmem:[#allocation2 + $0x20] sm:$0xff]
      %v4594 = vld [vmem:[#allocation2 + $0x28] sm:$0xff]
      %v4595 = vld [vmem:[#allocation2 + $0x30] sm:$0xff]
      %s4596 = scalar_lea.vmem %s262, 68
      %v4597 = vld [vmem:[%s4596] sm:$0xf]
      %v4602 = vunpack.c.l.b16 %v4585
      %v4603 = vunpack.c.h.b16 %v4585
      %v4604 = vunpack.c.l.b16 %v4586
      %v4605 = vunpack.c.h.b16 %v4586
      %v4606 = vunpack.c.l.b16 %v4587
      %v4607 = vunpack.c.h.b16 %v4587
      %v4608 = vunpack.c.l.b16 %v4588
      %v4609 = vunpack.c.h.b16 %v4588
      %v4610 = vpack.c.b16 %v4602, %v4602
      %v4611 = vpack.c.b16 %v4603, %v4603
      %v4612 = vpack.c.b16 %v4604, %v4604
      %v4613 = vpack.c.b16 %v4605, %v4605
      %v4614 = vpack.c.b16 %v4606, %v4606
      %v4615 = vpack.c.b16 %v4607, %v4607
      %v4616 = vpack.c.b16 %v4608, %v4608
      %v4617 = vpack.c.b16 %v4609, %v4609
      %4618 = vrot.lane.b32.xlu0 %v4610, 6
      %v4619 = vpop.permute.xlu0 %4618
      %4620 = vrot.lane.b32.xlu0 %v4611, 6
      %v4621 = vpop.permute.xlu0 %4620
      %4622 = vrot.lane.b32.xlu0 %v4612, 6
      %v4623 = vpop.permute.xlu0 %4622
      %4624 = vrot.lane.b32.xlu0 %v4613, 6
      %v4625 = vpop.permute.xlu0 %4624
      %4626 = vrot.lane.b32.xlu0 %v4614, 6
      %v4627 = vpop.permute.xlu0 %4626
      %4628 = vrot.lane.b32.xlu0 %v4615, 6
      %v4629 = vpop.permute.xlu0 %4628
      %4630 = vrot.lane.b32.xlu0 %v4616, 6
      %v4631 = vpop.permute.xlu0 %4630
      %4632 = vrot.lane.b32.xlu0 %v4617, 6
      %v4633 = vpop.permute.xlu0 %4632
      %vm4634 = vcmask 48128
      %v4635 = vsel %vm4634, %v4619, %v4621
      %v4636 = vsel %vm4634, %v4621, %v4623
      %v4637 = vsel %vm4634, %v4623, %v4625
      %v4638 = vsel %vm4634, %v4625, %v4627
      %v4639 = vsel %vm4634, %v4627, %v4629
      %v4640 = vsel %vm4634, %v4629, %v4631
      %v4641 = vsel %vm4634, %v4631, %v4633
      %v4643 = vsel %vm324, %v4597, 0
      %v4646 = vsel %vm328, %v4635, 0
      %v4649 = vsel %vm328, %v4636, 0
      %v4652 = vsel %vm328, %v4637, 0
      %v4655 = vsel %vm328, %v4638, 0
      %v4658 = vsel %vm328, %v4639, 0
      %v4661 = vsel %vm328, %v4640, 0
      %v4664 = vsel %vm328, %v4641, 0
      %4666 = vmatprep.subr.bf16.mxu0 %v4649
      %4667 = vmatpush1.bf16.msra.mxu0 %v4646
      %4668 = vmatprep.subr.bf16.mxu0 0
      %4669 = vmatpush1.bf16.msra.mxu0 0
      %4670 = vmatprep.subr.bf16.mxu0 0
      %4671 = vmatpush1.bf16.msra.mxu0 0
      %4672 = vmatprep.subr.bf16.mxu0 0
      %4673 = vmatpush1.bf16.msra.mxu0 0
      %4674 = vmatprep.subr.bf16.mxu0 0
      %4675 = vmatpush1.bf16.msra.mxu0 0
      %4676 = vmatprep.subr.bf16.mxu0 0
      %4677 = vmatpush1.bf16.msra.mxu0 0
      %4678 = vmatprep.subr.bf16.mxu0 0
      %4679 = vmatpush1.bf16.msra.mxu0 0
      %4680 = vmatprep.subr.bf16.mxu0 0
      %4681 = vmatpush1.bf16.msra.mxu0 0
      %4682 = vmatprep.subr.bf16.mxu0 0
      %4683 = vmatpush1.bf16.msra.mxu0 0
      %4684 = vmatprep.subr.bf16.mxu0 0
      %4685 = vmatpush1.bf16.msra.mxu0 0
      %4686 = vmatprep.subr.bf16.mxu0 0
      %4687 = vmatpush1.bf16.msra.mxu0 0
      %4688 = vmatprep.subr.bf16.mxu0 0
      %4689 = vmatpush1.bf16.msra.mxu0 0
      %4690 = vmatprep.subr.bf16.mxu0 0
      %4691 = vmatpush1.bf16.msra.mxu0 0
      %4692 = vmatprep.subr.bf16.mxu0 0
      %4693 = vmatpush1.bf16.msra.mxu0 0
      %4694 = vmatprep.subr.bf16.mxu0 0
      %4695 = vmatpush1.bf16.msra.mxu0 0
      %4696 = vmatprep.subr.bf16.mxu0 0
      %4697 = vmatpush1.bf16.msra.mxu0 0
      %4698 = vmatprep.mubr.bf16.mxu0 0
      %4699 = vmatmul.mubr.bf16.gmra.mrb[0].mxu0 %v4643
      %v4700 = vpop.f32.mrb[0].mxu0
      %v4701 = vadd.f32 0.0, %v4700
      %v4702 = vpop.f32.mrb[0].mxu0
      %v4703 = vadd.f32 0.0, %v4702
      %v4704 = vpop.f32.mrb[0].mxu0
      %v4705 = vpop.f32.mrb[0].mxu0
      %4706 = vdwg.mxu0
      %4707 = vmatprep.subr.bf16.mxu0 %v4655
      %4708 = vmatpush1.bf16.msra.mxu0 %v4652
      %4709 = vmatprep.subr.bf16.mxu0 0
      %4710 = vmatpush1.bf16.msra.mxu0 0
      %4711 = vmatprep.subr.bf16.mxu0 0
      %4712 = vmatpush1.bf16.msra.mxu0 0
      %4713 = vmatprep.subr.bf16.mxu0 0
      %4714 = vmatpush1.bf16.msra.mxu0 0
      %4715 = vmatprep.subr.bf16.mxu0 0
      %4716 = vmatpush1.bf16.msra.mxu0 0
      %4717 = vmatprep.subr.bf16.mxu0 0
      %4718 = vmatpush1.bf16.msra.mxu0 0
      %4719 = vmatprep.subr.bf16.mxu0 0
      %4720 = vmatpush1.bf16.msra.mxu0 0
      %4721 = vmatprep.subr.bf16.mxu0 0
      %4722 = vmatpush1.bf16.msra.mxu0 0
      %4723 = vmatprep.subr.bf16.mxu0 0
      %4724 = vmatpush1.bf16.msra.mxu0 0
      %4725 = vmatprep.subr.bf16.mxu0 0
      %4726 = vmatpush1.bf16.msra.mxu0 0
      %4727 = vmatprep.subr.bf16.mxu0 0
      %4728 = vmatpush1.bf16.msra.mxu0 0
      %4729 = vmatprep.subr.bf16.mxu0 0
      %4730 = vmatpush1.bf16.msra.mxu0 0
      %4731 = vmatprep.subr.bf16.mxu0 0
      %4732 = vmatpush1.bf16.msra.mxu0 0
      %4733 = vmatprep.subr.bf16.mxu0 0
      %4734 = vmatpush1.bf16.msra.mxu0 0
      %4735 = vmatprep.subr.bf16.mxu0 0
      %4736 = vmatpush1.bf16.msra.mxu0 0
      %4737 = vmatprep.subr.bf16.mxu0 0
      %4738 = vmatpush1.bf16.msra.mxu0 0
      %4739 = vmatprep.mubr.bf16.mxu0 0
      %4740 = vmatmul.mubr.bf16.gmra.mrb[0].mxu0 %v4643
      %v4741 = vpop.f32.mrb[0].mxu0
      %v4742 = vadd.f32 0.0, %v4741
      %v4743 = vpop.f32.mrb[0].mxu0
      %v4744 = vadd.f32 0.0, %v4743
      %v4745 = vpop.f32.mrb[0].mxu0
      %v4746 = vpop.f32.mrb[0].mxu0
      %4747 = vdwg.mxu0
      %4748 = vmatprep.subr.bf16.mxu0 %v4661
      %4749 = vmatpush1.bf16.msra.mxu0 %v4658
      %4750 = vmatprep.subr.bf16.mxu0 0
      %4751 = vmatpush1.bf16.msra.mxu0 0
      %4752 = vmatprep.subr.bf16.mxu0 0
      %4753 = vmatpush1.bf16.msra.mxu0 0
      %4754 = vmatprep.subr.bf16.mxu0 0
      %4755 = vmatpush1.bf16.msra.mxu0 0
      %4756 = vmatprep.subr.bf16.mxu0 0
      %4757 = vmatpush1.bf16.msra.mxu0 0
      %4758 = vmatprep.subr.bf16.mxu0 0
      %4759 = vmatpush1.bf16.msra.mxu0 0
      %4760 = vmatprep.subr.bf16.mxu0 0
      %4761 = vmatpush1.bf16.msra.mxu0 0
      %4762 = vmatprep.subr.bf16.mxu0 0
      %4763 = vmatpush1.bf16.msra.mxu0 0
      %4764 = vmatprep.subr.bf16.mxu0 0
      %4765 = vmatpush1.bf16.msra.mxu0 0
      %4766 = vmatprep.subr.bf16.mxu0 0
      %4767 = vmatpush1.bf16.msra.mxu0 0
      %4768 = vmatprep.subr.bf16.mxu0 0
      %4769 = vmatpush1.bf16.msra.mxu0 0
      %4770 = vmatprep.subr.bf16.mxu0 0
      %4771 = vmatpush1.bf16.msra.mxu0 0
      %4772 = vmatprep.subr.bf16.mxu0 0
      %4773 = vmatpush1.bf16.msra.mxu0 0
      %4774 = vmatprep.subr.bf16.mxu0 0
      %4775 = vmatpush1.bf16.msra.mxu0 0
      %4776 = vmatprep.subr.bf16.mxu0 0
      %4777 = vmatpush1.bf16.msra.mxu0 0
      %4778 = vmatprep.subr.bf16.mxu0 0
      %4779 = vmatpush1.bf16.msra.mxu0 0
      %4780 = vmatprep.mubr.bf16.mxu0 0
      %4781 = vmatmul.mubr.bf16.gmra.mrb[0].mxu0 %v4643
      %v4782 = vpop.f32.mrb[0].mxu0
      %v4783 = vadd.f32 0.0, %v4782
      %v4784 = vpop.f32.mrb[0].mxu0
      %v4785 = vadd.f32 0.0, %v4784
      %v4786 = vpop.f32.mrb[0].mxu0
      %v4787 = vpop.f32.mrb[0].mxu0
      %4788 = vdwg.mxu0
      %4789 = vmatprep.subr.bf16.mxu0 0
      %4790 = vmatpush1.bf16.msra.mxu0 %v4664
      %4791 = vmatprep.subr.bf16.mxu0 0
      %4792 = vmatpush1.bf16.msra.mxu0 0
      %4793 = vmatprep.subr.bf16.mxu0 0
      %4794 = vmatpush1.bf16.msra.mxu0 0
      %4795 = vmatprep.subr.bf16.mxu0 0
      %4796 = vmatpush1.bf16.msra.mxu0 0
      %4797 = vmatprep.subr.bf16.mxu0 0
      %4798 = vmatpush1.bf16.msra.mxu0 0
      %4799 = vmatprep.subr.bf16.mxu0 0
      %4800 = vmatpush1.bf16.msra.mxu0 0
      %4801 = vmatprep.subr.bf16.mxu0 0
      %4802 = vmatpush1.bf16.msra.mxu0 0
      %4803 = vmatprep.subr.bf16.mxu0 0
      %4804 = vmatpush1.bf16.msra.mxu0 0
      %4805 = vmatprep.subr.bf16.mxu0 0
      %4806 = vmatpush1.bf16.msra.mxu0 0
      %4807 = vmatprep.subr.bf16.mxu0 0
      %4808 = vmatpush1.bf16.msra.mxu0 0
      %4809 = vmatprep.subr.bf16.mxu0 0
      %4810 = vmatpush1.bf16.msra.mxu0 0
      %4811 = vmatprep.subr.bf16.mxu0 0
      %4812 = vmatpush1.bf16.msra.mxu0 0
      %4813 = vmatprep.subr.bf16.mxu0 0
      %4814 = vmatpush1.bf16.msra.mxu0 0
      %4815 = vmatprep.subr.bf16.mxu0 0
      %4816 = vmatpush1.bf16.msra.mxu0 0
      %4817 = vmatprep.subr.bf16.mxu0 0
      %4818 = vmatpush1.bf16.msra.mxu0 0
      %4819 = vmatprep.subr.bf16.mxu0 0
      %4820 = vmatpush1.bf16.msra.mxu0 0
      %4821 = vmatprep.mubr.bf16.mxu0 0
      %4822 = vmatmul.mubr.bf16.gmra.mrb[0].mxu0 %v4643
      %v4823 = vpop.f32.mrb[0].mxu0
      %v4824 = vadd.f32 0.0, %v4823
      %v4825 = vpop.f32.mrb[0].mxu0
      %v4826 = vpop.f32.mrb[0].mxu0
      %v4827 = vpop.f32.mrb[0].mxu0
      %4828 = vdwg.mxu0
      %v4829 = vadd.f32 %v4589, %v4701
      %v4830 = vadd.f32 %v4590, %v4703
      %v4831 = vadd.f32 %v4591, %v4742
      %v4832 = vadd.f32 %v4592, %v4744
      %v4833 = vadd.f32 %v4593, %v4783
      %v4834 = vadd.f32 %v4594, %v4785
      %v4835 = vadd.f32 %v4595, %v4824
      %4836 = vst [vmem:[#allocation2] sm:$0xff] %v4829
      %4837 = vst [vmem:[#allocation2 + $0x8] sm:$0xff] %v4830
      %4838 = vst [vmem:[#allocation2 + $0x10] sm:$0xff] %v4831
      %4839 = vst [vmem:[#allocation2 + $0x18] sm:$0xff] %v4832
      %4840 = vst [vmem:[#allocation2 + $0x20] sm:$0xff] %v4833
      %4841 = vst [vmem:[#allocation2 + $0x28] sm:$0xff] %v4834
      %4842 = vst.msk [vmem:[#allocation2 + $0x30] sm:$0xff] %vm292, %v4835
      %v4843 = vld [vmem:[%s267 + $0x4] sm:$0xff]
      %v4844 = vld [vmem:[%s267 + $0xc] sm:$0xff]
      %v4845 = vld [vmem:[%s267 + $0x14] sm:$0xff]
      %v4846 = vld [vmem:[%s267 + $0x1c] sm:$0xf]
      %v4847 = vld [vmem:[#allocation2] sm:$0xff]
      %v4848 = vld [vmem:[#allocation2 + $0x8] sm:$0xff]
      %v4849 = vld [vmem:[#allocation2 + $0x10] sm:$0xff]
      %v4850 = vld [vmem:[#allocation2 + $0x18] sm:$0xff]
      %v4851 = vld [vmem:[#allocation2 + $0x20] sm:$0xff]
      %v4852 = vld [vmem:[#allocation2 + $0x28] sm:$0xff]
      %v4853 = vld [vmem:[#allocation2 + $0x30] sm:$0xff]
      %s4854 = scalar_lea.vmem %s262, 72
      %v4855 = vld [vmem:[%s4854] sm:$0xf]
      %v4860 = vunpack.c.l.b16 %v4843
      %v4861 = vunpack.c.h.b16 %v4843
      %v4862 = vunpack.c.l.b16 %v4844
      %v4863 = vunpack.c.h.b16 %v4844
      %v4864 = vunpack.c.l.b16 %v4845
      %v4865 = vunpack.c.h.b16 %v4845
      %v4866 = vunpack.c.l.b16 %v4846
      %v4867 = vpack.c.b16 %v4860, %v4860
      %v4868 = vpack.c.b16 %v4861, %v4861
      %v4869 = vpack.c.b16 %v4862, %v4862
      %v4870 = vpack.c.b16 %v4863, %v4863
      %v4871 = vpack.c.b16 %v4864, %v4864
      %v4872 = vpack.c.b16 %v4865, %v4865
      %v4873 = vpack.c.b16 %v4866, %v4866
      %4874 = vrot.lane.b32.xlu0 %v4867, 56
      %v4875 = vpop.permute.xlu0 %4874
      %4876 = vrot.lane.b32.xlu0 %v4868, 56
      %v4877 = vpop.permute.xlu0 %4876
      %4878 = vrot.lane.b32.xlu0 %v4869, 56
      %v4879 = vpop.permute.xlu0 %4878
      %4880 = vrot.lane.b32.xlu0 %v4870, 56
      %v4881 = vpop.permute.xlu0 %4880
      %4882 = vrot.lane.b32.xlu0 %v4871, 56
      %v4883 = vpop.permute.xlu0 %4882
      %4884 = vrot.lane.b32.xlu0 %v4872, 56
      %v4885 = vpop.permute.xlu0 %4884
      %4886 = vrot.lane.b32.xlu0 %v4873, 56
      %v4887 = vpop.permute.xlu0 %4886
      %vm4888 = vcmask 457728
      %v4889 = vsel %vm4888, %v4875, %v4877
      %v4890 = vsel %vm4888, %v4877, %v4879
      %v4891 = vsel %vm4888, %v4879, %v4881
      %v4892 = vsel %vm4888, %v4881, %v4883
      %v4893 = vsel %vm4888, %v4883, %v4885
      %v4894 = vsel %vm4888, %v4885, %v4887
      %v4896 = vsel %vm324, %v4855, 0
      %v4899 = vsel %vm328, %v4889, 0
      %v4902 = vsel %vm328, %v4890, 0
      %v4905 = vsel %vm328, %v4891, 0
      %v4908 = vsel %vm328, %v4892, 0
      %v4911 = vsel %vm328, %v4893, 0
      %v4914 = vsel %vm328, %v4894, 0
      %v4917 = vsel %vm328, %v4887, 0
      %4919 = vmatprep.subr.bf16.mxu0 %v4902
      %4920 = vmatpush1.bf16.msra.mxu0 %v4899
      %4921 = vmatprep.subr.bf16.mxu0 0
      %4922 = vmatpush1.bf16.msra.mxu0 0
      %4923 = vmatprep.subr.bf16.mxu0 0
      %4924 = vmatpush1.bf16.msra.mxu0 0
      %4925 = vmatprep.subr.bf16.mxu0 0
      %4926 = vmatpush1.bf16.msra.mxu0 0
      %4927 = vmatprep.subr.bf16.mxu0 0
      %4928 = vmatpush1.bf16.msra.mxu0 0
      %4929 = vmatprep.subr.bf16.mxu0 0
      %4930 = vmatpush1.bf16.msra.mxu0 0
      %4931 = vmatprep.subr.bf16.mxu0 0
      %4932 = vmatpush1.bf16.msra.mxu0 0
      %4933 = vmatprep.subr.bf16.mxu0 0
      %4934 = vmatpush1.bf16.msra.mxu0 0
      %4935 = vmatprep.subr.bf16.mxu0 0
      %4936 = vmatpush1.bf16.msra.mxu0 0
      %4937 = vmatprep.subr.bf16.mxu0 0
      %4938 = vmatpush1.bf16.msra.mxu0 0
      %4939 = vmatprep.subr.bf16.mxu0 0
      %4940 = vmatpush1.bf16.msra.mxu0 0
      %4941 = vmatprep.subr.bf16.mxu0 0
      %4942 = vmatpush1.bf16.msra.mxu0 0
      %4943 = vmatprep.subr.bf16.mxu0 0
      %4944 = vmatpush1.bf16.msra.mxu0 0
      %4945 = vmatprep.subr.bf16.mxu0 0
      %4946 = vmatpush1.bf16.msra.mxu0 0
      %4947 = vmatprep.subr.bf16.mxu0 0
      %4948 = vmatpush1.bf16.msra.mxu0 0
      %4949 = vmatprep.subr.bf16.mxu0 0
      %4950 = vmatpush1.bf16.msra.mxu0 0
      %4951 = vmatprep.mubr.bf16.mxu0 0
      %4952 = vmatmul.mubr.bf16.gmra.mrb[0].mxu0 %v4896
      %v4953 = vpop.f32.mrb[0].mxu0
      %v4954 = vadd.f32 0.0, %v4953
      %v4955 = vpop.f32.mrb[0].mxu0
      %v4956 = vadd.f32 0.0, %v4955
      %v4957 = vpop.f32.mrb[0].mxu0
      %v4958 = vpop.f32.mrb[0].mxu0
      %4959 = vdwg.mxu0
      %4960 = vmatprep.subr.bf16.mxu0 %v4908
      %4961 = vmatpush1.bf16.msra.mxu0 %v4905
      %4962 = vmatprep.subr.bf16.mxu0 0
      %4963 = vmatpush1.bf16.msra.mxu0 0
      %4964 = vmatprep.subr.bf16.mxu0 0
      %4965 = vmatpush1.bf16.msra.mxu0 0
      %4966 = vmatprep.subr.bf16.mxu0 0
      %4967 = vmatpush1.bf16.msra.mxu0 0
      %4968 = vmatprep.subr.bf16.mxu0 0
      %4969 = vmatpush1.bf16.msra.mxu0 0
      %4970 = vmatprep.subr.bf16.mxu0 0
      %4971 = vmatpush1.bf16.msra.mxu0 0
      %4972 = vmatprep.subr.bf16.mxu0 0
      %4973 = vmatpush1.bf16.msra.mxu0 0
      %4974 = vmatprep.subr.bf16.mxu0 0
      %4975 = vmatpush1.bf16.msra.mxu0 0
      %4976 = vmatprep.subr.bf16.mxu0 0
      %4977 = vmatpush1.bf16.msra.mxu0 0
      %4978 = vmatprep.subr.bf16.mxu0 0
      %4979 = vmatpush1.bf16.msra.mxu0 0
      %4980 = vmatprep.subr.bf16.mxu0 0
      %4981 = vmatpush1.bf16.msra.mxu0 0
      %4982 = vmatprep.subr.bf16.mxu0 0
      %4983 = vmatpush1.bf16.msra.mxu0 0
      %4984 = vmatprep.subr.bf16.mxu0 0
      %4985 = vmatpush1.bf16.msra.mxu0 0
      %4986 = vmatprep.subr.bf16.mxu0 0
      %4987 = vmatpush1.bf16.msra.mxu0 0
      %4988 = vmatprep.subr.bf16.mxu0 0
      %4989 = vmatpush1.bf16.msra.mxu0 0
      %4990 = vmatprep.subr.bf16.mxu0 0
      %4991 = vmatpush1.bf16.msra.mxu0 0
      %4992 = vmatprep.mubr.bf16.mxu0 0
      %4993 = vmatmul.mubr.bf16.gmra.mrb[0].mxu0 %v4896
      %v4994 = vpop.f32.mrb[0].mxu0
      %v4995 = vadd.f32 0.0, %v4994
      %v4996 = vpop.f32.mrb[0].mxu0
      %v4997 = vadd.f32 0.0, %v4996
      %v4998 = vpop.f32.mrb[0].mxu0
      %v4999 = vpop.f32.mrb[0].mxu0
      %5000 = vdwg.mxu0
      %5001 = vmatprep.subr.bf16.mxu0 %v4914
      %5002 = vmatpush1.bf16.msra.mxu0 %v4911
      %5003 = vmatprep.subr.bf16.mxu0 0
      %5004 = vmatpush1.bf16.msra.mxu0 0
      %5005 = vmatprep.subr.bf16.mxu0 0
      %5006 = vmatpush1.bf16.msra.mxu0 0
      %5007 = vmatprep.subr.bf16.mxu0 0
      %5008 = vmatpush1.bf16.msra.mxu0 0
      %5009 = vmatprep.subr.bf16.mxu0 0
      %5010 = vmatpush1.bf16.msra.mxu0 0
      %5011 = vmatprep.subr.bf16.mxu0 0
      %5012 = vmatpush1.bf16.msra.mxu0 0
      %5013 = vmatprep.subr.bf16.mxu0 0
      %5014 = vmatpush1.bf16.msra.mxu0 0
      %5015 = vmatprep.subr.bf16.mxu0 0
      %5016 = vmatpush1.bf16.msra.mxu0 0
      %5017 = vmatprep.subr.bf16.mxu0 0
      %5018 = vmatpush1.bf16.msra.mxu0 0
      %5019 = vmatprep.subr.bf16.mxu0 0
      %5020 = vmatpush1.bf16.msra.mxu0 0
      %5021 = vmatprep.subr.bf16.mxu0 0
      %5022 = vmatpush1.bf16.msra.mxu0 0
      %5023 = vmatprep.subr.bf16.mxu0 0
      %5024 = vmatpush1.bf16.msra.mxu0 0
      %5025 = vmatprep.subr.bf16.mxu0 0
      %5026 = vmatpush1.bf16.msra.mxu0 0
      %5027 = vmatprep.subr.bf16.mxu0 0
      %5028 = vmatpush1.bf16.msra.mxu0 0
      %5029 = vmatprep.subr.bf16.mxu0 0
      %5030 = vmatpush1.bf16.msra.mxu0 0
      %5031 = vmatprep.subr.bf16.mxu0 0
      %5032 = vmatpush1.bf16.msra.mxu0 0
      %5033 = vmatprep.mubr.bf16.mxu0 0
      %5034 = vmatmul.mubr.bf16.gmra.mrb[0].mxu0 %v4896
      %v5035 = vpop.f32.mrb[0].mxu0
      %v5036 = vadd.f32 0.0, %v5035
      %v5037 = vpop.f32.mrb[0].mxu0
      %v5038 = vadd.f32 0.0, %v5037
      %v5039 = vpop.f32.mrb[0].mxu0
      %v5040 = vpop.f32.mrb[0].mxu0
      %5041 = vdwg.mxu0
      %5042 = vmatprep.subr.bf16.mxu0 0
      %5043 = vmatpush1.bf16.msra.mxu0 %v4917
      %5044 = vmatprep.subr.bf16.mxu0 0
      %5045 = vmatpush1.bf16.msra.mxu0 0
      %5046 = vmatprep.subr.bf16.mxu0 0
      %5047 = vmatpush1.bf16.msra.mxu0 0
      %5048 = vmatprep.subr.bf16.mxu0 0
      %5049 = vmatpush1.bf16.msra.mxu0 0
      %5050 = vmatprep.subr.bf16.mxu0 0
      %5051 = vmatpush1.bf16.msra.mxu0 0
      %5052 = vmatprep.subr.bf16.mxu0 0
      %5053 = vmatpush1.bf16.msra.mxu0 0
      %5054 = vmatprep.subr.bf16.mxu0 0
      %5055 = vmatpush1.bf16.msra.mxu0 0
      %5056 = vmatprep.subr.bf16.mxu0 0
      %5057 = vmatpush1.bf16.msra.mxu0 0
      %5058 = vmatprep.subr.bf16.mxu0 0
      %5059 = vmatpush1.bf16.msra.mxu0 0
      %5060 = vmatprep.subr.bf16.mxu0 0
      %5061 = vmatpush1.bf16.msra.mxu0 0
      %5062 = vmatprep.subr.bf16.mxu0 0
      %5063 = vmatpush1.bf16.msra.mxu0 0
      %5064 = vmatprep.subr.bf16.mxu0 0
      %5065 = vmatpush1.bf16.msra.mxu0 0
      %5066 = vmatprep.subr.bf16.mxu0 0
      %5067 = vmatpush1.bf16.msra.mxu0 0
      %5068 = vmatprep.subr.bf16.mxu0 0
      %5069 = vmatpush1.bf16.msra.mxu0 0
      %5070 = vmatprep.subr.bf16.mxu0 0
      %5071 = vmatpush1.bf16.msra.mxu0 0
      %5072 = vmatprep.subr.bf16.mxu0 0
      %5073 = vmatpush1.bf16.msra.mxu0 0
      %5074 = vmatprep.mubr.bf16.mxu0 0
      %5075 = vmatmul.mubr.bf16.gmra.mrb[0].mxu0 %v4896
      %v5076 = vpop.f32.mrb[0].mxu0
      %v5077 = vadd.f32 0.0, %v5076
      %v5078 = vpop.f32.mrb[0].mxu0
      %v5079 = vpop.f32.mrb[0].mxu0
      %v5080 = vpop.f32.mrb[0].mxu0
      %5081 = vdwg.mxu0
      %v5082 = vadd.f32 %v4847, %v4954
      %v5083 = vadd.f32 %v4848, %v4956
      %v5084 = vadd.f32 %v4849, %v4995
      %v5085 = vadd.f32 %v4850, %v4997
      %v5086 = vadd.f32 %v4851, %v5036
      %v5087 = vadd.f32 %v4852, %v5038
      %v5088 = vadd.f32 %v4853, %v5077
      %5089 = vst [vmem:[#allocation2] sm:$0xff] %v5082
      %5090 = vst [vmem:[#allocation2 + $0x8] sm:$0xff] %v5083
      %5091 = vst [vmem:[#allocation2 + $0x10] sm:$0xff] %v5084
      %5092 = vst [vmem:[#allocation2 + $0x18] sm:$0xff] %v5085
      %5093 = vst [vmem:[#allocation2 + $0x20] sm:$0xff] %v5086
      %5094 = vst [vmem:[#allocation2 + $0x28] sm:$0xff] %v5087
      %5095 = vst.msk [vmem:[#allocation2 + $0x30] sm:$0xff] %vm292, %v5088
      %v5096 = vld [vmem:[%s267 + $0x4] sm:$0xff]
      %v5097 = vld [vmem:[%s267 + $0xc] sm:$0xff]
      %v5098 = vld [vmem:[%s267 + $0x14] sm:$0xff]
      %v5099 = vld [vmem:[%s267 + $0x1c] sm:$0xf]
      %v5100 = vld [vmem:[#allocation2] sm:$0xff]
      %v5101 = vld [vmem:[#allocation2 + $0x8] sm:$0xff]
      %v5102 = vld [vmem:[#allocation2 + $0x10] sm:$0xff]
      %v5103 = vld [vmem:[#allocation2 + $0x18] sm:$0xff]
      %v5104 = vld [vmem:[#allocation2 + $0x20] sm:$0xff]
      %v5105 = vld [vmem:[#allocation2 + $0x28] sm:$0xff]
      %v5106 = vld [vmem:[#allocation2 + $0x30] sm:$0xff]
      %s5107 = scalar_lea.vmem %s262, 76
      %v5108 = vld [vmem:[%s5107] sm:$0xf]
      %v5113 = vunpack.c.l.b16 %v5096
      %v5114 = vunpack.c.h.b16 %v5096
      %v5115 = vunpack.c.l.b16 %v5097
      %v5116 = vunpack.c.h.b16 %v5097
      %v5117 = vunpack.c.l.b16 %v5098
      %v5118 = vunpack.c.h.b16 %v5098
      %v5119 = vunpack.c.l.b16 %v5099
      %v5120 = vpack.c.b16 %v5113, %v5113
      %v5121 = vpack.c.b16 %v5114, %v5114
      %v5122 = vpack.c.b16 %v5115, %v5115
      %v5123 = vpack.c.b16 %v5116, %v5116
      %v5124 = vpack.c.b16 %v5117, %v5117
      %v5125 = vpack.c.b16 %v5118, %v5118
      %v5126 = vpack.c.b16 %v5119, %v5119
      %5127 = vrot.lane.b32.xlu0 %v5120, 55
      %v5128 = vpop.permute.xlu0 %5127
      %5129 = vrot.lane.b32.xlu0 %v5121, 55
      %v5130 = vpop.permute.xlu0 %5129
      %5131 = vrot.lane.b32.xlu0 %v5122, 55
      %v5132 = vpop.permute.xlu0 %5131
      %5133 = vrot.lane.b32.xlu0 %v5123, 55
      %v5134 = vpop.permute.xlu0 %5133
      %5135 = vrot.lane.b32.xlu0 %v5124, 55
      %v5136 = vpop.permute.xlu0 %5135
      %5137 = vrot.lane.b32.xlu0 %v5125, 55
      %v5138 = vpop.permute.xlu0 %5137
      %5139 = vrot.lane.b32.xlu0 %v5126, 55
      %v5140 = vpop.permute.xlu0 %5139
      %vm5141 = vcmask 449536
      %v5142 = vsel %vm5141, %v5128, %v5130
      %v5143 = vsel %vm5141, %v5130, %v5132
      %v5144 = vsel %vm5141, %v5132, %v5134
      %v5145 = vsel %vm5141, %v5134, %v5136
      %v5146 = vsel %vm5141, %v5136, %v5138
      %v5147 = vsel %vm5141, %v5138, %v5140
      %v5149 = vsel %vm324, %v5108, 0
      %v5152 = vsel %vm328, %v5142, 0
      %v5155 = vsel %vm328, %v5143, 0
      %v5158 = vsel %vm328, %v5144, 0
      %v5161 = vsel %vm328, %v5145, 0
      %v5164 = vsel %vm328, %v5146, 0
      %v5167 = vsel %vm328, %v5147, 0
      %v5170 = vsel %vm328, %v5140, 0
      %5172 = vmatprep.subr.bf16.mxu0 %v5155
      %5173 = vmatpush1.bf16.msra.mxu0 %v5152
      %5174 = vmatprep.subr.bf16.mxu0 0
      %5175 = vmatpush1.bf16.msra.mxu0 0
      %5176 = vmatprep.subr.bf16.mxu0 0
      %5177 = vmatpush1.bf16.msra.mxu0 0
      %5178 = vmatprep.subr.bf16.mxu0 0
      %5179 = vmatpush1.bf16.msra.mxu0 0
      %5180 = vmatprep.subr.bf16.mxu0 0
      %5181 = vmatpush1.bf16.msra.mxu0 0
      %5182 = vmatprep.subr.bf16.mxu0 0
      %5183 = vmatpush1.bf16.msra.mxu0 0
      %5184 = vmatprep.subr.bf16.mxu0 0
      %5185 = vmatpush1.bf16.msra.mxu0 0
      %5186 = vmatprep.subr.bf16.mxu0 0
      %5187 = vmatpush1.bf16.msra.mxu0 0
      %5188 = vmatprep.subr.bf16.mxu0 0
      %5189 = vmatpush1.bf16.msra.mxu0 0
      %5190 = vmatprep.subr.bf16.mxu0 0
      %5191 = vmatpush1.bf16.msra.mxu0 0
      %5192 = vmatprep.subr.bf16.mxu0 0
      %5193 = vmatpush1.bf16.msra.mxu0 0
      %5194 = vmatprep.subr.bf16.mxu0 0
      %5195 = vmatpush1.bf16.msra.mxu0 0
      %5196 = vmatprep.subr.bf16.mxu0 0
      %5197 = vmatpush1.bf16.msra.mxu0 0
      %5198 = vmatprep.subr.bf16.mxu0 0
      %5199 = vmatpush1.bf16.msra.mxu0 0
      %5200 = vmatprep.subr.bf16.mxu0 0
      %5201 = vmatpush1.bf16.msra.mxu0 0
      %5202 = vmatprep.subr.bf16.mxu0 0
      %5203 = vmatpush1.bf16.msra.mxu0 0
      %5204 = vmatprep.mubr.bf16.mxu0 0
      %5205 = vmatmul.mubr.bf16.gmra.mrb[0].mxu0 %v5149
      %v5206 = vpop.f32.mrb[0].mxu0
      %v5207 = vadd.f32 0.0, %v5206
      %v5208 = vpop.f32.mrb[0].mxu0
      %v5209 = vadd.f32 0.0, %v5208
      %v5210 = vpop.f32.mrb[0].mxu0
      %v5211 = vpop.f32.mrb[0].mxu0
      %5212 = vdwg.mxu0
      %5213 = vmatprep.subr.bf16.mxu0 %v5161
      %5214 = vmatpush1.bf16.msra.mxu0 %v5158
      %5215 = vmatprep.subr.bf16.mxu0 0
      %5216 = vmatpush1.bf16.msra.mxu0 0
      %5217 = vmatprep.subr.bf16.mxu0 0
      %5218 = vmatpush1.bf16.msra.mxu0 0
      %5219 = vmatprep.subr.bf16.mxu0 0
      %5220 = vmatpush1.bf16.msra.mxu0 0
      %5221 = vmatprep.subr.bf16.mxu0 0
      %5222 = vmatpush1.bf16.msra.mxu0 0
      %5223 = vmatprep.subr.bf16.mxu0 0
      %5224 = vmatpush1.bf16.msra.mxu0 0
      %5225 = vmatprep.subr.bf16.mxu0 0
      %5226 = vmatpush1.bf16.msra.mxu0 0
      %5227 = vmatprep.subr.bf16.mxu0 0
      %5228 = vmatpush1.bf16.msra.mxu0 0
      %5229 = vmatprep.subr.bf16.mxu0 0
      %5230 = vmatpush1.bf16.msra.mxu0 0
      %5231 = vmatprep.subr.bf16.mxu0 0
      %5232 = vmatpush1.bf16.msra.mxu0 0
      %5233 = vmatprep.subr.bf16.mxu0 0
      %5234 = vmatpush1.bf16.msra.mxu0 0
      %5235 = vmatprep.subr.bf16.mxu0 0
      %5236 = vmatpush1.bf16.msra.mxu0 0
      %5237 = vmatprep.subr.bf16.mxu0 0
      %5238 = vmatpush1.bf16.msra.mxu0 0
      %5239 = vmatprep.subr.bf16.mxu0 0
      %5240 = vmatpush1.bf16.msra.mxu0 0
      %5241 = vmatprep.subr.bf16.mxu0 0
      %5242 = vmatpush1.bf16.msra.mxu0 0
      %5243 = vmatprep.subr.bf16.mxu0 0
      %5244 = vmatpush1.bf16.msra.mxu0 0
      %5245 = vmatprep.mubr.bf16.mxu0 0
      %5246 = vmatmul.mubr.bf16.gmra.mrb[0].mxu0 %v5149
      %v5247 = vpop.f32.mrb[0].mxu0
      %v5248 = vadd.f32 0.0, %v5247
      %v5249 = vpop.f32.mrb[0].mxu0
      %v5250 = vadd.f32 0.0, %v5249
      %v5251 = vpop.f32.mrb[0].mxu0
      %v5252 = vpop.f32.mrb[0].mxu0
      %5253 = vdwg.mxu0
      %5254 = vmatprep.subr.bf16.mxu0 %v5167
      %5255 = vmatpush1.bf16.msra.mxu0 %v5164
      %5256 = vmatprep.subr.bf16.mxu0 0
      %5257 = vmatpush1.bf16.msra.mxu0 0
      %5258 = vmatprep.subr.bf16.mxu0 0
      %5259 = vmatpush1.bf16.msra.mxu0 0
      %5260 = vmatprep.subr.bf16.mxu0 0
      %5261 = vmatpush1.bf16.msra.mxu0 0
      %5262 = vmatprep.subr.bf16.mxu0 0
      %5263 = vmatpush1.bf16.msra.mxu0 0
      %5264 = vmatprep.subr.bf16.mxu0 0
      %5265 = vmatpush1.bf16.msra.mxu0 0
      %5266 = vmatprep.subr.bf16.mxu0 0
      %5267 = vmatpush1.bf16.msra.mxu0 0
      %5268 = vmatprep.subr.bf16.mxu0 0
      %5269 = vmatpush1.bf16.msra.mxu0 0
      %5270 = vmatprep.subr.bf16.mxu0 0
      %5271 = vmatpush1.bf16.msra.mxu0 0
      %5272 = vmatprep.subr.bf16.mxu0 0
      %5273 = vmatpush1.bf16.msra.mxu0 0
      %5274 = vmatprep.subr.bf16.mxu0 0
      %5275 = vmatpush1.bf16.msra.mxu0 0
      %5276 = vmatprep.subr.bf16.mxu0 0
      %5277 = vmatpush1.bf16.msra.mxu0 0
      %5278 = vmatprep.subr.bf16.mxu0 0
      %5279 = vmatpush1.bf16.msra.mxu0 0
      %5280 = vmatprep.subr.bf16.mxu0 0
      %5281 = vmatpush1.bf16.msra.mxu0 0
      %5282 = vmatprep.subr.bf16.mxu0 0
      %5283 = vmatpush1.bf16.msra.mxu0 0
      %5284 = vmatprep.subr.bf16.mxu0 0
      %5285 = vmatpush1.bf16.msra.mxu0 0
      %5286 = vmatprep.mubr.bf16.mxu0 0
      %5287 = vmatmul.mubr.bf16.gmra.mrb[0].mxu0 %v5149
      %v5288 = vpop.f32.mrb[0].mxu0
      %v5289 = vadd.f32 0.0, %v5288
      %v5290 = vpop.f32.mrb[0].mxu0
      %v5291 = vadd.f32 0.0, %v5290
      %v5292 = vpop.f32.mrb[0].mxu0
      %v5293 = vpop.f32.mrb[0].mxu0
      %5294 = vdwg.mxu0
      %5295 = vmatprep.subr.bf16.mxu0 0
      %5296 = vmatpush1.bf16.msra.mxu0 %v5170
      %5297 = vmatprep.subr.bf16.mxu0 0
      %5298 = vmatpush1.bf16.msra.mxu0 0
      %5299 = vmatprep.subr.bf16.mxu0 0
      %5300 = vmatpush1.bf16.msra.mxu0 0
      %5301 = vmatprep.subr.bf16.mxu0 0
      %5302 = vmatpush1.bf16.msra.mxu0 0
      %5303 = vmatprep.subr.bf16.mxu0 0
      %5304 = vmatpush1.bf16.msra.mxu0 0
      %5305 = vmatprep.subr.bf16.mxu0 0
      %5306 = vmatpush1.bf16.msra.mxu0 0
      %5307 = vmatprep.subr.bf16.mxu0 0
      %5308 = vmatpush1.bf16.msra.mxu0 0
      %5309 = vmatprep.subr.bf16.mxu0 0
      %5310 = vmatpush1.bf16.msra.mxu0 0
      %5311 = vmatprep.subr.bf16.mxu0 0
      %5312 = vmatpush1.bf16.msra.mxu0 0
      %5313 = vmatprep.subr.bf16.mxu0 0
      %5314 = vmatpush1.bf16.msra.mxu0 0
      %5315 = vmatprep.subr.bf16.mxu0 0
      %5316 = vmatpush1.bf16.msra.mxu0 0
      %5317 = vmatprep.subr.bf16.mxu0 0
      %5318 = vmatpush1.bf16.msra.mxu0 0
      %5319 = vmatprep.subr.bf16.mxu0 0
      %5320 = vmatpush1.bf16.msra.mxu0 0
      %5321 = vmatprep.subr.bf16.mxu0 0
      %5322 = vmatpush1.bf16.msra.mxu0 0
      %5323 = vmatprep.subr.bf16.mxu0 0
      %5324 = vmatpush1.bf16.msra.mxu0 0
      %5325 = vmatprep.subr.bf16.mxu0 0
      %5326 = vmatpush1.bf16.msra.mxu0 0
      %5327 = vmatprep.mubr.bf16.mxu0 0
      %5328 = vmatmul.mubr.bf16.gmra.mrb[0].mxu0 %v5149
      %v5329 = vpop.f32.mrb[0].mxu0
      %v5330 = vadd.f32 0.0, %v5329
      %v5331 = vpop.f32.mrb[0].mxu0
      %v5332 = vpop.f32.mrb[0].mxu0
      %v5333 = vpop.f32.mrb[0].mxu0
      %5334 = vdwg.mxu0
      %v5335 = vadd.f32 %v5100, %v5207
      %v5336 = vadd.f32 %v5101, %v5209
      %v5337 = vadd.f32 %v5102, %v5248
      %v5338 = vadd.f32 %v5103, %v5250
      %v5339 = vadd.f32 %v5104, %v5289
      %v5340 = vadd.f32 %v5105, %v5291
      %v5341 = vadd.f32 %v5106, %v5330
      %5342 = vst [vmem:[#allocation2] sm:$0xff] %v5335
      %5343 = vst [vmem:[#allocation2 + $0x8] sm:$0xff] %v5336
      %5344 = vst [vmem:[#allocation2 + $0x10] sm:$0xff] %v5337
      %5345 = vst [vmem:[#allocation2 + $0x18] sm:$0xff] %v5338
      %5346 = vst [vmem:[#allocation2 + $0x20] sm:$0xff] %v5339
      %5347 = vst [vmem:[#allocation2 + $0x28] sm:$0xff] %v5340
      %5348 = vst.msk [vmem:[#allocation2 + $0x30] sm:$0xff] %vm292, %v5341
      %v5349 = vld [vmem:[%s267 + $0x4] sm:$0xff]
      %v5350 = vld [vmem:[%s267 + $0xc] sm:$0xff]
      %v5351 = vld [vmem:[%s267 + $0x14] sm:$0xff]
      %v5352 = vld [vmem:[%s267 + $0x1c] sm:$0xf]
      %v5353 = vld [vmem:[#allocation2] sm:$0xff]
      %v5354 = vld [vmem:[#allocation2 + $0x8] sm:$0xff]
      %v5355 = vld [vmem:[#allocation2 + $0x10] sm:$0xff]
      %v5356 = vld [vmem:[#allocation2 + $0x18] sm:$0xff]
      %v5357 = vld [vmem:[#allocation2 + $0x20] sm:$0xff]
      %v5358 = vld [vmem:[#allocation2 + $0x28] sm:$0xff]
      %v5359 = vld [vmem:[#allocation2 + $0x30] sm:$0xff]
      %s5360 = scalar_lea.vmem %s262, 80
      %v5361 = vld [vmem:[%s5360] sm:$0xf]
      %v5366 = vunpack.c.l.b16 %v5349
      %v5367 = vunpack.c.h.b16 %v5349
      %v5368 = vunpack.c.l.b16 %v5350
      %v5369 = vunpack.c.h.b16 %v5350
      %v5370 = vunpack.c.l.b16 %v5351
      %v5371 = vunpack.c.h.b16 %v5351
      %v5372 = vunpack.c.l.b16 %v5352
      %v5373 = vpack.c.b16 %v5366, %v5366
      %v5374 = vpack.c.b16 %v5367, %v5367
      %v5375 = vpack.c.b16 %v5368, %v5368
      %v5376 = vpack.c.b16 %v5369, %v5369
      %v5377 = vpack.c.b16 %v5370, %v5370
      %v5378 = vpack.c.b16 %v5371, %v5371
      %v5379 = vpack.c.b16 %v5372, %v5372
      %5380 = vrot.lane.b32.xlu0 %v5373, 54
      %v5381 = vpop.permute.xlu0 %5380
      %5382 = vrot.lane.b32.xlu0 %v5374, 54
      %v5383 = vpop.permute.xlu0 %5382
      %5384 = vrot.lane.b32.xlu0 %v5375, 54
      %v5385 = vpop.permute.xlu0 %5384
      %5386 = vrot.lane.b32.xlu0 %v5376, 54
      %v5387 = vpop.permute.xlu0 %5386
      %5388 = vrot.lane.b32.xlu0 %v5377, 54
      %v5389 = vpop.permute.xlu0 %5388
      %5390 = vrot.lane.b32.xlu0 %v5378, 54
      %v5391 = vpop.permute.xlu0 %5390
      %5392 = vrot.lane.b32.xlu0 %v5379, 54
      %v5393 = vpop.permute.xlu0 %5392
      %vm5394 = vcmask 441344
      %v5395 = vsel %vm5394, %v5381, %v5383
      %v5396 = vsel %vm5394, %v5383, %v5385
      %v5397 = vsel %vm5394, %v5385, %v5387
      %v5398 = vsel %vm5394, %v5387, %v5389
      %v5399 = vsel %vm5394, %v5389, %v5391
      %v5400 = vsel %vm5394, %v5391, %v5393
      %v5402 = vsel %vm324, %v5361, 0
      %v5405 = vsel %vm328, %v5395, 0
      %v5408 = vsel %vm328, %v5396, 0
      %v5411 = vsel %vm328, %v5397, 0
      %v5414 = vsel %vm328, %v5398, 0
      %v5417 = vsel %vm328, %v5399, 0
      %v5420 = vsel %vm328, %v5400, 0
      %v5423 = vsel %vm328, %v5393, 0
      %5425 = vmatprep.subr.bf16.mxu0 %v5408
      %5426 = vmatpush1.bf16.msra.mxu0 %v5405
      %5427 = vmatprep.subr.bf16.mxu0 0
      %5428 = vmatpush1.bf16.msra.mxu0 0
      %5429 = vmatprep.subr.bf16.mxu0 0
      %5430 = vmatpush1.bf16.msra.mxu0 0
      %5431 = vmatprep.subr.bf16.mxu0 0
      %5432 = vmatpush1.bf16.msra.mxu0 0
      %5433 = vmatprep.subr.bf16.mxu0 0
      %5434 = vmatpush1.bf16.msra.mxu0 0
      %5435 = vmatprep.subr.bf16.mxu0 0
      %5436 = vmatpush1.bf16.msra.mxu0 0
      %5437 = vmatprep.subr.bf16.mxu0 0
      %5438 = vmatpush1.bf16.msra.mxu0 0
      %5439 = vmatprep.subr.bf16.mxu0 0
      %5440 = vmatpush1.bf16.msra.mxu0 0
      %5441 = vmatprep.subr.bf16.mxu0 0
      %5442 = vmatpush1.bf16.msra.mxu0 0
      %5443 = vmatprep.subr.bf16.mxu0 0
      %5444 = vmatpush1.bf16.msra.mxu0 0
      %5445 = vmatprep.subr.bf16.mxu0 0
      %5446 = vmatpush1.bf16.msra.mxu0 0
      %5447 = vmatprep.subr.bf16.mxu0 0
      %5448 = vmatpush1.bf16.msra.mxu0 0
      %5449 = vmatprep.subr.bf16.mxu0 0
      %5450 = vmatpush1.bf16.msra.mxu0 0
      %5451 = vmatprep.subr.bf16.mxu0 0
      %5452 = vmatpush1.bf16.msra.mxu0 0
      %5453 = vmatprep.subr.bf16.mxu0 0
      %5454 = vmatpush1.bf16.msra.mxu0 0
      %5455 = vmatprep.subr.bf16.mxu0 0
      %5456 = vmatpush1.bf16.msra.mxu0 0
      %5457 = vmatprep.mubr.bf16.mxu0 0
      %5458 = vmatmul.mubr.bf16.gmra.mrb[0].mxu0 %v5402
      %v5459 = vpop.f32.mrb[0].mxu0
      %v5460 = vadd.f32 0.0, %v5459
      %v5461 = vpop.f32.mrb[0].mxu0
      %v5462 = vadd.f32 0.0, %v5461
      %v5463 = vpop.f32.mrb[0].mxu0
      %v5464 = vpop.f32.mrb[0].mxu0
      %5465 = vdwg.mxu0
      %5466 = vmatprep.subr.bf16.mxu0 %v5414
      %5467 = vmatpush1.bf16.msra.mxu0 %v5411
      %5468 = vmatprep.subr.bf16.mxu0 0
      %5469 = vmatpush1.bf16.msra.mxu0 0
      %5470 = vmatprep.subr.bf16.mxu0 0
      %5471 = vmatpush1.bf16.msra.mxu0 0
      %5472 = vmatprep.subr.bf16.mxu0 0
      %5473 = vmatpush1.bf16.msra.mxu0 0
      %5474 = vmatprep.subr.bf16.mxu0 0
      %5475 = vmatpush1.bf16.msra.mxu0 0
      %5476 = vmatprep.subr.bf16.mxu0 0
      %5477 = vmatpush1.bf16.msra.mxu0 0
      %5478 = vmatprep.subr.bf16.mxu0 0
      %5479 = vmatpush1.bf16.msra.mxu0 0
      %5480 = vmatprep.subr.bf16.mxu0 0
      %5481 = vmatpush1.bf16.msra.mxu0 0
      %5482 = vmatprep.subr.bf16.mxu0 0
      %5483 = vmatpush1.bf16.msra.mxu0 0
      %5484 = vmatprep.subr.bf16.mxu0 0
      %5485 = vmatpush1.bf16.msra.mxu0 0
      %5486 = vmatprep.subr.bf16.mxu0 0
      %5487 = vmatpush1.bf16.msra.mxu0 0
      %5488 = vmatprep.subr.bf16.mxu0 0
      %5489 = vmatpush1.bf16.msra.mxu0 0
      %5490 = vmatprep.subr.bf16.mxu0 0
      %5491 = vmatpush1.bf16.msra.mxu0 0
      %5492 = vmatprep.subr.bf16.mxu0 0
      %5493 = vmatpush1.bf16.msra.mxu0 0
      %5494 = vmatprep.subr.bf16.mxu0 0
      %5495 = vmatpush1.bf16.msra.mxu0 0
      %5496 = vmatprep.subr.bf16.mxu0 0
      %5497 = vmatpush1.bf16.msra.mxu0 0
      %5498 = vmatprep.mubr.bf16.mxu0 0
      %5499 = vmatmul.mubr.bf16.gmra.mrb[0].mxu0 %v5402
      %v5500 = vpop.f32.mrb[0].mxu0
      %v5501 = vadd.f32 0.0, %v5500
      %v5502 = vpop.f32.mrb[0].mxu0
      %v5503 = vadd.f32 0.0, %v5502
      %v5504 = vpop.f32.mrb[0].mxu0
      %v5505 = vpop.f32.mrb[0].mxu0
      %5506 = vdwg.mxu0
      %5507 = vmatprep.subr.bf16.mxu0 %v5420
      %5508 = vmatpush1.bf16.msra.mxu0 %v5417
      %5509 = vmatprep.subr.bf16.mxu0 0
      %5510 = vmatpush1.bf16.msra.mxu0 0
      %5511 = vmatprep.subr.bf16.mxu0 0
      %5512 = vmatpush1.bf16.msra.mxu0 0
      %5513 = vmatprep.subr.bf16.mxu0 0
      %5514 = vmatpush1.bf16.msra.mxu0 0
      %5515 = vmatprep.subr.bf16.mxu0 0
      %5516 = vmatpush1.bf16.msra.mxu0 0
      %5517 = vmatprep.subr.bf16.mxu0 0
      %5518 = vmatpush1.bf16.msra.mxu0 0
      %5519 = vmatprep.subr.bf16.mxu0 0
      %5520 = vmatpush1.bf16.msra.mxu0 0
      %5521 = vmatprep.subr.bf16.mxu0 0
      %5522 = vmatpush1.bf16.msra.mxu0 0
      %5523 = vmatprep.subr.bf16.mxu0 0
      %5524 = vmatpush1.bf16.msra.mxu0 0
      %5525 = vmatprep.subr.bf16.mxu0 0
      %5526 = vmatpush1.bf16.msra.mxu0 0
      %5527 = vmatprep.subr.bf16.mxu0 0
      %5528 = vmatpush1.bf16.msra.mxu0 0
      %5529 = vmatprep.subr.bf16.mxu0 0
      %5530 = vmatpush1.bf16.msra.mxu0 0
      %5531 = vmatprep.subr.bf16.mxu0 0
      %5532 = vmatpush1.bf16.msra.mxu0 0
      %5533 = vmatprep.subr.bf16.mxu0 0
      %5534 = vmatpush1.bf16.msra.mxu0 0
      %5535 = vmatprep.subr.bf16.mxu0 0
      %5536 = vmatpush1.bf16.msra.mxu0 0
      %5537 = vmatprep.subr.bf16.mxu0 0
      %5538 = vmatpush1.bf16.msra.mxu0 0
      %5539 = vmatprep.mubr.bf16.mxu0 0
      %5540 = vmatmul.mubr.bf16.gmra.mrb[0].mxu0 %v5402
      %v5541 = vpop.f32.mrb[0].mxu0
      %v5542 = vadd.f32 0.0, %v5541
      %v5543 = vpop.f32.mrb[0].mxu0
      %v5544 = vadd.f32 0.0, %v5543
      %v5545 = vpop.f32.mrb[0].mxu0
      %v5546 = vpop.f32.mrb[0].mxu0
      %5547 = vdwg.mxu0
      %5548 = vmatprep.subr.bf16.mxu0 0
      %5549 = vmatpush1.bf16.msra.mxu0 %v5423
      %5550 = vmatprep.subr.bf16.mxu0 0
      %5551 = vmatpush1.bf16.msra.mxu0 0
      %5552 = vmatprep.subr.bf16.mxu0 0
      %5553 = vmatpush1.bf16.msra.mxu0 0
      %5554 = vmatprep.subr.bf16.mxu0 0
      %5555 = vmatpush1.bf16.msra.mxu0 0
      %5556 = vmatprep.subr.bf16.mxu0 0
      %5557 = vmatpush1.bf16.msra.mxu0 0
      %5558 = vmatprep.subr.bf16.mxu0 0
      %5559 = vmatpush1.bf16.msra.mxu0 0
      %5560 = vmatprep.subr.bf16.mxu0 0
      %5561 = vmatpush1.bf16.msra.mxu0 0
      %5562 = vmatprep.subr.bf16.mxu0 0
      %5563 = vmatpush1.bf16.msra.mxu0 0
      %5564 = vmatprep.subr.bf16.mxu0 0
      %5565 = vmatpush1.bf16.msra.mxu0 0
      %5566 = vmatprep.subr.bf16.mxu0 0
      %5567 = vmatpush1.bf16.msra.mxu0 0
      %5568 = vmatprep.subr.bf16.mxu0 0
      %5569 = vmatpush1.bf16.msra.mxu0 0
      %5570 = vmatprep.subr.bf16.mxu0 0
      %5571 = vmatpush1.bf16.msra.mxu0 0
      %5572 = vmatprep.subr.bf16.mxu0 0
      %5573 = vmatpush1.bf16.msra.mxu0 0
      %5574 = vmatprep.subr.bf16.mxu0 0
      %5575 = vmatpush1.bf16.msra.mxu0 0
      %5576 = vmatprep.subr.bf16.mxu0 0
      %5577 = vmatpush1.bf16.msra.mxu0 0
      %5578 = vmatprep.subr.bf16.mxu0 0
      %5579 = vmatpush1.bf16.msra.mxu0 0
      %5580 = vmatprep.mubr.bf16.mxu0 0
      %5581 = vmatmul.mubr.bf16.gmra.mrb[0].mxu0 %v5402
      %v5582 = vpop.f32.mrb[0].mxu0
      %v5583 = vadd.f32 0.0, %v5582
      %v5584 = vpop.f32.mrb[0].mxu0
      %v5585 = vpop.f32.mrb[0].mxu0
      %v5586 = vpop.f32.mrb[0].mxu0
      %5587 = vdwg.mxu0
      %v5588 = vadd.f32 %v5353, %v5460
      %v5589 = vadd.f32 %v5354, %v5462
      %v5590 = vadd.f32 %v5355, %v5501
      %v5591 = vadd.f32 %v5356, %v5503
      %v5592 = vadd.f32 %v5357, %v5542
      %v5593 = vadd.f32 %v5358, %v5544
      %v5594 = vadd.f32 %v5359, %v5583
      %5595 = vst [vmem:[#allocation2] sm:$0xff] %v5588
      %5596 = vst [vmem:[#allocation2 + $0x8] sm:$0xff] %v5589
      %5597 = vst [vmem:[#allocation2 + $0x10] sm:$0xff] %v5590
      %5598 = vst [vmem:[#allocation2 + $0x18] sm:$0xff] %v5591
      %5599 = vst [vmem:[#allocation2 + $0x20] sm:$0xff] %v5592
      %5600 = vst [vmem:[#allocation2 + $0x28] sm:$0xff] %v5593
      %5601 = vst.msk [vmem:[#allocation2 + $0x30] sm:$0xff] %vm292, %v5594
      %v5602 = vld [vmem:[%s267 + $0x4] sm:$0xff]
      %v5603 = vld [vmem:[%s267 + $0xc] sm:$0xff]
      %v5604 = vld [vmem:[%s267 + $0x14] sm:$0xff]
      %v5605 = vld [vmem:[%s267 + $0x1c] sm:$0xf]
      %v5606 = vld [vmem:[#allocation2] sm:$0xff]
      %v5607 = vld [vmem:[#allocation2 + $0x8] sm:$0xff]
      %v5608 = vld [vmem:[#allocation2 + $0x10] sm:$0xff]
      %v5609 = vld [vmem:[#allocation2 + $0x18] sm:$0xff]
      %v5610 = vld [vmem:[#allocation2 + $0x20] sm:$0xff]
      %v5611 = vld [vmem:[#allocation2 + $0x28] sm:$0xff]
      %v5612 = vld [vmem:[#allocation2 + $0x30] sm:$0xff]
      %s5613 = scalar_lea.vmem %s262, 84
      %v5614 = vld [vmem:[%s5613] sm:$0xf]
      %v5619 = vunpack.c.l.b16 %v5602
      %v5620 = vunpack.c.h.b16 %v5602
      %v5621 = vunpack.c.l.b16 %v5603
      %v5622 = vunpack.c.h.b16 %v5603
      %v5623 = vunpack.c.l.b16 %v5604
      %v5624 = vunpack.c.h.b16 %v5604
      %v5625 = vunpack.c.l.b16 %v5605
      %v5626 = vpack.c.b16 %v5619, %v5619
      %v5627 = vpack.c.b16 %v5620, %v5620
      %v5628 = vpack.c.b16 %v5621, %v5621
      %v5629 = vpack.c.b16 %v5622, %v5622
      %v5630 = vpack.c.b16 %v5623, %v5623
      %v5631 = vpack.c.b16 %v5624, %v5624
      %v5632 = vpack.c.b16 %v5625, %v5625
      %5633 = vrot.lane.b32.xlu0 %v5626, 46
      %v5634 = vpop.permute.xlu0 %5633
      %5635 = vrot.lane.b32.xlu0 %v5627, 46
      %v5636 = vpop.permute.xlu0 %5635
      %5637 = vrot.lane.b32.xlu0 %v5628, 46
      %v5638 = vpop.permute.xlu0 %5637
      %5639 = vrot.lane.b32.xlu0 %v5629, 46
      %v5640 = vpop.permute.xlu0 %5639
      %5641 = vrot.lane.b32.xlu0 %v5630, 46
      %v5642 = vpop.permute.xlu0 %5641
      %5643 = vrot.lane.b32.xlu0 %v5631, 46
      %v5644 = vpop.permute.xlu0 %5643
      %5645 = vrot.lane.b32.xlu0 %v5632, 46
      %v5646 = vpop.permute.xlu0 %5645
      %vm5647 = vcmask 375808
      %v5648 = vsel %vm5647, %v5634, %v5636
      %v5649 = vsel %vm5647, %v5636, %v5638
      %v5650 = vsel %vm5647, %v5638, %v5640
      %v5651 = vsel %vm5647, %v5640, %v5642
      %v5652 = vsel %vm5647, %v5642, %v5644
      %v5653 = vsel %vm5647, %v5644, %v5646
      %v5655 = vsel %vm324, %v5614, 0
      %v5658 = vsel %vm328, %v5648, 0
      %v5661 = vsel %vm328, %v5649, 0
      %v5664 = vsel %vm328, %v5650, 0
      %v5667 = vsel %vm328, %v5651, 0
      %v5670 = vsel %vm328, %v5652, 0
      %v5673 = vsel %vm328, %v5653, 0
      %v5676 = vsel %vm328, %v5646, 0
      %5678 = vmatprep.subr.bf16.mxu0 %v5661
      %5679 = vmatpush1.bf16.msra.mxu0 %v5658
      %5680 = vmatprep.subr.bf16.mxu0 0
      %5681 = vmatpush1.bf16.msra.mxu0 0
      %5682 = vmatprep.subr.bf16.mxu0 0
      %5683 = vmatpush1.bf16.msra.mxu0 0
      %5684 = vmatprep.subr.bf16.mxu0 0
      %5685 = vmatpush1.bf16.msra.mxu0 0
      %5686 = vmatprep.subr.bf16.mxu0 0
      %5687 = vmatpush1.bf16.msra.mxu0 0
      %5688 = vmatprep.subr.bf16.mxu0 0
      %5689 = vmatpush1.bf16.msra.mxu0 0
      %5690 = vmatprep.subr.bf16.mxu0 0
      %5691 = vmatpush1.bf16.msra.mxu0 0
      %5692 = vmatprep.subr.bf16.mxu0 0
      %5693 = vmatpush1.bf16.msra.mxu0 0
      %5694 = vmatprep.subr.bf16.mxu0 0
      %5695 = vmatpush1.bf16.msra.mxu0 0
      %5696 = vmatprep.subr.bf16.mxu0 0
      %5697 = vmatpush1.bf16.msra.mxu0 0
      %5698 = vmatprep.subr.bf16.mxu0 0
      %5699 = vmatpush1.bf16.msra.mxu0 0
      %5700 = vmatprep.subr.bf16.mxu0 0
      %5701 = vmatpush1.bf16.msra.mxu0 0
      %5702 = vmatprep.subr.bf16.mxu0 0
      %5703 = vmatpush1.bf16.msra.mxu0 0
      %5704 = vmatprep.subr.bf16.mxu0 0
      %5705 = vmatpush1.bf16.msra.mxu0 0
      %5706 = vmatprep.subr.bf16.mxu0 0
      %5707 = vmatpush1.bf16.msra.mxu0 0
      %5708 = vmatprep.subr.bf16.mxu0 0
      %5709 = vmatpush1.bf16.msra.mxu0 0
      %5710 = vmatprep.mubr.bf16.mxu0 0
      %5711 = vmatmul.mubr.bf16.gmra.mrb[0].mxu0 %v5655
      %v5712 = vpop.f32.mrb[0].mxu0
      %v5713 = vadd.f32 0.0, %v5712
      %v5714 = vpop.f32.mrb[0].mxu0
      %v5715 = vadd.f32 0.0, %v5714
      %v5716 = vpop.f32.mrb[0].mxu0
      %v5717 = vpop.f32.mrb[0].mxu0
      %5718 = vdwg.mxu0
      %5719 = vmatprep.subr.bf16.mxu0 %v5667
      %5720 = vmatpush1.bf16.msra.mxu0 %v5664
      %5721 = vmatprep.subr.bf16.mxu0 0
      %5722 = vmatpush1.bf16.msra.mxu0 0
      %5723 = vmatprep.subr.bf16.mxu0 0
      %5724 = vmatpush1.bf16.msra.mxu0 0
      %5725 = vmatprep.subr.bf16.mxu0 0
      %5726 = vmatpush1.bf16.msra.mxu0 0
      %5727 = vmatprep.subr.bf16.mxu0 0
      %5728 = vmatpush1.bf16.msra.mxu0 0
      %5729 = vmatprep.subr.bf16.mxu0 0
      %5730 = vmatpush1.bf16.msra.mxu0 0
      %5731 = vmatprep.subr.bf16.mxu0 0
      %5732 = vmatpush1.bf16.msra.mxu0 0
      %5733 = vmatprep.subr.bf16.mxu0 0
      %5734 = vmatpush1.bf16.msra.mxu0 0
      %5735 = vmatprep.subr.bf16.mxu0 0
      %5736 = vmatpush1.bf16.msra.mxu0 0
      %5737 = vmatprep.subr.bf16.mxu0 0
      %5738 = vmatpush1.bf16.msra.mxu0 0
      %5739 = vmatprep.subr.bf16.mxu0 0
      %5740 = vmatpush1.bf16.msra.mxu0 0
      %5741 = vmatprep.subr.bf16.mxu0 0
      %5742 = vmatpush1.bf16.msra.mxu0 0
      %5743 = vmatprep.subr.bf16.mxu0 0
      %5744 = vmatpush1.bf16.msra.mxu0 0
      %5745 = vmatprep.subr.bf16.mxu0 0
      %5746 = vmatpush1.bf16.msra.mxu0 0
      %5747 = vmatprep.subr.bf16.mxu0 0
      %5748 = vmatpush1.bf16.msra.mxu0 0
      %5749 = vmatprep.subr.bf16.mxu0 0
      %5750 = vmatpush1.bf16.msra.mxu0 0
      %5751 = vmatprep.mubr.bf16.mxu0 0
      %5752 = vmatmul.mubr.bf16.gmra.mrb[0].mxu0 %v5655
      %v5753 = vpop.f32.mrb[0].mxu0
      %v5754 = vadd.f32 0.0, %v5753
      %v5755 = vpop.f32.mrb[0].mxu0
      %v5756 = vadd.f32 0.0, %v5755
      %v5757 = vpop.f32.mrb[0].mxu0
      %v5758 = vpop.f32.mrb[0].mxu0
      %5759 = vdwg.mxu0
      %5760 = vmatprep.subr.bf16.mxu0 %v5673
      %5761 = vmatpush1.bf16.msra.mxu0 %v5670
      %5762 = vmatprep.subr.bf16.mxu0 0
      %5763 = vmatpush1.bf16.msra.mxu0 0
      %5764 = vmatprep.subr.bf16.mxu0 0
      %5765 = vmatpush1.bf16.msra.mxu0 0
      %5766 = vmatprep.subr.bf16.mxu0 0
      %5767 = vmatpush1.bf16.msra.mxu0 0
      %5768 = vmatprep.subr.bf16.mxu0 0
      %5769 = vmatpush1.bf16.msra.mxu0 0
      %5770 = vmatprep.subr.bf16.mxu0 0
      %5771 = vmatpush1.bf16.msra.mxu0 0
      %5772 = vmatprep.subr.bf16.mxu0 0
      %5773 = vmatpush1.bf16.msra.mxu0 0
      %5774 = vmatprep.subr.bf16.mxu0 0
      %5775 = vmatpush1.bf16.msra.mxu0 0
      %5776 = vmatprep.subr.bf16.mxu0 0
      %5777 = vmatpush1.bf16.msra.mxu0 0
      %5778 = vmatprep.subr.bf16.mxu0 0
      %5779 = vmatpush1.bf16.msra.mxu0 0
      %5780 = vmatprep.subr.bf16.mxu0 0
      %5781 = vmatpush1.bf16.msra.mxu0 0
      %5782 = vmatprep.subr.bf16.mxu0 0
      %5783 = vmatpush1.bf16.msra.mxu0 0
      %5784 = vmatprep.subr.bf16.mxu0 0
      %5785 = vmatpush1.bf16.msra.mxu0 0
      %5786 = vmatprep.subr.bf16.mxu0 0
      %5787 = vmatpush1.bf16.msra.mxu0 0
      %5788 = vmatprep.subr.bf16.mxu0 0
      %5789 = vmatpush1.bf16.msra.mxu0 0
      %5790 = vmatprep.subr.bf16.mxu0 0
      %5791 = vmatpush1.bf16.msra.mxu0 0
      %5792 = vmatprep.mubr.bf16.mxu0 0
      %5793 = vmatmul.mubr.bf16.gmra.mrb[0].mxu0 %v5655
      %v5794 = vpop.f32.mrb[0].mxu0
      %v5795 = vadd.f32 0.0, %v5794
      %v5796 = vpop.f32.mrb[0].mxu0
      %v5797 = vadd.f32 0.0, %v5796
      %v5798 = vpop.f32.mrb[0].mxu0
      %v5799 = vpop.f32.mrb[0].mxu0
      %5800 = vdwg.mxu0
      %5801 = vmatprep.subr.bf16.mxu0 0
      %5802 = vmatpush1.bf16.msra.mxu0 %v5676
      %5803 = vmatprep.subr.bf16.mxu0 0
      %5804 = vmatpush1.bf16.msra.mxu0 0
      %5805 = vmatprep.subr.bf16.mxu0 0
      %5806 = vmatpush1.bf16.msra.mxu0 0
      %5807 = vmatprep.subr.bf16.mxu0 0
      %5808 = vmatpush1.bf16.msra.mxu0 0
      %5809 = vmatprep.subr.bf16.mxu0 0
      %5810 = vmatpush1.bf16.msra.mxu0 0
      %5811 = vmatprep.subr.bf16.mxu0 0
      %5812 = vmatpush1.bf16.msra.mxu0 0
      %5813 = vmatprep.subr.bf16.mxu0 0
      %5814 = vmatpush1.bf16.msra.mxu0 0
      %5815 = vmatprep.subr.bf16.mxu0 0
      %5816 = vmatpush1.bf16.msra.mxu0 0
      %5817 = vmatprep.subr.bf16.mxu0 0
      %5818 = vmatpush1.bf16.msra.mxu0 0
      %5819 = vmatprep.subr.bf16.mxu0 0
      %5820 = vmatpush1.bf16.msra.mxu0 0
      %5821 = vmatprep.subr.bf16.mxu0 0
      %5822 = vmatpush1.bf16.msra.mxu0 0
      %5823 = vmatprep.subr.bf16.mxu0 0
      %5824 = vmatpush1.bf16.msra.mxu0 0
      %5825 = vmatprep.subr.bf16.mxu0 0
      %5826 = vmatpush1.bf16.msra.mxu0 0
      %5827 = vmatprep.subr.bf16.mxu0 0
      %5828 = vmatpush1.bf16.msra.mxu0 0
      %5829 = vmatprep.subr.bf16.mxu0 0
      %5830 = vmatpush1.bf16.msra.mxu0 0
      %5831 = vmatprep.subr.bf16.mxu0 0
      %5832 = vmatpush1.bf16.msra.mxu0 0
      %5833 = vmatprep.mubr.bf16.mxu0 0
      %5834 = vmatmul.mubr.bf16.gmra.mrb[0].mxu0 %v5655
      %v5835 = vpop.f32.mrb[0].mxu0
      %v5836 = vadd.f32 0.0, %v5835
      %v5837 = vpop.f32.mrb[0].mxu0
      %v5838 = vpop.f32.mrb[0].mxu0
      %v5839 = vpop.f32.mrb[0].mxu0
      %5840 = vdwg.mxu0
      %v5841 = vadd.f32 %v5606, %v5713
      %v5842 = vadd.f32 %v5607, %v5715
      %v5843 = vadd.f32 %v5608, %v5754
      %v5844 = vadd.f32 %v5609, %v5756
      %v5845 = vadd.f32 %v5610, %v5795
      %v5846 = vadd.f32 %v5611, %v5797
      %v5847 = vadd.f32 %v5612, %v5836
      %5848 = vst [vmem:[#allocation2] sm:$0xff] %v5841
      %5849 = vst [vmem:[#allocation2 + $0x8] sm:$0xff] %v5842
      %5850 = vst [vmem:[#allocation2 + $0x10] sm:$0xff] %v5843
      %5851 = vst [vmem:[#allocation2 + $0x18] sm:$0xff] %v5844
      %5852 = vst [vmem:[#allocation2 + $0x20] sm:$0xff] %v5845
      %5853 = vst [vmem:[#allocation2 + $0x28] sm:$0xff] %v5846
      %5854 = vst.msk [vmem:[#allocation2 + $0x30] sm:$0xff] %vm292, %v5847
      %v5855 = vld [vmem:[%s267 + $0x4] sm:$0xff]
      %v5856 = vld [vmem:[%s267 + $0xc] sm:$0xff]
      %v5857 = vld [vmem:[%s267 + $0x14] sm:$0xff]
      %v5858 = vld [vmem:[%s267 + $0x1c] sm:$0xf]
      %v5859 = vld [vmem:[#allocation2] sm:$0xff]
      %v5860 = vld [vmem:[#allocation2 + $0x8] sm:$0xff]
      %v5861 = vld [vmem:[#allocation2 + $0x10] sm:$0xff]
      %v5862 = vld [vmem:[#allocation2 + $0x18] sm:$0xff]
      %v5863 = vld [vmem:[#allocation2 + $0x20] sm:$0xff]
      %v5864 = vld [vmem:[#allocation2 + $0x28] sm:$0xff]
      %v5865 = vld [vmem:[#allocation2 + $0x30] sm:$0xff]
      %s5866 = scalar_lea.vmem %s262, 88
      %v5867 = vld [vmem:[%s5866] sm:$0xf]
      %v5872 = vunpack.c.l.b16 %v5855
      %v5873 = vunpack.c.h.b16 %v5855
      %v5874 = vunpack.c.l.b16 %v5856
      %v5875 = vunpack.c.h.b16 %v5856
      %v5876 = vunpack.c.l.b16 %v5857
      %v5877 = vunpack.c.h.b16 %v5857
      %v5878 = vunpack.c.l.b16 %v5858
      %v5879 = vpack.c.b16 %v5872, %v5872
      %v5880 = vpack.c.b16 %v5873, %v5873
      %v5881 = vpack.c.b16 %v5874, %v5874
      %v5882 = vpack.c.b16 %v5875, %v5875
      %v5883 = vpack.c.b16 %v5876, %v5876
      %v5884 = vpack.c.b16 %v5877, %v5877
      %v5885 = vpack.c.b16 %v5878, %v5878
      %5886 = vrot.lane.b32.xlu0 %v5879, 45
      %v5887 = vpop.permute.xlu0 %5886
      %5888 = vrot.lane.b32.xlu0 %v5880, 45
      %v5889 = vpop.permute.xlu0 %5888
      %5890 = vrot.lane.b32.xlu0 %v5881, 45
      %v5891 = vpop.permute.xlu0 %5890
      %5892 = vrot.lane.b32.xlu0 %v5882, 45
      %v5893 = vpop.permute.xlu0 %5892
      %5894 = vrot.lane.b32.xlu0 %v5883, 45
      %v5895 = vpop.permute.xlu0 %5894
      %5896 = vrot.lane.b32.xlu0 %v5884, 45
      %v5897 = vpop.permute.xlu0 %5896
      %5898 = vrot.lane.b32.xlu0 %v5885, 45
      %v5899 = vpop.permute.xlu0 %5898
      %vm5900 = vcmask 367616
      %v5901 = vsel %vm5900, %v5887, %v5889
      %v5902 = vsel %vm5900, %v5889, %v5891
      %v5903 = vsel %vm5900, %v5891, %v5893
      %v5904 = vsel %vm5900, %v5893, %v5895
      %v5905 = vsel %vm5900, %v5895, %v5897
      %v5906 = vsel %vm5900, %v5897, %v5899
      %v5908 = vsel %vm324, %v5867, 0
      %v5911 = vsel %vm328, %v5901, 0
      %v5914 = vsel %vm328, %v5902, 0
      %v5917 = vsel %vm328, %v5903, 0
      %v5920 = vsel %vm328, %v5904, 0
      %v5923 = vsel %vm328, %v5905, 0
      %v5926 = vsel %vm328, %v5906, 0
      %v5929 = vsel %vm328, %v5899, 0
      %5931 = vmatprep.subr.bf16.mxu0 %v5914
      %5932 = vmatpush1.bf16.msra.mxu0 %v5911
      %5933 = vmatprep.subr.bf16.mxu0 0
      %5934 = vmatpush1.bf16.msra.mxu0 0
      %5935 = vmatprep.subr.bf16.mxu0 0
      %5936 = vmatpush1.bf16.msra.mxu0 0
      %5937 = vmatprep.subr.bf16.mxu0 0
      %5938 = vmatpush1.bf16.msra.mxu0 0
      %5939 = vmatprep.subr.bf16.mxu0 0
      %5940 = vmatpush1.bf16.msra.mxu0 0
      %5941 = vmatprep.subr.bf16.mxu0 0
      %5942 = vmatpush1.bf16.msra.mxu0 0
      %5943 = vmatprep.subr.bf16.mxu0 0
      %5944 = vmatpush1.bf16.msra.mxu0 0
      %5945 = vmatprep.subr.bf16.mxu0 0
      %5946 = vmatpush1.bf16.msra.mxu0 0
      %5947 = vmatprep.subr.bf16.mxu0 0
      %5948 = vmatpush1.bf16.msra.mxu0 0
      %5949 = vmatprep.subr.bf16.mxu0 0
      %5950 = vmatpush1.bf16.msra.mxu0 0
      %5951 = vmatprep.subr.bf16.mxu0 0
      %5952 = vmatpush1.bf16.msra.mxu0 0
      %5953 = vmatprep.subr.bf16.mxu0 0
      %5954 = vmatpush1.bf16.msra.mxu0 0
      %5955 = vmatprep.subr.bf16.mxu0 0
      %5956 = vmatpush1.bf16.msra.mxu0 0
      %5957 = vmatprep.subr.bf16.mxu0 0
      %5958 = vmatpush1.bf16.msra.mxu0 0
      %5959 = vmatprep.subr.bf16.mxu0 0
      %5960 = vmatpush1.bf16.msra.mxu0 0
      %5961 = vmatprep.subr.bf16.mxu0 0
      %5962 = vmatpush1.bf16.msra.mxu0 0
      %5963 = vmatprep.mubr.bf16.mxu0 0
      %5964 = vmatmul.mubr.bf16.gmra.mrb[0].mxu0 %v5908
      %v5965 = vpop.f32.mrb[0].mxu0
      %v5966 = vadd.f32 0.0, %v5965
      %v5967 = vpop.f32.mrb[0].mxu0
      %v5968 = vadd.f32 0.0, %v5967
      %v5969 = vpop.f32.mrb[0].mxu0
      %v5970 = vpop.f32.mrb[0].mxu0
      %5971 = vdwg.mxu0
      %5972 = vmatprep.subr.bf16.mxu0 %v5920
      %5973 = vmatpush1.bf16.msra.mxu0 %v5917
      %5974 = vmatprep.subr.bf16.mxu0 0
      %5975 = vmatpush1.bf16.msra.mxu0 0
      %5976 = vmatprep.subr.bf16.mxu0 0
      %5977 = vmatpush1.bf16.msra.mxu0 0
      %5978 = vmatprep.subr.bf16.mxu0 0
      %5979 = vmatpush1.bf16.msra.mxu0 0
      %5980 = vmatprep.subr.bf16.mxu0 0
      %5981 = vmatpush1.bf16.msra.mxu0 0
      %5982 = vmatprep.subr.bf16.mxu0 0
      %5983 = vmatpush1.bf16.msra.mxu0 0
      %5984 = vmatprep.subr.bf16.mxu0 0
      %5985 = vmatpush1.bf16.msra.mxu0 0
      %5986 = vmatprep.subr.bf16.mxu0 0
      %5987 = vmatpush1.bf16.msra.mxu0 0
      %5988 = vmatprep.subr.bf16.mxu0 0
      %5989 = vmatpush1.bf16.msra.mxu0 0
      %5990 = vmatprep.subr.bf16.mxu0 0
      %5991 = vmatpush1.bf16.msra.mxu0 0
      %5992 = vmatprep.subr.bf16.mxu0 0
      %5993 = vmatpush1.bf16.msra.mxu0 0
      %5994 = vmatprep.subr.bf16.mxu0 0
      %5995 = vmatpush1.bf16.msra.mxu0 0
      %5996 = vmatprep.subr.bf16.mxu0 0
      %5997 = vmatpush1.bf16.msra.mxu0 0
      %5998 = vmatprep.subr.bf16.mxu0 0
      %5999 = vmatpush1.bf16.msra.mxu0 0
      %6000 = vmatprep.subr.bf16.mxu0 0
      %6001 = vmatpush1.bf16.msra.mxu0 0
      %6002 = vmatprep.subr.bf16.mxu0 0
      %6003 = vmatpush1.bf16.msra.mxu0 0
      %6004 = vmatprep.mubr.bf16.mxu0 0
      %6005 = vmatmul.mubr.bf16.gmra.mrb[0].mxu0 %v5908
      %v6006 = vpop.f32.mrb[0].mxu0
      %v6007 = vadd.f32 0.0, %v6006
      %v6008 = vpop.f32.mrb[0].mxu0
      %v6009 = vadd.f32 0.0, %v6008
      %v6010 = vpop.f32.mrb[0].mxu0
      %v6011 = vpop.f32.mrb[0].mxu0
      %6012 = vdwg.mxu0
      %6013 = vmatprep.subr.bf16.mxu0 %v5926
      %6014 = vmatpush1.bf16.msra.mxu0 %v5923
      %6015 = vmatprep.subr.bf16.mxu0 0
      %6016 = vmatpush1.bf16.msra.mxu0 0
      %6017 = vmatprep.subr.bf16.mxu0 0
      %6018 = vmatpush1.bf16.msra.mxu0 0
      %6019 = vmatprep.subr.bf16.mxu0 0
      %6020 = vmatpush1.bf16.msra.mxu0 0
      %6021 = vmatprep.subr.bf16.mxu0 0
      %6022 = vmatpush1.bf16.msra.mxu0 0
      %6023 = vmatprep.subr.bf16.mxu0 0
      %6024 = vmatpush1.bf16.msra.mxu0 0
      %6025 = vmatprep.subr.bf16.mxu0 0
      %6026 = vmatpush1.bf16.msra.mxu0 0
      %6027 = vmatprep.subr.bf16.mxu0 0
      %6028 = vmatpush1.bf16.msra.mxu0 0
      %6029 = vmatprep.subr.bf16.mxu0 0
      %6030 = vmatpush1.bf16.msra.mxu0 0
      %6031 = vmatprep.subr.bf16.mxu0 0
      %6032 = vmatpush1.bf16.msra.mxu0 0
      %6033 = vmatprep.subr.bf16.mxu0 0
      %6034 = vmatpush1.bf16.msra.mxu0 0
      %6035 = vmatprep.subr.bf16.mxu0 0
      %6036 = vmatpush1.bf16.msra.mxu0 0
      %6037 = vmatprep.subr.bf16.mxu0 0
      %6038 = vmatpush1.bf16.msra.mxu0 0
      %6039 = vmatprep.subr.bf16.mxu0 0
      %6040 = vmatpush1.bf16.msra.mxu0 0
      %6041 = vmatprep.subr.bf16.mxu0 0
      %6042 = vmatpush1.bf16.msra.mxu0 0
      %6043 = vmatprep.subr.bf16.mxu0 0
      %6044 = vmatpush1.bf16.msra.mxu0 0
      %6045 = vmatprep.mubr.bf16.mxu0 0
      %6046 = vmatmul.mubr.bf16.gmra.mrb[0].mxu0 %v5908
      %v6047 = vpop.f32.mrb[0].mxu0
      %v6048 = vadd.f32 0.0, %v6047
      %v6049 = vpop.f32.mrb[0].mxu0
      %v6050 = vadd.f32 0.0, %v6049
      %v6051 = vpop.f32.mrb[0].mxu0
      %v6052 = vpop.f32.mrb[0].mxu0
      %6053 = vdwg.mxu0
      %6054 = vmatprep.subr.bf16.mxu0 0
      %6055 = vmatpush1.bf16.msra.mxu0 %v5929
      %6056 = vmatprep.subr.bf16.mxu0 0
      %6057 = vmatpush1.bf16.msra.mxu0 0
      %6058 = vmatprep.subr.bf16.mxu0 0
      %6059 = vmatpush1.bf16.msra.mxu0 0
      %6060 = vmatprep.subr.bf16.mxu0 0
      %6061 = vmatpush1.bf16.msra.mxu0 0
      %6062 = vmatprep.subr.bf16.mxu0 0
      %6063 = vmatpush1.bf16.msra.mxu0 0
      %6064 = vmatprep.subr.bf16.mxu0 0
      %6065 = vmatpush1.bf16.msra.mxu0 0
      %6066 = vmatprep.subr.bf16.mxu0 0
      %6067 = vmatpush1.bf16.msra.mxu0 0
      %6068 = vmatprep.subr.bf16.mxu0 0
      %6069 = vmatpush1.bf16.msra.mxu0 0
      %6070 = vmatprep.subr.bf16.mxu0 0
      %6071 = vmatpush1.bf16.msra.mxu0 0
      %6072 = vmatprep.subr.bf16.mxu0 0
      %6073 = vmatpush1.bf16.msra.mxu0 0
      %6074 = vmatprep.subr.bf16.mxu0 0
      %6075 = vmatpush1.bf16.msra.mxu0 0
      %6076 = vmatprep.subr.bf16.mxu0 0
      %6077 = vmatpush1.bf16.msra.mxu0 0
      %6078 = vmatprep.subr.bf16.mxu0 0
      %6079 = vmatpush1.bf16.msra.mxu0 0
      %6080 = vmatprep.subr.bf16.mxu0 0
      %6081 = vmatpush1.bf16.msra.mxu0 0
      %6082 = vmatprep.subr.bf16.mxu0 0
      %6083 = vmatpush1.bf16.msra.mxu0 0
      %6084 = vmatprep.subr.bf16.mxu0 0
      %6085 = vmatpush1.bf16.msra.mxu0 0
      %6086 = vmatprep.mubr.bf16.mxu0 0
      %6087 = vmatmul.mubr.bf16.gmra.mrb[0].mxu0 %v5908
      %v6088 = vpop.f32.mrb[0].mxu0
      %v6089 = vadd.f32 0.0, %v6088
      %v6090 = vpop.f32.mrb[0].mxu0
      %v6091 = vpop.f32.mrb[0].mxu0
      %v6092 = vpop.f32.mrb[0].mxu0
      %6093 = vdwg.mxu0
      %v6094 = vadd.f32 %v5859, %v5966
      %v6095 = vadd.f32 %v5860, %v5968
      %v6096 = vadd.f32 %v5861, %v6007
      %v6097 = vadd.f32 %v5862, %v6009
      %v6098 = vadd.f32 %v5863, %v6048
      %v6099 = vadd.f32 %v5864, %v6050
      %v6100 = vadd.f32 %v5865, %v6089
      %6101 = vst [vmem:[#allocation2] sm:$0xff] %v6094
      %6102 = vst [vmem:[#allocation2 + $0x8] sm:$0xff] %v6095
      %6103 = vst [vmem:[#allocation2 + $0x10] sm:$0xff] %v6096
      %6104 = vst [vmem:[#allocation2 + $0x18] sm:$0xff] %v6097
      %6105 = vst [vmem:[#allocation2 + $0x20] sm:$0xff] %v6098
      %6106 = vst [vmem:[#allocation2 + $0x28] sm:$0xff] %v6099
      %6107 = vst.msk [vmem:[#allocation2 + $0x30] sm:$0xff] %vm292, %v6100
      %v6108 = vld [vmem:[%s267 + $0x4] sm:$0xff]
      %v6109 = vld [vmem:[%s267 + $0xc] sm:$0xff]
      %v6110 = vld [vmem:[%s267 + $0x14] sm:$0xff]
      %v6111 = vld [vmem:[%s267 + $0x1c] sm:$0xf]
      %v6112 = vld [vmem:[#allocation2] sm:$0xff]
      %v6113 = vld [vmem:[#allocation2 + $0x8] sm:$0xff]
      %v6114 = vld [vmem:[#allocation2 + $0x10] sm:$0xff]
      %v6115 = vld [vmem:[#allocation2 + $0x18] sm:$0xff]
      %v6116 = vld [vmem:[#allocation2 + $0x20] sm:$0xff]
      %v6117 = vld [vmem:[#allocation2 + $0x28] sm:$0xff]
      %v6118 = vld [vmem:[#allocation2 + $0x30] sm:$0xff]
      %s6119 = scalar_lea.vmem %s262, 92
      %v6120 = vld [vmem:[%s6119] sm:$0xf]
      %v6125 = vunpack.c.l.b16 %v6108
      %v6126 = vunpack.c.h.b16 %v6108
      %v6127 = vunpack.c.l.b16 %v6109
      %v6128 = vunpack.c.h.b16 %v6109
      %v6129 = vunpack.c.l.b16 %v6110
      %v6130 = vunpack.c.h.b16 %v6110
      %v6131 = vunpack.c.l.b16 %v6111
      %v6132 = vpack.c.b16 %v6125, %v6125
      %v6133 = vpack.c.b16 %v6126, %v6126
      %v6134 = vpack.c.b16 %v6127, %v6127
      %v6135 = vpack.c.b16 %v6128, %v6128
      %v6136 = vpack.c.b16 %v6129, %v6129
      %v6137 = vpack.c.b16 %v6130, %v6130
      %v6138 = vpack.c.b16 %v6131, %v6131
      %6139 = vrot.lane.b32.xlu0 %v6132, 44
      %v6140 = vpop.permute.xlu0 %6139
      %6141 = vrot.lane.b32.xlu0 %v6133, 44
      %v6142 = vpop.permute.xlu0 %6141
      %6143 = vrot.lane.b32.xlu0 %v6134, 44
      %v6144 = vpop.permute.xlu0 %6143
      %6145 = vrot.lane.b32.xlu0 %v6135, 44
      %v6146 = vpop.permute.xlu0 %6145
      %6147 = vrot.lane.b32.xlu0 %v6136, 44
      %v6148 = vpop.permute.xlu0 %6147
      %6149 = vrot.lane.b32.xlu0 %v6137, 44
      %v6150 = vpop.permute.xlu0 %6149
      %6151 = vrot.lane.b32.xlu0 %v6138, 44
      %v6152 = vpop.permute.xlu0 %6151
      %vm6153 = vcmask 359424
      %v6154 = vsel %vm6153, %v6140, %v6142
      %v6155 = vsel %vm6153, %v6142, %v6144
      %v6156 = vsel %vm6153, %v6144, %v6146
      %v6157 = vsel %vm6153, %v6146, %v6148
      %v6158 = vsel %vm6153, %v6148, %v6150
      %v6159 = vsel %vm6153, %v6150, %v6152
      %v6161 = vsel %vm324, %v6120, 0
      %v6164 = vsel %vm328, %v6154, 0
      %v6167 = vsel %vm328, %v6155, 0
      %v6170 = vsel %vm328, %v6156, 0
      %v6173 = vsel %vm328, %v6157, 0
      %v6176 = vsel %vm328, %v6158, 0
      %v6179 = vsel %vm328, %v6159, 0
      %v6182 = vsel %vm328, %v6152, 0
      %6184 = vmatprep.subr.bf16.mxu0 %v6167
      %6185 = vmatpush1.bf16.msra.mxu0 %v6164
      %6186 = vmatprep.subr.bf16.mxu0 0
      %6187 = vmatpush1.bf16.msra.mxu0 0
      %6188 = vmatprep.subr.bf16.mxu0 0
      %6189 = vmatpush1.bf16.msra.mxu0 0
      %6190 = vmatprep.subr.bf16.mxu0 0
      %6191 = vmatpush1.bf16.msra.mxu0 0
      %6192 = vmatprep.subr.bf16.mxu0 0
      %6193 = vmatpush1.bf16.msra.mxu0 0
      %6194 = vmatprep.subr.bf16.mxu0 0
      %6195 = vmatpush1.bf16.msra.mxu0 0
      %6196 = vmatprep.subr.bf16.mxu0 0
      %6197 = vmatpush1.bf16.msra.mxu0 0
      %6198 = vmatprep.subr.bf16.mxu0 0
      %6199 = vmatpush1.bf16.msra.mxu0 0
      %6200 = vmatprep.subr.bf16.mxu0 0
      %6201 = vmatpush1.bf16.msra.mxu0 0
      %6202 = vmatprep.subr.bf16.mxu0 0
      %6203 = vmatpush1.bf16.msra.mxu0 0
      %6204 = vmatprep.subr.bf16.mxu0 0
      %6205 = vmatpush1.bf16.msra.mxu0 0
      %6206 = vmatprep.subr.bf16.mxu0 0
      %6207 = vmatpush1.bf16.msra.mxu0 0
      %6208 = vmatprep.subr.bf16.mxu0 0
      %6209 = vmatpush1.bf16.msra.mxu0 0
      %6210 = vmatprep.subr.bf16.mxu0 0
      %6211 = vmatpush1.bf16.msra.mxu0 0
      %6212 = vmatprep.subr.bf16.mxu0 0
      %6213 = vmatpush1.bf16.msra.mxu0 0
      %6214 = vmatprep.subr.bf16.mxu0 0
      %6215 = vmatpush1.bf16.msra.mxu0 0
      %6216 = vmatprep.mubr.bf16.mxu0 0
      %6217 = vmatmul.mubr.bf16.gmra.mrb[0].mxu0 %v6161
      %v6218 = vpop.f32.mrb[0].mxu0
      %v6219 = vadd.f32 0.0, %v6218
      %v6220 = vpop.f32.mrb[0].mxu0
      %v6221 = vadd.f32 0.0, %v6220
      %v6222 = vpop.f32.mrb[0].mxu0
      %v6223 = vpop.f32.mrb[0].mxu0
      %6224 = vdwg.mxu0
      %6225 = vmatprep.subr.bf16.mxu0 %v6173
      %6226 = vmatpush1.bf16.msra.mxu0 %v6170
      %6227 = vmatprep.subr.bf16.mxu0 0
      %6228 = vmatpush1.bf16.msra.mxu0 0
      %6229 = vmatprep.subr.bf16.mxu0 0
      %6230 = vmatpush1.bf16.msra.mxu0 0
      %6231 = vmatprep.subr.bf16.mxu0 0
      %6232 = vmatpush1.bf16.msra.mxu0 0
      %6233 = vmatprep.subr.bf16.mxu0 0
      %6234 = vmatpush1.bf16.msra.mxu0 0
      %6235 = vmatprep.subr.bf16.mxu0 0
      %6236 = vmatpush1.bf16.msra.mxu0 0
      %6237 = vmatprep.subr.bf16.mxu0 0
      %6238 = vmatpush1.bf16.msra.mxu0 0
      %6239 = vmatprep.subr.bf16.mxu0 0
      %6240 = vmatpush1.bf16.msra.mxu0 0
      %6241 = vmatprep.subr.bf16.mxu0 0
      %6242 = vmatpush1.bf16.msra.mxu0 0
      %6243 = vmatprep.subr.bf16.mxu0 0
      %6244 = vmatpush1.bf16.msra.mxu0 0
      %6245 = vmatprep.subr.bf16.mxu0 0
      %6246 = vmatpush1.bf16.msra.mxu0 0
      %6247 = vmatprep.subr.bf16.mxu0 0
      %6248 = vmatpush1.bf16.msra.mxu0 0
      %6249 = vmatprep.subr.bf16.mxu0 0
      %6250 = vmatpush1.bf16.msra.mxu0 0
      %6251 = vmatprep.subr.bf16.mxu0 0
      %6252 = vmatpush1.bf16.msra.mxu0 0
      %6253 = vmatprep.subr.bf16.mxu0 0
      %6254 = vmatpush1.bf16.msra.mxu0 0
      %6255 = vmatprep.subr.bf16.mxu0 0
      %6256 = vmatpush1.bf16.msra.mxu0 0
      %6257 = vmatprep.mubr.bf16.mxu0 0
      %6258 = vmatmul.mubr.bf16.gmra.mrb[0].mxu0 %v6161
      %v6259 = vpop.f32.mrb[0].mxu0
      %v6260 = vadd.f32 0.0, %v6259
      %v6261 = vpop.f32.mrb[0].mxu0
      %v6262 = vadd.f32 0.0, %v6261
      %v6263 = vpop.f32.mrb[0].mxu0
      %v6264 = vpop.f32.mrb[0].mxu0
      %6265 = vdwg.mxu0
      %6266 = vmatprep.subr.bf16.mxu0 %v6179
      %6267 = vmatpush1.bf16.msra.mxu0 %v6176
      %6268 = vmatprep.subr.bf16.mxu0 0
      %6269 = vmatpush1.bf16.msra.mxu0 0
      %6270 = vmatprep.subr.bf16.mxu0 0
      %6271 = vmatpush1.bf16.msra.mxu0 0
      %6272 = vmatprep.subr.bf16.mxu0 0
      %6273 = vmatpush1.bf16.msra.mxu0 0
      %6274 = vmatprep.subr.bf16.mxu0 0
      %6275 = vmatpush1.bf16.msra.mxu0 0
      %6276 = vmatprep.subr.bf16.mxu0 0
      %6277 = vmatpush1.bf16.msra.mxu0 0
      %6278 = vmatprep.subr.bf16.mxu0 0
      %6279 = vmatpush1.bf16.msra.mxu0 0
      %6280 = vmatprep.subr.bf16.mxu0 0
      %6281 = vmatpush1.bf16.msra.mxu0 0
      %6282 = vmatprep.subr.bf16.mxu0 0
      %6283 = vmatpush1.bf16.msra.mxu0 0
      %6284 = vmatprep.subr.bf16.mxu0 0
      %6285 = vmatpush1.bf16.msra.mxu0 0
      %6286 = vmatprep.subr.bf16.mxu0 0
      %6287 = vmatpush1.bf16.msra.mxu0 0
      %6288 = vmatprep.subr.bf16.mxu0 0
      %6289 = vmatpush1.bf16.msra.mxu0 0
      %6290 = vmatprep.subr.bf16.mxu0 0
      %6291 = vmatpush1.bf16.msra.mxu0 0
      %6292 = vmatprep.subr.bf16.mxu0 0
      %6293 = vmatpush1.bf16.msra.mxu0 0
      %6294 = vmatprep.subr.bf16.mxu0 0
      %6295 = vmatpush1.bf16.msra.mxu0 0
      %6296 = vmatprep.subr.bf16.mxu0 0
      %6297 = vmatpush1.bf16.msra.mxu0 0
      %6298 = vmatprep.mubr.bf16.mxu0 0
      %6299 = vmatmul.mubr.bf16.gmra.mrb[0].mxu0 %v6161
      %v6300 = vpop.f32.mrb[0].mxu0
      %v6301 = vadd.f32 0.0, %v6300
      %v6302 = vpop.f32.mrb[0].mxu0
      %v6303 = vadd.f32 0.0, %v6302
      %v6304 = vpop.f32.mrb[0].mxu0
      %v6305 = vpop.f32.mrb[0].mxu0
      %6306 = vdwg.mxu0
      %6307 = vmatprep.subr.bf16.mxu0 0
      %6308 = vmatpush1.bf16.msra.mxu0 %v6182
      %6309 = vmatprep.subr.bf16.mxu0 0
      %6310 = vmatpush1.bf16.msra.mxu0 0
      %6311 = vmatprep.subr.bf16.mxu0 0
      %6312 = vmatpush1.bf16.msra.mxu0 0
      %6313 = vmatprep.subr.bf16.mxu0 0
      %6314 = vmatpush1.bf16.msra.mxu0 0
      %6315 = vmatprep.subr.bf16.mxu0 0
      %6316 = vmatpush1.bf16.msra.mxu0 0
      %6317 = vmatprep.subr.bf16.mxu0 0
      %6318 = vmatpush1.bf16.msra.mxu0 0
      %6319 = vmatprep.subr.bf16.mxu0 0
      %6320 = vmatpush1.bf16.msra.mxu0 0
      %6321 = vmatprep.subr.bf16.mxu0 0
      %6322 = vmatpush1.bf16.msra.mxu0 0
      %6323 = vmatprep.subr.bf16.mxu0 0
      %6324 = vmatpush1.bf16.msra.mxu0 0
      %6325 = vmatprep.subr.bf16.mxu0 0
      %6326 = vmatpush1.bf16.msra.mxu0 0
      %6327 = vmatprep.subr.bf16.mxu0 0
      %6328 = vmatpush1.bf16.msra.mxu0 0
      %6329 = vmatprep.subr.bf16.mxu0 0
      %6330 = vmatpush1.bf16.msra.mxu0 0
      %6331 = vmatprep.subr.bf16.mxu0 0
      %6332 = vmatpush1.bf16.msra.mxu0 0
      %6333 = vmatprep.subr.bf16.mxu0 0
      %6334 = vmatpush1.bf16.msra.mxu0 0
      %6335 = vmatprep.subr.bf16.mxu0 0
      %6336 = vmatpush1.bf16.msra.mxu0 0
      %6337 = vmatprep.subr.bf16.mxu0 0
      %6338 = vmatpush1.bf16.msra.mxu0 0
      %6339 = vmatprep.mubr.bf16.mxu0 0
      %6340 = vmatmul.mubr.bf16.gmra.mrb[0].mxu0 %v6161
      %v6341 = vpop.f32.mrb[0].mxu0
      %v6342 = vadd.f32 0.0, %v6341
      %v6343 = vpop.f32.mrb[0].mxu0
      %v6344 = vpop.f32.mrb[0].mxu0
      %v6345 = vpop.f32.mrb[0].mxu0
      %6346 = vdwg.mxu0
      %v6347 = vadd.f32 %v6112, %v6219
      %v6348 = vadd.f32 %v6113, %v6221
      %v6349 = vadd.f32 %v6114, %v6260
      %v6350 = vadd.f32 %v6115, %v6262
      %v6351 = vadd.f32 %v6116, %v6301
      %v6352 = vadd.f32 %v6117, %v6303
      %v6353 = vadd.f32 %v6118, %v6342
      %6354 = vst [vmem:[#allocation2] sm:$0xff] %v6347
      %6355 = vst [vmem:[#allocation2 + $0x8] sm:$0xff] %v6348
      %6356 = vst [vmem:[#allocation2 + $0x10] sm:$0xff] %v6349
      %6357 = vst [vmem:[#allocation2 + $0x18] sm:$0xff] %v6350
      %6358 = vst [vmem:[#allocation2 + $0x20] sm:$0xff] %v6351
      %6359 = vst [vmem:[#allocation2 + $0x28] sm:$0xff] %v6352
      %6360 = vst.msk [vmem:[#allocation2 + $0x30] sm:$0xff] %vm292, %v6353
      %v6361 = vld [vmem:[%s267 + $0x4] sm:$0xff]
      %v6362 = vld [vmem:[%s267 + $0xc] sm:$0xff]
      %v6363 = vld [vmem:[%s267 + $0x14] sm:$0xff]
      %v6364 = vld [vmem:[%s267 + $0x1c] sm:$0xf]
      %v6365 = vld [vmem:[#allocation2] sm:$0xff]
      %v6366 = vld [vmem:[#allocation2 + $0x8] sm:$0xff]
      %v6367 = vld [vmem:[#allocation2 + $0x10] sm:$0xff]
      %v6368 = vld [vmem:[#allocation2 + $0x18] sm:$0xff]
      %v6369 = vld [vmem:[#allocation2 + $0x20] sm:$0xff]
      %v6370 = vld [vmem:[#allocation2 + $0x28] sm:$0xff]
      %v6371 = vld [vmem:[#allocation2 + $0x30] sm:$0xff]
      %s6372 = scalar_lea.vmem %s262, 96
      %v6373 = vld [vmem:[%s6372] sm:$0xf]
      %v6378 = vunpack.c.l.b16 %v6361
      %v6379 = vunpack.c.h.b16 %v6361
      %v6380 = vunpack.c.l.b16 %v6362
      %v6381 = vunpack.c.h.b16 %v6362
      %v6382 = vunpack.c.l.b16 %v6363
      %v6383 = vunpack.c.h.b16 %v6363
      %v6384 = vunpack.c.l.b16 %v6364
      %v6385 = vpack.c.b16 %v6378, %v6378
      %v6386 = vpack.c.b16 %v6379, %v6379
      %v6387 = vpack.c.b16 %v6380, %v6380
      %v6388 = vpack.c.b16 %v6381, %v6381
      %v6389 = vpack.c.b16 %v6382, %v6382
      %v6390 = vpack.c.b16 %v6383, %v6383
      %v6391 = vpack.c.b16 %v6384, %v6384
      %6392 = vrot.lane.b32.xlu0 %v6385, 36
      %v6393 = vpop.permute.xlu0 %6392
      %6394 = vrot.lane.b32.xlu0 %v6386, 36
      %v6395 = vpop.permute.xlu0 %6394
      %6396 = vrot.lane.b32.xlu0 %v6387, 36
      %v6397 = vpop.permute.xlu0 %6396
      %6398 = vrot.lane.b32.xlu0 %v6388, 36
      %v6399 = vpop.permute.xlu0 %6398
      %6400 = vrot.lane.b32.xlu0 %v6389, 36
      %v6401 = vpop.permute.xlu0 %6400
      %6402 = vrot.lane.b32.xlu0 %v6390, 36
      %v6403 = vpop.permute.xlu0 %6402
      %6404 = vrot.lane.b32.xlu0 %v6391, 36
      %v6405 = vpop.permute.xlu0 %6404
      %vm6406 = vcmask 293888
      %v6407 = vsel %vm6406, %v6393, %v6395
      %v6408 = vsel %vm6406, %v6395, %v6397
      %v6409 = vsel %vm6406, %v6397, %v6399
      %v6410 = vsel %vm6406, %v6399, %v6401
      %v6411 = vsel %vm6406, %v6401, %v6403
      %v6412 = vsel %vm6406, %v6403, %v6405
      %v6414 = vsel %vm324, %v6373, 0
      %v6417 = vsel %vm328, %v6407, 0
      %v6420 = vsel %vm328, %v6408, 0
      %v6423 = vsel %vm328, %v6409, 0
      %v6426 = vsel %vm328, %v6410, 0
      %v6429 = vsel %vm328, %v6411, 0
      %v6432 = vsel %vm328, %v6412, 0
      %v6435 = vsel %vm328, %v6405, 0
      %6437 = vmatprep.subr.bf16.mxu0 %v6420
      %6438 = vmatpush1.bf16.msra.mxu0 %v6417
      %6439 = vmatprep.subr.bf16.mxu0 0
      %6440 = vmatpush1.bf16.msra.mxu0 0
      %6441 = vmatprep.subr.bf16.mxu0 0
      %6442 = vmatpush1.bf16.msra.mxu0 0
      %6443 = vmatprep.subr.bf16.mxu0 0
      %6444 = vmatpush1.bf16.msra.mxu0 0
      %6445 = vmatprep.subr.bf16.mxu0 0
      %6446 = vmatpush1.bf16.msra.mxu0 0
      %6447 = vmatprep.subr.bf16.mxu0 0
      %6448 = vmatpush1.bf16.msra.mxu0 0
      %6449 = vmatprep.subr.bf16.mxu0 0
      %6450 = vmatpush1.bf16.msra.mxu0 0
      %6451 = vmatprep.subr.bf16.mxu0 0
      %6452 = vmatpush1.bf16.msra.mxu0 0
      %6453 = vmatprep.subr.bf16.mxu0 0
      %6454 = vmatpush1.bf16.msra.mxu0 0
      %6455 = vmatprep.subr.bf16.mxu0 0
      %6456 = vmatpush1.bf16.msra.mxu0 0
      %6457 = vmatprep.subr.bf16.mxu0 0
      %6458 = vmatpush1.bf16.msra.mxu0 0
      %6459 = vmatprep.subr.bf16.mxu0 0
      %6460 = vmatpush1.bf16.msra.mxu0 0
      %6461 = vmatprep.subr.bf16.mxu0 0
      %6462 = vmatpush1.bf16.msra.mxu0 0
      %6463 = vmatprep.subr.bf16.mxu0 0
      %6464 = vmatpush1.bf16.msra.mxu0 0
      %6465 = vmatprep.subr.bf16.mxu0 0
      %6466 = vmatpush1.bf16.msra.mxu0 0
      %6467 = vmatprep.subr.bf16.mxu0 0
      %6468 = vmatpush1.bf16.msra.mxu0 0
      %6469 = vmatprep.mubr.bf16.mxu0 0
      %6470 = vmatmul.mubr.bf16.gmra.mrb[0].mxu0 %v6414
      %v6471 = vpop.f32.mrb[0].mxu0
      %v6472 = vadd.f32 0.0, %v6471
      %v6473 = vpop.f32.mrb[0].mxu0
      %v6474 = vadd.f32 0.0, %v6473
      %v6475 = vpop.f32.mrb[0].mxu0
      %v6476 = vpop.f32.mrb[0].mxu0
      %6477 = vdwg.mxu0
      %6478 = vmatprep.subr.bf16.mxu0 %v6426
      %6479 = vmatpush1.bf16.msra.mxu0 %v6423
      %6480 = vmatprep.subr.bf16.mxu0 0
      %6481 = vmatpush1.bf16.msra.mxu0 0
      %6482 = vmatprep.subr.bf16.mxu0 0
      %6483 = vmatpush1.bf16.msra.mxu0 0
      %6484 = vmatprep.subr.bf16.mxu0 0
      %6485 = vmatpush1.bf16.msra.mxu0 0
      %6486 = vmatprep.subr.bf16.mxu0 0
      %6487 = vmatpush1.bf16.msra.mxu0 0
      %6488 = vmatprep.subr.bf16.mxu0 0
      %6489 = vmatpush1.bf16.msra.mxu0 0
      %6490 = vmatprep.subr.bf16.mxu0 0
      %6491 = vmatpush1.bf16.msra.mxu0 0
      %6492 = vmatprep.subr.bf16.mxu0 0
      %6493 = vmatpush1.bf16.msra.mxu0 0
      %6494 = vmatprep.subr.bf16.mxu0 0
      %6495 = vmatpush1.bf16.msra.mxu0 0
      %6496 = vmatprep.subr.bf16.mxu0 0
      %6497 = vmatpush1.bf16.msra.mxu0 0
      %6498 = vmatprep.subr.bf16.mxu0 0
      %6499 = vmatpush1.bf16.msra.mxu0 0
      %6500 = vmatprep.subr.bf16.mxu0 0
      %6501 = vmatpush1.bf16.msra.mxu0 0
      %6502 = vmatprep.subr.bf16.mxu0 0
      %6503 = vmatpush1.bf16.msra.mxu0 0
      %6504 = vmatprep.subr.bf16.mxu0 0
      %6505 = vmatpush1.bf16.msra.mxu0 0
      %6506 = vmatprep.subr.bf16.mxu0 0
      %6507 = vmatpush1.bf16.msra.mxu0 0
      %6508 = vmatprep.subr.bf16.mxu0 0
      %6509 = vmatpush1.bf16.msra.mxu0 0
      %6510 = vmatprep.mubr.bf16.mxu0 0
      %6511 = vmatmul.mubr.bf16.gmra.mrb[0].mxu0 %v6414
      %v6512 = vpop.f32.mrb[0].mxu0
      %v6513 = vadd.f32 0.0, %v6512
      %v6514 = vpop.f32.mrb[0].mxu0
      %v6515 = vadd.f32 0.0, %v6514
      %v6516 = vpop.f32.mrb[0].mxu0
      %v6517 = vpop.f32.mrb[0].mxu0
      %6518 = vdwg.mxu0
      %6519 = vmatprep.subr.bf16.mxu0 %v6432
      %6520 = vmatpush1.bf16.msra.mxu0 %v6429
      %6521 = vmatprep.subr.bf16.mxu0 0
      %6522 = vmatpush1.bf16.msra.mxu0 0
      %6523 = vmatprep.subr.bf16.mxu0 0
      %6524 = vmatpush1.bf16.msra.mxu0 0
      %6525 = vmatprep.subr.bf16.mxu0 0
      %6526 = vmatpush1.bf16.msra.mxu0 0
      %6527 = vmatprep.subr.bf16.mxu0 0
      %6528 = vmatpush1.bf16.msra.mxu0 0
      %6529 = vmatprep.subr.bf16.mxu0 0
      %6530 = vmatpush1.bf16.msra.mxu0 0
      %6531 = vmatprep.subr.bf16.mxu0 0
      %6532 = vmatpush1.bf16.msra.mxu0 0
      %6533 = vmatprep.subr.bf16.mxu0 0
      %6534 = vmatpush1.bf16.msra.mxu0 0
      %6535 = vmatprep.subr.bf16.mxu0 0
      %6536 = vmatpush1.bf16.msra.mxu0 0
      %6537 = vmatprep.subr.bf16.mxu0 0
      %6538 = vmatpush1.bf16.msra.mxu0 0
      %6539 = vmatprep.subr.bf16.mxu0 0
      %6540 = vmatpush1.bf16.msra.mxu0 0
      %6541 = vmatprep.subr.bf16.mxu0 0
      %6542 = vmatpush1.bf16.msra.mxu0 0
      %6543 = vmatprep.subr.bf16.mxu0 0
      %6544 = vmatpush1.bf16.msra.mxu0 0
      %6545 = vmatprep.subr.bf16.mxu0 0
      %6546 = vmatpush1.bf16.msra.mxu0 0
      %6547 = vmatprep.subr.bf16.mxu0 0
      %6548 = vmatpush1.bf16.msra.mxu0 0
      %6549 = vmatprep.subr.bf16.mxu0 0
      %6550 = vmatpush1.bf16.msra.mxu0 0
      %6551 = vmatprep.mubr.bf16.mxu0 0
      %6552 = vmatmul.mubr.bf16.gmra.mrb[0].mxu0 %v6414
      %v6553 = vpop.f32.mrb[0].mxu0
      %v6554 = vadd.f32 0.0, %v6553
      %v6555 = vpop.f32.mrb[0].mxu0
      %v6556 = vadd.f32 0.0, %v6555
      %v6557 = vpop.f32.mrb[0].mxu0
      %v6558 = vpop.f32.mrb[0].mxu0
      %6559 = vdwg.mxu0
      %6560 = vmatprep.subr.bf16.mxu0 0
      %6561 = vmatpush1.bf16.msra.mxu0 %v6435
      %6562 = vmatprep.subr.bf16.mxu0 0
      %6563 = vmatpush1.bf16.msra.mxu0 0
      %6564 = vmatprep.subr.bf16.mxu0 0
      %6565 = vmatpush1.bf16.msra.mxu0 0
      %6566 = vmatprep.subr.bf16.mxu0 0
      %6567 = vmatpush1.bf16.msra.mxu0 0
      %6568 = vmatprep.subr.bf16.mxu0 0
      %6569 = vmatpush1.bf16.msra.mxu0 0
      %6570 = vmatprep.subr.bf16.mxu0 0
      %6571 = vmatpush1.bf16.msra.mxu0 0
      %6572 = vmatprep.subr.bf16.mxu0 0
      %6573 = vmatpush1.bf16.msra.mxu0 0
      %6574 = vmatprep.subr.bf16.mxu0 0
      %6575 = vmatpush1.bf16.msra.mxu0 0
      %6576 = vmatprep.subr.bf16.mxu0 0
      %6577 = vmatpush1.bf16.msra.mxu0 0
      %6578 = vmatprep.subr.bf16.mxu0 0
      %6579 = vmatpush1.bf16.msra.mxu0 0
      %6580 = vmatprep.subr.bf16.mxu0 0
      %6581 = vmatpush1.bf16.msra.mxu0 0
      %6582 = vmatprep.subr.bf16.mxu0 0
      %6583 = vmatpush1.bf16.msra.mxu0 0
      %6584 = vmatprep.subr.bf16.mxu0 0
      %6585 = vmatpush1.bf16.msra.mxu0 0
      %6586 = vmatprep.subr.bf16.mxu0 0
      %6587 = vmatpush1.bf16.msra.mxu0 0
      %6588 = vmatprep.subr.bf16.mxu0 0
      %6589 = vmatpush1.bf16.msra.mxu0 0
      %6590 = vmatprep.subr.bf16.mxu0 0
      %6591 = vmatpush1.bf16.msra.mxu0 0
      %6592 = vmatprep.mubr.bf16.mxu0 0
      %6593 = vmatmul.mubr.bf16.gmra.mrb[0].mxu0 %v6414
      %v6594 = vpop.f32.mrb[0].mxu0
      %v6595 = vadd.f32 0.0, %v6594
      %v6596 = vpop.f32.mrb[0].mxu0
      %v6597 = vpop.f32.mrb[0].mxu0
      %v6598 = vpop.f32.mrb[0].mxu0
      %6599 = vdwg.mxu0
      %v6600 = vadd.f32 %v6365, %v6472
      %v6601 = vadd.f32 %v6366, %v6474
      %v6602 = vadd.f32 %v6367, %v6513
      %v6603 = vadd.f32 %v6368, %v6515
      %v6604 = vadd.f32 %v6369, %v6554
      %v6605 = vadd.f32 %v6370, %v6556
      %v6606 = vadd.f32 %v6371, %v6595
      %6607 = vst [vmem:[#allocation2] sm:$0xff] %v6600
      %6608 = vst [vmem:[#allocation2 + $0x8] sm:$0xff] %v6601
      %6609 = vst [vmem:[#allocation2 + $0x10] sm:$0xff] %v6602
      %6610 = vst [vmem:[#allocation2 + $0x18] sm:$0xff] %v6603
      %6611 = vst [vmem:[#allocation2 + $0x20] sm:$0xff] %v6604
      %6612 = vst [vmem:[#allocation2 + $0x28] sm:$0xff] %v6605
      %6613 = vst.msk [vmem:[#allocation2 + $0x30] sm:$0xff] %vm292, %v6606
      %v6614 = vld [vmem:[%s267 + $0x4] sm:$0xff]
      %v6615 = vld [vmem:[%s267 + $0xc] sm:$0xff]
      %v6616 = vld [vmem:[%s267 + $0x14] sm:$0xff]
      %v6617 = vld [vmem:[%s267 + $0x1c] sm:$0xf]
      %v6618 = vld [vmem:[#allocation2] sm:$0xff]
      %v6619 = vld [vmem:[#allocation2 + $0x8] sm:$0xff]
      %v6620 = vld [vmem:[#allocation2 + $0x10] sm:$0xff]
      %v6621 = vld [vmem:[#allocation2 + $0x18] sm:$0xff]
      %v6622 = vld [vmem:[#allocation2 + $0x20] sm:$0xff]
      %v6623 = vld [vmem:[#allocation2 + $0x28] sm:$0xff]
      %v6624 = vld [vmem:[#allocation2 + $0x30] sm:$0xff]
      %s6625 = scalar_lea.vmem %s262, 100
      %v6626 = vld [vmem:[%s6625] sm:$0xf]
      %v6631 = vunpack.c.l.b16 %v6614
      %v6632 = vunpack.c.h.b16 %v6614
      %v6633 = vunpack.c.l.b16 %v6615
      %v6634 = vunpack.c.h.b16 %v6615
      %v6635 = vunpack.c.l.b16 %v6616
      %v6636 = vunpack.c.h.b16 %v6616
      %v6637 = vunpack.c.l.b16 %v6617
      %v6638 = vpack.c.b16 %v6631, %v6631
      %v6639 = vpack.c.b16 %v6632, %v6632
      %v6640 = vpack.c.b16 %v6633, %v6633
      %v6641 = vpack.c.b16 %v6634, %v6634
      %v6642 = vpack.c.b16 %v6635, %v6635
      %v6643 = vpack.c.b16 %v6636, %v6636
      %v6644 = vpack.c.b16 %v6637, %v6637
      %6645 = vrot.lane.b32.xlu0 %v6638, 35
      %v6646 = vpop.permute.xlu0 %6645
      %6647 = vrot.lane.b32.xlu0 %v6639, 35
      %v6648 = vpop.permute.xlu0 %6647
      %6649 = vrot.lane.b32.xlu0 %v6640, 35
      %v6650 = vpop.permute.xlu0 %6649
      %6651 = vrot.lane.b32.xlu0 %v6641, 35
      %v6652 = vpop.permute.xlu0 %6651
      %6653 = vrot.lane.b32.xlu0 %v6642, 35
      %v6654 = vpop.permute.xlu0 %6653
      %6655 = vrot.lane.b32.xlu0 %v6643, 35
      %v6656 = vpop.permute.xlu0 %6655
      %6657 = vrot.lane.b32.xlu0 %v6644, 35
      %v6658 = vpop.permute.xlu0 %6657
      %vm6659 = vcmask 285696
      %v6660 = vsel %vm6659, %v6646, %v6648
      %v6661 = vsel %vm6659, %v6648, %v6650
      %v6662 = vsel %vm6659, %v6650, %v6652
      %v6663 = vsel %vm6659, %v6652, %v6654
      %v6664 = vsel %vm6659, %v6654, %v6656
      %v6665 = vsel %vm6659, %v6656, %v6658
      %v6667 = vsel %vm324, %v6626, 0
      %v6670 = vsel %vm328, %v6660, 0
      %v6673 = vsel %vm328, %v6661, 0
      %v6676 = vsel %vm328, %v6662, 0
      %v6679 = vsel %vm328, %v6663, 0
      %v6682 = vsel %vm328, %v6664, 0
      %v6685 = vsel %vm328, %v6665, 0
      %v6688 = vsel %vm328, %v6658, 0
      %6690 = vmatprep.subr.bf16.mxu0 %v6673
      %6691 = vmatpush1.bf16.msra.mxu0 %v6670
      %6692 = vmatprep.subr.bf16.mxu0 0
      %6693 = vmatpush1.bf16.msra.mxu0 0
      %6694 = vmatprep.subr.bf16.mxu0 0
      %6695 = vmatpush1.bf16.msra.mxu0 0
      %6696 = vmatprep.subr.bf16.mxu0 0
      %6697 = vmatpush1.bf16.msra.mxu0 0
      %6698 = vmatprep.subr.bf16.mxu0 0
      %6699 = vmatpush1.bf16.msra.mxu0 0
      %6700 = vmatprep.subr.bf16.mxu0 0
      %6701 = vmatpush1.bf16.msra.mxu0 0
      %6702 = vmatprep.subr.bf16.mxu0 0
      %6703 = vmatpush1.bf16.msra.mxu0 0
      %6704 = vmatprep.subr.bf16.mxu0 0
      %6705 = vmatpush1.bf16.msra.mxu0 0
      %6706 = vmatprep.subr.bf16.mxu0 0
      %6707 = vmatpush1.bf16.msra.mxu0 0
      %6708 = vmatprep.subr.bf16.mxu0 0
      %6709 = vmatpush1.bf16.msra.mxu0 0
      %6710 = vmatprep.subr.bf16.mxu0 0
      %6711 = vmatpush1.bf16.msra.mxu0 0
      %6712 = vmatprep.subr.bf16.mxu0 0
      %6713 = vmatpush1.bf16.msra.mxu0 0
      %6714 = vmatprep.subr.bf16.mxu0 0
      %6715 = vmatpush1.bf16.msra.mxu0 0
      %6716 = vmatprep.subr.bf16.mxu0 0
      %6717 = vmatpush1.bf16.msra.mxu0 0
      %6718 = vmatprep.subr.bf16.mxu0 0
      %6719 = vmatpush1.bf16.msra.mxu0 0
      %6720 = vmatprep.subr.bf16.mxu0 0
      %6721 = vmatpush1.bf16.msra.mxu0 0
      %6722 = vmatprep.mubr.bf16.mxu0 0
      %6723 = vmatmul.mubr.bf16.gmra.mrb[0].mxu0 %v6667
      %v6724 = vpop.f32.mrb[0].mxu0
      %v6725 = vadd.f32 0.0, %v6724
      %v6726 = vpop.f32.mrb[0].mxu0
      %v6727 = vadd.f32 0.0, %v6726
      %v6728 = vpop.f32.mrb[0].mxu0
      %v6729 = vpop.f32.mrb[0].mxu0
      %6730 = vdwg.mxu0
      %6731 = vmatprep.subr.bf16.mxu0 %v6679
      %6732 = vmatpush1.bf16.msra.mxu0 %v6676
      %6733 = vmatprep.subr.bf16.mxu0 0
      %6734 = vmatpush1.bf16.msra.mxu0 0
      %6735 = vmatprep.subr.bf16.mxu0 0
      %6736 = vmatpush1.bf16.msra.mxu0 0
      %6737 = vmatprep.subr.bf16.mxu0 0
      %6738 = vmatpush1.bf16.msra.mxu0 0
      %6739 = vmatprep.subr.bf16.mxu0 0
      %6740 = vmatpush1.bf16.msra.mxu0 0
      %6741 = vmatprep.subr.bf16.mxu0 0
      %6742 = vmatpush1.bf16.msra.mxu0 0
      %6743 = vmatprep.subr.bf16.mxu0 0
      %6744 = vmatpush1.bf16.msra.mxu0 0
      %6745 = vmatprep.subr.bf16.mxu0 0
      %6746 = vmatpush1.bf16.msra.mxu0 0
      %6747 = vmatprep.subr.bf16.mxu0 0
      %6748 = vmatpush1.bf16.msra.mxu0 0
      %6749 = vmatprep.subr.bf16.mxu0 0
      %6750 = vmatpush1.bf16.msra.mxu0 0
      %6751 = vmatprep.subr.bf16.mxu0 0
      %6752 = vmatpush1.bf16.msra.mxu0 0
      %6753 = vmatprep.subr.bf16.mxu0 0
      %6754 = vmatpush1.bf16.msra.mxu0 0
      %6755 = vmatprep.subr.bf16.mxu0 0
      %6756 = vmatpush1.bf16.msra.mxu0 0
      %6757 = vmatprep.subr.bf16.mxu0 0
      %6758 = vmatpush1.bf16.msra.mxu0 0
      %6759 = vmatprep.subr.bf16.mxu0 0
      %6760 = vmatpush1.bf16.msra.mxu0 0
      %6761 = vmatprep.subr.bf16.mxu0 0
      %6762 = vmatpush1.bf16.msra.mxu0 0
      %6763 = vmatprep.mubr.bf16.mxu0 0
      %6764 = vmatmul.mubr.bf16.gmra.mrb[0].mxu0 %v6667
      %v6765 = vpop.f32.mrb[0].mxu0
      %v6766 = vadd.f32 0.0, %v6765
      %v6767 = vpop.f32.mrb[0].mxu0
      %v6768 = vadd.f32 0.0, %v6767
      %v6769 = vpop.f32.mrb[0].mxu0
      %v6770 = vpop.f32.mrb[0].mxu0
      %6771 = vdwg.mxu0
      %6772 = vmatprep.subr.bf16.mxu0 %v6685
      %6773 = vmatpush1.bf16.msra.mxu0 %v6682
      %6774 = vmatprep.subr.bf16.mxu0 0
      %6775 = vmatpush1.bf16.msra.mxu0 0
      %6776 = vmatprep.subr.bf16.mxu0 0
      %6777 = vmatpush1.bf16.msra.mxu0 0
      %6778 = vmatprep.subr.bf16.mxu0 0
      %6779 = vmatpush1.bf16.msra.mxu0 0
      %6780 = vmatprep.subr.bf16.mxu0 0
      %6781 = vmatpush1.bf16.msra.mxu0 0
      %6782 = vmatprep.subr.bf16.mxu0 0
      %6783 = vmatpush1.bf16.msra.mxu0 0
      %6784 = vmatprep.subr.bf16.mxu0 0
      %6785 = vmatpush1.bf16.msra.mxu0 0
      %6786 = vmatprep.subr.bf16.mxu0 0
      %6787 = vmatpush1.bf16.msra.mxu0 0
      %6788 = vmatprep.subr.bf16.mxu0 0
      %6789 = vmatpush1.bf16.msra.mxu0 0
      %6790 = vmatprep.subr.bf16.mxu0 0
      %6791 = vmatpush1.bf16.msra.mxu0 0
      %6792 = vmatprep.subr.bf16.mxu0 0
      %6793 = vmatpush1.bf16.msra.mxu0 0
      %6794 = vmatprep.subr.bf16.mxu0 0
      %6795 = vmatpush1.bf16.msra.mxu0 0
      %6796 = vmatprep.subr.bf16.mxu0 0
      %6797 = vmatpush1.bf16.msra.mxu0 0
      %6798 = vmatprep.subr.bf16.mxu0 0
      %6799 = vmatpush1.bf16.msra.mxu0 0
      %6800 = vmatprep.subr.bf16.mxu0 0
      %6801 = vmatpush1.bf16.msra.mxu0 0
      %6802 = vmatprep.subr.bf16.mxu0 0
      %6803 = vmatpush1.bf16.msra.mxu0 0
      %6804 = vmatprep.mubr.bf16.mxu0 0
      %6805 = vmatmul.mubr.bf16.gmra.mrb[0].mxu0 %v6667
      %v6806 = vpop.f32.mrb[0].mxu0
      %v6807 = vadd.f32 0.0, %v6806
      %v6808 = vpop.f32.mrb[0].mxu0
      %v6809 = vadd.f32 0.0, %v6808
      %v6810 = vpop.f32.mrb[0].mxu0
      %v6811 = vpop.f32.mrb[0].mxu0
      %6812 = vdwg.mxu0
      %6813 = vmatprep.subr.bf16.mxu0 0
      %6814 = vmatpush1.bf16.msra.mxu0 %v6688
      %6815 = vmatprep.subr.bf16.mxu0 0
      %6816 = vmatpush1.bf16.msra.mxu0 0
      %6817 = vmatprep.subr.bf16.mxu0 0
      %6818 = vmatpush1.bf16.msra.mxu0 0
      %6819 = vmatprep.subr.bf16.mxu0 0
      %6820 = vmatpush1.bf16.msra.mxu0 0
      %6821 = vmatprep.subr.bf16.mxu0 0
      %6822 = vmatpush1.bf16.msra.mxu0 0
      %6823 = vmatprep.subr.bf16.mxu0 0
      %6824 = vmatpush1.bf16.msra.mxu0 0
      %6825 = vmatprep.subr.bf16.mxu0 0
      %6826 = vmatpush1.bf16.msra.mxu0 0
      %6827 = vmatprep.subr.bf16.mxu0 0
      %6828 = vmatpush1.bf16.msra.mxu0 0
      %6829 = vmatprep.subr.bf16.mxu0 0
      %6830 = vmatpush1.bf16.msra.mxu0 0
      %6831 = vmatprep.subr.bf16.mxu0 0
      %6832 = vmatpush1.bf16.msra.mxu0 0
      %6833 = vmatprep.subr.bf16.mxu0 0
      %6834 = vmatpush1.bf16.msra.mxu0 0
      %6835 = vmatprep.subr.bf16.mxu0 0
      %6836 = vmatpush1.bf16.msra.mxu0 0
      %6837 = vmatprep.subr.bf16.mxu0 0
      %6838 = vmatpush1.bf16.msra.mxu0 0
      %6839 = vmatprep.subr.bf16.mxu0 0
      %6840 = vmatpush1.bf16.msra.mxu0 0
      %6841 = vmatprep.subr.bf16.mxu0 0
      %6842 = vmatpush1.bf16.msra.mxu0 0
      %6843 = vmatprep.subr.bf16.mxu0 0
      %6844 = vmatpush1.bf16.msra.mxu0 0
      %6845 = vmatprep.mubr.bf16.mxu0 0
      %6846 = vmatmul.mubr.bf16.gmra.mrb[0].mxu0 %v6667
      %v6847 = vpop.f32.mrb[0].mxu0
      %v6848 = vadd.f32 0.0, %v6847
      %v6849 = vpop.f32.mrb[0].mxu0
      %v6850 = vpop.f32.mrb[0].mxu0
      %v6851 = vpop.f32.mrb[0].mxu0
      %6852 = vdwg.mxu0
      %v6853 = vadd.f32 %v6618, %v6725
      %v6854 = vadd.f32 %v6619, %v6727
      %v6855 = vadd.f32 %v6620, %v6766
      %v6856 = vadd.f32 %v6621, %v6768
      %v6857 = vadd.f32 %v6622, %v6807
      %v6858 = vadd.f32 %v6623, %v6809
      %v6859 = vadd.f32 %v6624, %v6848
      %6860 = vst [vmem:[#allocation2] sm:$0xff] %v6853
      %6861 = vst [vmem:[#allocation2 + $0x8] sm:$0xff] %v6854
      %6862 = vst [vmem:[#allocation2 + $0x10] sm:$0xff] %v6855
      %6863 = vst [vmem:[#allocation2 + $0x18] sm:$0xff] %v6856
      %6864 = vst [vmem:[#allocation2 + $0x20] sm:$0xff] %v6857
      %6865 = vst [vmem:[#allocation2 + $0x28] sm:$0xff] %v6858
      %6866 = vst.msk [vmem:[#allocation2 + $0x30] sm:$0xff] %vm292, %v6859
      %v6867 = vld [vmem:[%s267 + $0x4] sm:$0xff]
      %v6868 = vld [vmem:[%s267 + $0xc] sm:$0xff]
      %v6869 = vld [vmem:[%s267 + $0x14] sm:$0xff]
      %v6870 = vld [vmem:[%s267 + $0x1c] sm:$0xf]
      %v6871 = vld [vmem:[#allocation2] sm:$0xff]
      %v6872 = vld [vmem:[#allocation2 + $0x8] sm:$0xff]
      %v6873 = vld [vmem:[#allocation2 + $0x10] sm:$0xff]
      %v6874 = vld [vmem:[#allocation2 + $0x18] sm:$0xff]
      %v6875 = vld [vmem:[#allocation2 + $0x20] sm:$0xff]
      %v6876 = vld [vmem:[#allocation2 + $0x28] sm:$0xff]
      %v6877 = vld [vmem:[#allocation2 + $0x30] sm:$0xff]
      %s6878 = scalar_lea.vmem %s262, 104
      %v6879 = vld [vmem:[%s6878] sm:$0xf]
      %v6884 = vunpack.c.l.b16 %v6867
      %v6885 = vunpack.c.h.b16 %v6867
      %v6886 = vunpack.c.l.b16 %v6868
      %v6887 = vunpack.c.h.b16 %v6868
      %v6888 = vunpack.c.l.b16 %v6869
      %v6889 = vunpack.c.h.b16 %v6869
      %v6890 = vunpack.c.l.b16 %v6870
      %v6891 = vpack.c.b16 %v6884, %v6884
      %v6892 = vpack.c.b16 %v6885, %v6885
      %v6893 = vpack.c.b16 %v6886, %v6886
      %v6894 = vpack.c.b16 %v6887, %v6887
      %v6895 = vpack.c.b16 %v6888, %v6888
      %v6896 = vpack.c.b16 %v6889, %v6889
      %v6897 = vpack.c.b16 %v6890, %v6890
      %6898 = vrot.lane.b32.xlu0 %v6891, 34
      %v6899 = vpop.permute.xlu0 %6898
      %6900 = vrot.lane.b32.xlu0 %v6892, 34
      %v6901 = vpop.permute.xlu0 %6900
      %6902 = vrot.lane.b32.xlu0 %v6893, 34
      %v6903 = vpop.permute.xlu0 %6902
      %6904 = vrot.lane.b32.xlu0 %v6894, 34
      %v6905 = vpop.permute.xlu0 %6904
      %6906 = vrot.lane.b32.xlu0 %v6895, 34
      %v6907 = vpop.permute.xlu0 %6906
      %6908 = vrot.lane.b32.xlu0 %v6896, 34
      %v6909 = vpop.permute.xlu0 %6908
      %6910 = vrot.lane.b32.xlu0 %v6897, 34
      %v6911 = vpop.permute.xlu0 %6910
      %vm6912 = vcmask 277504
      %v6913 = vsel %vm6912, %v6899, %v6901
      %v6914 = vsel %vm6912, %v6901, %v6903
      %v6915 = vsel %vm6912, %v6903, %v6905
      %v6916 = vsel %vm6912, %v6905, %v6907
      %v6917 = vsel %vm6912, %v6907, %v6909
      %v6918 = vsel %vm6912, %v6909, %v6911
      %v6920 = vsel %vm324, %v6879, 0
      %v6923 = vsel %vm328, %v6913, 0
      %v6926 = vsel %vm328, %v6914, 0
      %v6929 = vsel %vm328, %v6915, 0
      %v6932 = vsel %vm328, %v6916, 0
      %v6935 = vsel %vm328, %v6917, 0
      %v6938 = vsel %vm328, %v6918, 0
      %v6941 = vsel %vm328, %v6911, 0
      %6943 = vmatprep.subr.bf16.mxu0 %v6926
      %6944 = vmatpush1.bf16.msra.mxu0 %v6923
      %6945 = vmatprep.subr.bf16.mxu0 0
      %6946 = vmatpush1.bf16.msra.mxu0 0
      %6947 = vmatprep.subr.bf16.mxu0 0
      %6948 = vmatpush1.bf16.msra.mxu0 0
      %6949 = vmatprep.subr.bf16.mxu0 0
      %6950 = vmatpush1.bf16.msra.mxu0 0
      %6951 = vmatprep.subr.bf16.mxu0 0
      %6952 = vmatpush1.bf16.msra.mxu0 0
      %6953 = vmatprep.subr.bf16.mxu0 0
      %6954 = vmatpush1.bf16.msra.mxu0 0
      %6955 = vmatprep.subr.bf16.mxu0 0
      %6956 = vmatpush1.bf16.msra.mxu0 0
      %6957 = vmatprep.subr.bf16.mxu0 0
      %6958 = vmatpush1.bf16.msra.mxu0 0
      %6959 = vmatprep.subr.bf16.mxu0 0
      %6960 = vmatpush1.bf16.msra.mxu0 0
      %6961 = vmatprep.subr.bf16.mxu0 0
      %6962 = vmatpush1.bf16.msra.mxu0 0
      %6963 = vmatprep.subr.bf16.mxu0 0
      %6964 = vmatpush1.bf16.msra.mxu0 0
      %6965 = vmatprep.subr.bf16.mxu0 0
      %6966 = vmatpush1.bf16.msra.mxu0 0
      %6967 = vmatprep.subr.bf16.mxu0 0
      %6968 = vmatpush1.bf16.msra.mxu0 0
      %6969 = vmatprep.subr.bf16.mxu0 0
      %6970 = vmatpush1.bf16.msra.mxu0 0
      %6971 = vmatprep.subr.bf16.mxu0 0
      %6972 = vmatpush1.bf16.msra.mxu0 0
      %6973 = vmatprep.subr.bf16.mxu0 0
      %6974 = vmatpush1.bf16.msra.mxu0 0
      %6975 = vmatprep.mubr.bf16.mxu0 0
      %6976 = vmatmul.mubr.bf16.gmra.mrb[0].mxu0 %v6920
      %v6977 = vpop.f32.mrb[0].mxu0
      %v6978 = vadd.f32 0.0, %v6977
      %v6979 = vpop.f32.mrb[0].mxu0
      %v6980 = vadd.f32 0.0, %v6979
      %v6981 = vpop.f32.mrb[0].mxu0
      %v6982 = vpop.f32.mrb[0].mxu0
      %6983 = vdwg.mxu0
      %6984 = vmatprep.subr.bf16.mxu0 %v6932
      %6985 = vmatpush1.bf16.msra.mxu0 %v6929
      %6986 = vmatprep.subr.bf16.mxu0 0
      %6987 = vmatpush1.bf16.msra.mxu0 0
      %6988 = vmatprep.subr.bf16.mxu0 0
      %6989 = vmatpush1.bf16.msra.mxu0 0
      %6990 = vmatprep.subr.bf16.mxu0 0
      %6991 = vmatpush1.bf16.msra.mxu0 0
      %6992 = vmatprep.subr.bf16.mxu0 0
      %6993 = vmatpush1.bf16.msra.mxu0 0
      %6994 = vmatprep.subr.bf16.mxu0 0
      %6995 = vmatpush1.bf16.msra.mxu0 0
      %6996 = vmatprep.subr.bf16.mxu0 0
      %6997 = vmatpush1.bf16.msra.mxu0 0
      %6998 = vmatprep.subr.bf16.mxu0 0
      %6999 = vmatpush1.bf16.msra.mxu0 0
      %7000 = vmatprep.subr.bf16.mxu0 0
      %7001 = vmatpush1.bf16.msra.mxu0 0
      %7002 = vmatprep.subr.bf16.mxu0 0
      %7003 = vmatpush1.bf16.msra.mxu0 0
      %7004 = vmatprep.subr.bf16.mxu0 0
      %7005 = vmatpush1.bf16.msra.mxu0 0
      %7006 = vmatprep.subr.bf16.mxu0 0
      %7007 = vmatpush1.bf16.msra.mxu0 0
      %7008 = vmatprep.subr.bf16.mxu0 0
      %7009 = vmatpush1.bf16.msra.mxu0 0
      %7010 = vmatprep.subr.bf16.mxu0 0
      %7011 = vmatpush1.bf16.msra.mxu0 0
      %7012 = vmatprep.subr.bf16.mxu0 0
      %7013 = vmatpush1.bf16.msra.mxu0 0
      %7014 = vmatprep.subr.bf16.mxu0 0
      %7015 = vmatpush1.bf16.msra.mxu0 0
      %7016 = vmatprep.mubr.bf16.mxu0 0
      %7017 = vmatmul.mubr.bf16.gmra.mrb[0].mxu0 %v6920
      %v7018 = vpop.f32.mrb[0].mxu0
      %v7019 = vadd.f32 0.0, %v7018
      %v7020 = vpop.f32.mrb[0].mxu0
      %v7021 = vadd.f32 0.0, %v7020
      %v7022 = vpop.f32.mrb[0].mxu0
      %v7023 = vpop.f32.mrb[0].mxu0
      %7024 = vdwg.mxu0
      %7025 = vmatprep.subr.bf16.mxu0 %v6938
      %7026 = vmatpush1.bf16.msra.mxu0 %v6935
      %7027 = vmatprep.subr.bf16.mxu0 0
      %7028 = vmatpush1.bf16.msra.mxu0 0
      %7029 = vmatprep.subr.bf16.mxu0 0
      %7030 = vmatpush1.bf16.msra.mxu0 0
      %7031 = vmatprep.subr.bf16.mxu0 0
      %7032 = vmatpush1.bf16.msra.mxu0 0
      %7033 = vmatprep.subr.bf16.mxu0 0
      %7034 = vmatpush1.bf16.msra.mxu0 0
      %7035 = vmatprep.subr.bf16.mxu0 0
      %7036 = vmatpush1.bf16.msra.mxu0 0
      %7037 = vmatprep.subr.bf16.mxu0 0
      %7038 = vmatpush1.bf16.msra.mxu0 0
      %7039 = vmatprep.subr.bf16.mxu0 0
      %7040 = vmatpush1.bf16.msra.mxu0 0
      %7041 = vmatprep.subr.bf16.mxu0 0
      %7042 = vmatpush1.bf16.msra.mxu0 0
      %7043 = vmatprep.subr.bf16.mxu0 0
      %7044 = vmatpush1.bf16.msra.mxu0 0
      %7045 = vmatprep.subr.bf16.mxu0 0
      %7046 = vmatpush1.bf16.msra.mxu0 0
      %7047 = vmatprep.subr.bf16.mxu0 0
      %7048 = vmatpush1.bf16.msra.mxu0 0
      %7049 = vmatprep.subr.bf16.mxu0 0
      %7050 = vmatpush1.bf16.msra.mxu0 0
      %7051 = vmatprep.subr.bf16.mxu0 0
      %7052 = vmatpush1.bf16.msra.mxu0 0
      %7053 = vmatprep.subr.bf16.mxu0 0
      %7054 = vmatpush1.bf16.msra.mxu0 0
      %7055 = vmatprep.subr.bf16.mxu0 0
      %7056 = vmatpush1.bf16.msra.mxu0 0
      %7057 = vmatprep.mubr.bf16.mxu0 0
      %7058 = vmatmul.mubr.bf16.gmra.mrb[0].mxu0 %v6920
      %v7059 = vpop.f32.mrb[0].mxu0
      %v7060 = vadd.f32 0.0, %v7059
      %v7061 = vpop.f32.mrb[0].mxu0
      %v7062 = vadd.f32 0.0, %v7061
      %v7063 = vpop.f32.mrb[0].mxu0
      %v7064 = vpop.f32.mrb[0].mxu0
      %7065 = vdwg.mxu0
      %7066 = vmatprep.subr.bf16.mxu0 0
      %7067 = vmatpush1.bf16.msra.mxu0 %v6941
      %7068 = vmatprep.subr.bf16.mxu0 0
      %7069 = vmatpush1.bf16.msra.mxu0 0
      %7070 = vmatprep.subr.bf16.mxu0 0
      %7071 = vmatpush1.bf16.msra.mxu0 0
      %7072 = vmatprep.subr.bf16.mxu0 0
      %7073 = vmatpush1.bf16.msra.mxu0 0
      %7074 = vmatprep.subr.bf16.mxu0 0
      %7075 = vmatpush1.bf16.msra.mxu0 0
      %7076 = vmatprep.subr.bf16.mxu0 0
      %7077 = vmatpush1.bf16.msra.mxu0 0
      %7078 = vmatprep.subr.bf16.mxu0 0
      %7079 = vmatpush1.bf16.msra.mxu0 0
      %7080 = vmatprep.subr.bf16.mxu0 0
      %7081 = vmatpush1.bf16.msra.mxu0 0
      %7082 = vmatprep.subr.bf16.mxu0 0
      %7083 = vmatpush1.bf16.msra.mxu0 0
      %7084 = vmatprep.subr.bf16.mxu0 0
      %7085 = vmatpush1.bf16.msra.mxu0 0
      %7086 = vmatprep.subr.bf16.mxu0 0
      %7087 = vmatpush1.bf16.msra.mxu0 0
      %7088 = vmatprep.subr.bf16.mxu0 0
      %7089 = vmatpush1.bf16.msra.mxu0 0
      %7090 = vmatprep.subr.bf16.mxu0 0
      %7091 = vmatpush1.bf16.msra.mxu0 0
      %7092 = vmatprep.subr.bf16.mxu0 0
      %7093 = vmatpush1.bf16.msra.mxu0 0
      %7094 = vmatprep.subr.bf16.mxu0 0
      %7095 = vmatpush1.bf16.msra.mxu0 0
      %7096 = vmatprep.subr.bf16.mxu0 0
      %7097 = vmatpush1.bf16.msra.mxu0 0
      %7098 = vmatprep.mubr.bf16.mxu0 0
      %7099 = vmatmul.mubr.bf16.gmra.mrb[0].mxu0 %v6920
      %v7100 = vpop.f32.mrb[0].mxu0
      %v7101 = vadd.f32 0.0, %v7100
      %v7102 = vpop.f32.mrb[0].mxu0
      %v7103 = vpop.f32.mrb[0].mxu0
      %v7104 = vpop.f32.mrb[0].mxu0
      %7105 = vdwg.mxu0
      %v7106 = vadd.f32 %v6871, %v6978
      %v7107 = vadd.f32 %v6872, %v6980
      %v7108 = vadd.f32 %v6873, %v7019
      %v7109 = vadd.f32 %v6874, %v7021
      %v7110 = vadd.f32 %v6875, %v7060
      %v7111 = vadd.f32 %v6876, %v7062
      %v7112 = vadd.f32 %v6877, %v7101
      %7113 = vst [vmem:[#allocation2] sm:$0xff] %v7106
      %7114 = vst [vmem:[#allocation2 + $0x8] sm:$0xff] %v7107
      %7115 = vst [vmem:[#allocation2 + $0x10] sm:$0xff] %v7108
      %7116 = vst [vmem:[#allocation2 + $0x18] sm:$0xff] %v7109
      %7117 = vst [vmem:[#allocation2 + $0x20] sm:$0xff] %v7110
      %7118 = vst [vmem:[#allocation2 + $0x28] sm:$0xff] %v7111
      %7119 = vst.msk [vmem:[#allocation2 + $0x30] sm:$0xff] %vm292, %v7112
      %v7120 = vld [vmem:[#allocation2] sm:$0xff]
      %v7121 = vld [vmem:[#allocation2 + $0x8] sm:$0xff]
      %v7122 = vld [vmem:[#allocation2 + $0x10] sm:$0xff]
      %v7123 = vld [vmem:[#allocation2 + $0x18] sm:$0xff]
      %v7124 = vld [vmem:[#allocation2 + $0x20] sm:$0xff]
      %v7125 = vld [vmem:[#allocation2 + $0x28] sm:$0xff]
      %v7126 = vld [vmem:[#allocation2 + $0x30] sm:$0xff]
      %7127 = vst [vmem:[%s276] sm:$0xff] %v7120
      %7128 = vst [vmem:[%s276 + $0x8] sm:$0xff] %v7121
      %7129 = vst [vmem:[%s276 + $0x10] sm:$0xff] %v7122
      %7130 = vst [vmem:[%s276 + $0x18] sm:$0xff] %v7123
      %7131 = vst [vmem:[%s276 + $0x20] sm:$0xff] %v7124
      %7132 = vst [vmem:[%s276 + $0x28] sm:$0xff] %v7125
      %7133 = vst.msk [vmem:[%s276 + $0x30] sm:$0xff] %vm292, %v7126
      %p7134 = scmp.eq.s32.totalorder %s22, 0
      // Predicated region
      $region33: #{conv3x3_forward.4} parent=31 // pred_check
        %p7135 = pneg %p7134
      $region34: #{conv3x3_forward.4} parent=31 // pred_check_branch
        %7137 = sbr.rel (%p7135) target = $region36
      $region35: #{conv3x3_forward.4} parent=31 // pred_region
        %vm7138 = vcmask 7168
        %7139 = vst.msk [vmem:[%s280] sm:$0xff] %vm7138, 0.0
        %7140 = vst.msk [vmem:[%s284] sm:$0xff] %vm7138, 0.0
      $region36: #{conv3x3_forward.4} parent=31 // pred_fallthru
        _
      %v7141 = vld [vmem:[%s2] sm:$0x7f]
      %v7143 = vlaneseq
      %v7144 = vshrl.u32 %v7143, 7
      %v7145 = vsub.s32 0, %v7144
      %v7146 = vrot.slane %v7141, %v7145
      %v7147 = vlaneseq
      %v7148 = vshrl.u32 %v7147, 7
      %v7149 = vsub.s32 1, %v7148
      %v7150 = vrot.slane %v7141, %v7149
      %v7151 = vlaneseq
      %v7152 = vshrl.u32 %v7151, 7
      %v7153 = vsub.s32 2, %v7152
      %v7154 = vrot.slane %v7141, %v7153
      %v7155 = vlaneseq
      %v7156 = vshrl.u32 %v7155, 7
      %v7157 = vsub.s32 3, %v7156
      %v7158 = vrot.slane %v7141, %v7157
      %v7159 = vlaneseq
      %v7160 = vshrl.u32 %v7159, 7
      %v7161 = vsub.s32 4, %v7160
      %v7162 = vrot.slane %v7141, %v7161
      %v7163 = vlaneseq
      %v7164 = vshrl.u32 %v7163, 7
      %v7165 = vsub.s32 5, %v7164
      %v7166 = vrot.slane %v7141, %v7165
      %v7167 = vlaneseq
      %v7168 = vshrl.u32 %v7167, 7
      %v7169 = vsub.s32 6, %v7168
      %v7170 = vrot.slane %v7141, %v7169
      %v7178 = vmul.f32 %v7120, %v7146
      %v7179 = vmul.f32 %v7121, %v7150
      %v7180 = vmul.f32 %v7122, %v7154
      %v7181 = vmul.f32 %v7123, %v7158
      %v7182 = vmul.f32 %v7124, %v7162
      %v7183 = vmul.f32 %v7125, %v7166
      %v7184 = vmul.f32 %v7126, %v7170
      %v7185 = vld [vmem:[%s280] sm:$0xff]
      %v7186 = vadd.f32 %v7178, %v7179
      %v7187 = vadd.f32 %v7186, %v7180
      %v7188 = vadd.f32 %v7187, %v7181
      %v7189 = vadd.f32 %v7188, %v7182
      %v7190 = vadd.f32 %v7189, %v7183
      %v7191 = vsel %vm292, %v7184, 0.0
      %v7192 = vadd.f32 %v7190, %v7191
      %7193 = vadd.xlane.f32.xlu0 %v7192
      %v7194 = vpop.xlane.xlu0 %7193
      %v7195 = vadd.f32 %v7185, %v7194
      %vm7196 = vcmask 7168
      %7197 = vst.msk [vmem:[%s280] sm:$0xff] %vm7196, %v7195
      %v7198 = vld [vmem:[%s284] sm:$0xff]
      %v7199 = vmul.f32 %v7178, %v7120
      %v7200 = vmul.f32 %v7179, %v7121
      %v7201 = vmul.f32 %v7180, %v7122
      %v7202 = vmul.f32 %v7181, %v7123
      %v7203 = vmul.f32 %v7182, %v7124
      %v7204 = vmul.f32 %v7183, %v7125
      %v7205 = vmul.f32 %v7184, %v7126
      %v7206 = vadd.f32 %v7199, %v7200
      %v7207 = vadd.f32 %v7206, %v7201
      %v7208 = vadd.f32 %v7207, %v7202
      %v7209 = vadd.f32 %v7208, %v7203
      %v7210 = vadd.f32 %v7209, %v7204
      %v7211 = vsel %vm292, %v7205, 0.0
      %v7212 = vadd.f32 %v7210, %v7211
      %7213 = vadd.xlane.f32.xlu0 %v7212
      %v7214 = vpop.xlane.xlu0 %7213
      %v7215 = vadd.f32 %v7198, %v7214
      %7216 = vst.msk [vmem:[%s284] sm:$0xff] %vm7196, %v7215
      %p7217 = scmp.lt.s32.totalorder %s22, 1
      %s7218 = scalar_select %p7217, %s22, 1
      %p7219 = scmp.lt.s32.totalorder %s21, 0
      %s7220 = scalar_select %p7219, %s21, 0
      %s7221 = smul.addr %s7220, 7
      %s7222 = smul.addr %s7218, 7
      %s7223 = sadd.s32 %s7221, %s7222
      %s7224 = smul.addr %s7223, 8
      %s7225 = scalar_lea.vmem %s3, %s7224
      %p7226 = scmp.lt.s32.totalorder %s21, 0
      %s7227 = scalar_select %p7226, %s21, 0
      %s7228 = smul.addr %s7227, 8
      %s7229 = scalar_lea.vmem %s4, %s7228
      %p7230 = scmp.lt.s32.totalorder %s21, 0
      %s7231 = scalar_select %p7230, %s21, 0
      %s7232 = smul.addr %s7231, 8
      %s7233 = scalar_lea.vmem %s5, %s7232
      // Predicated region
      $region37: #{conv3x3_forward.4} parent=31 // pred_check
        %p7234 = pneg %p122
      $region38: #{conv3x3_forward.4} parent=31 // pred_check_branch
        %7236 = sbr.rel (%p7234) target = $region40
      $region39: #{conv3x3_forward.4} parent=31 // pred_region
        _
      $region40: #{conv3x3_forward.4} parent=31 // pred_fallthru
        _
      // Predicated region
      $region41: #{conv3x3_forward.4} parent=31 // pred_check
        %p7237 = pneg %p148
      $region42: #{conv3x3_forward.4} parent=31 // pred_check_branch
        %7239 = sbr.rel (%p7237) target = $region44
      $region43: #{conv3x3_forward.4} parent=31 // pred_region
        _
      $region44: #{conv3x3_forward.4} parent=31 // pred_fallthru
        _
      // Predicated region
      $region45: #{conv3x3_forward.4} parent=31 // pred_check
        %p7240 = pneg %p174
      $region46: #{conv3x3_forward.4} parent=31 // pred_check_branch
        %7242 = sbr.rel (%p7240) target = $region48
      $region47: #{conv3x3_forward.4} parent=31 // pred_region
        _
      $region48: #{conv3x3_forward.4} parent=31 // pred_fallthru
        _
      // Predicated region
      $region49: #{conv3x3_forward.4} parent=31 // pred_check
        %p7243 = pneg %p148
      $region50: #{conv3x3_forward.4} parent=31 // pred_check_branch
        %7245 = sbr.rel (%p7243) target = $region52
      $region51: #{conv3x3_forward.4} parent=31 // pred_region
        %p7246 = scmp.lt.s32.totalorder %s21, 0
        %s7247 = scalar_select %p7246, %s21, 0
        %s7248 = smul.addr %s7247, 8
        %s7249 = scalar_lea.vmem %s4, %s7248
      $region52: #{conv3x3_forward.4} parent=31 // pred_fallthru
        _
      // Predicated region
      $region53: #{conv3x3_forward.4} parent=31 // pred_check
        %p7250 = pneg %p174
      $region54: #{conv3x3_forward.4} parent=31 // pred_check_branch
        %7252 = sbr.rel (%p7250) target = $region56
      $region55: #{conv3x3_forward.4} parent=31 // pred_region
        %p7253 = scmp.lt.s32.totalorder %s21, 0
        %s7254 = scalar_select %p7253, %s21, 0
        %s7255 = smul.addr %s7254, 8
        %s7256 = scalar_lea.vmem %s5, %s7255
      $region56: #{conv3x3_forward.4} parent=31 // pred_fallthru
        _
    $region32: #{conv3x3_forward.4} parent=5 // pred_fallthru
      _
    %p7257 = scmp.le.s32.totalorder 2, %s12
    // Predicated region
    $region57: #{conv3x3_forward.4} parent=5 // pred_check
      %p7258 = pneg %p7257
    $region58: #{conv3x3_forward.4} parent=5 // pred_check_branch
      %7260 = sbr.rel (%p7258) target = $region60
    $region59: #{conv3x3_forward.4} parent=5 // pred_region
      %s7261 = ssub.s32 %s12, 2
      // Predicated region
      $region61: #{conv3x3_forward.4} parent=59 // pred_check
        %p7262 = pneg %p128
      $region62: #{conv3x3_forward.4} parent=59 // pred_check_branch
        %7264 = sbr.rel (%p7262) target = $region64
      $region63: #{conv3x3_forward.4} parent=59 // pred_region
        %p7265 = scmp.lt.s32.totalorder %s24, 1
        %s7266 = scalar_select %p7265, %s24, 1
        %p7267 = scmp.lt.s32.totalorder %s23, 0
        %s7268 = scalar_select %p7267, %s23, 0
        %s7269 = smul.addr %s7268, 7
        %s7270 = smul.addr %s7266, 7
        %s7271 = sadd.s32 %s7269, %s7270
        %s7272 = smul.addr %s7271, 8
        %s7273 = scalar_lea.vmem %s3, %s7272
      $region64: #{conv3x3_forward.4} parent=59 // pred_fallthru
        _
    $region60: #{conv3x3_forward.4} parent=5 // pred_fallthru
      _
  $region6: #{conv3x3_forward.4} parent=0 // loop_footer
    %s16 = sadd.s32 1, %s12
  $region7: #{conv3x3_forward.4} parent=0 // loop_footer_branch
    %11 = sbr.rel target = $region3
  $region8: #{conv3x3_forward.4} parent=0 // loop_exit
    _

</llo_original>
